<compile_context>
chip_gen: v5e
topology: v5e:2x2
jax: 0.10.0
libtpu: 0.0.40
codegen_flags: <defaults>
</compile_context>

<pallas_src>
import numpy as np
import jax
import jax.numpy as jnp
from jax.experimental import pallas as pl
from jax.experimental.pallas import tpu as pltpu

_VMEM_LIMIT = 32 * 1024 * 1024  # <= scoped default on every generation incl. v7x


def _round_up(x, m):
    return (x + m - 1) // m * m


def _full_spec(shape):
    """Whole-array block (used for grid=(1,) kernels with small operands)."""
    nd = len(shape)
    return pl.BlockSpec(shape, lambda i, _nd=nd: (0,) * _nd)


# ----------------------------------------------------------------------------
# Pallas kernels
# ----------------------------------------------------------------------------
def _conv_pool_relu_kernel(p_ref, w_ref, b_ref, o_ref):
    """Fused conv-as-GEMM + bias + maxpool + relu.

    p_ref: [pp, tm, K] bf16 pool-grouped im2col patches (pp = pool*pool)
    w_ref: [K, C]  bf16 conv weight (GEMM form), b_ref: [1, C] f32
    o_ref: [tm, C] bf16

    max_over_window(patch @ W + b) == max_over_window(patch @ W) + b,
    so the bias is added once after the max; relu follows (matches torch).
    """
    w = w_ref[...]
    acc = jnp.dot(p_ref[0], w, preferred_element_type=jnp.float32)
    for i in range(1, p_ref.shape[0]):
        acc = jnp.maximum(
            acc, jnp.dot(p_ref[i], w, preferred_element_type=jnp.float32))
    o_ref[...] = jnp.maximum(acc + b_ref[...], 0.0).astype(o_ref.dtype)


def _tail_kernel(p_ref, cw_ref, cb_ref,
                 w1_ref, b1_ref, w2_ref, b2_ref,
                 w3_ref, b3_ref, w4_ref, b4_ref, o_ref):
    """conv3 + maxpool2 + relu + view(-1,64) + fc1..fc3 + (dropout) + fc4."""
    cw = cw_ref[...]
    acc = jnp.dot(p_ref[0], cw, preferred_element_type=jnp.float32)
    for i in range(1, p_ref.shape[0]):
        acc = jnp.maximum(
            acc, jnp.dot(p_ref[i], cw, preferred_element_type=jnp.float32))
    h = jnp.maximum(acc + cb_ref[...], 0.0)                 # [B, 64] == view(-1, 64)

    h = h.astype(w1_ref.dtype)
    h = jnp.dot(h, w1_ref[...], preferred_element_type=jnp.float32) + b1_ref[...]
    h = h.astype(w2_ref.dtype)
    h = jnp.dot(h, w2_ref[...], preferred_element_type=jnp.float32) + b2_ref[...]
    h = h.astype(w3_ref.dtype)
    h = jnp.dot(h, w3_ref[...], preferred_element_type=jnp.float32) + b3_ref[...]
    # torch.dropout(p=0.2) is identity in eval mode.
    h = h.astype(w4_ref.dtype)
    o_ref[...] = (
        jnp.dot(h, w4_ref[...], preferred_element_type=jnp.float32) + b4_ref[...]
    )


# ----------------------------------------------------------------------------
# pallas_call wrappers
# ----------------------------------------------------------------------------
def conv_pool_relu(patches, w, b, *, num_blocks=1):
    """patches: [pp, M, K] bf16 -> [M, C] bf16 (fused conv+bias+maxpool+relu).

    Tiles M into `num_blocks` blocks (rounded up to a sublane multiple of 8)
    so the patch DMA pipelines against the MXU and the grid axis can be
    sharded across TensorCores on v7x.
    """
    pp, M, K = patches.shape
    C = w.shape[1]
    tm = _round_up(pl.cdiv(M, num_blocks), 8)
    Mp = tm * num_blocks
    if Mp != M:
        patches = jnp.pad(patches, ((0, 0), (0, Mp - M), (0, 0)))

    itemsize = patches.dtype.itemsize
    cost = pl.CostEstimate(
        flops=2 * pp * Mp * K * C,
        transcendentals=0,
        bytes_accessed=int(patches.size * itemsize
                           + w.size * w.dtype.itemsize
                           + Mp * C * 2 + C * 4),
    )

    out = pl.pallas_call(
        _conv_pool_relu_kernel,
        grid=(num_blocks,),
        out_shape=jax.ShapeDtypeStruct((Mp, C), jnp.bfloat16),
        in_specs=[
            pl.BlockSpec((pp, tm, K), lambda i: (0, i, 0)),
            pl.BlockSpec((K, C), lambda i: (0, 0)),
            pl.BlockSpec((1, C), lambda i: (0, 0)),
        ],
        out_specs=pl.BlockSpec((tm, C), lambda i: (i, 0)),
        compiler_params=pltpu.CompilerParams(
            dimension_semantics=("parallel",),
            vmem_limit_bytes=_VMEM_LIMIT),
        cost_estimate=cost,
    )(patches, w, b.reshape(1, C))
    return out[:M]


def tail_fused(patches, params):
    """conv3 stage + whole fc chain in a single pallas_call."""
    pp, B, K = patches.shape
    args = (
        patches,
        params["conv3_w"], params["conv3_b"].reshape(1, -1),
        params["fc1_w"], params["fc1_b"].reshape(1, -1),
        params["fc2_w"], params["fc2_b"].reshape(1, -1),
        params["fc3_w"], params["fc3_b"].reshape(1, -1),
        params["fc4_w"], params["fc4_b"].reshape(1, -1),
    )
    flops = 2 * (pp * B * K * 64
                 + B * (64 * 1280 + 1280 * 512 + 512 * 256 + 256 * 9))
    bytes_accessed = int(sum(int(np.prod(a.shape)) * a.dtype.itemsize for a in args)
                         + B * 9 * 4)
    return pl.pallas_call(
        _tail_kernel,
        grid=(1,),
        out_shape=jax.ShapeDtypeStruct((B, 9), jnp.float32),
        in_specs=[_full_spec(a.shape) for a in args],
        out_specs=_full_spec((B, 9)),
        compiler_params=pltpu.CompilerParams(
            dimension_semantics=("arbitrary",),
            vmem_limit_bytes=_VMEM_LIMIT),
        cost_estimate=pl.CostEstimate(
            flops=flops, transcendentals=0, bytes_accessed=bytes_accessed),
    )(*args)


# ----------------------------------------------------------------------------
# JAX glue: pool-grouped im2col (pure layout, no hot compute)
# ----------------------------------------------------------------------------
def conv_pool_patches(x, k, stride, pool):
    """x: [B,H,W,C] NHWC -> patches [pool*pool, B*PH*PW, k*k*C].

    Patch features ordered (ki, kj, c); leading axis enumerates the pool*pool
    conv positions of each pooled output (floor/ceil_mode=False cropping).
    Rows within each slice are ordered (b, ph, pw).
    """
    B, H, W, C = x.shape
    OH = (H - k) // stride + 1
    OW = (W - k) // stride + 1
    PH, PW = OH // pool, OW // pool
    cols = []
    for i in range(k):
        for j in range(k):
            cols.append(
                x[:, i:i + stride * (OH - 1) + 1:stride,
                     j:j + stride * (OW - 1) + 1:stride, :]
            )
    p = jnp.stack(cols, axis=3)                       # [B, OH, OW, k*k, C]
    p = p[:, :PH * pool, :PW * pool]                  # crop like ceil_mode=False
    p = p.reshape(B, PH, pool, PW, pool, k * k * C)
    p = p.transpose(2, 4, 0, 1, 3, 5)                 # [pool, pool, B, PH, PW, kkC]
    p = p.reshape(pool * pool, B * PH * PW, k * k * C)
    return p, (B, PH, PW)


# ----------------------------------------------------------------------------
# Full forward
# ----------------------------------------------------------------------------
@jax.jit
def net_forward(params, x_nchw):
    # NCHW -> NHWC; matmul operands in bf16 (f32 accumulation inside kernels).
    x = jnp.transpose(x_nchw, (0, 2, 3, 1)).astype(jnp.bfloat16)

    # Stage 1: conv1 (1->16, k5, s2) + maxpool(2) + relu   [fused, M-tiled]
    p, (B, PH, PW) = conv_pool_patches(x, 5, 2, 2)
    y = conv_pool_relu(p, params["conv1_w"], params["conv1_b"], num_blocks=4)
    y = y.reshape(B, PH, PW, 16)

    # Stage 2: conv2 (16->32, k3, s1) + Dropout2d(eval) + maxpool(4) + relu
    p, (B, PH, PW) = conv_pool_patches(y, 3, 1, 4)
    y = conv_pool_relu(p, params["conv2_w"], params["conv2_b"], num_blocks=1)
    y = y.reshape(B, PH, PW, 32)

    # Stage 3 + head: conv3 (32->64, k3, s2) + Dropout2d(eval) + maxpool(2)
    # + relu + view(-1, 64) + fc1..fc3 + dropout(eval) + fc4   [one kernel]
    p, _ = conv_pool_patches(y, 3, 2, 2)
    return tail_fused(p, params)


# ----------------------------------------------------------------------------
# Deterministic synthetic parameters (shapes from Net.__init__)
# Conv weights stored pre-flattened to GEMM form [(kh*kw*Cin), Cout]
# (== torch weight [Cout,Cin,KH,KW].transpose(2,3,1,0).reshape(-1, Cout)).
# Matmul weights are bf16; biases stay f32 (epilogues run in f32).
# ----------------------------------------------------------------------------
def init_params(key):
    ks = jax.random.split(key, 14)

    def w(k, fan_in, shape):
        return (jax.random.normal(k, shape, jnp.float32)
                * (1.0 / np.sqrt(fan_in))).astype(jnp.bfloat16)

    def b(k, n):
        return jax.random.normal(k, (n,), jnp.float32) * 0.01

    return {
        "conv1_w": w(ks[0], 5 * 5 * 1, (5 * 5 * 1, 16)),
        "conv1_b": b(ks[1], 16),
        "conv2_w": w(ks[2], 3 * 3 * 16, (3 * 3 * 16, 32)),
        "conv2_b": b(ks[3], 32),
        "conv3_w": w(ks[4], 3 * 3 * 32, (3 * 3 * 32, 64)),
        "conv3_b": b(ks[5], 64),
        "fc1_w": w(ks[6], 64, (64, 1280)),
        "fc1_b": b(ks[7], 1280),
        "fc2_w": w(ks[8], 1280, (1280, 512)),
        "fc2_b": b(ks[9], 512),
        "fc3_w": w(ks[10], 512, (512, 256)),
        "fc3_b": b(ks[11], 256),
        "fc4_w": w(ks[12], 256, (256, 9)),
        "fc4_b": b(ks[13], 9),
    }


if __name__ == "__main__":
    key = jax.random.PRNGKey(0)
    pkey, xkey = jax.random.split(key)
    params = init_params(pkey)

    # 96x96 is the natural input size: the conv/pool stack collapses spatial
    # dims to 1x1 so view([-1, 64]) preserves the batch dimension (fc1 in=64).
    x = jax.random.normal(xkey, (2, 1, 96, 96), jnp.float32)   # NCHW

    out = net_forward(params, x)
    out = jax.block_until_ready(out)
    assert out.shape == (2, 9), out.shape
    assert bool(jnp.all(jnp.isfinite(out)))
    print("KERNEL_OK")
</pallas_src>

<mosaic_0001>
module attributes {stable_mosaic.version = 11 : i64} {
  func.func @_conv_pool_relu_kernel(%arg0: i32, %arg1: memref<4x272x25xbf16, #tpu.memory_space<vmem>>, %arg2: memref<25x16xbf16, #tpu.memory_space<vmem>>, %arg3: memref<1x16xf32, #tpu.memory_space<vmem>>, %arg4: memref<272x16xbf16, #tpu.memory_space<vmem>>) attributes {dimension_semantics = [#tpu.dimension_semantics<parallel>], iteration_bounds = array<i64: 4>, scalar_prefetch = 0 : i64, scratch_operands = 0 : i64, tpu.core_type = #tpu.core_type<tc>, window_params = [{transform_indices = @transform_0, window_bounds = array<i64: 4, 272, 25>}, {pipeline_mode = #tpu.pipeline_mode<synchronous>, transform_indices = @transform_1, window_bounds = array<i64: 25, 16>}, {pipeline_mode = #tpu.pipeline_mode<synchronous>, transform_indices = @transform_2, window_bounds = array<i64: 1, 16>}, {transform_indices = @transform_3, window_bounds = array<i64: 272, 16>}]} {
    %c0 = arith.constant 0 : index
    %c0_0 = arith.constant 0 : index
    %0 = vector.load %arg2[%c0, %c0_0] : memref<25x16xbf16, #tpu.memory_space<vmem>>, vector<25x16xbf16>
    %c0_1 = arith.constant 0 : index
    %c0_2 = arith.constant 0 : index
    %c0_3 = arith.constant 0 : index
    %1 = vector.load %arg1[%c0_1, %c0_2, %c0_3] : memref<4x272x25xbf16, #tpu.memory_space<vmem>>, vector<1x272x25xbf16>
    %2 = vector.shape_cast %1 : vector<1x272x25xbf16> to vector<272x25xbf16>
    %cst = arith.constant dense<0.000000e+00> : vector<272x16xf32>
    %3 = tpu.matmul %2, %0, %cst {dimension_numbers = #tpu.dot_dimension_numbers<[1], [0], [0], [1], [0, 0, 1, 1], [], []>} : vector<272x25xbf16>, vector<25x16xbf16>, vector<272x16xf32> -> vector<272x16xf32>
    %c1 = arith.constant 1 : index
    %c0_4 = arith.constant 0 : index
    %c0_5 = arith.constant 0 : index
    %4 = vector.load %arg1[%c1, %c0_4, %c0_5] : memref<4x272x25xbf16, #tpu.memory_space<vmem>>, vector<1x272x25xbf16>
    %5 = vector.shape_cast %4 : vector<1x272x25xbf16> to vector<272x25xbf16>
    %cst_6 = arith.constant dense<0.000000e+00> : vector<272x16xf32>
    %6 = tpu.matmul %5, %0, %cst_6 {dimension_numbers = #tpu.dot_dimension_numbers<[1], [0], [0], [1], [0, 0, 1, 1], [], []>} : vector<272x25xbf16>, vector<25x16xbf16>, vector<272x16xf32> -> vector<272x16xf32>
    %7 = arith.maximumf %3, %6 : vector<272x16xf32>
    %c2 = arith.constant 2 : index
    %c0_7 = arith.constant 0 : index
    %c0_8 = arith.constant 0 : index
    %8 = vector.load %arg1[%c2, %c0_7, %c0_8] : memref<4x272x25xbf16, #tpu.memory_space<vmem>>, vector<1x272x25xbf16>
    %9 = vector.shape_cast %8 : vector<1x272x25xbf16> to vector<272x25xbf16>
    %cst_9 = arith.constant dense<0.000000e+00> : vector<272x16xf32>
    %10 = tpu.matmul %9, %0, %cst_9 {dimension_numbers = #tpu.dot_dimension_numbers<[1], [0], [0], [1], [0, 0, 1, 1], [], []>} : vector<272x25xbf16>, vector<25x16xbf16>, vector<272x16xf32> -> vector<272x16xf32>
    %11 = arith.maximumf %7, %10 : vector<272x16xf32>
    %c3 = arith.constant 3 : index
    %c0_10 = arith.constant 0 : index
    %c0_11 = arith.constant 0 : index
    %12 = vector.load %arg1[%c3, %c0_10, %c0_11] : memref<4x272x25xbf16, #tpu.memory_space<vmem>>, vector<1x272x25xbf16>
    %13 = vector.shape_cast %12 : vector<1x272x25xbf16> to vector<272x25xbf16>
    %cst_12 = arith.constant dense<0.000000e+00> : vector<272x16xf32>
    %14 = tpu.matmul %13, %0, %cst_12 {dimension_numbers = #tpu.dot_dimension_numbers<[1], [0], [0], [1], [0, 0, 1, 1], [], []>} : vector<272x25xbf16>, vector<25x16xbf16>, vector<272x16xf32> -> vector<272x16xf32>
    %15 = arith.maximumf %11, %14 : vector<272x16xf32>
    %c0_13 = arith.constant 0 : index
    %c0_14 = arith.constant 0 : index
    %16 = vector.load %arg3[%c0_13, %c0_14] : memref<1x16xf32, #tpu.memory_space<vmem>>, vector<1x16xf32>
    %17 = vector.broadcast %16 : vector<1x16xf32> to vector<272x16xf32>
    %18 = arith.addf %15, %17 : vector<272x16xf32>
    %cst_15 = arith.constant 0.000000e+00 : f32
    %19 = vector.broadcast %cst_15 : f32 to vector<272x16xf32>
    %20 = arith.maximumf %18, %19 : vector<272x16xf32>
    %21 = arith.truncf %20 : vector<272x16xf32> to vector<272x16xbf16>
    %c0_16 = arith.constant 0 : index
    %c0_17 = arith.constant 0 : index
    %22 = vector.load %arg4[%c0_16, %c0_17] : memref<272x16xbf16, #tpu.memory_space<vmem>>, vector<272x16xbf16>
    tpu.vector_store %arg4[%c0_16, %c0_17], %21 {strides = array<i32>} : memref<272x16xbf16, #tpu.memory_space<vmem>>, vector<272x16xbf16>,
    return
  }
  func.func @transform_0(%arg0: i32) -> (i32, i32, i32) {
    %c0_i32 = arith.constant 0 : i32
    %c0_i32_0 = arith.constant 0 : i32
    %c0_i32_1 = arith.constant 0 : i32
    return %c0_i32, %arg0, %c0_i32_0 : i32, i32, i32
  }
  func.func @transform_1(%arg0: i32) -> (i32, i32) {
    %c0_i32 = arith.constant 0 : i32
    %c0_i32_0 = arith.constant 0 : i32
    %c0_i32_1 = arith.constant 0 : i32
    return %c0_i32, %c0_i32_0 : i32, i32
  }
  func.func @transform_2(%arg0: i32) -> (i32, i32) {
    %c0_i32 = arith.constant 0 : i32
    %c0_i32_0 = arith.constant 0 : i32
    %c0_i32_1 = arith.constant 0 : i32
    return %c0_i32, %c0_i32_0 : i32, i32
  }
  func.func @transform_3(%arg0: i32) -> (i32, i32) {
    %c0_i32 = arith.constant 0 : i32
    %c0_i32_0 = arith.constant 0 : i32
    return %arg0, %c0_i32 : i32, i32
  }
}

module attributes {stable_mosaic.version = 11 : i64} {
  func.func @_conv_pool_relu_kernel(%arg0: i32, %arg1: memref<16x56x144xbf16, #tpu.memory_space<vmem>>, %arg2: memref<144x32xbf16, #tpu.memory_space<vmem>>, %arg3: memref<1x32xf32, #tpu.memory_space<vmem>>, %arg4: memref<56x32xbf16, #tpu.memory_space<vmem>>) attributes {dimension_semantics = [#tpu.dimension_semantics<parallel>], iteration_bounds = array<i64: 1>, scalar_prefetch = 0 : i64, scratch_operands = 0 : i64, tpu.core_type = #tpu.core_type<tc>, window_params = [{transform_indices = @transform_0, window_bounds = array<i64: 16, 56, 144>}, {pipeline_mode = #tpu.pipeline_mode<synchronous>, transform_indices = @transform_1, window_bounds = array<i64: 144, 32>}, {pipeline_mode = #tpu.pipeline_mode<synchronous>, transform_indices = @transform_2, window_bounds = array<i64: 1, 32>}, {transform_indices = @transform_3, window_bounds = array<i64: 56, 32>}]} {
    %c0 = arith.constant 0 : index
    %c0_0 = arith.constant 0 : index
    %0 = vector.load %arg2[%c0, %c0_0] : memref<144x32xbf16, #tpu.memory_space<vmem>>, vector<144x32xbf16>
    %c0_1 = arith.constant 0 : index
    %c0_2 = arith.constant 0 : index
    %c0_3 = arith.constant 0 : index
    %1 = vector.load %arg1[%c0_1, %c0_2, %c0_3] : memref<16x56x144xbf16, #tpu.memory_space<vmem>>, vector<1x56x144xbf16>
    %2 = vector.shape_cast %1 : vector<1x56x144xbf16> to vector<56x144xbf16>
    %cst = arith.constant dense<0.000000e+00> : vector<56x32xf32>
    %3 = tpu.matmul %2, %0, %cst {dimension_numbers = #tpu.dot_dimension_numbers<[1], [0], [0], [1], [0, 0, 1, 1], [], []>} : vector<56x144xbf16>, vector<144x32xbf16>, vector<56x32xf32> -> vector<56x32xf32>
    %c1 = arith.constant 1 : index
    %c0_4 = arith.constant 0 : index
    %c0_5 = arith.constant 0 : index
    %4 = vector.load %arg1[%c1, %c0_4, %c0_5] : memref<16x56x144xbf16, #tpu.memory_space<vmem>>, vector<1x56x144xbf16>
    %5 = vector.shape_cast %4 : vector<1x56x144xbf16> to vector<56x144xbf16>
    %cst_6 = arith.constant dense<0.000000e+00> : vector<56x32xf32>
    %6 = tpu.matmul %5, %0, %cst_6 {dimension_numbers = #tpu.dot_dimension_numbers<[1], [0], [0], [1], [0, 0, 1, 1], [], []>} : vector<56x144xbf16>, vector<144x32xbf16>, vector<56x32xf32> -> vector<56x32xf32>
    %7 = arith.maximumf %3, %6 : vector<56x32xf32>
    %c2 = arith.constant 2 : index
    %c0_7 = arith.constant 0 : index
    %c0_8 = arith.constant 0 : index
    %8 = vector.load %arg1[%c2, %c0_7, %c0_8] : memref<16x56x144xbf16, #tpu.memory_space<vmem>>, vector<1x56x144xbf16>
    %9 = vector.shape_cast %8 : vector<1x56x144xbf16> to vector<56x144xbf16>
    %cst_9 = arith.constant dense<0.000000e+00> : vector<56x32xf32>
    %10 = tpu.matmul %9, %0, %cst_9 {dimension_numbers = #tpu.dot_dimension_numbers<[1], [0], [0], [1], [0, 0, 1, 1], [], []>} : vector<56x144xbf16>, vector<144x32xbf16>, vector<56x32xf32> -> vector<56x32xf32>
    %11 = arith.maximumf %7, %10 : vector<56x32xf32>
    %c3 = arith.constant 3 : index
    %c0_10 = arith.constant 0 : index
    %c0_11 = arith.constant 0 : index
    %12 = vector.load %arg1[%c3, %c0_10, %c0_11] : memref<16x56x144xbf16, #tpu.memory_space<vmem>>, vector<1x56x144xbf16>
    %13 = vector.shape_cast %12 : vector<1x56x144xbf16> to vector<56x144xbf16>
    %cst_12 = arith.constant dense<0.000000e+00> : vector<56x32xf32>
    %14 = tpu.matmul %13, %0, %cst_12 {dimension_numbers = #tpu.dot_dimension_numbers<[1], [0], [0], [1], [0, 0, 1, 1], [], []>} : vector<56x144xbf16>, vector<144x32xbf16>, vector<56x32xf32> -> vector<56x32xf32>
    %15 = arith.maximumf %11, %14 : vector<56x32xf32>
    %c4 = arith.constant 4 : index
    %c0_13 = arith.constant 0 : index
    %c0_14 = arith.constant 0 : index
    %16 = vector.load %arg1[%c4, %c0_13, %c0_14] : memref<16x56x144xbf16, #tpu.memory_space<vmem>>, vector<1x56x144xbf16>
    %17 = vector.shape_cast %16 : vector<1x56x144xbf16> to vector<56x144xbf16>
    %cst_15 = arith.constant dense<0.000000e+00> : vector<56x32xf32>
    %18 = tpu.matmul %17, %0, %cst_15 {dimension_numbers = #tpu.dot_dimension_numbers<[1], [0], [0], [1], [0, 0, 1, 1], [], []>} : vector<56x144xbf16>, vector<144x32xbf16>, vector<56x32xf32> -> vector<56x32xf32>
    %19 = arith.maximumf %15, %18 : vector<56x32xf32>
    %c5 = arith.constant 5 : index
    %c0_16 = arith.constant 0 : index
    %c0_17 = arith.constant 0 : index
    %20 = vector.load %arg1[%c5, %c0_16, %c0_17] : memref<16x56x144xbf16, #tpu.memory_space<vmem>>, vector<1x56x144xbf16>
    %21 = vector.shape_cast %20 : vector<1x56x144xbf16> to vector<56x144xbf16>
    %cst_18 = arith.constant dense<0.000000e+00> : vector<56x32xf32>
    %22 = tpu.matmul %21, %0, %cst_18 {dimension_numbers = #tpu.dot_dimension_numbers<[1], [0], [0], [1], [0, 0, 1, 1], [], []>} : vector<56x144xbf16>, vector<144x32xbf16>, vector<56x32xf32> -> vector<56x32xf32>
    %23 = arith.maximumf %19, %22 : vector<56x32xf32>
    %c6 = arith.constant 6 : index
    %c0_19 = arith.constant 0 : index
    %c0_20 = arith.constant 0 : index
    %24 = vector.load %arg1[%c6, %c0_19, %c0_20] : memref<16x56x144xbf16, #tpu.memory_space<vmem>>, vector<1x56x144xbf16>
    %25 = vector.shape_cast %24 : vector<1x56x144xbf16> to vector<56x144xbf16>
    %cst_21 = arith.constant dense<0.000000e+00> : vector<56x32xf32>
    %26 = tpu.matmul %25, %0, %cst_21 {dimension_numbers = #tpu.dot_dimension_numbers<[1], [0], [0], [1], [0, 0, 1, 1], [], []>} : vector<56x144xbf16>, vector<144x32xbf16>, vector<56x32xf32> -> vector<56x32xf32>
    %27 = arith.maximumf %23, %26 : vector<56x32xf32>
    %c7 = arith.constant 7 : index
    %c0_22 = arith.constant 0 : index
    %c0_23 = arith.constant 0 : index
    %28 = vector.load %arg1[%c7, %c0_22, %c0_23] : memref<16x56x144xbf16, #tpu.memory_space<vmem>>, vector<1x56x144xbf16>
    %29 = vector.shape_cast %28 : vector<1x56x144xbf16> to vector<56x144xbf16>
    %cst_24 = arith.constant dense<0.000000e+00> : vector<56x32xf32>
    %30 = tpu.matmul %29, %0, %cst_24 {dimension_numbers = #tpu.dot_dimension_numbers<[1], [0], [0], [1], [0, 0, 1, 1], [], []>} : vector<56x144xbf16>, vector<144x32xbf16>, vector<56x32xf32> -> vector<56x32xf32>
    %31 = arith.maximumf %27, %30 : vector<56x32xf32>
    %c8 = arith.constant 8 : index
    %c0_25 = arith.constant 0 : index
    %c0_26 = arith.constant 0 : index
    %32 = vector.load %arg1[%c8, %c0_25, %c0_26] : memref<16x56x144xbf16, #tpu.memory_space<vmem>>, vector<1x56x144xbf16>
    %33 = vector.shape_cast %32 : vector<1x56x144xbf16> to vector<56x144xbf16>
    %cst_27 = arith.constant dense<0.000000e+00> : vector<56x32xf32>
    %34 = tpu.matmul %33, %0, %cst_27 {dimension_numbers = #tpu.dot_dimension_numbers<[1], [0], [0], [1], [0, 0, 1, 1], [], []>} : vector<56x144xbf16>, vector<144x32xbf16>, vector<56x32xf32> -> vector<56x32xf32>
    %35 = arith.maximumf %31, %34 : vector<56x32xf32>
    %c9 = arith.constant 9 : index
    %c0_28 = arith.constant 0 : index
    %c0_29 = arith.constant 0 : index
    %36 = vector.load %arg1[%c9, %c0_28, %c0_29] : memref<16x56x144xbf16, #tpu.memory_space<vmem>>, vector<1x56x144xbf16>
    %37 = vector.shape_cast %36 : vector<1x56x144xbf16> to vector<56x144xbf16>
    %cst_30 = arith.constant dense<0.000000e+00> : vector<56x32xf32>
    %38 = tpu.matmul %37, %0, %cst_30 {dimension_numbers = #tpu.dot_dimension_numbers<[1], [0], [0], [1], [0, 0, 1, 1], [], []>} : vector<56x144xbf16>, vector<144x32xbf16>, vector<56x32xf32> -> vector<56x32xf32>
    %39 = arith.maximumf %35, %38 : vector<56x32xf32>
    %c10 = arith.constant 10 : index
    %c0_31 = arith.constant 0 : index
    %c0_32 = arith.constant 0 : index
    %40 = vector.load %arg1[%c10, %c0_31, %c0_32] : memref<16x56x144xbf16, #tpu.memory_space<vmem>>, vector<1x56x144xbf16>
    %41 = vector.shape_cast %40 : vector<1x56x144xbf16> to vector<56x144xbf16>
    %cst_33 = arith.constant dense<0.000000e+00> : vector<56x32xf32>
    %42 = tpu.matmul %41, %0, %cst_33 {dimension_numbers = #tpu.dot_dimension_numbers<[1], [0], [0], [1], [0, 0, 1, 1], [], []>} : vector<56x144xbf16>, vector<144x32xbf16>, vector<56x32xf32> -> vector<56x32xf32>
    %43 = arith.maximumf %39, %42 : vector<56x32xf32>
    %c11 = arith.constant 11 : index
    %c0_34 = arith.constant 0 : index
    %c0_35 = arith.constant 0 : index
    %44 = vector.load %arg1[%c11, %c0_34, %c0_35] : memref<16x56x144xbf16, #tpu.memory_space<vmem>>, vector<1x56x144xbf16>
    %45 = vector.shape_cast %44 : vector<1x56x144xbf16> to vector<56x144xbf16>
    %cst_36 = arith.constant dense<0.000000e+00> : vector<56x32xf32>
    %46 = tpu.matmul %45, %0, %cst_36 {dimension_numbers = #tpu.dot_dimension_numbers<[1], [0], [0], [1], [0, 0, 1, 1], [], []>} : vector<56x144xbf16>, vector<144x32xbf16>, vector<56x32xf32> -> vector<56x32xf32>
    %47 = arith.maximumf %43, %46 : vector<56x32xf32>
    %c12 = arith.constant 12 : index
    %c0_37 = arith.constant 0 : index
    %c0_38 = arith.constant 0 : index
    %48 = vector.load %arg1[%c12, %c0_37, %c0_38] : memref<16x56x144xbf16, #tpu.memory_space<vmem>>, vector<1x56x144xbf16>
    %49 = vector.shape_cast %48 : vector<1x56x144xbf16> to vector<56x144xbf16>
    %cst_39 = arith.constant dense<0.000000e+00> : vector<56x32xf32>
    %50 = tpu.matmul %49, %0, %cst_39 {dimension_numbers = #tpu.dot_dimension_numbers<[1], [0], [0], [1], [0, 0, 1, 1], [], []>} : vector<56x144xbf16>, vector<144x32xbf16>, vector<56x32xf32> -> vector<56x32xf32>
    %51 = arith.maximumf %47, %50 : vector<56x32xf32>
    %c13 = arith.constant 13 : index
    %c0_40 = arith.constant 0 : index
    %c0_41 = arith.constant 0 : index
    %52 = vector.load %arg1[%c13, %c0_40, %c0_41] : memref<16x56x144xbf16, #tpu.memory_space<vmem>>, vector<1x56x144xbf16>
    %53 = vector.shape_cast %52 : vector<1x56x144xbf16> to vector<56x144xbf16>
    %cst_42 = arith.constant dense<0.000000e+00> : vector<56x32xf32>
    %54 = tpu.matmul %53, %0, %cst_42 {dimension_numbers = #tpu.dot_dimension_numbers<[1], [0], [0], [1], [0, 0, 1, 1], [], []>} : vector<56x144xbf16>, vector<144x32xbf16>, vector<56x32xf32> -> vector<56x32xf32>
    %55 = arith.maximumf %51, %54 : vector<56x32xf32>
    %c14 = arith.constant 14 : index
    %c0_43 = arith.constant 0 : index
    %c0_44 = arith.constant 0 : index
    %56 = vector.load %arg1[%c14, %c0_43, %c0_44] : memref<16x56x144xbf16, #tpu.memory_space<vmem>>, vector<1x56x144xbf16>
    %57 = vector.shape_cast %56 : vector<1x56x144xbf16> to vector<56x144xbf16>
    %cst_45 = arith.constant dense<0.000000e+00> : vector<56x32xf32>
    %58 = tpu.matmul %57, %0, %cst_45 {dimension_numbers = #tpu.dot_dimension_numbers<[1], [0], [0], [1], [0, 0, 1, 1], [], []>} : vector<56x144xbf16>, vector<144x32xbf16>, vector<56x32xf32> -> vector<56x32xf32>
    %59 = arith.maximumf %55, %58 : vector<56x32xf32>
    %c15 = arith.constant 15 : index
    %c0_46 = arith.constant 0 : index
    %c0_47 = arith.constant 0 : index
    %60 = vector.load %arg1[%c15, %c0_46, %c0_47] : memref<16x56x144xbf16, #tpu.memory_space<vmem>>, vector<1x56x144xbf16>
    %61 = vector.shape_cast %60 : vector<1x56x144xbf16> to vector<56x144xbf16>
    %cst_48 = arith.constant dense<0.000000e+00> : vector<56x32xf32>
    %62 = tpu.matmul %61, %0, %cst_48 {dimension_numbers = #tpu.dot_dimension_numbers<[1], [0], [0], [1], [0, 0, 1, 1], [], []>} : vector<56x144xbf16>, vector<144x32xbf16>, vector<56x32xf32> -> vector<56x32xf32>
    %63 = arith.maximumf %59, %62 : vector<56x32xf32>
    %c0_49 = arith.constant 0 : index
    %c0_50 = arith.constant 0 : index
    %64 = vector.load %arg3[%c0_49, %c0_50] : memref<1x32xf32, #tpu.memory_space<vmem>>, vector<1x32xf32>
    %65 = vector.broadcast %64 : vector<1x32xf32> to vector<56x32xf32>
    %66 = arith.addf %63, %65 : vector<56x32xf32>
    %cst_51 = arith.constant 0.000000e+00 : f32
    %67 = vector.broadcast %cst_51 : f32 to vector<56x32xf32>
    %68 = arith.maximumf %66, %67 : vector<56x32xf32>
    %69 = arith.truncf %68 : vector<56x32xf32> to vector<56x32xbf16>
    %c0_52 = arith.constant 0 : index
    %c0_53 = arith.constant 0 : index
    %70 = vector.load %arg4[%c0_52, %c0_53] : memref<56x32xbf16, #tpu.memory_space<vmem>>, vector<56x32xbf16>
    tpu.vector_store %arg4[%c0_52, %c0_53], %69 {strides = array<i32>} : memref<56x32xbf16, #tpu.memory_space<vmem>>, vector<56x32xbf16>,
    return
  }
  func.func @transform_0(%arg0: i32) -> (i32, i32, i32) {
    %c0_i32 = arith.constant 0 : i32
    %c0_i32_0 = arith.constant 0 : i32
    %c0_i32_1 = arith.constant 0 : i32
    return %c0_i32, %arg0, %c0_i32_0 : i32, i32, i32
  }
  func.func @transform_1(%arg0: i32) -> (i32, i32) {
    %c0_i32 = arith.constant 0 : i32
    %c0_i32_0 = arith.constant 0 : i32
    %c0_i32_1 = arith.constant 0 : i32
    return %c0_i32, %c0_i32_0 : i32, i32
  }
  func.func @transform_2(%arg0: i32) -> (i32, i32) {
    %c0_i32 = arith.constant 0 : i32
    %c0_i32_0 = arith.constant 0 : i32
    %c0_i32_1 = arith.constant 0 : i32
    return %c0_i32, %c0_i32_0 : i32, i32
  }
  func.func @transform_3(%arg0: i32) -> (i32, i32) {
    %c0_i32 = arith.constant 0 : i32
    %c0_i32_0 = arith.constant 0 : i32
    return %arg0, %c0_i32 : i32, i32
  }
}

module attributes {stable_mosaic.version = 11 : i64} {
  func.func @_tail_kernel(%arg0: i32, %arg1: memref<4x2x288xbf16, #tpu.memory_space<vmem>>, %arg2: memref<288x64xbf16, #tpu.memory_space<vmem>>, %arg3: memref<1x64xf32, #tpu.memory_space<vmem>>, %arg4: memref<64x1280xbf16, #tpu.memory_space<vmem>>, %arg5: memref<1x1280xf32, #tpu.memory_space<vmem>>, %arg6: memref<1280x512xbf16, #tpu.memory_space<vmem>>, %arg7: memref<1x512xf32, #tpu.memory_space<vmem>>, %arg8: memref<512x256xbf16, #tpu.memory_space<vmem>>, %arg9: memref<1x256xf32, #tpu.memory_space<vmem>>, %arg10: memref<256x9xbf16, #tpu.memory_space<vmem>>, %arg11: memref<1x9xf32, #tpu.memory_space<vmem>>, %arg12: memref<2x9xf32, #tpu.memory_space<vmem>>) attributes {dimension_semantics = [#tpu.dimension_semantics<arbitrary>], iteration_bounds = array<i64: 1>, scalar_prefetch = 0 : i64, scratch_operands = 0 : i64, tpu.core_type = #tpu.core_type<tc>, window_params = [{pipeline_mode = #tpu.pipeline_mode<synchronous>, transform_indices = @transform_0, window_bounds = array<i64: 4, 2, 288>}, {pipeline_mode = #tpu.pipeline_mode<synchronous>, transform_indices = @transform_1, window_bounds = array<i64: 288, 64>}, {pipeline_mode = #tpu.pipeline_mode<synchronous>, transform_indices = @transform_2, window_bounds = array<i64: 1, 64>}, {pipeline_mode = #tpu.pipeline_mode<synchronous>, transform_indices = @transform_3, window_bounds = array<i64: 64, 1280>}, {pipeline_mode = #tpu.pipeline_mode<synchronous>, transform_indices = @transform_4, window_bounds = array<i64: 1, 1280>}, {pipeline_mode = #tpu.pipeline_mode<synchronous>, transform_indices = @transform_5, window_bounds = array<i64: 1280, 512>}, {pipeline_mode = #tpu.pipeline_mode<synchronous>, transform_indices = @transform_6, window_bounds = array<i64: 1, 512>}, {pipeline_mode = #tpu.pipeline_mode<synchronous>, transform_indices = @transform_7, window_bounds = array<i64: 512, 256>}, {pipeline_mode = #tpu.pipeline_mode<synchronous>, transform_indices = @transform_8, window_bounds = array<i64: 1, 256>}, {pipeline_mode = #tpu.pipeline_mode<synchronous>, transform_indices = @transform_9, window_bounds = array<i64: 256, 9>}, {pipeline_mode = #tpu.pipeline_mode<synchronous>, transform_indices = @transform_10, window_bounds = array<i64: 1, 9>}, {pipeline_mode = #tpu.pipeline_mode<synchronous>, transform_indices = @transform_11, window_bounds = array<i64: 2, 9>}]} {
    %c0 = arith.constant 0 : index
    %c0_0 = arith.constant 0 : index
    %0 = vector.load %arg2[%c0, %c0_0] : memref<288x64xbf16, #tpu.memory_space<vmem>>, vector<288x64xbf16>
    %c0_1 = arith.constant 0 : index
    %c0_2 = arith.constant 0 : index
    %c0_3 = arith.constant 0 : index
    %1 = vector.load %arg1[%c0_1, %c0_2, %c0_3] : memref<4x2x288xbf16, #tpu.memory_space<vmem>>, vector<1x2x288xbf16>
    %2 = vector.shape_cast %1 : vector<1x2x288xbf16> to vector<2x288xbf16>
    %cst = arith.constant dense<0.000000e+00> : vector<2x64xf32>
    %3 = tpu.matmul %2, %0, %cst {dimension_numbers = #tpu.dot_dimension_numbers<[1], [0], [0], [1], [0, 0, 1, 1], [], []>} : vector<2x288xbf16>, vector<288x64xbf16>, vector<2x64xf32> -> vector<2x64xf32>
    %c1 = arith.constant 1 : index
    %c0_4 = arith.constant 0 : index
    %c0_5 = arith.constant 0 : index
    %4 = vector.load %arg1[%c1, %c0_4, %c0_5] : memref<4x2x288xbf16, #tpu.memory_space<vmem>>, vector<1x2x288xbf16>
    %5 = vector.shape_cast %4 : vector<1x2x288xbf16> to vector<2x288xbf16>
    %cst_6 = arith.constant dense<0.000000e+00> : vector<2x64xf32>
    %6 = tpu.matmul %5, %0, %cst_6 {dimension_numbers = #tpu.dot_dimension_numbers<[1], [0], [0], [1], [0, 0, 1, 1], [], []>} : vector<2x288xbf16>, vector<288x64xbf16>, vector<2x64xf32> -> vector<2x64xf32>
    %7 = arith.maximumf %3, %6 : vector<2x64xf32>
    %c2 = arith.constant 2 : index
    %c0_7 = arith.constant 0 : index
    %c0_8 = arith.constant 0 : index
    %8 = vector.load %arg1[%c2, %c0_7, %c0_8] : memref<4x2x288xbf16, #tpu.memory_space<vmem>>, vector<1x2x288xbf16>
    %9 = vector.shape_cast %8 : vector<1x2x288xbf16> to vector<2x288xbf16>
    %cst_9 = arith.constant dense<0.000000e+00> : vector<2x64xf32>
    %10 = tpu.matmul %9, %0, %cst_9 {dimension_numbers = #tpu.dot_dimension_numbers<[1], [0], [0], [1], [0, 0, 1, 1], [], []>} : vector<2x288xbf16>, vector<288x64xbf16>, vector<2x64xf32> -> vector<2x64xf32>
    %11 = arith.maximumf %7, %10 : vector<2x64xf32>
    %c3 = arith.constant 3 : index
    %c0_10 = arith.constant 0 : index
    %c0_11 = arith.constant 0 : index
    %12 = vector.load %arg1[%c3, %c0_10, %c0_11] : memref<4x2x288xbf16, #tpu.memory_space<vmem>>, vector<1x2x288xbf16>
    %13 = vector.shape_cast %12 : vector<1x2x288xbf16> to vector<2x288xbf16>
    %cst_12 = arith.constant dense<0.000000e+00> : vector<2x64xf32>
    %14 = tpu.matmul %13, %0, %cst_12 {dimension_numbers = #tpu.dot_dimension_numbers<[1], [0], [0], [1], [0, 0, 1, 1], [], []>} : vector<2x288xbf16>, vector<288x64xbf16>, vector<2x64xf32> -> vector<2x64xf32>
    %15 = arith.maximumf %11, %14 : vector<2x64xf32>
    %c0_13 = arith.constant 0 : index
    %c0_14 = arith.constant 0 : index
    %16 = vector.load %arg3[%c0_13, %c0_14] : memref<1x64xf32, #tpu.memory_space<vmem>>, vector<1x64xf32>
    %17 = vector.broadcast %16 : vector<1x64xf32> to vector<2x64xf32>
    %18 = arith.addf %15, %17 : vector<2x64xf32>
    %cst_15 = arith.constant 0.000000e+00 : f32
    %19 = vector.broadcast %cst_15 : f32 to vector<2x64xf32>
    %20 = arith.maximumf %18, %19 : vector<2x64xf32>
    %21 = arith.truncf %20 : vector<2x64xf32> to vector<2x64xbf16>
    %c0_16 = arith.constant 0 : index
    %c0_17 = arith.constant 0 : index
    %22 = vector.load %arg4[%c0_16, %c0_17] : memref<64x1280xbf16, #tpu.memory_space<vmem>>, vector<64x1280xbf16>
    %cst_18 = arith.constant dense<0.000000e+00> : vector<2x1280xf32>
    %23 = tpu.matmul %21, %22, %cst_18 {dimension_numbers = #tpu.dot_dimension_numbers<[1], [0], [0], [1], [0, 0, 1, 1], [], []>} : vector<2x64xbf16>, vector<64x1280xbf16>, vector<2x1280xf32> -> vector<2x1280xf32>
    %c0_19 = arith.constant 0 : index
    %c0_20 = arith.constant 0 : index
    %24 = vector.load %arg5[%c0_19, %c0_20] : memref<1x1280xf32, #tpu.memory_space<vmem>>, vector<1x1280xf32>
    %25 = vector.broadcast %24 : vector<1x1280xf32> to vector<2x1280xf32>
    %26 = arith.addf %23, %25 : vector<2x1280xf32>
    %27 = arith.truncf %26 : vector<2x1280xf32> to vector<2x1280xbf16>
    %c0_21 = arith.constant 0 : index
    %c0_22 = arith.constant 0 : index
    %28 = vector.load %arg6[%c0_21, %c0_22] : memref<1280x512xbf16, #tpu.memory_space<vmem>>, vector<1280x512xbf16>
    %cst_23 = arith.constant dense<0.000000e+00> : vector<2x512xf32>
    %29 = tpu.matmul %27, %28, %cst_23 {dimension_numbers = #tpu.dot_dimension_numbers<[1], [0], [0], [1], [0, 0, 1, 1], [], []>} : vector<2x1280xbf16>, vector<1280x512xbf16>, vector<2x512xf32> -> vector<2x512xf32>
    %c0_24 = arith.constant 0 : index
    %c0_25 = arith.constant 0 : index
    %30 = vector.load %arg7[%c0_24, %c0_25] : memref<1x512xf32, #tpu.memory_space<vmem>>, vector<1x512xf32>
    %31 = vector.broadcast %30 : vector<1x512xf32> to vector<2x512xf32>
    %32 = arith.addf %29, %31 : vector<2x512xf32>
    %33 = arith.truncf %32 : vector<2x512xf32> to vector<2x512xbf16>
    %c0_26 = arith.constant 0 : index
    %c0_27 = arith.constant 0 : index
    %34 = vector.load %arg8[%c0_26, %c0_27] : memref<512x256xbf16, #tpu.memory_space<vmem>>, vector<512x256xbf16>
    %cst_28 = arith.constant dense<0.000000e+00> : vector<2x256xf32>
    %35 = tpu.matmul %33, %34, %cst_28 {dimension_numbers = #tpu.dot_dimension_numbers<[1], [0], [0], [1], [0, 0, 1, 1], [], []>} : vector<2x512xbf16>, vector<512x256xbf16>, vector<2x256xf32> -> vector<2x256xf32>
    %c0_29 = arith.constant 0 : index
    %c0_30 = arith.constant 0 : index
    %36 = vector.load %arg9[%c0_29, %c0_30] : memref<1x256xf32, #tpu.memory_space<vmem>>, vector<1x256xf32>
    %37 = vector.broadcast %36 : vector<1x256xf32> to vector<2x256xf32>
    %38 = arith.addf %35, %37 : vector<2x256xf32>
    %39 = arith.truncf %38 : vector<2x256xf32> to vector<2x256xbf16>
    %c0_31 = arith.constant 0 : index
    %c0_32 = arith.constant 0 : index
    %40 = vector.load %arg10[%c0_31, %c0_32] : memref<256x9xbf16, #tpu.memory_space<vmem>>, vector<256x9xbf16>
    %cst_33 = arith.constant dense<0.000000e+00> : vector<2x9xf32>
    %41 = tpu.matmul %39, %40, %cst_33 {dimension_numbers = #tpu.dot_dimension_numbers<[1], [0], [0], [1], [0, 0, 1, 1], [], []>} : vector<2x256xbf16>, vector<256x9xbf16>, vector<2x9xf32> -> vector<2x9xf32>
    %c0_34 = arith.constant 0 : index
    %c0_35 = arith.constant 0 : index
    %42 = vector.load %arg11[%c0_34, %c0_35] : memref<1x9xf32, #tpu.memory_space<vmem>>, vector<1x9xf32>
    %43 = vector.broadcast %42 : vector<1x9xf32> to vector<2x9xf32>
    %44 = arith.addf %41, %43 : vector<2x9xf32>
    %c0_36 = arith.constant 0 : index
    %c0_37 = arith.constant 0 : index
    %45 = vector.load %arg12[%c0_36, %c0_37] : memref<2x9xf32, #tpu.memory_space<vmem>>, vector<2x9xf32>
    tpu.vector_store %arg12[%c0_36, %c0_37], %44 {strides = array<i32>} : memref<2x9xf32, #tpu.memory_space<vmem>>, vector<2x9xf32>,
    return
  }
  func.func @transform_0(%arg0: i32) -> (i32, i32, i32) {
    %c0_i32 = arith.constant 0 : i32
    %c0_i32_0 = arith.constant 0 : i32
    %c0_i32_1 = arith.constant 0 : i32
    %c0_i32_2 = arith.constant 0 : i32
    return %c0_i32, %c0_i32_0, %c0_i32_1 : i32, i32, i32
  }
  func.func @transform_1(%arg0: i32) -> (i32, i32) {
    %c0_i32 = arith.constant 0 : i32
    %c0_i32_0 = arith.constant 0 : i32
    %c0_i32_1 = arith.constant 0 : i32
    return %c0_i32, %c0_i32_0 : i32, i32
  }
  func.func @transform_2(%arg0: i32) -> (i32, i32) {
    %c0_i32 = arith.constant 0 : i32
    %c0_i32_0 = arith.constant 0 : i32
    %c0_i32_1 = arith.constant 0 : i32
    return %c0_i32, %c0_i32_0 : i32, i32
  }
  func.func @transform_3(%arg0: i32) -> (i32, i32) {
    %c0_i32 = arith.constant 0 : i32
    %c0_i32_0 = arith.constant 0 : i32
    %c0_i32_1 = arith.constant 0 : i32
    return %c0_i32, %c0_i32_0 : i32, i32
  }
  func.func @transform_4(%arg0: i32) -> (i32, i32) {
    %c0_i32 = arith.constant 0 : i32
    %c0_i32_0 = arith.constant 0 : i32
    %c0_i32_1 = arith.constant 0 : i32
    return %c0_i32, %c0_i32_0 : i32, i32
  }
  func.func @transform_5(%arg0: i32) -> (i32, i32) {
    %c0_i32 = arith.constant 0 : i32
    %c0_i32_0 = arith.constant 0 : i32
    %c0_i32_1 = arith.constant 0 : i32
    return %c0_i32, %c0_i32_0 : i32, i32
  }
  func.func @transform_6(%arg0: i32) -> (i32, i32) {
    %c0_i32 = arith.constant 0 : i32
    %c0_i32_0 = arith.constant 0 : i32
    %c0_i32_1 = arith.constant 0 : i32
    return %c0_i32, %c0_i32_0 : i32, i32
  }
  func.func @transform_7(%arg0: i32) -> (i32, i32) {
    %c0_i32 = arith.constant 0 : i32
    %c0_i32_0 = arith.constant 0 : i32
    %c0_i32_1 = arith.constant 0 : i32
    return %c0_i32, %c0_i32_0 : i32, i32
  }
  func.func @transform_8(%arg0: i32) -> (i32, i32) {
    %c0_i32 = arith.constant 0 : i32
    %c0_i32_0 = arith.constant 0 : i32
    %c0_i32_1 = arith.constant 0 : i32
    return %c0_i32, %c0_i32_0 : i32, i32
  }
  func.func @transform_9(%arg0: i32) -> (i32, i32) {
    %c0_i32 = arith.constant 0 : i32
    %c0_i32_0 = arith.constant 0 : i32
    %c0_i32_1 = arith.constant 0 : i32
    return %c0_i32, %c0_i32_0 : i32, i32
  }
  func.func @transform_10(%arg0: i32) -> (i32, i32) {
    %c0_i32 = arith.constant 0 : i32
    %c0_i32_0 = arith.constant 0 : i32
    %c0_i32_1 = arith.constant 0 : i32
    return %c0_i32, %c0_i32_0 : i32, i32
  }
  func.func @transform_11(%arg0: i32) -> (i32, i32) {
    %c0_i32 = arith.constant 0 : i32
    %c0_i32_0 = arith.constant 0 : i32
    %c0_i32_1 = arith.constant 0 : i32
    return %c0_i32, %c0_i32_0 : i32, i32
  }
}

</mosaic_0001>

<llo_original>
// kernel: net_forward.3
$region0: #{net_forward.3}
  #allocation0 [shape = 'u32[]', space=smem, size = 0x4, offset = 0x4, fixed_abs, tag = 'smem constant byte address 0x4 - core index']
  #allocation1 [shape = 'u32[72,128]{1,0:T(1,128)}', space=vmem, size = 0x9000, scoped, tag = 'internal scratch']
  %s0 = inlined_call_operand.vmem [shape: bf16[4,1088,25], index: 0, kind: input, shape index: {}]
  %s1 = inlined_call_operand.vmem [shape: bf16[25,16], index: 1, kind: input, shape index: {}]
  %s2 = inlined_call_operand.vmem [shape: f32[1,16], index: 2, kind: input, shape index: {}]
  %s3 = inlined_call_operand.vmem [shape: bf16[1088,16], index: 3, kind: output, shape index: {}]
  %s4 = sld [smem:[#allocation0]]
  $region86: #{net_forward.3} parent=0
    _
  %s6 = ssub.s32 1, %s4
  %s7 = scalar_select 0, %s6, %s4
  $region1: #{net_forward.3} parent=0
    #allocation2 [shape = 'u8[557056]{0}', space=vmem, size = 0x88000, scoped, tag = 'input window, operand 0']
    loop: start=0, step=1, limit=6
    $region2: #{net_forward.3} parent=1 // loop_pre_header
      _
    $region3: #{net_forward.3} parent=1 // loop_header
      %s9 = sphi 0, %s13
      %p10 = scmp.ge.s32.totalorder %s9, 6
      %s19 = sphi 0, %s21
      %s22 = sphi 0, %s19
      %s23 = sphi 0, %s22
      %s39 = sphi 0, %s23
      %s43 = sphi 0, %s43
      %s45 = sphi 0, %s43
      %s46 = sphi 0, %s45
      %s60 = sphi 0, %s46
      %s64 = sphi 0, %s64
      %s66 = sphi 0, %s64
      %s67 = sphi 0, %s66
      %s81 = sphi 0, %s67
      %s87 = sphi 0, %s89
      %s90 = sphi 0, %s87
      %s91 = sphi 0, %s90
      %s107 = sphi 0, %s91
    $region4: #{net_forward.3} parent=1 // loop_header_branch
      %12 = sbr.rel (%p10) target = $region8
    $region5: #{net_forward.3} parent=1 // loop_body
      %s14 = ssub.s32 %s9, 1
      %s15 = ssub.s32 %s9, 2
      %s16 = sadd.s32 %s9, 1
      %s17 = ssub.s32 %s9, %s16
      %p18 = scmp.eq.s32.totalorder %s17, 0
      %s20 = sadd.s32 %s19, 1
      %s21 = scalar_select %p18, %s19, %s20
      %p24 = pneg %p18
      %p25 = scmp.eq.s32.totalorder %s9, 3
      %p26 = por %p24, %p25
      %p27 = scmp.ne.s32.totalorder %s19, %s22
      %p28 = scmp.eq.s32.totalorder %s9, 0
      %p29 = por %p27, %p28
      %p30 = scmp.ne.s32.totalorder %s19, %s22
      %p31 = scmp.eq.s32.totalorder %s14, 3
      %p32 = por %p30, %p31
      %p33 = scmp.ne.s32.totalorder %s22, %s23
      %p34 = scmp.eq.s32.totalorder %s14, 0
      %p35 = por %p33, %p34
      %p36 = scmp.ne.s32.totalorder %s22, %s23
      %p37 = scmp.eq.s32.totalorder %s15, 3
      %p38 = por %p36, %p37
      %p40 = scmp.ne.s32.totalorder %s23, %s39
      %p41 = scmp.eq.s32.totalorder %s15, 0
      %p42 = por %p40, %p41
      %s44 = sadd.s32 %s43, 1
      %p47 = scmp.eq.s32.totalorder %s9, 3
      %p48 = scmp.ne.s32.totalorder %s43, %s45
      %p49 = scmp.eq.s32.totalorder %s9, 0
      %p50 = por %p48, %p49
      %p51 = scmp.ne.s32.totalorder %s43, %s45
      %p52 = scmp.eq.s32.totalorder %s14, 3
      %p53 = por %p51, %p52
      %p54 = scmp.ne.s32.totalorder %s45, %s46
      %p55 = scmp.eq.s32.totalorder %s14, 0
      %p56 = por %p54, %p55
      %p57 = scmp.ne.s32.totalorder %s45, %s46
      %p58 = scmp.eq.s32.totalorder %s15, 3
      %p59 = por %p57, %p58
      %p61 = scmp.ne.s32.totalorder %s46, %s60
      %p62 = scmp.eq.s32.totalorder %s15, 0
      %p63 = por %p61, %p62
      %s65 = sadd.s32 %s64, 1
      %p68 = scmp.eq.s32.totalorder %s9, 3
      %p69 = scmp.ne.s32.totalorder %s64, %s66
      %p70 = scmp.eq.s32.totalorder %s9, 0
      %p71 = por %p69, %p70
      %p72 = scmp.ne.s32.totalorder %s64, %s66
      %p73 = scmp.eq.s32.totalorder %s14, 3
      %p74 = por %p72, %p73
      %p75 = scmp.ne.s32.totalorder %s66, %s67
      %p76 = scmp.eq.s32.totalorder %s14, 0
      %p77 = por %p75, %p76
      %p78 = scmp.ne.s32.totalorder %s66, %s67
      %p79 = scmp.eq.s32.totalorder %s15, 3
      %p80 = por %p78, %p79
      %p82 = scmp.ne.s32.totalorder %s67, %s81
      %p83 = scmp.eq.s32.totalorder %s15, 0
      %p84 = por %p82, %p83
      %s85 = ssub.s32 %s9, %s16
      %p86 = scmp.eq.s32.totalorder %s85, 0
      %s88 = sadd.s32 %s87, 1
      %s89 = scalar_select %p86, %s87, %s88
      %p92 = pneg %p86
      %p93 = scmp.eq.s32.totalorder %s9, 3
      %p94 = por %p92, %p93
      %p95 = scmp.ne.s32.totalorder %s87, %s90
      %p96 = scmp.eq.s32.totalorder %s9, 0
      %p97 = por %p95, %p96
      %p98 = scmp.ne.s32.totalorder %s87, %s90
      %p99 = scmp.eq.s32.totalorder %s14, 3
      %p100 = por %p98, %p99
      %p101 = scmp.ne.s32.totalorder %s90, %s91
      %p102 = scmp.eq.s32.totalorder %s14, 0
      %p103 = por %p101, %p102
      %p104 = scmp.ne.s32.totalorder %s90, %s91
      %p105 = scmp.eq.s32.totalorder %s15, 3
      %p106 = por %p104, %p105
      %p108 = scmp.ne.s32.totalorder %s91, %s107
      %p109 = scmp.eq.s32.totalorder %s15, 0
      %p110 = por %p108, %p109
      %p111 = scmp.le.s32.totalorder 1, %s9
      %p112 = scmp.lt.s32.totalorder %s9, 5
      %p113 = pnand %p111, %p112
      %p114 = pneg %p113
      // Predicated region
      $region9: #{net_forward.3} parent=5 // pred_check
        _
      $region10: #{net_forward.3} parent=5 // pred_check_branch
        %116 = sbr.rel (%p113) target = $region12
      $region11: #{net_forward.3} parent=5 // pred_region
        %s117 = ssub.s32 %s9, 1
        // Predicated region
        $region13: #{net_forward.3} parent=11 // pred_check
          %p118 = pneg %p56
        $region14: #{net_forward.3} parent=11 // pred_check_branch
          %120 = sbr.rel (%p118) target = $region16
        $region15: #{net_forward.3} parent=11 // pred_region
          _
        $region16: #{net_forward.3} parent=11 // pred_fallthru
          _
        // Predicated region
        $region17: #{net_forward.3} parent=11 // pred_check
          %p121 = pneg %p77
        $region18: #{net_forward.3} parent=11 // pred_check_branch
          %123 = sbr.rel (%p121) target = $region20
        $region19: #{net_forward.3} parent=11 // pred_region
          _
        $region20: #{net_forward.3} parent=11 // pred_fallthru
          _
      $region12: #{net_forward.3} parent=5 // pred_fallthru
        _
      %p124 = scmp.lt.s32.totalorder %s9, 4
      // Predicated region
      $region21: #{net_forward.3} parent=5 // pred_check
        %p125 = pneg %p124
      $region22: #{net_forward.3} parent=5 // pred_check_branch
        %127 = sbr.rel (%p125) target = $region24
      $region23: #{net_forward.3} parent=5 // pred_region
        // Predicated region
        $region25: #{net_forward.3} parent=23 // pred_check
          %p128 = pneg %p29
        $region26: #{net_forward.3} parent=23 // pred_check_branch
          %130 = sbr.rel (%p128) target = $region28
        $region27: #{net_forward.3} parent=23 // pred_region
          %s131 = sand.u32 %s19, 1
          %s132 = sand.u32 %s19, 1
          %s133 = smul.addr %s132, 544
          %s134 = scalar_lea.vmem [#allocation2], %s133
          %s135 = smul.u32 34, %s9
          %s136 = smul.addr %s135, 4
          %s137 = scalar_lea.vmem %s0, %s136
          // Predicated region
          $region29: #{net_forward.3} parent=27 // pred_check
            _
          $region30: #{net_forward.3} parent=27 // pred_check_branch
            %139 = sbr.rel (0) target = $region32
          $region31: #{net_forward.3} parent=27 // pred_region
            // Predicated region
            $region33: #{net_forward.3} parent=31 // pred_check
              _
            $region34: #{net_forward.3} parent=31 // pred_check_branch
              %141 = sbr.rel target = $region36
            $region35: #{net_forward.3} parent=31 // pred_region
              // Predicated region
              $region48: #{net_forward.3} parent=35 // pred_check
                _
              $region49: #{net_forward.3} parent=35 // pred_check_branch
                %427 = sbr.rel (0) target = $region51
              $region50: #{net_forward.3} parent=35 // pred_region
                loop: start=0, step=1, limit=1
                $region52: #{net_forward.3} parent=50 // loop_pre_header
                  _
                $region53: #{net_forward.3} parent=50 // loop_header
                  %s429 = sphi 0, %s433
                  %p430 = scmp.ge.s32.totalorder %s429, 1
                  %s434 = sphi %s137, %s137
                  %s435 = sphi %s134, %s134
                $region54: #{net_forward.3} parent=50 // loop_header_branch
                  %432 = sbr.rel (%p430) target = $region58
                $region55: #{net_forward.3} parent=50 // loop_body
                  _
                $region56: #{net_forward.3} parent=50 // loop_footer
                  %s433 = sadd.s32 1, %s429
                $region57: #{net_forward.3} parent=50 // loop_footer_branch
                  %428 = sbr.rel target = $region53
                $region58: #{net_forward.3} parent=50 // loop_exit
                  _
                %s437 = ssub.s32 16, 1
                loop: start=0, step=1, limit=1
                $region59: #{net_forward.3} parent=50 // loop_pre_header
                  _
                $region60: #{net_forward.3} parent=50 // loop_header
                  %s439 = sphi 0, %s443
                  %p440 = scmp.ge.s32.totalorder %s439, 1
                  %s444 = sphi %s137, %s137
                  %s445 = sphi %s134, %s134
                $region61: #{net_forward.3} parent=50 // loop_header_branch
                  %442 = sbr.rel (%p440) target = $region65
                $region62: #{net_forward.3} parent=50 // loop_body
                  %v446 = vld [vmem:[%s444] sm:%s437]
                  %447 = vst [vmem:[%s445] sm:%s437] %v446
                  %v448 = vld [vmem:[%s444 + $0x4] sm:%s437]
                  %449 = vst [vmem:[%s445 + $0x4] sm:%s437] %v448
                  %v450 = vld [vmem:[%s444 + $0x8] sm:%s437]
                  %451 = vst [vmem:[%s445 + $0x8] sm:%s437] %v450
                  %v452 = vld [vmem:[%s444 + $0xc] sm:%s437]
                  %453 = vst [vmem:[%s445 + $0xc] sm:%s437] %v452
                  %v454 = vld [vmem:[%s444 + $0x10] sm:%s437]
                  %455 = vst [vmem:[%s445 + $0x10] sm:%s437] %v454
                  %v456 = vld [vmem:[%s444 + $0x14] sm:%s437]
                  %457 = vst [vmem:[%s445 + $0x14] sm:%s437] %v456
                  %v458 = vld [vmem:[%s444 + $0x18] sm:%s437]
                  %459 = vst [vmem:[%s445 + $0x18] sm:%s437] %v458
                  %v460 = vld [vmem:[%s444 + $0x1c] sm:%s437]
                  %461 = vst [vmem:[%s445 + $0x1c] sm:%s437] %v460
                  %v462 = vld [vmem:[%s444 + $0x20] sm:%s437]
                  %463 = vst [vmem:[%s445 + $0x20] sm:%s437] %v462
                  %v464 = vld [vmem:[%s444 + $0x24] sm:%s437]
                  %465 = vst [vmem:[%s445 + $0x24] sm:%s437] %v464
                  %v466 = vld [vmem:[%s444 + $0x28] sm:%s437]
                  %467 = vst [vmem:[%s445 + $0x28] sm:%s437] %v466
                  %v468 = vld [vmem:[%s444 + $0x2c] sm:%s437]
                  %469 = vst [vmem:[%s445 + $0x2c] sm:%s437] %v468
                  %v470 = vld [vmem:[%s444 + $0x30] sm:%s437]
                  %471 = vst [vmem:[%s445 + $0x30] sm:%s437] %v470
                  %v472 = vld [vmem:[%s444 + $0x34] sm:%s437]
                  %473 = vst [vmem:[%s445 + $0x34] sm:%s437] %v472
                  %v474 = vld [vmem:[%s444 + $0x38] sm:%s437]
                  %475 = vst [vmem:[%s445 + $0x38] sm:%s437] %v474
                  %v476 = vld [vmem:[%s444 + $0x3c] sm:%s437]
                  %477 = vst [vmem:[%s445 + $0x3c] sm:%s437] %v476
                  %v478 = vld [vmem:[%s444 + $0x40] sm:%s437]
                  %479 = vst [vmem:[%s445 + $0x40] sm:%s437] %v478
                  %v480 = vld [vmem:[%s444 + $0x44] sm:%s437]
                  %481 = vst [vmem:[%s445 + $0x44] sm:%s437] %v480
                  %v482 = vld [vmem:[%s444 + $0x48] sm:%s437]
                  %483 = vst [vmem:[%s445 + $0x48] sm:%s437] %v482
                  %v484 = vld [vmem:[%s444 + $0x4c] sm:%s437]
                  %485 = vst [vmem:[%s445 + $0x4c] sm:%s437] %v484
                  %v486 = vld [vmem:[%s444 + $0x50] sm:%s437]
                  %487 = vst [vmem:[%s445 + $0x50] sm:%s437] %v486
                  %v488 = vld [vmem:[%s444 + $0x54] sm:%s437]
                  %489 = vst [vmem:[%s445 + $0x54] sm:%s437] %v488
                  %v490 = vld [vmem:[%s444 + $0x58] sm:%s437]
                  %491 = vst [vmem:[%s445 + $0x58] sm:%s437] %v490
                  %v492 = vld [vmem:[%s444 + $0x5c] sm:%s437]
                  %493 = vst [vmem:[%s445 + $0x5c] sm:%s437] %v492
                  %v494 = vld [vmem:[%s444 + $0x60] sm:%s437]
                  %495 = vst [vmem:[%s445 + $0x60] sm:%s437] %v494
                  %v496 = vld [vmem:[%s444 + $0x64] sm:%s437]
                  %497 = vst [vmem:[%s445 + $0x64] sm:%s437] %v496
                  %v498 = vld [vmem:[%s444 + $0x68] sm:%s437]
                  %499 = vst [vmem:[%s445 + $0x68] sm:%s437] %v498
                  %v500 = vld [vmem:[%s444 + $0x6c] sm:%s437]
                  %501 = vst [vmem:[%s445 + $0x6c] sm:%s437] %v500
                  %v502 = vld [vmem:[%s444 + $0x70] sm:%s437]
                  %503 = vst [vmem:[%s445 + $0x70] sm:%s437] %v502
                  %v504 = vld [vmem:[%s444 + $0x74] sm:%s437]
                  %505 = vst [vmem:[%s445 + $0x74] sm:%s437] %v504
                  %v506 = vld [vmem:[%s444 + $0x78] sm:%s437]
                  %507 = vst [vmem:[%s445 + $0x78] sm:%s437] %v506
                  %v508 = vld [vmem:[%s444 + $0x7c] sm:%s437]
                  %509 = vst [vmem:[%s445 + $0x7c] sm:%s437] %v508
                  %v510 = vld [vmem:[%s444 + $0x80] sm:%s437]
                  %511 = vst [vmem:[%s445 + $0x80] sm:%s437] %v510
                  %v512 = vld [vmem:[%s444 + $0x84] sm:%s437]
                  %513 = vst [vmem:[%s445 + $0x84] sm:%s437] %v512
                  %v514 = vld [vmem:[%s444 + $0x220] sm:%s437]
                  %515 = vst [vmem:[%s445 + $0x88] sm:%s437] %v514
                  %v516 = vld [vmem:[%s444 + $0x224] sm:%s437]
                  %517 = vst [vmem:[%s445 + $0x8c] sm:%s437] %v516
                  %v518 = vld [vmem:[%s444 + $0x228] sm:%s437]
                  %519 = vst [vmem:[%s445 + $0x90] sm:%s437] %v518
                  %v520 = vld [vmem:[%s444 + $0x22c] sm:%s437]
                  %521 = vst [vmem:[%s445 + $0x94] sm:%s437] %v520
                  %v522 = vld [vmem:[%s444 + $0x230] sm:%s437]
                  %523 = vst [vmem:[%s445 + $0x98] sm:%s437] %v522
                  %v524 = vld [vmem:[%s444 + $0x234] sm:%s437]
                  %525 = vst [vmem:[%s445 + $0x9c] sm:%s437] %v524
                  %v526 = vld [vmem:[%s444 + $0x238] sm:%s437]
                  %527 = vst [vmem:[%s445 + $0xa0] sm:%s437] %v526
                  %v528 = vld [vmem:[%s444 + $0x23c] sm:%s437]
                  %529 = vst [vmem:[%s445 + $0xa4] sm:%s437] %v528
                  %v530 = vld [vmem:[%s444 + $0x240] sm:%s437]
                  %531 = vst [vmem:[%s445 + $0xa8] sm:%s437] %v530
                  %v532 = vld [vmem:[%s444 + $0x244] sm:%s437]
                  %533 = vst [vmem:[%s445 + $0xac] sm:%s437] %v532
                  %v534 = vld [vmem:[%s444 + $0x248] sm:%s437]
                  %535 = vst [vmem:[%s445 + $0xb0] sm:%s437] %v534
                  %v536 = vld [vmem:[%s444 + $0x24c] sm:%s437]
                  %537 = vst [vmem:[%s445 + $0xb4] sm:%s437] %v536
                  %v538 = vld [vmem:[%s444 + $0x250] sm:%s437]
                  %539 = vst [vmem:[%s445 + $0xb8] sm:%s437] %v538
                  %v540 = vld [vmem:[%s444 + $0x254] sm:%s437]
                  %541 = vst [vmem:[%s445 + $0xbc] sm:%s437] %v540
                  %v542 = vld [vmem:[%s444 + $0x258] sm:%s437]
                  %543 = vst [vmem:[%s445 + $0xc0] sm:%s437] %v542
                  %v544 = vld [vmem:[%s444 + $0x25c] sm:%s437]
                  %545 = vst [vmem:[%s445 + $0xc4] sm:%s437] %v544
                  %v546 = vld [vmem:[%s444 + $0x260] sm:%s437]
                  %547 = vst [vmem:[%s445 + $0xc8] sm:%s437] %v546
                  %v548 = vld [vmem:[%s444 + $0x264] sm:%s437]
                  %549 = vst [vmem:[%s445 + $0xcc] sm:%s437] %v548
                  %v550 = vld [vmem:[%s444 + $0x268] sm:%s437]
                  %551 = vst [vmem:[%s445 + $0xd0] sm:%s437] %v550
                  %v552 = vld [vmem:[%s444 + $0x26c] sm:%s437]
                  %553 = vst [vmem:[%s445 + $0xd4] sm:%s437] %v552
                  %v554 = vld [vmem:[%s444 + $0x270] sm:%s437]
                  %555 = vst [vmem:[%s445 + $0xd8] sm:%s437] %v554
                  %v556 = vld [vmem:[%s444 + $0x274] sm:%s437]
                  %557 = vst [vmem:[%s445 + $0xdc] sm:%s437] %v556
                  %v558 = vld [vmem:[%s444 + $0x278] sm:%s437]
                  %559 = vst [vmem:[%s445 + $0xe0] sm:%s437] %v558
                  %v560 = vld [vmem:[%s444 + $0x27c] sm:%s437]
                  %561 = vst [vmem:[%s445 + $0xe4] sm:%s437] %v560
                  %v562 = vld [vmem:[%s444 + $0x280] sm:%s437]
                  %563 = vst [vmem:[%s445 + $0xe8] sm:%s437] %v562
                  %v564 = vld [vmem:[%s444 + $0x284] sm:%s437]
                  %565 = vst [vmem:[%s445 + $0xec] sm:%s437] %v564
                  %v566 = vld [vmem:[%s444 + $0x288] sm:%s437]
                  %567 = vst [vmem:[%s445 + $0xf0] sm:%s437] %v566
                  %v568 = vld [vmem:[%s444 + $0x28c] sm:%s437]
                  %569 = vst [vmem:[%s445 + $0xf4] sm:%s437] %v568
                  %v570 = vld [vmem:[%s444 + $0x290] sm:%s437]
                  %571 = vst [vmem:[%s445 + $0xf8] sm:%s437] %v570
                  %v572 = vld [vmem:[%s444 + $0x294] sm:%s437]
                  %573 = vst [vmem:[%s445 + $0xfc] sm:%s437] %v572
                  %v574 = vld [vmem:[%s444 + $0x298] sm:%s437]
                  %575 = vst [vmem:[%s445 + $0x100] sm:%s437] %v574
                  %v576 = vld [vmem:[%s444 + $0x29c] sm:%s437]
                  %577 = vst [vmem:[%s445 + $0x104] sm:%s437] %v576
                  %v578 = vld [vmem:[%s444 + $0x2a0] sm:%s437]
                  %579 = vst [vmem:[%s445 + $0x108] sm:%s437] %v578
                  %v580 = vld [vmem:[%s444 + $0x2a4] sm:%s437]
                  %581 = vst [vmem:[%s445 + $0x10c] sm:%s437] %v580
                  %v582 = vld [vmem:[%s444 + $0x440] sm:%s437]
                  %583 = vst [vmem:[%s445 + $0x110] sm:%s437] %v582
                  %v584 = vld [vmem:[%s444 + $0x444] sm:%s437]
                  %585 = vst [vmem:[%s445 + $0x114] sm:%s437] %v584
                  %v586 = vld [vmem:[%s444 + $0x448] sm:%s437]
                  %587 = vst [vmem:[%s445 + $0x118] sm:%s437] %v586
                  %v588 = vld [vmem:[%s444 + $0x44c] sm:%s437]
                  %589 = vst [vmem:[%s445 + $0x11c] sm:%s437] %v588
                  %v590 = vld [vmem:[%s444 + $0x450] sm:%s437]
                  %591 = vst [vmem:[%s445 + $0x120] sm:%s437] %v590
                  %v592 = vld [vmem:[%s444 + $0x454] sm:%s437]
                  %593 = vst [vmem:[%s445 + $0x124] sm:%s437] %v592
                  %v594 = vld [vmem:[%s444 + $0x458] sm:%s437]
                  %595 = vst [vmem:[%s445 + $0x128] sm:%s437] %v594
                  %v596 = vld [vmem:[%s444 + $0x45c] sm:%s437]
                  %597 = vst [vmem:[%s445 + $0x12c] sm:%s437] %v596
                  %v598 = vld [vmem:[%s444 + $0x460] sm:%s437]
                  %599 = vst [vmem:[%s445 + $0x130] sm:%s437] %v598
                  %v600 = vld [vmem:[%s444 + $0x464] sm:%s437]
                  %601 = vst [vmem:[%s445 + $0x134] sm:%s437] %v600
                  %v602 = vld [vmem:[%s444 + $0x468] sm:%s437]
                  %603 = vst [vmem:[%s445 + $0x138] sm:%s437] %v602
                  %v604 = vld [vmem:[%s444 + $0x46c] sm:%s437]
                  %605 = vst [vmem:[%s445 + $0x13c] sm:%s437] %v604
                  %v606 = vld [vmem:[%s444 + $0x470] sm:%s437]
                  %607 = vst [vmem:[%s445 + $0x140] sm:%s437] %v606
                  %v608 = vld [vmem:[%s444 + $0x474] sm:%s437]
                  %609 = vst [vmem:[%s445 + $0x144] sm:%s437] %v608
                  %v610 = vld [vmem:[%s444 + $0x478] sm:%s437]
                  %611 = vst [vmem:[%s445 + $0x148] sm:%s437] %v610
                  %v612 = vld [vmem:[%s444 + $0x47c] sm:%s437]
                  %613 = vst [vmem:[%s445 + $0x14c] sm:%s437] %v612
                  %v614 = vld [vmem:[%s444 + $0x480] sm:%s437]
                  %615 = vst [vmem:[%s445 + $0x150] sm:%s437] %v614
                  %v616 = vld [vmem:[%s444 + $0x484] sm:%s437]
                  %617 = vst [vmem:[%s445 + $0x154] sm:%s437] %v616
                  %v618 = vld [vmem:[%s444 + $0x488] sm:%s437]
                  %619 = vst [vmem:[%s445 + $0x158] sm:%s437] %v618
                  %v620 = vld [vmem:[%s444 + $0x48c] sm:%s437]
                  %621 = vst [vmem:[%s445 + $0x15c] sm:%s437] %v620
                  %v622 = vld [vmem:[%s444 + $0x490] sm:%s437]
                  %623 = vst [vmem:[%s445 + $0x160] sm:%s437] %v622
                  %v624 = vld [vmem:[%s444 + $0x494] sm:%s437]
                  %625 = vst [vmem:[%s445 + $0x164] sm:%s437] %v624
                  %v626 = vld [vmem:[%s444 + $0x498] sm:%s437]
                  %627 = vst [vmem:[%s445 + $0x168] sm:%s437] %v626
                  %v628 = vld [vmem:[%s444 + $0x49c] sm:%s437]
                  %629 = vst [vmem:[%s445 + $0x16c] sm:%s437] %v628
                  %v630 = vld [vmem:[%s444 + $0x4a0] sm:%s437]
                  %631 = vst [vmem:[%s445 + $0x170] sm:%s437] %v630
                  %v632 = vld [vmem:[%s444 + $0x4a4] sm:%s437]
                  %633 = vst [vmem:[%s445 + $0x174] sm:%s437] %v632
                  %v634 = vld [vmem:[%s444 + $0x4a8] sm:%s437]
                  %635 = vst [vmem:[%s445 + $0x178] sm:%s437] %v634
                  %v636 = vld [vmem:[%s444 + $0x4ac] sm:%s437]
                  %637 = vst [vmem:[%s445 + $0x17c] sm:%s437] %v636
                  %v638 = vld [vmem:[%s444 + $0x4b0] sm:%s437]
                  %639 = vst [vmem:[%s445 + $0x180] sm:%s437] %v638
                  %v640 = vld [vmem:[%s444 + $0x4b4] sm:%s437]
                  %641 = vst [vmem:[%s445 + $0x184] sm:%s437] %v640
                  %v642 = vld [vmem:[%s444 + $0x4b8] sm:%s437]
                  %643 = vst [vmem:[%s445 + $0x188] sm:%s437] %v642
                  %v644 = vld [vmem:[%s444 + $0x4bc] sm:%s437]
                  %645 = vst [vmem:[%s445 + $0x18c] sm:%s437] %v644
                  %v646 = vld [vmem:[%s444 + $0x4c0] sm:%s437]
                  %647 = vst [vmem:[%s445 + $0x190] sm:%s437] %v646
                  %v648 = vld [vmem:[%s444 + $0x4c4] sm:%s437]
                  %649 = vst [vmem:[%s445 + $0x194] sm:%s437] %v648
                  %v650 = vld [vmem:[%s444 + $0x660] sm:%s437]
                  %651 = vst [vmem:[%s445 + $0x198] sm:%s437] %v650
                  %v652 = vld [vmem:[%s444 + $0x664] sm:%s437]
                  %653 = vst [vmem:[%s445 + $0x19c] sm:%s437] %v652
                  %v654 = vld [vmem:[%s444 + $0x668] sm:%s437]
                  %655 = vst [vmem:[%s445 + $0x1a0] sm:%s437] %v654
                  %v656 = vld [vmem:[%s444 + $0x66c] sm:%s437]
                  %657 = vst [vmem:[%s445 + $0x1a4] sm:%s437] %v656
                  %v658 = vld [vmem:[%s444 + $0x670] sm:%s437]
                  %659 = vst [vmem:[%s445 + $0x1a8] sm:%s437] %v658
                  %v660 = vld [vmem:[%s444 + $0x674] sm:%s437]
                  %661 = vst [vmem:[%s445 + $0x1ac] sm:%s437] %v660
                  %v662 = vld [vmem:[%s444 + $0x678] sm:%s437]
                  %663 = vst [vmem:[%s445 + $0x1b0] sm:%s437] %v662
                  %v664 = vld [vmem:[%s444 + $0x67c] sm:%s437]
                  %665 = vst [vmem:[%s445 + $0x1b4] sm:%s437] %v664
                  %v666 = vld [vmem:[%s444 + $0x680] sm:%s437]
                  %667 = vst [vmem:[%s445 + $0x1b8] sm:%s437] %v666
                  %v668 = vld [vmem:[%s444 + $0x684] sm:%s437]
                  %669 = vst [vmem:[%s445 + $0x1bc] sm:%s437] %v668
                  %v670 = vld [vmem:[%s444 + $0x688] sm:%s437]
                  %671 = vst [vmem:[%s445 + $0x1c0] sm:%s437] %v670
                  %v672 = vld [vmem:[%s444 + $0x68c] sm:%s437]
                  %673 = vst [vmem:[%s445 + $0x1c4] sm:%s437] %v672
                  %v674 = vld [vmem:[%s444 + $0x690] sm:%s437]
                  %675 = vst [vmem:[%s445 + $0x1c8] sm:%s437] %v674
                  %v676 = vld [vmem:[%s444 + $0x694] sm:%s437]
                  %677 = vst [vmem:[%s445 + $0x1cc] sm:%s437] %v676
                  %v678 = vld [vmem:[%s444 + $0x698] sm:%s437]
                  %679 = vst [vmem:[%s445 + $0x1d0] sm:%s437] %v678
                  %v680 = vld [vmem:[%s444 + $0x69c] sm:%s437]
                  %681 = vst [vmem:[%s445 + $0x1d4] sm:%s437] %v680
                  %v682 = vld [vmem:[%s444 + $0x6a0] sm:%s437]
                  %683 = vst [vmem:[%s445 + $0x1d8] sm:%s437] %v682
                  %v684 = vld [vmem:[%s444 + $0x6a4] sm:%s437]
                  %685 = vst [vmem:[%s445 + $0x1dc] sm:%s437] %v684
                  %v686 = vld [vmem:[%s444 + $0x6a8] sm:%s437]
                  %687 = vst [vmem:[%s445 + $0x1e0] sm:%s437] %v686
                  %v688 = vld [vmem:[%s444 + $0x6ac] sm:%s437]
                  %689 = vst [vmem:[%s445 + $0x1e4] sm:%s437] %v688
                  %v690 = vld [vmem:[%s444 + $0x6b0] sm:%s437]
                  %691 = vst [vmem:[%s445 + $0x1e8] sm:%s437] %v690
                  %v692 = vld [vmem:[%s444 + $0x6b4] sm:%s437]
                  %693 = vst [vmem:[%s445 + $0x1ec] sm:%s437] %v692
                  %v694 = vld [vmem:[%s444 + $0x6b8] sm:%s437]
                  %695 = vst [vmem:[%s445 + $0x1f0] sm:%s437] %v694
                  %v696 = vld [vmem:[%s444 + $0x6bc] sm:%s437]
                  %697 = vst [vmem:[%s445 + $0x1f4] sm:%s437] %v696
                  %v698 = vld [vmem:[%s444 + $0x6c0] sm:%s437]
                  %699 = vst [vmem:[%s445 + $0x1f8] sm:%s437] %v698
                  %v700 = vld [vmem:[%s444 + $0x6c4] sm:%s437]
                  %701 = vst [vmem:[%s445 + $0x1fc] sm:%s437] %v700
                  %v702 = vld [vmem:[%s444 + $0x6c8] sm:%s437]
                  %703 = vst [vmem:[%s445 + $0x200] sm:%s437] %v702
                  %v704 = vld [vmem:[%s444 + $0x6cc] sm:%s437]
                  %705 = vst [vmem:[%s445 + $0x204] sm:%s437] %v704
                  %v706 = vld [vmem:[%s444 + $0x6d0] sm:%s437]
                  %707 = vst [vmem:[%s445 + $0x208] sm:%s437] %v706
                  %v708 = vld [vmem:[%s444 + $0x6d4] sm:%s437]
                  %709 = vst [vmem:[%s445 + $0x20c] sm:%s437] %v708
                  %v710 = vld [vmem:[%s444 + $0x6d8] sm:%s437]
                  %711 = vst [vmem:[%s445 + $0x210] sm:%s437] %v710
                  %v712 = vld [vmem:[%s444 + $0x6dc] sm:%s437]
                  %713 = vst [vmem:[%s445 + $0x214] sm:%s437] %v712
                  %v714 = vld [vmem:[%s444 + $0x6e0] sm:%s437]
                  %715 = vst [vmem:[%s445 + $0x218] sm:%s437] %v714
                  %v716 = vld [vmem:[%s444 + $0x6e4] sm:%s437]
                  %717 = vst [vmem:[%s445 + $0x21c] sm:%s437] %v716
                $region63: #{net_forward.3} parent=50 // loop_footer
                  %s443 = sadd.s32 1, %s439
                $region64: #{net_forward.3} parent=50 // loop_footer_branch
                  %438 = sbr.rel target = $region60
                $region65: #{net_forward.3} parent=50 // loop_exit
                  _
              $region51: #{net_forward.3} parent=35 // pred_fallthru
                _
            $region36: #{net_forward.3} parent=31 // pred_fallthru
              _
            // Predicated region
            $region37: #{net_forward.3} parent=31 // pred_check
              _
            $region38: #{net_forward.3} parent=31 // pred_check_branch
              %143 = sbr.rel (0) target = $region40
            $region39: #{net_forward.3} parent=31 // pred_region
              %s145 = ssub.s32 16, 1
              loop: start=0, step=1, limit=1
              $region41: #{net_forward.3} parent=39 // loop_pre_header
                _
              $region42: #{net_forward.3} parent=39 // loop_header
                %s147 = sphi 0, %s151
                %p148 = scmp.ge.s32.totalorder %s147, 1
                %s152 = sphi %s137, %s137
                %s153 = sphi %s134, %s134
              $region43: #{net_forward.3} parent=39 // loop_header_branch
                %150 = sbr.rel (%p148) target = $region47
              $region44: #{net_forward.3} parent=39 // loop_body
                %v154 = vld [vmem:[%s152] sm:%s145]
                %155 = vst [vmem:[%s153] sm:%s145] %v154
                %v156 = vld [vmem:[%s152 + $0x4] sm:%s145]
                %157 = vst [vmem:[%s153 + $0x4] sm:%s145] %v156
                %v158 = vld [vmem:[%s152 + $0x8] sm:%s145]
                %159 = vst [vmem:[%s153 + $0x8] sm:%s145] %v158
                %v160 = vld [vmem:[%s152 + $0xc] sm:%s145]
                %161 = vst [vmem:[%s153 + $0xc] sm:%s145] %v160
                %v162 = vld [vmem:[%s152 + $0x10] sm:%s145]
                %163 = vst [vmem:[%s153 + $0x10] sm:%s145] %v162
                %v164 = vld [vmem:[%s152 + $0x14] sm:%s145]
                %165 = vst [vmem:[%s153 + $0x14] sm:%s145] %v164
                %v166 = vld [vmem:[%s152 + $0x18] sm:%s145]
                %167 = vst [vmem:[%s153 + $0x18] sm:%s145] %v166
                %v168 = vld [vmem:[%s152 + $0x1c] sm:%s145]
                %169 = vst [vmem:[%s153 + $0x1c] sm:%s145] %v168
                %v170 = vld [vmem:[%s152 + $0x20] sm:%s145]
                %171 = vst [vmem:[%s153 + $0x20] sm:%s145] %v170
                %v172 = vld [vmem:[%s152 + $0x24] sm:%s145]
                %173 = vst [vmem:[%s153 + $0x24] sm:%s145] %v172
                %v174 = vld [vmem:[%s152 + $0x28] sm:%s145]
                %175 = vst [vmem:[%s153 + $0x28] sm:%s145] %v174
                %v176 = vld [vmem:[%s152 + $0x2c] sm:%s145]
                %177 = vst [vmem:[%s153 + $0x2c] sm:%s145] %v176
                %v178 = vld [vmem:[%s152 + $0x30] sm:%s145]
                %179 = vst [vmem:[%s153 + $0x30] sm:%s145] %v178
                %v180 = vld [vmem:[%s152 + $0x34] sm:%s145]
                %181 = vst [vmem:[%s153 + $0x34] sm:%s145] %v180
                %v182 = vld [vmem:[%s152 + $0x38] sm:%s145]
                %183 = vst [vmem:[%s153 + $0x38] sm:%s145] %v182
                %v184 = vld [vmem:[%s152 + $0x3c] sm:%s145]
                %185 = vst [vmem:[%s153 + $0x3c] sm:%s145] %v184
                %v186 = vld [vmem:[%s152 + $0x40] sm:%s145]
                %187 = vst [vmem:[%s153 + $0x40] sm:%s145] %v186
                %v188 = vld [vmem:[%s152 + $0x44] sm:%s145]
                %189 = vst [vmem:[%s153 + $0x44] sm:%s145] %v188
                %v190 = vld [vmem:[%s152 + $0x48] sm:%s145]
                %191 = vst [vmem:[%s153 + $0x48] sm:%s145] %v190
                %v192 = vld [vmem:[%s152 + $0x4c] sm:%s145]
                %193 = vst [vmem:[%s153 + $0x4c] sm:%s145] %v192
                %v194 = vld [vmem:[%s152 + $0x50] sm:%s145]
                %195 = vst [vmem:[%s153 + $0x50] sm:%s145] %v194
                %v196 = vld [vmem:[%s152 + $0x54] sm:%s145]
                %197 = vst [vmem:[%s153 + $0x54] sm:%s145] %v196
                %v198 = vld [vmem:[%s152 + $0x58] sm:%s145]
                %199 = vst [vmem:[%s153 + $0x58] sm:%s145] %v198
                %v200 = vld [vmem:[%s152 + $0x5c] sm:%s145]
                %201 = vst [vmem:[%s153 + $0x5c] sm:%s145] %v200
                %v202 = vld [vmem:[%s152 + $0x60] sm:%s145]
                %203 = vst [vmem:[%s153 + $0x60] sm:%s145] %v202
                %v204 = vld [vmem:[%s152 + $0x64] sm:%s145]
                %205 = vst [vmem:[%s153 + $0x64] sm:%s145] %v204
                %v206 = vld [vmem:[%s152 + $0x68] sm:%s145]
                %207 = vst [vmem:[%s153 + $0x68] sm:%s145] %v206
                %v208 = vld [vmem:[%s152 + $0x6c] sm:%s145]
                %209 = vst [vmem:[%s153 + $0x6c] sm:%s145] %v208
                %v210 = vld [vmem:[%s152 + $0x70] sm:%s145]
                %211 = vst [vmem:[%s153 + $0x70] sm:%s145] %v210
                %v212 = vld [vmem:[%s152 + $0x74] sm:%s145]
                %213 = vst [vmem:[%s153 + $0x74] sm:%s145] %v212
                %v214 = vld [vmem:[%s152 + $0x78] sm:%s145]
                %215 = vst [vmem:[%s153 + $0x78] sm:%s145] %v214
                %v216 = vld [vmem:[%s152 + $0x7c] sm:%s145]
                %217 = vst [vmem:[%s153 + $0x7c] sm:%s145] %v216
                %v218 = vld [vmem:[%s152 + $0x80] sm:%s145]
                %219 = vst [vmem:[%s153 + $0x80] sm:%s145] %v218
                %v220 = vld [vmem:[%s152 + $0x84] sm:%s145]
                %221 = vst [vmem:[%s153 + $0x84] sm:%s145] %v220
                %v222 = vld [vmem:[%s152 + $0x220] sm:%s145]
                %223 = vst [vmem:[%s153 + $0x88] sm:%s145] %v222
                %v224 = vld [vmem:[%s152 + $0x224] sm:%s145]
                %225 = vst [vmem:[%s153 + $0x8c] sm:%s145] %v224
                %v226 = vld [vmem:[%s152 + $0x228] sm:%s145]
                %227 = vst [vmem:[%s153 + $0x90] sm:%s145] %v226
                %v228 = vld [vmem:[%s152 + $0x22c] sm:%s145]
                %229 = vst [vmem:[%s153 + $0x94] sm:%s145] %v228
                %v230 = vld [vmem:[%s152 + $0x230] sm:%s145]
                %231 = vst [vmem:[%s153 + $0x98] sm:%s145] %v230
                %v232 = vld [vmem:[%s152 + $0x234] sm:%s145]
                %233 = vst [vmem:[%s153 + $0x9c] sm:%s145] %v232
                %v234 = vld [vmem:[%s152 + $0x238] sm:%s145]
                %235 = vst [vmem:[%s153 + $0xa0] sm:%s145] %v234
                %v236 = vld [vmem:[%s152 + $0x23c] sm:%s145]
                %237 = vst [vmem:[%s153 + $0xa4] sm:%s145] %v236
                %v238 = vld [vmem:[%s152 + $0x240] sm:%s145]
                %239 = vst [vmem:[%s153 + $0xa8] sm:%s145] %v238
                %v240 = vld [vmem:[%s152 + $0x244] sm:%s145]
                %241 = vst [vmem:[%s153 + $0xac] sm:%s145] %v240
                %v242 = vld [vmem:[%s152 + $0x248] sm:%s145]
                %243 = vst [vmem:[%s153 + $0xb0] sm:%s145] %v242
                %v244 = vld [vmem:[%s152 + $0x24c] sm:%s145]
                %245 = vst [vmem:[%s153 + $0xb4] sm:%s145] %v244
                %v246 = vld [vmem:[%s152 + $0x250] sm:%s145]
                %247 = vst [vmem:[%s153 + $0xb8] sm:%s145] %v246
                %v248 = vld [vmem:[%s152 + $0x254] sm:%s145]
                %249 = vst [vmem:[%s153 + $0xbc] sm:%s145] %v248
                %v250 = vld [vmem:[%s152 + $0x258] sm:%s145]
                %251 = vst [vmem:[%s153 + $0xc0] sm:%s145] %v250
                %v252 = vld [vmem:[%s152 + $0x25c] sm:%s145]
                %253 = vst [vmem:[%s153 + $0xc4] sm:%s145] %v252
                %v254 = vld [vmem:[%s152 + $0x260] sm:%s145]
                %255 = vst [vmem:[%s153 + $0xc8] sm:%s145] %v254
                %v256 = vld [vmem:[%s152 + $0x264] sm:%s145]
                %257 = vst [vmem:[%s153 + $0xcc] sm:%s145] %v256
                %v258 = vld [vmem:[%s152 + $0x268] sm:%s145]
                %259 = vst [vmem:[%s153 + $0xd0] sm:%s145] %v258
                %v260 = vld [vmem:[%s152 + $0x26c] sm:%s145]
                %261 = vst [vmem:[%s153 + $0xd4] sm:%s145] %v260
                %v262 = vld [vmem:[%s152 + $0x270] sm:%s145]
                %263 = vst [vmem:[%s153 + $0xd8] sm:%s145] %v262
                %v264 = vld [vmem:[%s152 + $0x274] sm:%s145]
                %265 = vst [vmem:[%s153 + $0xdc] sm:%s145] %v264
                %v266 = vld [vmem:[%s152 + $0x278] sm:%s145]
                %267 = vst [vmem:[%s153 + $0xe0] sm:%s145] %v266
                %v268 = vld [vmem:[%s152 + $0x27c] sm:%s145]
                %269 = vst [vmem:[%s153 + $0xe4] sm:%s145] %v268
                %v270 = vld [vmem:[%s152 + $0x280] sm:%s145]
                %271 = vst [vmem:[%s153 + $0xe8] sm:%s145] %v270
                %v272 = vld [vmem:[%s152 + $0x284] sm:%s145]
                %273 = vst [vmem:[%s153 + $0xec] sm:%s145] %v272
                %v274 = vld [vmem:[%s152 + $0x288] sm:%s145]
                %275 = vst [vmem:[%s153 + $0xf0] sm:%s145] %v274
                %v276 = vld [vmem:[%s152 + $0x28c] sm:%s145]
                %277 = vst [vmem:[%s153 + $0xf4] sm:%s145] %v276
                %v278 = vld [vmem:[%s152 + $0x290] sm:%s145]
                %279 = vst [vmem:[%s153 + $0xf8] sm:%s145] %v278
                %v280 = vld [vmem:[%s152 + $0x294] sm:%s145]
                %281 = vst [vmem:[%s153 + $0xfc] sm:%s145] %v280
                %v282 = vld [vmem:[%s152 + $0x298] sm:%s145]
                %283 = vst [vmem:[%s153 + $0x100] sm:%s145] %v282
                %v284 = vld [vmem:[%s152 + $0x29c] sm:%s145]
                %285 = vst [vmem:[%s153 + $0x104] sm:%s145] %v284
                %v286 = vld [vmem:[%s152 + $0x2a0] sm:%s145]
                %287 = vst [vmem:[%s153 + $0x108] sm:%s145] %v286
                %v288 = vld [vmem:[%s152 + $0x2a4] sm:%s145]
                %289 = vst [vmem:[%s153 + $0x10c] sm:%s145] %v288
                %v290 = vld [vmem:[%s152 + $0x440] sm:%s145]
                %291 = vst [vmem:[%s153 + $0x110] sm:%s145] %v290
                %v292 = vld [vmem:[%s152 + $0x444] sm:%s145]
                %293 = vst [vmem:[%s153 + $0x114] sm:%s145] %v292
                %v294 = vld [vmem:[%s152 + $0x448] sm:%s145]
                %295 = vst [vmem:[%s153 + $0x118] sm:%s145] %v294
                %v296 = vld [vmem:[%s152 + $0x44c] sm:%s145]
                %297 = vst [vmem:[%s153 + $0x11c] sm:%s145] %v296
                %v298 = vld [vmem:[%s152 + $0x450] sm:%s145]
                %299 = vst [vmem:[%s153 + $0x120] sm:%s145] %v298
                %v300 = vld [vmem:[%s152 + $0x454] sm:%s145]
                %301 = vst [vmem:[%s153 + $0x124] sm:%s145] %v300
                %v302 = vld [vmem:[%s152 + $0x458] sm:%s145]
                %303 = vst [vmem:[%s153 + $0x128] sm:%s145] %v302
                %v304 = vld [vmem:[%s152 + $0x45c] sm:%s145]
                %305 = vst [vmem:[%s153 + $0x12c] sm:%s145] %v304
                %v306 = vld [vmem:[%s152 + $0x460] sm:%s145]
                %307 = vst [vmem:[%s153 + $0x130] sm:%s145] %v306
                %v308 = vld [vmem:[%s152 + $0x464] sm:%s145]
                %309 = vst [vmem:[%s153 + $0x134] sm:%s145] %v308
                %v310 = vld [vmem:[%s152 + $0x468] sm:%s145]
                %311 = vst [vmem:[%s153 + $0x138] sm:%s145] %v310
                %v312 = vld [vmem:[%s152 + $0x46c] sm:%s145]
                %313 = vst [vmem:[%s153 + $0x13c] sm:%s145] %v312
                %v314 = vld [vmem:[%s152 + $0x470] sm:%s145]
                %315 = vst [vmem:[%s153 + $0x140] sm:%s145] %v314
                %v316 = vld [vmem:[%s152 + $0x474] sm:%s145]
                %317 = vst [vmem:[%s153 + $0x144] sm:%s145] %v316
                %v318 = vld [vmem:[%s152 + $0x478] sm:%s145]
                %319 = vst [vmem:[%s153 + $0x148] sm:%s145] %v318
                %v320 = vld [vmem:[%s152 + $0x47c] sm:%s145]
                %321 = vst [vmem:[%s153 + $0x14c] sm:%s145] %v320
                %v322 = vld [vmem:[%s152 + $0x480] sm:%s145]
                %323 = vst [vmem:[%s153 + $0x150] sm:%s145] %v322
                %v324 = vld [vmem:[%s152 + $0x484] sm:%s145]
                %325 = vst [vmem:[%s153 + $0x154] sm:%s145] %v324
                %v326 = vld [vmem:[%s152 + $0x488] sm:%s145]
                %327 = vst [vmem:[%s153 + $0x158] sm:%s145] %v326
                %v328 = vld [vmem:[%s152 + $0x48c] sm:%s145]
                %329 = vst [vmem:[%s153 + $0x15c] sm:%s145] %v328
                %v330 = vld [vmem:[%s152 + $0x490] sm:%s145]
                %331 = vst [vmem:[%s153 + $0x160] sm:%s145] %v330
                %v332 = vld [vmem:[%s152 + $0x494] sm:%s145]
                %333 = vst [vmem:[%s153 + $0x164] sm:%s145] %v332
                %v334 = vld [vmem:[%s152 + $0x498] sm:%s145]
                %335 = vst [vmem:[%s153 + $0x168] sm:%s145] %v334
                %v336 = vld [vmem:[%s152 + $0x49c] sm:%s145]
                %337 = vst [vmem:[%s153 + $0x16c] sm:%s145] %v336
                %v338 = vld [vmem:[%s152 + $0x4a0] sm:%s145]
                %339 = vst [vmem:[%s153 + $0x170] sm:%s145] %v338
                %v340 = vld [vmem:[%s152 + $0x4a4] sm:%s145]
                %341 = vst [vmem:[%s153 + $0x174] sm:%s145] %v340
                %v342 = vld [vmem:[%s152 + $0x4a8] sm:%s145]
                %343 = vst [vmem:[%s153 + $0x178] sm:%s145] %v342
                %v344 = vld [vmem:[%s152 + $0x4ac] sm:%s145]
                %345 = vst [vmem:[%s153 + $0x17c] sm:%s145] %v344
                %v346 = vld [vmem:[%s152 + $0x4b0] sm:%s145]
                %347 = vst [vmem:[%s153 + $0x180] sm:%s145] %v346
                %v348 = vld [vmem:[%s152 + $0x4b4] sm:%s145]
                %349 = vst [vmem:[%s153 + $0x184] sm:%s145] %v348
                %v350 = vld [vmem:[%s152 + $0x4b8] sm:%s145]
                %351 = vst [vmem:[%s153 + $0x188] sm:%s145] %v350
                %v352 = vld [vmem:[%s152 + $0x4bc] sm:%s145]
                %353 = vst [vmem:[%s153 + $0x18c] sm:%s145] %v352
                %v354 = vld [vmem:[%s152 + $0x4c0] sm:%s145]
                %355 = vst [vmem:[%s153 + $0x190] sm:%s145] %v354
                %v356 = vld [vmem:[%s152 + $0x4c4] sm:%s145]
                %357 = vst [vmem:[%s153 + $0x194] sm:%s145] %v356
                %v358 = vld [vmem:[%s152 + $0x660] sm:%s145]
                %359 = vst [vmem:[%s153 + $0x198] sm:%s145] %v358
                %v360 = vld [vmem:[%s152 + $0x664] sm:%s145]
                %361 = vst [vmem:[%s153 + $0x19c] sm:%s145] %v360
                %v362 = vld [vmem:[%s152 + $0x668] sm:%s145]
                %363 = vst [vmem:[%s153 + $0x1a0] sm:%s145] %v362
                %v364 = vld [vmem:[%s152 + $0x66c] sm:%s145]
                %365 = vst [vmem:[%s153 + $0x1a4] sm:%s145] %v364
                %v366 = vld [vmem:[%s152 + $0x670] sm:%s145]
                %367 = vst [vmem:[%s153 + $0x1a8] sm:%s145] %v366
                %v368 = vld [vmem:[%s152 + $0x674] sm:%s145]
                %369 = vst [vmem:[%s153 + $0x1ac] sm:%s145] %v368
                %v370 = vld [vmem:[%s152 + $0x678] sm:%s145]
                %371 = vst [vmem:[%s153 + $0x1b0] sm:%s145] %v370
                %v372 = vld [vmem:[%s152 + $0x67c] sm:%s145]
                %373 = vst [vmem:[%s153 + $0x1b4] sm:%s145] %v372
                %v374 = vld [vmem:[%s152 + $0x680] sm:%s145]
                %375 = vst [vmem:[%s153 + $0x1b8] sm:%s145] %v374
                %v376 = vld [vmem:[%s152 + $0x684] sm:%s145]
                %377 = vst [vmem:[%s153 + $0x1bc] sm:%s145] %v376
                %v378 = vld [vmem:[%s152 + $0x688] sm:%s145]
                %379 = vst [vmem:[%s153 + $0x1c0] sm:%s145] %v378
                %v380 = vld [vmem:[%s152 + $0x68c] sm:%s145]
                %381 = vst [vmem:[%s153 + $0x1c4] sm:%s145] %v380
                %v382 = vld [vmem:[%s152 + $0x690] sm:%s145]
                %383 = vst [vmem:[%s153 + $0x1c8] sm:%s145] %v382
                %v384 = vld [vmem:[%s152 + $0x694] sm:%s145]
                %385 = vst [vmem:[%s153 + $0x1cc] sm:%s145] %v384
                %v386 = vld [vmem:[%s152 + $0x698] sm:%s145]
                %387 = vst [vmem:[%s153 + $0x1d0] sm:%s145] %v386
                %v388 = vld [vmem:[%s152 + $0x69c] sm:%s145]
                %389 = vst [vmem:[%s153 + $0x1d4] sm:%s145] %v388
                %v390 = vld [vmem:[%s152 + $0x6a0] sm:%s145]
                %391 = vst [vmem:[%s153 + $0x1d8] sm:%s145] %v390
                %v392 = vld [vmem:[%s152 + $0x6a4] sm:%s145]
                %393 = vst [vmem:[%s153 + $0x1dc] sm:%s145] %v392
                %v394 = vld [vmem:[%s152 + $0x6a8] sm:%s145]
                %395 = vst [vmem:[%s153 + $0x1e0] sm:%s145] %v394
                %v396 = vld [vmem:[%s152 + $0x6ac] sm:%s145]
                %397 = vst [vmem:[%s153 + $0x1e4] sm:%s145] %v396
                %v398 = vld [vmem:[%s152 + $0x6b0] sm:%s145]
                %399 = vst [vmem:[%s153 + $0x1e8] sm:%s145] %v398
                %v400 = vld [vmem:[%s152 + $0x6b4] sm:%s145]
                %401 = vst [vmem:[%s153 + $0x1ec] sm:%s145] %v400
                %v402 = vld [vmem:[%s152 + $0x6b8] sm:%s145]
                %403 = vst [vmem:[%s153 + $0x1f0] sm:%s145] %v402
                %v404 = vld [vmem:[%s152 + $0x6bc] sm:%s145]
                %405 = vst [vmem:[%s153 + $0x1f4] sm:%s145] %v404
                %v406 = vld [vmem:[%s152 + $0x6c0] sm:%s145]
                %407 = vst [vmem:[%s153 + $0x1f8] sm:%s145] %v406
                %v408 = vld [vmem:[%s152 + $0x6c4] sm:%s145]
                %409 = vst [vmem:[%s153 + $0x1fc] sm:%s145] %v408
                %v410 = vld [vmem:[%s152 + $0x6c8] sm:%s145]
                %411 = vst [vmem:[%s153 + $0x200] sm:%s145] %v410
                %v412 = vld [vmem:[%s152 + $0x6cc] sm:%s145]
                %413 = vst [vmem:[%s153 + $0x204] sm:%s145] %v412
                %v414 = vld [vmem:[%s152 + $0x6d0] sm:%s145]
                %415 = vst [vmem:[%s153 + $0x208] sm:%s145] %v414
                %v416 = vld [vmem:[%s152 + $0x6d4] sm:%s145]
                %417 = vst [vmem:[%s153 + $0x20c] sm:%s145] %v416
                %v418 = vld [vmem:[%s152 + $0x6d8] sm:%s145]
                %419 = vst [vmem:[%s153 + $0x210] sm:%s145] %v418
                %v420 = vld [vmem:[%s152 + $0x6dc] sm:%s145]
                %421 = vst [vmem:[%s153 + $0x214] sm:%s145] %v420
                %v422 = vld [vmem:[%s152 + $0x6e0] sm:%s145]
                %423 = vst [vmem:[%s153 + $0x218] sm:%s145] %v422
                %v424 = vld [vmem:[%s152 + $0x6e4] sm:%s145]
                %425 = vst [vmem:[%s153 + $0x21c] sm:%s145] %v424
              $region45: #{net_forward.3} parent=39 // loop_footer
                %s151 = sadd.s32 1, %s147
              $region46: #{net_forward.3} parent=39 // loop_footer_branch
                %146 = sbr.rel target = $region42
              $region47: #{net_forward.3} parent=39 // loop_exit
                _
            $region40: #{net_forward.3} parent=31 // pred_fallthru
              _
          $region32: #{net_forward.3} parent=27 // pred_fallthru
            _
          %718 = vnop
        $region28: #{net_forward.3} parent=23 // pred_fallthru
          _
      $region24: #{net_forward.3} parent=5 // pred_fallthru
        _
      %p719 = scmp.le.s32.totalorder 1, %s9
      %p720 = scmp.lt.s32.totalorder %s9, 5
      %p721 = pnand %p719, %p720
      %p722 = pneg %p721
      // Predicated region
      $region66: #{net_forward.3} parent=5 // pred_check
        _
      $region67: #{net_forward.3} parent=5 // pred_check_branch
        %724 = sbr.rel (%p721) target = $region69
      $region68: #{net_forward.3} parent=5 // pred_region
        %s725 = ssub.s32 %s9, 1
        %s726 = sand.u32 %s22, 1
        %s727 = sand.u32 %s22, 1
        %s728 = smul.addr %s727, 544
        %s729 = scalar_lea.vmem [#allocation2], %s728
        // Predicated region
        $region70: #{net_forward.3} parent=68 // pred_check
          %p730 = pneg %p35
        $region71: #{net_forward.3} parent=68 // pred_check_branch
          %732 = sbr.rel (%p730) target = $region73
        $region72: #{net_forward.3} parent=68 // pred_region
          _
        $region73: #{net_forward.3} parent=68 // pred_fallthru
          _
        %s733 = sand.u32 %s22, 1
        %s734 = sand.u32 %s22, 1
        %s735 = smul.addr %s734, 544
        %s736 = scalar_lea.vmem [#allocation2], %s735
        %p737 = pneg %p35
        %p738 = pneg %p32
        %p739 = pneg %p56
        %p740 = pneg %p53
        %p741 = pneg %p77
        %p742 = pneg %p74
        %p743 = pneg %p103
        %p744 = pneg %p100
        %s745 = smul.u32 34, %s14
        %p746 = scmp.lt.s32.totalorder %s745, 135
        %s747 = scalar_select %p746, %s745, 135
        %s748 = smul.addr %s747, 4
        %s749 = scalar_lea.vmem %s3, %s748
        %s750 = smul.u32 34, %s14
        %s751 = smul.u32 34, %s14
        %p752 = scmp.lt.s32.totalorder %s751, 135
        %s753 = scalar_select %p752, %s751, 135
        %s754 = smul.addr %s753, 4
        %s755 = scalar_lea.vmem %s3, %s754
        %s756 = smul.u32 34, %s14
        %v758 = vld [vmem:[%s1] sm:$0xf]
        %v759 = vld [vmem:[%s1 + $0x4] sm:$0xf]
        %v760 = vld [vmem:[%s1 + $0x8] sm:$0xf]
        %v761 = vld [vmem:[%s1 + $0xc] sm:$0x1]
        %v762 = vld [vmem:[%s729] sm:$0xf]
        %v763 = vld [vmem:[%s729 + $0x4] sm:$0xf]
        %v764 = vld [vmem:[%s729 + $0x8] sm:$0xf]
        %v765 = vld [vmem:[%s729 + $0xc] sm:$0xf]
        %v766 = vld [vmem:[%s729 + $0x10] sm:$0xf]
        %v767 = vld [vmem:[%s729 + $0x14] sm:$0xf]
        %v768 = vld [vmem:[%s729 + $0x18] sm:$0xf]
        %v769 = vld [vmem:[%s729 + $0x1c] sm:$0xf]
        %v770 = vld [vmem:[%s729 + $0x20] sm:$0xf]
        %v771 = vld [vmem:[%s729 + $0x24] sm:$0xf]
        %v772 = vld [vmem:[%s729 + $0x28] sm:$0xf]
        %v773 = vld [vmem:[%s729 + $0x2c] sm:$0xf]
        %v774 = vld [vmem:[%s729 + $0x30] sm:$0xf]
        %v775 = vld [vmem:[%s729 + $0x34] sm:$0xf]
        %v776 = vld [vmem:[%s729 + $0x38] sm:$0xf]
        %v777 = vld [vmem:[%s729 + $0x3c] sm:$0xf]
        %v778 = vld [vmem:[%s729 + $0x40] sm:$0xf]
        %v779 = vld [vmem:[%s729 + $0x44] sm:$0xf]
        %v780 = vld [vmem:[%s729 + $0x48] sm:$0xf]
        %v781 = vld [vmem:[%s729 + $0x4c] sm:$0xf]
        %v782 = vld [vmem:[%s729 + $0x50] sm:$0xf]
        %v783 = vld [vmem:[%s729 + $0x54] sm:$0xf]
        %v784 = vld [vmem:[%s729 + $0x58] sm:$0xf]
        %v785 = vld [vmem:[%s729 + $0x5c] sm:$0xf]
        %v786 = vld [vmem:[%s729 + $0x60] sm:$0xf]
        %v787 = vld [vmem:[%s729 + $0x64] sm:$0xf]
        %v788 = vld [vmem:[%s729 + $0x68] sm:$0xf]
        %v789 = vld [vmem:[%s729 + $0x6c] sm:$0xf]
        %v790 = vld [vmem:[%s729 + $0x70] sm:$0xf]
        %v791 = vld [vmem:[%s729 + $0x74] sm:$0xf]
        %v792 = vld [vmem:[%s729 + $0x78] sm:$0xf]
        %v793 = vld [vmem:[%s729 + $0x7c] sm:$0xf]
        %v794 = vld [vmem:[%s729 + $0x80] sm:$0xf]
        %v795 = vld [vmem:[%s729 + $0x84] sm:$0xf]
        %v830 = vunpack.c.l.b16 %v762
        %v831 = vunpack.c.l.b16 %v763
        %v832 = vunpack.c.l.b16 %v764
        %v833 = vunpack.c.l.b16 %v765
        %v834 = vunpack.c.l.b16 %v766
        %v835 = vunpack.c.l.b16 %v767
        %v836 = vunpack.c.l.b16 %v768
        %v837 = vunpack.c.l.b16 %v769
        %v838 = vunpack.c.l.b16 %v770
        %v839 = vunpack.c.l.b16 %v771
        %v840 = vunpack.c.l.b16 %v772
        %v841 = vunpack.c.l.b16 %v773
        %v842 = vunpack.c.l.b16 %v774
        %v843 = vunpack.c.l.b16 %v775
        %v844 = vunpack.c.l.b16 %v776
        %v845 = vunpack.c.l.b16 %v777
        %v846 = vunpack.c.l.b16 %v778
        %v847 = vunpack.c.l.b16 %v779
        %v848 = vunpack.c.l.b16 %v780
        %v849 = vunpack.c.l.b16 %v781
        %v850 = vunpack.c.l.b16 %v782
        %v851 = vunpack.c.l.b16 %v783
        %v852 = vunpack.c.l.b16 %v784
        %v853 = vunpack.c.l.b16 %v785
        %v854 = vunpack.c.l.b16 %v786
        %v855 = vunpack.c.l.b16 %v787
        %v856 = vunpack.c.l.b16 %v788
        %v857 = vunpack.c.l.b16 %v789
        %v858 = vunpack.c.l.b16 %v790
        %v859 = vunpack.c.l.b16 %v791
        %v860 = vunpack.c.l.b16 %v792
        %v861 = vunpack.c.l.b16 %v793
        %v862 = vunpack.c.l.b16 %v794
        %v863 = vunpack.c.l.b16 %v795
        %v864 = vpack.c.b16 %v831, %v830
        %v865 = vpack.c.b16 %v833, %v832
        %v866 = vpack.c.b16 %v835, %v834
        %v867 = vpack.c.b16 %v837, %v836
        %v868 = vpack.c.b16 %v839, %v838
        %v869 = vpack.c.b16 %v841, %v840
        %v870 = vpack.c.b16 %v843, %v842
        %v871 = vpack.c.b16 %v845, %v844
        %v872 = vpack.c.b16 %v847, %v846
        %v873 = vpack.c.b16 %v849, %v848
        %v874 = vpack.c.b16 %v851, %v850
        %v875 = vpack.c.b16 %v853, %v852
        %v876 = vpack.c.b16 %v855, %v854
        %v877 = vpack.c.b16 %v857, %v856
        %v878 = vpack.c.b16 %v859, %v858
        %v879 = vpack.c.b16 %v861, %v860
        %v880 = vpack.c.b16 %v863, %v862
        %v885 = vunpack.c.l.b16 %v758
        %v886 = vunpack.c.l.b16 %v759
        %v887 = vunpack.c.l.b16 %v760
        %v888 = vunpack.c.l.b16 %v761
        %v889 = vpack.c.b16 %v886, %v885
        %v890 = vpack.c.b16 %v888, %v887
        %vm892 = vcmask 203776
        %v894 = vsel %vm892, %v864, 0
        %v897 = vsel %vm892, %v865, 0
        %v900 = vsel %vm892, %v866, 0
        %v903 = vsel %vm892, %v867, 0
        %v906 = vsel %vm892, %v868, 0
        %v909 = vsel %vm892, %v869, 0
        %v912 = vsel %vm892, %v870, 0
        %v915 = vsel %vm892, %v871, 0
        %v918 = vsel %vm892, %v872, 0
        %v921 = vsel %vm892, %v873, 0
        %v924 = vsel %vm892, %v874, 0
        %v927 = vsel %vm892, %v875, 0
        %v930 = vsel %vm892, %v876, 0
        %v933 = vsel %vm892, %v877, 0
        %v936 = vsel %vm892, %v878, 0
        %v939 = vsel %vm892, %v879, 0
        %v942 = vsel %vm892, %v880, 0
        %vm944 = vcmask 1043456
        %vm945 = vcmask 1044480
        %v946 = vsel %vm944, 4294967295, 65535
        %v947 = vsel %vm945, %v946, 0
        %v949 = vand.u32 %v890, %v947
        %951 = vmatpush.bf16.msra.mxu0 0
        %952 = vmatpush.bf16.msra.mxu0 0
        %953 = vmatpush.bf16.msra.mxu0 0
        %954 = vmatpush.bf16.msra.mxu0 0
        %955 = vmatpush.bf16.msra.mxu0 0
        %956 = vmatpush.bf16.msra.mxu0 0
        %957 = vmatpush.bf16.msra.mxu0 %v949
        %958 = vmatpush.bf16.msra.mxu0 %v889
        %959 = vmatmul.bf16.gmra.mxu0 %v894
        %v960 = vpop.f32.mrf.mxu0
        %v961 = vadd.f32 0.0, %v960
        %v962 = vpop.f32.mrf.mxu0
        %v963 = vadd.f32 0.0, %v962
        %964 = vmatmul.bf16.gmra.mxu0 %v897
        %v965 = vpop.f32.mrf.mxu0
        %v966 = vadd.f32 0.0, %v965
        %v967 = vpop.f32.mrf.mxu0
        %v968 = vadd.f32 0.0, %v967
        %969 = vmatmul.bf16.gmra.mxu0 %v900
        %v970 = vpop.f32.mrf.mxu0
        %v971 = vadd.f32 0.0, %v970
        %v972 = vpop.f32.mrf.mxu0
        %v973 = vadd.f32 0.0, %v972
        %974 = vmatmul.bf16.gmra.mxu0 %v903
        %v975 = vpop.f32.mrf.mxu0
        %v976 = vadd.f32 0.0, %v975
        %v977 = vpop.f32.mrf.mxu0
        %v978 = vadd.f32 0.0, %v977
        %979 = vmatmul.bf16.gmra.mxu0 %v906
        %v980 = vpop.f32.mrf.mxu0
        %v981 = vadd.f32 0.0, %v980
        %v982 = vpop.f32.mrf.mxu0
        %v983 = vadd.f32 0.0, %v982
        %984 = vmatmul.bf16.gmra.mxu0 %v909
        %v985 = vpop.f32.mrf.mxu0
        %v986 = vadd.f32 0.0, %v985
        %v987 = vpop.f32.mrf.mxu0
        %v988 = vadd.f32 0.0, %v987
        %989 = vmatmul.bf16.gmra.mxu0 %v912
        %v990 = vpop.f32.mrf.mxu0
        %v991 = vadd.f32 0.0, %v990
        %v992 = vpop.f32.mrf.mxu0
        %v993 = vadd.f32 0.0, %v992
        %994 = vmatmul.bf16.gmra.mxu0 %v915
        %v995 = vpop.f32.mrf.mxu0
        %v996 = vadd.f32 0.0, %v995
        %v997 = vpop.f32.mrf.mxu0
        %v998 = vadd.f32 0.0, %v997
        %999 = vmatmul.bf16.gmra.mxu0 %v918
        %v1000 = vpop.f32.mrf.mxu0
        %v1001 = vadd.f32 0.0, %v1000
        %v1002 = vpop.f32.mrf.mxu0
        %v1003 = vadd.f32 0.0, %v1002
        %1004 = vmatmul.bf16.gmra.mxu0 %v921
        %v1005 = vpop.f32.mrf.mxu0
        %v1006 = vadd.f32 0.0, %v1005
        %v1007 = vpop.f32.mrf.mxu0
        %v1008 = vadd.f32 0.0, %v1007
        %1009 = vmatmul.bf16.gmra.mxu0 %v924
        %v1010 = vpop.f32.mrf.mxu0
        %v1011 = vadd.f32 0.0, %v1010
        %v1012 = vpop.f32.mrf.mxu0
        %v1013 = vadd.f32 0.0, %v1012
        %1014 = vmatmul.bf16.gmra.mxu0 %v927
        %v1015 = vpop.f32.mrf.mxu0
        %v1016 = vadd.f32 0.0, %v1015
        %v1017 = vpop.f32.mrf.mxu0
        %v1018 = vadd.f32 0.0, %v1017
        %1019 = vmatmul.bf16.gmra.mxu0 %v930
        %v1020 = vpop.f32.mrf.mxu0
        %v1021 = vadd.f32 0.0, %v1020
        %v1022 = vpop.f32.mrf.mxu0
        %v1023 = vadd.f32 0.0, %v1022
        %1024 = vmatmul.bf16.gmra.mxu0 %v933
        %v1025 = vpop.f32.mrf.mxu0
        %v1026 = vadd.f32 0.0, %v1025
        %v1027 = vpop.f32.mrf.mxu0
        %v1028 = vadd.f32 0.0, %v1027
        %1029 = vmatmul.bf16.gmra.mxu0 %v936
        %v1030 = vpop.f32.mrf.mxu0
        %v1031 = vadd.f32 0.0, %v1030
        %v1032 = vpop.f32.mrf.mxu0
        %v1033 = vadd.f32 0.0, %v1032
        %1034 = vmatmul.bf16.gmra.mxu0 %v939
        %v1035 = vpop.f32.mrf.mxu0
        %v1036 = vadd.f32 0.0, %v1035
        %v1037 = vpop.f32.mrf.mxu0
        %v1038 = vadd.f32 0.0, %v1037
        %1039 = vmatmul.bf16.gmra.mxu0 %v942
        %v1040 = vpop.f32.mrf.mxu0
        %v1041 = vadd.f32 0.0, %v1040
        %v1042 = vpop.f32.mrf.mxu0
        %v1043 = vadd.f32 0.0, %v1042
        %1044 = vdwg.mxu0
        %s1045 = scalar_lea.vmem %s729, 136 [#allocation2]
        %v1046 = vld [vmem:[%s1045] sm:$0xf]
        %v1047 = vld [vmem:[%s1045 + $0x4] sm:$0xf]
        %v1048 = vld [vmem:[%s1045 + $0x8] sm:$0xf]
        %v1049 = vld [vmem:[%s1045 + $0xc] sm:$0xf]
        %v1050 = vld [vmem:[%s1045 + $0x10] sm:$0xf]
        %v1051 = vld [vmem:[%s1045 + $0x14] sm:$0xf]
        %v1052 = vld [vmem:[%s1045 + $0x18] sm:$0xf]
        %v1053 = vld [vmem:[%s1045 + $0x1c] sm:$0xf]
        %v1054 = vld [vmem:[%s1045 + $0x20] sm:$0xf]
        %v1055 = vld [vmem:[%s1045 + $0x24] sm:$0xf]
        %v1056 = vld [vmem:[%s1045 + $0x28] sm:$0xf]
        %v1057 = vld [vmem:[%s1045 + $0x2c] sm:$0xf]
        %v1058 = vld [vmem:[%s1045 + $0x30] sm:$0xf]
        %v1059 = vld [vmem:[%s1045 + $0x34] sm:$0xf]
        %v1060 = vld [vmem:[%s1045 + $0x38] sm:$0xf]
        %v1061 = vld [vmem:[%s1045 + $0x3c] sm:$0xf]
        %v1062 = vld [vmem:[%s1045 + $0x40] sm:$0xf]
        %v1063 = vld [vmem:[%s1045 + $0x44] sm:$0xf]
        %v1064 = vld [vmem:[%s1045 + $0x48] sm:$0xf]
        %v1065 = vld [vmem:[%s1045 + $0x4c] sm:$0xf]
        %v1066 = vld [vmem:[%s1045 + $0x50] sm:$0xf]
        %v1067 = vld [vmem:[%s1045 + $0x54] sm:$0xf]
        %v1068 = vld [vmem:[%s1045 + $0x58] sm:$0xf]
        %v1069 = vld [vmem:[%s1045 + $0x5c] sm:$0xf]
        %v1070 = vld [vmem:[%s1045 + $0x60] sm:$0xf]
        %v1071 = vld [vmem:[%s1045 + $0x64] sm:$0xf]
        %v1072 = vld [vmem:[%s1045 + $0x68] sm:$0xf]
        %v1073 = vld [vmem:[%s1045 + $0x6c] sm:$0xf]
        %v1074 = vld [vmem:[%s1045 + $0x70] sm:$0xf]
        %v1075 = vld [vmem:[%s1045 + $0x74] sm:$0xf]
        %v1076 = vld [vmem:[%s1045 + $0x78] sm:$0xf]
        %v1077 = vld [vmem:[%s1045 + $0x7c] sm:$0xf]
        %v1078 = vld [vmem:[%s1045 + $0x80] sm:$0xf]
        %v1079 = vld [vmem:[%s1045 + $0x84] sm:$0xf]
        %v1114 = vunpack.c.l.b16 %v1046
        %v1115 = vunpack.c.l.b16 %v1047
        %v1116 = vunpack.c.l.b16 %v1048
        %v1117 = vunpack.c.l.b16 %v1049
        %v1118 = vunpack.c.l.b16 %v1050
        %v1119 = vunpack.c.l.b16 %v1051
        %v1120 = vunpack.c.l.b16 %v1052
        %v1121 = vunpack.c.l.b16 %v1053
        %v1122 = vunpack.c.l.b16 %v1054
        %v1123 = vunpack.c.l.b16 %v1055
        %v1124 = vunpack.c.l.b16 %v1056
        %v1125 = vunpack.c.l.b16 %v1057
        %v1126 = vunpack.c.l.b16 %v1058
        %v1127 = vunpack.c.l.b16 %v1059
        %v1128 = vunpack.c.l.b16 %v1060
        %v1129 = vunpack.c.l.b16 %v1061
        %v1130 = vunpack.c.l.b16 %v1062
        %v1131 = vunpack.c.l.b16 %v1063
        %v1132 = vunpack.c.l.b16 %v1064
        %v1133 = vunpack.c.l.b16 %v1065
        %v1134 = vunpack.c.l.b16 %v1066
        %v1135 = vunpack.c.l.b16 %v1067
        %v1136 = vunpack.c.l.b16 %v1068
        %v1137 = vunpack.c.l.b16 %v1069
        %v1138 = vunpack.c.l.b16 %v1070
        %v1139 = vunpack.c.l.b16 %v1071
        %v1140 = vunpack.c.l.b16 %v1072
        %v1141 = vunpack.c.l.b16 %v1073
        %v1142 = vunpack.c.l.b16 %v1074
        %v1143 = vunpack.c.l.b16 %v1075
        %v1144 = vunpack.c.l.b16 %v1076
        %v1145 = vunpack.c.l.b16 %v1077
        %v1146 = vunpack.c.l.b16 %v1078
        %v1147 = vunpack.c.l.b16 %v1079
        %v1148 = vpack.c.b16 %v1115, %v1114
        %v1149 = vpack.c.b16 %v1117, %v1116
        %v1150 = vpack.c.b16 %v1119, %v1118
        %v1151 = vpack.c.b16 %v1121, %v1120
        %v1152 = vpack.c.b16 %v1123, %v1122
        %v1153 = vpack.c.b16 %v1125, %v1124
        %v1154 = vpack.c.b16 %v1127, %v1126
        %v1155 = vpack.c.b16 %v1129, %v1128
        %v1156 = vpack.c.b16 %v1131, %v1130
        %v1157 = vpack.c.b16 %v1133, %v1132
        %v1158 = vpack.c.b16 %v1135, %v1134
        %v1159 = vpack.c.b16 %v1137, %v1136
        %v1160 = vpack.c.b16 %v1139, %v1138
        %v1161 = vpack.c.b16 %v1141, %v1140
        %v1162 = vpack.c.b16 %v1143, %v1142
        %v1163 = vpack.c.b16 %v1145, %v1144
        %v1164 = vpack.c.b16 %v1147, %v1146
        %v1166 = vsel %vm892, %v1148, 0
        %v1169 = vsel %vm892, %v1149, 0
        %v1172 = vsel %vm892, %v1150, 0
        %v1175 = vsel %vm892, %v1151, 0
        %v1178 = vsel %vm892, %v1152, 0
        %v1181 = vsel %vm892, %v1153, 0
        %v1184 = vsel %vm892, %v1154, 0
        %v1187 = vsel %vm892, %v1155, 0
        %v1190 = vsel %vm892, %v1156, 0
        %v1193 = vsel %vm892, %v1157, 0
        %v1196 = vsel %vm892, %v1158, 0
        %v1199 = vsel %vm892, %v1159, 0
        %v1202 = vsel %vm892, %v1160, 0
        %v1205 = vsel %vm892, %v1161, 0
        %v1208 = vsel %vm892, %v1162, 0
        %v1211 = vsel %vm892, %v1163, 0
        %v1214 = vsel %vm892, %v1164, 0
        %1216 = vmatpush.bf16.msra.mxu0 0
        %1217 = vmatpush.bf16.msra.mxu0 0
        %1218 = vmatpush.bf16.msra.mxu0 0
        %1219 = vmatpush.bf16.msra.mxu0 0
        %1220 = vmatpush.bf16.msra.mxu0 0
        %1221 = vmatpush.bf16.msra.mxu0 0
        %1222 = vmatpush.bf16.msra.mxu0 %v949
        %1223 = vmatpush.bf16.msra.mxu0 %v889
        %1224 = vmatmul.bf16.gmra.mxu0 %v1166
        %v1225 = vpop.f32.mrf.mxu0
        %v1226 = vadd.f32 0.0, %v1225
        %v1227 = vpop.f32.mrf.mxu0
        %v1228 = vadd.f32 0.0, %v1227
        %1229 = vmatmul.bf16.gmra.mxu0 %v1169
        %v1230 = vpop.f32.mrf.mxu0
        %v1231 = vadd.f32 0.0, %v1230
        %v1232 = vpop.f32.mrf.mxu0
        %v1233 = vadd.f32 0.0, %v1232
        %1234 = vmatmul.bf16.gmra.mxu0 %v1172
        %v1235 = vpop.f32.mrf.mxu0
        %v1236 = vadd.f32 0.0, %v1235
        %v1237 = vpop.f32.mrf.mxu0
        %v1238 = vadd.f32 0.0, %v1237
        %1239 = vmatmul.bf16.gmra.mxu0 %v1175
        %v1240 = vpop.f32.mrf.mxu0
        %v1241 = vadd.f32 0.0, %v1240
        %v1242 = vpop.f32.mrf.mxu0
        %v1243 = vadd.f32 0.0, %v1242
        %1244 = vmatmul.bf16.gmra.mxu0 %v1178
        %v1245 = vpop.f32.mrf.mxu0
        %v1246 = vadd.f32 0.0, %v1245
        %v1247 = vpop.f32.mrf.mxu0
        %v1248 = vadd.f32 0.0, %v1247
        %1249 = vmatmul.bf16.gmra.mxu0 %v1181
        %v1250 = vpop.f32.mrf.mxu0
        %v1251 = vadd.f32 0.0, %v1250
        %v1252 = vpop.f32.mrf.mxu0
        %v1253 = vadd.f32 0.0, %v1252
        %1254 = vmatmul.bf16.gmra.mxu0 %v1184
        %v1255 = vpop.f32.mrf.mxu0
        %v1256 = vadd.f32 0.0, %v1255
        %v1257 = vpop.f32.mrf.mxu0
        %v1258 = vadd.f32 0.0, %v1257
        %1259 = vmatmul.bf16.gmra.mxu0 %v1187
        %v1260 = vpop.f32.mrf.mxu0
        %v1261 = vadd.f32 0.0, %v1260
        %v1262 = vpop.f32.mrf.mxu0
        %v1263 = vadd.f32 0.0, %v1262
        %1264 = vmatmul.bf16.gmra.mxu0 %v1190
        %v1265 = vpop.f32.mrf.mxu0
        %v1266 = vadd.f32 0.0, %v1265
        %v1267 = vpop.f32.mrf.mxu0
        %v1268 = vadd.f32 0.0, %v1267
        %1269 = vmatmul.bf16.gmra.mxu0 %v1193
        %v1270 = vpop.f32.mrf.mxu0
        %v1271 = vadd.f32 0.0, %v1270
        %v1272 = vpop.f32.mrf.mxu0
        %v1273 = vadd.f32 0.0, %v1272
        %1274 = vmatmul.bf16.gmra.mxu0 %v1196
        %v1275 = vpop.f32.mrf.mxu0
        %v1276 = vadd.f32 0.0, %v1275
        %v1277 = vpop.f32.mrf.mxu0
        %v1278 = vadd.f32 0.0, %v1277
        %1279 = vmatmul.bf16.gmra.mxu0 %v1199
        %v1280 = vpop.f32.mrf.mxu0
        %v1281 = vadd.f32 0.0, %v1280
        %v1282 = vpop.f32.mrf.mxu0
        %v1283 = vadd.f32 0.0, %v1282
        %1284 = vmatmul.bf16.gmra.mxu0 %v1202
        %v1285 = vpop.f32.mrf.mxu0
        %v1286 = vadd.f32 0.0, %v1285
        %v1287 = vpop.f32.mrf.mxu0
        %v1288 = vadd.f32 0.0, %v1287
        %1289 = vmatmul.bf16.gmra.mxu0 %v1205
        %v1290 = vpop.f32.mrf.mxu0
        %v1291 = vadd.f32 0.0, %v1290
        %v1292 = vpop.f32.mrf.mxu0
        %v1293 = vadd.f32 0.0, %v1292
        %1294 = vmatmul.bf16.gmra.mxu0 %v1208
        %v1295 = vpop.f32.mrf.mxu0
        %v1296 = vadd.f32 0.0, %v1295
        %v1297 = vpop.f32.mrf.mxu0
        %v1298 = vadd.f32 0.0, %v1297
        %1299 = vmatmul.bf16.gmra.mxu0 %v1211
        %v1300 = vpop.f32.mrf.mxu0
        %v1301 = vadd.f32 0.0, %v1300
        %v1302 = vpop.f32.mrf.mxu0
        %v1303 = vadd.f32 0.0, %v1302
        %1304 = vmatmul.bf16.gmra.mxu0 %v1214
        %v1305 = vpop.f32.mrf.mxu0
        %v1306 = vadd.f32 0.0, %v1305
        %v1307 = vpop.f32.mrf.mxu0
        %v1308 = vadd.f32 0.0, %v1307
        %1309 = vdwg.mxu0
        %v1310 = vmax.f32 %v961, %v1226
        %v1311 = vmax.f32 %v963, %v1228
        %v1312 = vmax.f32 %v966, %v1231
        %v1313 = vmax.f32 %v968, %v1233
        %v1314 = vmax.f32 %v971, %v1236
        %v1315 = vmax.f32 %v973, %v1238
        %v1316 = vmax.f32 %v976, %v1241
        %v1317 = vmax.f32 %v978, %v1243
        %v1318 = vmax.f32 %v981, %v1246
        %v1319 = vmax.f32 %v983, %v1248
        %v1320 = vmax.f32 %v986, %v1251
        %v1321 = vmax.f32 %v988, %v1253
        %v1322 = vmax.f32 %v991, %v1256
        %v1323 = vmax.f32 %v993, %v1258
        %v1324 = vmax.f32 %v996, %v1261
        %v1325 = vmax.f32 %v998, %v1263
        %v1326 = vmax.f32 %v1001, %v1266
        %v1327 = vmax.f32 %v1003, %v1268
        %v1328 = vmax.f32 %v1006, %v1271
        %v1329 = vmax.f32 %v1008, %v1273
        %v1330 = vmax.f32 %v1011, %v1276
        %v1331 = vmax.f32 %v1013, %v1278
        %v1332 = vmax.f32 %v1016, %v1281
        %v1333 = vmax.f32 %v1018, %v1283
        %v1334 = vmax.f32 %v1021, %v1286
        %v1335 = vmax.f32 %v1023, %v1288
        %v1336 = vmax.f32 %v1026, %v1291
        %v1337 = vmax.f32 %v1028, %v1293
        %v1338 = vmax.f32 %v1031, %v1296
        %v1339 = vmax.f32 %v1033, %v1298
        %v1340 = vmax.f32 %v1036, %v1301
        %v1341 = vmax.f32 %v1038, %v1303
        %v1342 = vmax.f32 %v1041, %v1306
        %v1343 = vmax.f32 %v1043, %v1308
        %s1344 = scalar_lea.vmem %s729, 272 [#allocation2]
        %v1345 = vld [vmem:[%s1344] sm:$0xf]
        %v1346 = vld [vmem:[%s1344 + $0x4] sm:$0xf]
        %v1347 = vld [vmem:[%s1344 + $0x8] sm:$0xf]
        %v1348 = vld [vmem:[%s1344 + $0xc] sm:$0xf]
        %v1349 = vld [vmem:[%s1344 + $0x10] sm:$0xf]
        %v1350 = vld [vmem:[%s1344 + $0x14] sm:$0xf]
        %v1351 = vld [vmem:[%s1344 + $0x18] sm:$0xf]
        %v1352 = vld [vmem:[%s1344 + $0x1c] sm:$0xf]
        %v1353 = vld [vmem:[%s1344 + $0x20] sm:$0xf]
        %v1354 = vld [vmem:[%s1344 + $0x24] sm:$0xf]
        %v1355 = vld [vmem:[%s1344 + $0x28] sm:$0xf]
        %v1356 = vld [vmem:[%s1344 + $0x2c] sm:$0xf]
        %v1357 = vld [vmem:[%s1344 + $0x30] sm:$0xf]
        %v1358 = vld [vmem:[%s1344 + $0x34] sm:$0xf]
        %v1359 = vld [vmem:[%s1344 + $0x38] sm:$0xf]
        %v1360 = vld [vmem:[%s1344 + $0x3c] sm:$0xf]
        %v1361 = vld [vmem:[%s1344 + $0x40] sm:$0xf]
        %v1362 = vld [vmem:[%s1344 + $0x44] sm:$0xf]
        %v1363 = vld [vmem:[%s1344 + $0x48] sm:$0xf]
        %v1364 = vld [vmem:[%s1344 + $0x4c] sm:$0xf]
        %v1365 = vld [vmem:[%s1344 + $0x50] sm:$0xf]
        %v1366 = vld [vmem:[%s1344 + $0x54] sm:$0xf]
        %v1367 = vld [vmem:[%s1344 + $0x58] sm:$0xf]
        %v1368 = vld [vmem:[%s1344 + $0x5c] sm:$0xf]
        %v1369 = vld [vmem:[%s1344 + $0x60] sm:$0xf]
        %v1370 = vld [vmem:[%s1344 + $0x64] sm:$0xf]
        %v1371 = vld [vmem:[%s1344 + $0x68] sm:$0xf]
        %v1372 = vld [vmem:[%s1344 + $0x6c] sm:$0xf]
        %v1373 = vld [vmem:[%s1344 + $0x70] sm:$0xf]
        %v1374 = vld [vmem:[%s1344 + $0x74] sm:$0xf]
        %v1375 = vld [vmem:[%s1344 + $0x78] sm:$0xf]
        %v1376 = vld [vmem:[%s1344 + $0x7c] sm:$0xf]
        %v1377 = vld [vmem:[%s1344 + $0x80] sm:$0xf]
        %v1378 = vld [vmem:[%s1344 + $0x84] sm:$0xf]
        %v1413 = vunpack.c.l.b16 %v1345
        %v1414 = vunpack.c.l.b16 %v1346
        %v1415 = vunpack.c.l.b16 %v1347
        %v1416 = vunpack.c.l.b16 %v1348
        %v1417 = vunpack.c.l.b16 %v1349
        %v1418 = vunpack.c.l.b16 %v1350
        %v1419 = vunpack.c.l.b16 %v1351
        %v1420 = vunpack.c.l.b16 %v1352
        %v1421 = vunpack.c.l.b16 %v1353
        %v1422 = vunpack.c.l.b16 %v1354
        %v1423 = vunpack.c.l.b16 %v1355
        %v1424 = vunpack.c.l.b16 %v1356
        %v1425 = vunpack.c.l.b16 %v1357
        %v1426 = vunpack.c.l.b16 %v1358
        %v1427 = vunpack.c.l.b16 %v1359
        %v1428 = vunpack.c.l.b16 %v1360
        %v1429 = vunpack.c.l.b16 %v1361
        %v1430 = vunpack.c.l.b16 %v1362
        %v1431 = vunpack.c.l.b16 %v1363
        %v1432 = vunpack.c.l.b16 %v1364
        %v1433 = vunpack.c.l.b16 %v1365
        %v1434 = vunpack.c.l.b16 %v1366
        %v1435 = vunpack.c.l.b16 %v1367
        %v1436 = vunpack.c.l.b16 %v1368
        %v1437 = vunpack.c.l.b16 %v1369
        %v1438 = vunpack.c.l.b16 %v1370
        %v1439 = vunpack.c.l.b16 %v1371
        %v1440 = vunpack.c.l.b16 %v1372
        %v1441 = vunpack.c.l.b16 %v1373
        %v1442 = vunpack.c.l.b16 %v1374
        %v1443 = vunpack.c.l.b16 %v1375
        %v1444 = vunpack.c.l.b16 %v1376
        %v1445 = vunpack.c.l.b16 %v1377
        %v1446 = vunpack.c.l.b16 %v1378
        %v1447 = vpack.c.b16 %v1414, %v1413
        %v1448 = vpack.c.b16 %v1416, %v1415
        %v1449 = vpack.c.b16 %v1418, %v1417
        %v1450 = vpack.c.b16 %v1420, %v1419
        %v1451 = vpack.c.b16 %v1422, %v1421
        %v1452 = vpack.c.b16 %v1424, %v1423
        %v1453 = vpack.c.b16 %v1426, %v1425
        %v1454 = vpack.c.b16 %v1428, %v1427
        %v1455 = vpack.c.b16 %v1430, %v1429
        %v1456 = vpack.c.b16 %v1432, %v1431
        %v1457 = vpack.c.b16 %v1434, %v1433
        %v1458 = vpack.c.b16 %v1436, %v1435
        %v1459 = vpack.c.b16 %v1438, %v1437
        %v1460 = vpack.c.b16 %v1440, %v1439
        %v1461 = vpack.c.b16 %v1442, %v1441
        %v1462 = vpack.c.b16 %v1444, %v1443
        %v1463 = vpack.c.b16 %v1446, %v1445
        %v1465 = vsel %vm892, %v1447, 0
        %v1468 = vsel %vm892, %v1448, 0
        %v1471 = vsel %vm892, %v1449, 0
        %v1474 = vsel %vm892, %v1450, 0
        %v1477 = vsel %vm892, %v1451, 0
        %v1480 = vsel %vm892, %v1452, 0
        %v1483 = vsel %vm892, %v1453, 0
        %v1486 = vsel %vm892, %v1454, 0
        %v1489 = vsel %vm892, %v1455, 0
        %v1492 = vsel %vm892, %v1456, 0
        %v1495 = vsel %vm892, %v1457, 0
        %v1498 = vsel %vm892, %v1458, 0
        %v1501 = vsel %vm892, %v1459, 0
        %v1504 = vsel %vm892, %v1460, 0
        %v1507 = vsel %vm892, %v1461, 0
        %v1510 = vsel %vm892, %v1462, 0
        %v1513 = vsel %vm892, %v1463, 0
        %1515 = vmatpush.bf16.msra.mxu0 0
        %1516 = vmatpush.bf16.msra.mxu0 0
        %1517 = vmatpush.bf16.msra.mxu0 0
        %1518 = vmatpush.bf16.msra.mxu0 0
        %1519 = vmatpush.bf16.msra.mxu0 0
        %1520 = vmatpush.bf16.msra.mxu0 0
        %1521 = vmatpush.bf16.msra.mxu0 %v949
        %1522 = vmatpush.bf16.msra.mxu0 %v889
        %1523 = vmatmul.bf16.gmra.mxu0 %v1465
        %v1524 = vpop.f32.mrf.mxu0
        %v1525 = vadd.f32 0.0, %v1524
        %v1526 = vpop.f32.mrf.mxu0
        %v1527 = vadd.f32 0.0, %v1526
        %1528 = vmatmul.bf16.gmra.mxu0 %v1468
        %v1529 = vpop.f32.mrf.mxu0
        %v1530 = vadd.f32 0.0, %v1529
        %v1531 = vpop.f32.mrf.mxu0
        %v1532 = vadd.f32 0.0, %v1531
        %1533 = vmatmul.bf16.gmra.mxu0 %v1471
        %v1534 = vpop.f32.mrf.mxu0
        %v1535 = vadd.f32 0.0, %v1534
        %v1536 = vpop.f32.mrf.mxu0
        %v1537 = vadd.f32 0.0, %v1536
        %1538 = vmatmul.bf16.gmra.mxu0 %v1474
        %v1539 = vpop.f32.mrf.mxu0
        %v1540 = vadd.f32 0.0, %v1539
        %v1541 = vpop.f32.mrf.mxu0
        %v1542 = vadd.f32 0.0, %v1541
        %1543 = vmatmul.bf16.gmra.mxu0 %v1477
        %v1544 = vpop.f32.mrf.mxu0
        %v1545 = vadd.f32 0.0, %v1544
        %v1546 = vpop.f32.mrf.mxu0
        %v1547 = vadd.f32 0.0, %v1546
        %1548 = vmatmul.bf16.gmra.mxu0 %v1480
        %v1549 = vpop.f32.mrf.mxu0
        %v1550 = vadd.f32 0.0, %v1549
        %v1551 = vpop.f32.mrf.mxu0
        %v1552 = vadd.f32 0.0, %v1551
        %1553 = vmatmul.bf16.gmra.mxu0 %v1483
        %v1554 = vpop.f32.mrf.mxu0
        %v1555 = vadd.f32 0.0, %v1554
        %v1556 = vpop.f32.mrf.mxu0
        %v1557 = vadd.f32 0.0, %v1556
        %1558 = vmatmul.bf16.gmra.mxu0 %v1486
        %v1559 = vpop.f32.mrf.mxu0
        %v1560 = vadd.f32 0.0, %v1559
        %v1561 = vpop.f32.mrf.mxu0
        %v1562 = vadd.f32 0.0, %v1561
        %1563 = vmatmul.bf16.gmra.mxu0 %v1489
        %v1564 = vpop.f32.mrf.mxu0
        %v1565 = vadd.f32 0.0, %v1564
        %v1566 = vpop.f32.mrf.mxu0
        %v1567 = vadd.f32 0.0, %v1566
        %1568 = vmatmul.bf16.gmra.mxu0 %v1492
        %v1569 = vpop.f32.mrf.mxu0
        %v1570 = vadd.f32 0.0, %v1569
        %v1571 = vpop.f32.mrf.mxu0
        %v1572 = vadd.f32 0.0, %v1571
        %1573 = vmatmul.bf16.gmra.mxu0 %v1495
        %v1574 = vpop.f32.mrf.mxu0
        %v1575 = vadd.f32 0.0, %v1574
        %v1576 = vpop.f32.mrf.mxu0
        %v1577 = vadd.f32 0.0, %v1576
        %1578 = vmatmul.bf16.gmra.mxu0 %v1498
        %v1579 = vpop.f32.mrf.mxu0
        %v1580 = vadd.f32 0.0, %v1579
        %v1581 = vpop.f32.mrf.mxu0
        %v1582 = vadd.f32 0.0, %v1581
        %1583 = vmatmul.bf16.gmra.mxu0 %v1501
        %v1584 = vpop.f32.mrf.mxu0
        %v1585 = vadd.f32 0.0, %v1584
        %v1586 = vpop.f32.mrf.mxu0
        %v1587 = vadd.f32 0.0, %v1586
        %1588 = vmatmul.bf16.gmra.mxu0 %v1504
        %v1589 = vpop.f32.mrf.mxu0
        %v1590 = vadd.f32 0.0, %v1589
        %v1591 = vpop.f32.mrf.mxu0
        %v1592 = vadd.f32 0.0, %v1591
        %1593 = vmatmul.bf16.gmra.mxu0 %v1507
        %v1594 = vpop.f32.mrf.mxu0
        %v1595 = vadd.f32 0.0, %v1594
        %v1596 = vpop.f32.mrf.mxu0
        %v1597 = vadd.f32 0.0, %v1596
        %1598 = vmatmul.bf16.gmra.mxu0 %v1510
        %v1599 = vpop.f32.mrf.mxu0
        %v1600 = vadd.f32 0.0, %v1599
        %v1601 = vpop.f32.mrf.mxu0
        %v1602 = vadd.f32 0.0, %v1601
        %1603 = vmatmul.bf16.gmra.mxu0 %v1513
        %v1604 = vpop.f32.mrf.mxu0
        %v1605 = vadd.f32 0.0, %v1604
        %v1606 = vpop.f32.mrf.mxu0
        %v1607 = vadd.f32 0.0, %v1606
        %1608 = vdwg.mxu0
        %v1609 = vmax.f32 %v1310, %v1525
        %v1610 = vmax.f32 %v1311, %v1527
        %v1611 = vmax.f32 %v1312, %v1530
        %v1612 = vmax.f32 %v1313, %v1532
        %v1613 = vmax.f32 %v1314, %v1535
        %v1614 = vmax.f32 %v1315, %v1537
        %v1615 = vmax.f32 %v1316, %v1540
        %v1616 = vmax.f32 %v1317, %v1542
        %v1617 = vmax.f32 %v1318, %v1545
        %v1618 = vmax.f32 %v1319, %v1547
        %v1619 = vmax.f32 %v1320, %v1550
        %v1620 = vmax.f32 %v1321, %v1552
        %v1621 = vmax.f32 %v1322, %v1555
        %v1622 = vmax.f32 %v1323, %v1557
        %v1623 = vmax.f32 %v1324, %v1560
        %v1624 = vmax.f32 %v1325, %v1562
        %v1625 = vmax.f32 %v1326, %v1565
        %v1626 = vmax.f32 %v1327, %v1567
        %v1627 = vmax.f32 %v1328, %v1570
        %v1628 = vmax.f32 %v1329, %v1572
        %v1629 = vmax.f32 %v1330, %v1575
        %v1630 = vmax.f32 %v1331, %v1577
        %v1631 = vmax.f32 %v1332, %v1580
        %v1632 = vmax.f32 %v1333, %v1582
        %v1633 = vmax.f32 %v1334, %v1585
        %v1634 = vmax.f32 %v1335, %v1587
        %v1635 = vmax.f32 %v1336, %v1590
        %v1636 = vmax.f32 %v1337, %v1592
        %v1637 = vmax.f32 %v1338, %v1595
        %v1638 = vmax.f32 %v1339, %v1597
        %v1639 = vmax.f32 %v1340, %v1600
        %v1640 = vmax.f32 %v1341, %v1602
        %v1641 = vmax.f32 %v1342, %v1605
        %v1642 = vmax.f32 %v1343, %v1607
        %s1643 = scalar_lea.vmem %s729, 408 [#allocation2]
        %v1644 = vld [vmem:[%s1643] sm:$0xf]
        %v1645 = vld [vmem:[%s1643 + $0x4] sm:$0xf]
        %v1646 = vld [vmem:[%s1643 + $0x8] sm:$0xf]
        %v1647 = vld [vmem:[%s1643 + $0xc] sm:$0xf]
        %v1648 = vld [vmem:[%s1643 + $0x10] sm:$0xf]
        %v1649 = vld [vmem:[%s1643 + $0x14] sm:$0xf]
        %v1650 = vld [vmem:[%s1643 + $0x18] sm:$0xf]
        %v1651 = vld [vmem:[%s1643 + $0x1c] sm:$0xf]
        %v1652 = vld [vmem:[%s1643 + $0x20] sm:$0xf]
        %v1653 = vld [vmem:[%s1643 + $0x24] sm:$0xf]
        %v1654 = vld [vmem:[%s1643 + $0x28] sm:$0xf]
        %v1655 = vld [vmem:[%s1643 + $0x2c] sm:$0xf]
        %v1656 = vld [vmem:[%s1643 + $0x30] sm:$0xf]
        %v1657 = vld [vmem:[%s1643 + $0x34] sm:$0xf]
        %v1658 = vld [vmem:[%s1643 + $0x38] sm:$0xf]
        %v1659 = vld [vmem:[%s1643 + $0x3c] sm:$0xf]
        %v1660 = vld [vmem:[%s1643 + $0x40] sm:$0xf]
        %v1661 = vld [vmem:[%s1643 + $0x44] sm:$0xf]
        %v1662 = vld [vmem:[%s1643 + $0x48] sm:$0xf]
        %v1663 = vld [vmem:[%s1643 + $0x4c] sm:$0xf]
        %v1664 = vld [vmem:[%s1643 + $0x50] sm:$0xf]
        %v1665 = vld [vmem:[%s1643 + $0x54] sm:$0xf]
        %v1666 = vld [vmem:[%s1643 + $0x58] sm:$0xf]
        %v1667 = vld [vmem:[%s1643 + $0x5c] sm:$0xf]
        %v1668 = vld [vmem:[%s1643 + $0x60] sm:$0xf]
        %v1669 = vld [vmem:[%s1643 + $0x64] sm:$0xf]
        %v1670 = vld [vmem:[%s1643 + $0x68] sm:$0xf]
        %v1671 = vld [vmem:[%s1643 + $0x6c] sm:$0xf]
        %v1672 = vld [vmem:[%s1643 + $0x70] sm:$0xf]
        %v1673 = vld [vmem:[%s1643 + $0x74] sm:$0xf]
        %v1674 = vld [vmem:[%s1643 + $0x78] sm:$0xf]
        %v1675 = vld [vmem:[%s1643 + $0x7c] sm:$0xf]
        %v1676 = vld [vmem:[%s1643 + $0x80] sm:$0xf]
        %v1677 = vld [vmem:[%s1643 + $0x84] sm:$0xf]
        %v1712 = vunpack.c.l.b16 %v1644
        %v1713 = vunpack.c.l.b16 %v1645
        %v1714 = vunpack.c.l.b16 %v1646
        %v1715 = vunpack.c.l.b16 %v1647
        %v1716 = vunpack.c.l.b16 %v1648
        %v1717 = vunpack.c.l.b16 %v1649
        %v1718 = vunpack.c.l.b16 %v1650
        %v1719 = vunpack.c.l.b16 %v1651
        %v1720 = vunpack.c.l.b16 %v1652
        %v1721 = vunpack.c.l.b16 %v1653
        %v1722 = vunpack.c.l.b16 %v1654
        %v1723 = vunpack.c.l.b16 %v1655
        %v1724 = vunpack.c.l.b16 %v1656
        %v1725 = vunpack.c.l.b16 %v1657
        %v1726 = vunpack.c.l.b16 %v1658
        %v1727 = vunpack.c.l.b16 %v1659
        %v1728 = vunpack.c.l.b16 %v1660
        %v1729 = vunpack.c.l.b16 %v1661
        %v1730 = vunpack.c.l.b16 %v1662
        %v1731 = vunpack.c.l.b16 %v1663
        %v1732 = vunpack.c.l.b16 %v1664
        %v1733 = vunpack.c.l.b16 %v1665
        %v1734 = vunpack.c.l.b16 %v1666
        %v1735 = vunpack.c.l.b16 %v1667
        %v1736 = vunpack.c.l.b16 %v1668
        %v1737 = vunpack.c.l.b16 %v1669
        %v1738 = vunpack.c.l.b16 %v1670
        %v1739 = vunpack.c.l.b16 %v1671
        %v1740 = vunpack.c.l.b16 %v1672
        %v1741 = vunpack.c.l.b16 %v1673
        %v1742 = vunpack.c.l.b16 %v1674
        %v1743 = vunpack.c.l.b16 %v1675
        %v1744 = vunpack.c.l.b16 %v1676
        %v1745 = vunpack.c.l.b16 %v1677
        %v1746 = vpack.c.b16 %v1713, %v1712
        %v1747 = vpack.c.b16 %v1715, %v1714
        %v1748 = vpack.c.b16 %v1717, %v1716
        %v1749 = vpack.c.b16 %v1719, %v1718
        %v1750 = vpack.c.b16 %v1721, %v1720
        %v1751 = vpack.c.b16 %v1723, %v1722
        %v1752 = vpack.c.b16 %v1725, %v1724
        %v1753 = vpack.c.b16 %v1727, %v1726
        %v1754 = vpack.c.b16 %v1729, %v1728
        %v1755 = vpack.c.b16 %v1731, %v1730
        %v1756 = vpack.c.b16 %v1733, %v1732
        %v1757 = vpack.c.b16 %v1735, %v1734
        %v1758 = vpack.c.b16 %v1737, %v1736
        %v1759 = vpack.c.b16 %v1739, %v1738
        %v1760 = vpack.c.b16 %v1741, %v1740
        %v1761 = vpack.c.b16 %v1743, %v1742
        %v1762 = vpack.c.b16 %v1745, %v1744
        %v1764 = vsel %vm892, %v1746, 0
        %v1767 = vsel %vm892, %v1747, 0
        %v1770 = vsel %vm892, %v1748, 0
        %v1773 = vsel %vm892, %v1749, 0
        %v1776 = vsel %vm892, %v1750, 0
        %v1779 = vsel %vm892, %v1751, 0
        %v1782 = vsel %vm892, %v1752, 0
        %v1785 = vsel %vm892, %v1753, 0
        %v1788 = vsel %vm892, %v1754, 0
        %v1791 = vsel %vm892, %v1755, 0
        %v1794 = vsel %vm892, %v1756, 0
        %v1797 = vsel %vm892, %v1757, 0
        %v1800 = vsel %vm892, %v1758, 0
        %v1803 = vsel %vm892, %v1759, 0
        %v1806 = vsel %vm892, %v1760, 0
        %v1809 = vsel %vm892, %v1761, 0
        %v1812 = vsel %vm892, %v1762, 0
        %1814 = vmatpush.bf16.msra.mxu0 0
        %1815 = vmatpush.bf16.msra.mxu0 0
        %1816 = vmatpush.bf16.msra.mxu0 0
        %1817 = vmatpush.bf16.msra.mxu0 0
        %1818 = vmatpush.bf16.msra.mxu0 0
        %1819 = vmatpush.bf16.msra.mxu0 0
        %1820 = vmatpush.bf16.msra.mxu0 %v949
        %1821 = vmatpush.bf16.msra.mxu0 %v889
        %1822 = vmatmul.bf16.gmra.mxu0 %v1764
        %v1823 = vpop.f32.mrf.mxu0
        %v1824 = vadd.f32 0.0, %v1823
        %v1825 = vpop.f32.mrf.mxu0
        %v1826 = vadd.f32 0.0, %v1825
        %1827 = vmatmul.bf16.gmra.mxu0 %v1767
        %v1828 = vpop.f32.mrf.mxu0
        %v1829 = vadd.f32 0.0, %v1828
        %v1830 = vpop.f32.mrf.mxu0
        %v1831 = vadd.f32 0.0, %v1830
        %1832 = vmatmul.bf16.gmra.mxu0 %v1770
        %v1833 = vpop.f32.mrf.mxu0
        %v1834 = vadd.f32 0.0, %v1833
        %v1835 = vpop.f32.mrf.mxu0
        %v1836 = vadd.f32 0.0, %v1835
        %1837 = vmatmul.bf16.gmra.mxu0 %v1773
        %v1838 = vpop.f32.mrf.mxu0
        %v1839 = vadd.f32 0.0, %v1838
        %v1840 = vpop.f32.mrf.mxu0
        %v1841 = vadd.f32 0.0, %v1840
        %1842 = vmatmul.bf16.gmra.mxu0 %v1776
        %v1843 = vpop.f32.mrf.mxu0
        %v1844 = vadd.f32 0.0, %v1843
        %v1845 = vpop.f32.mrf.mxu0
        %v1846 = vadd.f32 0.0, %v1845
        %1847 = vmatmul.bf16.gmra.mxu0 %v1779
        %v1848 = vpop.f32.mrf.mxu0
        %v1849 = vadd.f32 0.0, %v1848
        %v1850 = vpop.f32.mrf.mxu0
        %v1851 = vadd.f32 0.0, %v1850
        %1852 = vmatmul.bf16.gmra.mxu0 %v1782
        %v1853 = vpop.f32.mrf.mxu0
        %v1854 = vadd.f32 0.0, %v1853
        %v1855 = vpop.f32.mrf.mxu0
        %v1856 = vadd.f32 0.0, %v1855
        %1857 = vmatmul.bf16.gmra.mxu0 %v1785
        %v1858 = vpop.f32.mrf.mxu0
        %v1859 = vadd.f32 0.0, %v1858
        %v1860 = vpop.f32.mrf.mxu0
        %v1861 = vadd.f32 0.0, %v1860
        %1862 = vmatmul.bf16.gmra.mxu0 %v1788
        %v1863 = vpop.f32.mrf.mxu0
        %v1864 = vadd.f32 0.0, %v1863
        %v1865 = vpop.f32.mrf.mxu0
        %v1866 = vadd.f32 0.0, %v1865
        %1867 = vmatmul.bf16.gmra.mxu0 %v1791
        %v1868 = vpop.f32.mrf.mxu0
        %v1869 = vadd.f32 0.0, %v1868
        %v1870 = vpop.f32.mrf.mxu0
        %v1871 = vadd.f32 0.0, %v1870
        %1872 = vmatmul.bf16.gmra.mxu0 %v1794
        %v1873 = vpop.f32.mrf.mxu0
        %v1874 = vadd.f32 0.0, %v1873
        %v1875 = vpop.f32.mrf.mxu0
        %v1876 = vadd.f32 0.0, %v1875
        %1877 = vmatmul.bf16.gmra.mxu0 %v1797
        %v1878 = vpop.f32.mrf.mxu0
        %v1879 = vadd.f32 0.0, %v1878
        %v1880 = vpop.f32.mrf.mxu0
        %v1881 = vadd.f32 0.0, %v1880
        %1882 = vmatmul.bf16.gmra.mxu0 %v1800
        %v1883 = vpop.f32.mrf.mxu0
        %v1884 = vadd.f32 0.0, %v1883
        %v1885 = vpop.f32.mrf.mxu0
        %v1886 = vadd.f32 0.0, %v1885
        %1887 = vmatmul.bf16.gmra.mxu0 %v1803
        %v1888 = vpop.f32.mrf.mxu0
        %v1889 = vadd.f32 0.0, %v1888
        %v1890 = vpop.f32.mrf.mxu0
        %v1891 = vadd.f32 0.0, %v1890
        %1892 = vmatmul.bf16.gmra.mxu0 %v1806
        %v1893 = vpop.f32.mrf.mxu0
        %v1894 = vadd.f32 0.0, %v1893
        %v1895 = vpop.f32.mrf.mxu0
        %v1896 = vadd.f32 0.0, %v1895
        %1897 = vmatmul.bf16.gmra.mxu0 %v1809
        %v1898 = vpop.f32.mrf.mxu0
        %v1899 = vadd.f32 0.0, %v1898
        %v1900 = vpop.f32.mrf.mxu0
        %v1901 = vadd.f32 0.0, %v1900
        %1902 = vmatmul.bf16.gmra.mxu0 %v1812
        %v1903 = vpop.f32.mrf.mxu0
        %v1904 = vadd.f32 0.0, %v1903
        %v1905 = vpop.f32.mrf.mxu0
        %v1906 = vadd.f32 0.0, %v1905
        %1907 = vdwg.mxu0
        %v1908 = vmax.f32 %v1609, %v1824
        %v1909 = vmax.f32 %v1610, %v1826
        %v1910 = vmax.f32 %v1611, %v1829
        %v1911 = vmax.f32 %v1612, %v1831
        %v1912 = vmax.f32 %v1613, %v1834
        %v1913 = vmax.f32 %v1614, %v1836
        %v1914 = vmax.f32 %v1615, %v1839
        %v1915 = vmax.f32 %v1616, %v1841
        %v1916 = vmax.f32 %v1617, %v1844
        %v1917 = vmax.f32 %v1618, %v1846
        %v1918 = vmax.f32 %v1619, %v1849
        %v1919 = vmax.f32 %v1620, %v1851
        %v1920 = vmax.f32 %v1621, %v1854
        %v1921 = vmax.f32 %v1622, %v1856
        %v1922 = vmax.f32 %v1623, %v1859
        %v1923 = vmax.f32 %v1624, %v1861
        %v1924 = vmax.f32 %v1625, %v1864
        %v1925 = vmax.f32 %v1626, %v1866
        %v1926 = vmax.f32 %v1627, %v1869
        %v1927 = vmax.f32 %v1628, %v1871
        %v1928 = vmax.f32 %v1629, %v1874
        %v1929 = vmax.f32 %v1630, %v1876
        %v1930 = vmax.f32 %v1631, %v1879
        %v1931 = vmax.f32 %v1632, %v1881
        %v1932 = vmax.f32 %v1633, %v1884
        %v1933 = vmax.f32 %v1634, %v1886
        %v1934 = vmax.f32 %v1635, %v1889
        %v1935 = vmax.f32 %v1636, %v1891
        %v1936 = vmax.f32 %v1637, %v1894
        %v1937 = vmax.f32 %v1638, %v1896
        %v1938 = vmax.f32 %v1639, %v1899
        %v1939 = vmax.f32 %v1640, %v1901
        %v1940 = vmax.f32 %v1641, %v1904
        %v1941 = vmax.f32 %v1642, %v1906
        %v1942 = vld [vmem:[%s2] sm:$0x1]
        %v1944 = vperm.slane %v1942, 0
        %v1946 = vadd.f32 %v1908, %v1944
        %v1947 = vadd.f32 %v1909, %v1944
        %v1948 = vadd.f32 %v1910, %v1944
        %v1949 = vadd.f32 %v1911, %v1944
        %v1950 = vadd.f32 %v1912, %v1944
        %v1951 = vadd.f32 %v1913, %v1944
        %v1952 = vadd.f32 %v1914, %v1944
        %v1953 = vadd.f32 %v1915, %v1944
        %v1954 = vadd.f32 %v1916, %v1944
        %v1955 = vadd.f32 %v1917, %v1944
        %v1956 = vadd.f32 %v1918, %v1944
        %v1957 = vadd.f32 %v1919, %v1944
        %v1958 = vadd.f32 %v1920, %v1944
        %v1959 = vadd.f32 %v1921, %v1944
        %v1960 = vadd.f32 %v1922, %v1944
        %v1961 = vadd.f32 %v1923, %v1944
        %v1962 = vadd.f32 %v1924, %v1944
        %v1963 = vadd.f32 %v1925, %v1944
        %v1964 = vadd.f32 %v1926, %v1944
        %v1965 = vadd.f32 %v1927, %v1944
        %v1966 = vadd.f32 %v1928, %v1944
        %v1967 = vadd.f32 %v1929, %v1944
        %v1968 = vadd.f32 %v1930, %v1944
        %v1969 = vadd.f32 %v1931, %v1944
        %v1970 = vadd.f32 %v1932, %v1944
        %v1971 = vadd.f32 %v1933, %v1944
        %v1972 = vadd.f32 %v1934, %v1944
        %v1973 = vadd.f32 %v1935, %v1944
        %v1974 = vadd.f32 %v1936, %v1944
        %v1975 = vadd.f32 %v1937, %v1944
        %v1976 = vadd.f32 %v1938, %v1944
        %v1977 = vadd.f32 %v1939, %v1944
        %v1978 = vadd.f32 %v1940, %v1944
        %v1979 = vadd.f32 %v1941, %v1944
        %v1980 = vmax.f32 %v1946, 0.0
        %v1981 = vmax.f32 %v1947, 0.0
        %v1982 = vmax.f32 %v1948, 0.0
        %v1983 = vmax.f32 %v1949, 0.0
        %v1984 = vmax.f32 %v1950, 0.0
        %v1985 = vmax.f32 %v1951, 0.0
        %v1986 = vmax.f32 %v1952, 0.0
        %v1987 = vmax.f32 %v1953, 0.0
        %v1988 = vmax.f32 %v1954, 0.0
        %v1989 = vmax.f32 %v1955, 0.0
        %v1990 = vmax.f32 %v1956, 0.0
        %v1991 = vmax.f32 %v1957, 0.0
        %v1992 = vmax.f32 %v1958, 0.0
        %v1993 = vmax.f32 %v1959, 0.0
        %v1994 = vmax.f32 %v1960, 0.0
        %v1995 = vmax.f32 %v1961, 0.0
        %v1996 = vmax.f32 %v1962, 0.0
        %v1997 = vmax.f32 %v1963, 0.0
        %v1998 = vmax.f32 %v1964, 0.0
        %v1999 = vmax.f32 %v1965, 0.0
        %v2000 = vmax.f32 %v1966, 0.0
        %v2001 = vmax.f32 %v1967, 0.0
        %v2002 = vmax.f32 %v1968, 0.0
        %v2003 = vmax.f32 %v1969, 0.0
        %v2004 = vmax.f32 %v1970, 0.0
        %v2005 = vmax.f32 %v1971, 0.0
        %v2006 = vmax.f32 %v1972, 0.0
        %v2007 = vmax.f32 %v1973, 0.0
        %v2008 = vmax.f32 %v1974, 0.0
        %v2009 = vmax.f32 %v1975, 0.0
        %v2010 = vmax.f32 %v1976, 0.0
        %v2011 = vmax.f32 %v1977, 0.0
        %v2012 = vmax.f32 %v1978, 0.0
        %v2013 = vmax.f32 %v1979, 0.0
        %v2014 = vpack.c.bf16 %v1980, %v1980
        %v2015 = vpack.c.bf16 %v1981, %v1981
        %v2016 = vpack.c.bf16 %v1982, %v1982
        %v2017 = vpack.c.bf16 %v1983, %v1983
        %v2018 = vpack.c.bf16 %v1984, %v1984
        %v2019 = vpack.c.bf16 %v1985, %v1985
        %v2020 = vpack.c.bf16 %v1986, %v1986
        %v2021 = vpack.c.bf16 %v1987, %v1987
        %v2022 = vpack.c.bf16 %v1988, %v1988
        %v2023 = vpack.c.bf16 %v1989, %v1989
        %v2024 = vpack.c.bf16 %v1990, %v1990
        %v2025 = vpack.c.bf16 %v1991, %v1991
        %v2026 = vpack.c.bf16 %v1992, %v1992
        %v2027 = vpack.c.bf16 %v1993, %v1993
        %v2028 = vpack.c.bf16 %v1994, %v1994
        %v2029 = vpack.c.bf16 %v1995, %v1995
        %v2030 = vpack.c.bf16 %v1996, %v1996
        %v2031 = vpack.c.bf16 %v1997, %v1997
        %v2032 = vpack.c.bf16 %v1998, %v1998
        %v2033 = vpack.c.bf16 %v1999, %v1999
        %v2034 = vpack.c.bf16 %v2000, %v2000
        %v2035 = vpack.c.bf16 %v2001, %v2001
        %v2036 = vpack.c.bf16 %v2002, %v2002
        %v2037 = vpack.c.bf16 %v2003, %v2003
        %v2038 = vpack.c.bf16 %v2004, %v2004
        %v2039 = vpack.c.bf16 %v2005, %v2005
        %v2040 = vpack.c.bf16 %v2006, %v2006
        %v2041 = vpack.c.bf16 %v2007, %v2007
        %v2042 = vpack.c.bf16 %v2008, %v2008
        %v2043 = vpack.c.bf16 %v2009, %v2009
        %v2044 = vpack.c.bf16 %v2010, %v2010
        %v2045 = vpack.c.bf16 %v2011, %v2011
        %v2046 = vpack.c.bf16 %v2012, %v2012
        %v2047 = vpack.c.bf16 %v2013, %v2013
        %vm2048 = vcmask 125952
        %2049 = vst.msk [vmem:[%s755] sm:$0xf] %vm2048, %v2014
        %2050 = vst.msk [vmem:[%s755 + $0x4] sm:$0xf] %vm2048, %v2015
        %2051 = vst.msk [vmem:[%s755 + $0x8] sm:$0xf] %vm2048, %v2016
        %2052 = vst.msk [vmem:[%s755 + $0xc] sm:$0xf] %vm2048, %v2017
        %2053 = vst.msk [vmem:[%s755 + $0x10] sm:$0xf] %vm2048, %v2018
        %2054 = vst.msk [vmem:[%s755 + $0x14] sm:$0xf] %vm2048, %v2019
        %2055 = vst.msk [vmem:[%s755 + $0x18] sm:$0xf] %vm2048, %v2020
        %2056 = vst.msk [vmem:[%s755 + $0x1c] sm:$0xf] %vm2048, %v2021
        %2057 = vst.msk [vmem:[%s755 + $0x20] sm:$0xf] %vm2048, %v2022
        %2058 = vst.msk [vmem:[%s755 + $0x24] sm:$0xf] %vm2048, %v2023
        %2059 = vst.msk [vmem:[%s755 + $0x28] sm:$0xf] %vm2048, %v2024
        %2060 = vst.msk [vmem:[%s755 + $0x2c] sm:$0xf] %vm2048, %v2025
        %2061 = vst.msk [vmem:[%s755 + $0x30] sm:$0xf] %vm2048, %v2026
        %2062 = vst.msk [vmem:[%s755 + $0x34] sm:$0xf] %vm2048, %v2027
        %2063 = vst.msk [vmem:[%s755 + $0x38] sm:$0xf] %vm2048, %v2028
        %2064 = vst.msk [vmem:[%s755 + $0x3c] sm:$0xf] %vm2048, %v2029
        %2065 = vst.msk [vmem:[%s755 + $0x40] sm:$0xf] %vm2048, %v2030
        %2066 = vst.msk [vmem:[%s755 + $0x44] sm:$0xf] %vm2048, %v2031
        %2067 = vst.msk [vmem:[%s755 + $0x48] sm:$0xf] %vm2048, %v2032
        %2068 = vst.msk [vmem:[%s755 + $0x4c] sm:$0xf] %vm2048, %v2033
        %2069 = vst.msk [vmem:[%s755 + $0x50] sm:$0xf] %vm2048, %v2034
        %2070 = vst.msk [vmem:[%s755 + $0x54] sm:$0xf] %vm2048, %v2035
        %2071 = vst.msk [vmem:[%s755 + $0x58] sm:$0xf] %vm2048, %v2036
        %2072 = vst.msk [vmem:[%s755 + $0x5c] sm:$0xf] %vm2048, %v2037
        %2073 = vst.msk [vmem:[%s755 + $0x60] sm:$0xf] %vm2048, %v2038
        %2074 = vst.msk [vmem:[%s755 + $0x64] sm:$0xf] %vm2048, %v2039
        %2075 = vst.msk [vmem:[%s755 + $0x68] sm:$0xf] %vm2048, %v2040
        %2076 = vst.msk [vmem:[%s755 + $0x6c] sm:$0xf] %vm2048, %v2041
        %2077 = vst.msk [vmem:[%s755 + $0x70] sm:$0xf] %vm2048, %v2042
        %2078 = vst.msk [vmem:[%s755 + $0x74] sm:$0xf] %vm2048, %v2043
        %2079 = vst.msk [vmem:[%s755 + $0x78] sm:$0xf] %vm2048, %v2044
        %2080 = vst.msk [vmem:[%s755 + $0x7c] sm:$0xf] %vm2048, %v2045
        %2081 = vst.msk [vmem:[%s755 + $0x80] sm:$0xf] %vm2048, %v2046
        %2082 = vst.msk [vmem:[%s755 + $0x84] sm:$0xf] %vm2048, %v2047
        %s2083 = smul.u32 34, %s14
        %p2084 = scmp.lt.s32.totalorder %s2083, 135
        %s2085 = scalar_select %p2084, %s2083, 135
        %s2086 = smul.addr %s2085, 4
        %s2087 = scalar_lea.vmem %s3, %s2086
        // Predicated region
        $region74: #{net_forward.3} parent=68 // pred_check
          %p2088 = pneg %p100
        $region75: #{net_forward.3} parent=68 // pred_check_branch
          %2090 = sbr.rel (%p2088) target = $region77
        $region76: #{net_forward.3} parent=68 // pred_region
          %s2091 = smul.u32 34, %s14
        $region77: #{net_forward.3} parent=68 // pred_fallthru
          _
      $region69: #{net_forward.3} parent=5 // pred_fallthru
        _
      %p2092 = scmp.le.s32.totalorder 2, %s9
      // Predicated region
      $region78: #{net_forward.3} parent=5 // pred_check
        %p2093 = pneg %p2092
      $region79: #{net_forward.3} parent=5 // pred_check_branch
        %2095 = sbr.rel (%p2093) target = $region81
      $region80: #{net_forward.3} parent=5 // pred_region
        %s2096 = ssub.s32 %s9, 2
        // Predicated region
        $region82: #{net_forward.3} parent=80 // pred_check
          %p2097 = pneg %p106
        $region83: #{net_forward.3} parent=80 // pred_check_branch
          %2099 = sbr.rel (%p2097) target = $region85
        $region84: #{net_forward.3} parent=80 // pred_region
          %s2100 = smul.u32 34, %s15
          %p2101 = scmp.lt.s32.totalorder %s2100, 135
          %s2102 = scalar_select %p2101, %s2100, 135
          %s2103 = smul.addr %s2102, 4
          %s2104 = scalar_lea.vmem %s3, %s2103
        $region85: #{net_forward.3} parent=80 // pred_fallthru
          _
      $region81: #{net_forward.3} parent=5 // pred_fallthru
        _
    $region6: #{net_forward.3} parent=1 // loop_footer
      %s13 = sadd.s32 1, %s9
    $region7: #{net_forward.3} parent=1 // loop_footer_branch
      %8 = sbr.rel target = $region3
    $region8: #{net_forward.3} parent=1 // loop_exit
      _

// kernel: net_forward.4
$region0: #{net_forward.4}
  #allocation0 [shape = 'u32[]', space=smem, size = 0x4, offset = 0x4, fixed_abs, tag = 'smem constant byte address 0x4 - core index']
  #allocation1 [shape = 'u32[72,128]{1,0:T(1,128)}', space=vmem, size = 0x9000, scoped, tag = 'internal scratch']
  %s0 = inlined_call_operand.vmem [shape: bf16[16,56,144], index: 0, kind: input, shape index: {}]
  %s1 = inlined_call_operand.vmem [shape: bf16[144,32], index: 1, kind: input, shape index: {}]
  %s2 = inlined_call_operand.vmem [shape: f32[1,32], index: 2, kind: input, shape index: {}]
  %s3 = inlined_call_operand.vmem [shape: bf16[56,32], index: 3, kind: output, shape index: {}]
  %s4 = sld [smem:[#allocation0]]
  $region22: #{net_forward.4} parent=0
    _
  %s6 = ssub.s32 1, %s4
  %s7 = scalar_select 0, %s6, %s4
  // Predicated region
  $region2: #{net_forward.4} parent=0 // pred_check
    _
  $region3: #{net_forward.4} parent=0 // pred_check_branch
    %9 = sbr.rel (0) target = $region5
  $region4: #{net_forward.4} parent=0 // pred_region
    _
  $region5: #{net_forward.4} parent=0 // pred_fallthru
    _
  // Predicated region
  $region6: #{net_forward.4} parent=0 // pred_check
    _
  $region7: #{net_forward.4} parent=0 // pred_check_branch
    %11 = sbr.rel (0) target = $region9
  $region8: #{net_forward.4} parent=0 // pred_region
    _
  $region9: #{net_forward.4} parent=0 // pred_fallthru
    _
  // Predicated region
  $region10: #{net_forward.4} parent=0 // pred_check
    _
  $region11: #{net_forward.4} parent=0 // pred_check_branch
    %13 = sbr.rel (0) target = $region13
  $region12: #{net_forward.4} parent=0 // pred_region
    _
  $region13: #{net_forward.4} parent=0 // pred_fallthru
    _
  %v15 = vld [vmem:[%s1] sm:$0xf]
  %v16 = vld [vmem:[%s1 + $0x4] sm:$0xf]
  %v17 = vld [vmem:[%s1 + $0x8] sm:$0xf]
  %v18 = vld [vmem:[%s1 + $0xc] sm:$0xf]
  %v19 = vld [vmem:[%s1 + $0x10] sm:$0xf]
  %v20 = vld [vmem:[%s1 + $0x14] sm:$0xf]
  %v21 = vld [vmem:[%s1 + $0x18] sm:$0xf]
  %v22 = vld [vmem:[%s1 + $0x1c] sm:$0xf]
  %v23 = vld [vmem:[%s1 + $0x20] sm:$0xf]
  %v24 = vld [vmem:[%s1 + $0x24] sm:$0xf]
  %v25 = vld [vmem:[%s1 + $0x28] sm:$0xf]
  %v26 = vld [vmem:[%s1 + $0x2c] sm:$0xf]
  %v27 = vld [vmem:[%s1 + $0x30] sm:$0xf]
  %v28 = vld [vmem:[%s1 + $0x34] sm:$0xf]
  %v29 = vld [vmem:[%s1 + $0x38] sm:$0xf]
  %v30 = vld [vmem:[%s1 + $0x3c] sm:$0xf]
  %v31 = vld [vmem:[%s1 + $0x40] sm:$0xf]
  %v32 = vld [vmem:[%s1 + $0x44] sm:$0xf]
  %v33 = vld [vmem:[%s0] sm:$0xff]
  %v34 = vld [vmem:[%s0 + $0x8] sm:$0xff]
  %v35 = vld [vmem:[%s0 + $0x10] sm:$0xff]
  %v36 = vld [vmem:[%s0 + $0x18] sm:$0xff]
  %v37 = vld [vmem:[%s0 + $0x20] sm:$0xff]
  %v38 = vld [vmem:[%s0 + $0x28] sm:$0xff]
  %v39 = vld [vmem:[%s0 + $0x30] sm:$0xff]
  %v47 = vunpack.c.l.b16 %v33
  %v48 = vunpack.c.h.b16 %v33
  %v49 = vunpack.c.l.b16 %v34
  %v50 = vunpack.c.h.b16 %v34
  %v51 = vunpack.c.l.b16 %v35
  %v52 = vunpack.c.h.b16 %v35
  %v53 = vunpack.c.l.b16 %v36
  %v54 = vunpack.c.h.b16 %v36
  %v55 = vunpack.c.l.b16 %v37
  %v56 = vunpack.c.h.b16 %v37
  %v57 = vunpack.c.l.b16 %v38
  %v58 = vunpack.c.h.b16 %v38
  %v59 = vunpack.c.l.b16 %v39
  %v60 = vunpack.c.h.b16 %v39
  %v61 = vpack.c.b16 %v49, %v47
  %v62 = vpack.c.b16 %v50, %v48
  %v63 = vpack.c.b16 %v53, %v51
  %v64 = vpack.c.b16 %v54, %v52
  %v65 = vpack.c.b16 %v57, %v55
  %v66 = vpack.c.b16 %v58, %v56
  %v67 = vpack.c.b16 %v59, %v59
  %v68 = vpack.c.b16 %v60, %v60
  %v91 = vunpack.c.l.b16 %v15
  %v92 = vunpack.c.l.b16 %v16
  %v93 = vunpack.c.l.b16 %v17
  %v94 = vunpack.c.l.b16 %v18
  %v95 = vunpack.c.l.b16 %v19
  %v96 = vunpack.c.l.b16 %v20
  %v97 = vunpack.c.l.b16 %v21
  %v98 = vunpack.c.l.b16 %v22
  %v99 = vunpack.c.l.b16 %v23
  %v100 = vunpack.c.l.b16 %v24
  %v101 = vunpack.c.l.b16 %v25
  %v102 = vunpack.c.l.b16 %v26
  %v103 = vunpack.c.l.b16 %v27
  %v104 = vunpack.c.l.b16 %v28
  %v105 = vunpack.c.l.b16 %v29
  %v106 = vunpack.c.l.b16 %v30
  %v107 = vunpack.c.l.b16 %v31
  %v108 = vunpack.c.l.b16 %v32
  %v109 = vpack.c.b16 %v92, %v91
  %v110 = vpack.c.b16 %v94, %v93
  %v111 = vpack.c.b16 %v96, %v95
  %v112 = vpack.c.b16 %v98, %v97
  %v113 = vpack.c.b16 %v100, %v99
  %v114 = vpack.c.b16 %v102, %v101
  %v115 = vpack.c.b16 %v104, %v103
  %v116 = vpack.c.b16 %v106, %v105
  %v117 = vpack.c.b16 %v108, %v107
  %vm127 = vcmask 130048
  %v129 = vsel %vm127, %v62, 0
  %v132 = vsel %vm127, %v64, 0
  %v135 = vsel %vm127, %v66, 0
  %v138 = vsel %vm127, %v68, 0
  %140 = vmatpush.bf16.msra.mxu0 %v116
  %141 = vmatpush.bf16.msra.mxu0 %v115
  %142 = vmatpush.bf16.msra.mxu0 %v114
  %143 = vmatpush.bf16.msra.mxu0 %v113
  %144 = vmatpush.bf16.msra.mxu0 %v112
  %145 = vmatpush.bf16.msra.mxu0 %v111
  %146 = vmatpush.bf16.msra.mxu0 %v110
  %147 = vmatpush.bf16.msra.mxu0 %v109
  %148 = vmatmul.bf16.gmra.mxu0 %v61
  %v149 = vpop.f32.mrf.mxu0
  %v150 = vadd.f32 0.0, %v149
  %v151 = vpop.f32.mrf.mxu0
  %v152 = vadd.f32 0.0, %v151
  %153 = vmatmul.bf16.gmra.mxu0 %v63
  %v154 = vpop.f32.mrf.mxu0
  %v155 = vadd.f32 0.0, %v154
  %v156 = vpop.f32.mrf.mxu0
  %v157 = vadd.f32 0.0, %v156
  %158 = vmatmul.bf16.gmra.mxu0 %v65
  %v159 = vpop.f32.mrf.mxu0
  %v160 = vadd.f32 0.0, %v159
  %v161 = vpop.f32.mrf.mxu0
  %v162 = vadd.f32 0.0, %v161
  %163 = vmatmul.bf16.gmra.mxu0 %v67
  %v164 = vpop.f32.mrf.mxu0
  %v165 = vadd.f32 0.0, %v164
  %v166 = vpop.f32.mrf.mxu0
  %167 = vdwg.mxu0
  %168 = vmatpush.bf16.msra.mxu0 0
  %169 = vmatpush.bf16.msra.mxu0 0
  %170 = vmatpush.bf16.msra.mxu0 0
  %171 = vmatpush.bf16.msra.mxu0 0
  %172 = vmatpush.bf16.msra.mxu0 0
  %173 = vmatpush.bf16.msra.mxu0 0
  %174 = vmatpush.bf16.msra.mxu0 0
  %175 = vmatpush.bf16.msra.mxu0 %v117
  %176 = vmatmul.bf16.gmra.mxu0 %v129
  %v177 = vpop.f32.mrf.mxu0
  %v178 = vadd.f32 %v150, %v177
  %v179 = vpop.f32.mrf.mxu0
  %v180 = vadd.f32 %v152, %v179
  %181 = vmatmul.bf16.gmra.mxu0 %v132
  %v182 = vpop.f32.mrf.mxu0
  %v183 = vadd.f32 %v155, %v182
  %v184 = vpop.f32.mrf.mxu0
  %v185 = vadd.f32 %v157, %v184
  %186 = vmatmul.bf16.gmra.mxu0 %v135
  %v187 = vpop.f32.mrf.mxu0
  %v188 = vadd.f32 %v160, %v187
  %v189 = vpop.f32.mrf.mxu0
  %v190 = vadd.f32 %v162, %v189
  %191 = vmatmul.bf16.gmra.mxu0 %v138
  %v192 = vpop.f32.mrf.mxu0
  %v193 = vadd.f32 %v165, %v192
  %v194 = vpop.f32.mrf.mxu0
  %195 = vdwg.mxu0
  %s196 = scalar_lea.vmem %s0, 56
  %v197 = vld [vmem:[%s196] sm:$0xff]
  %v198 = vld [vmem:[%s196 + $0x8] sm:$0xff]
  %v199 = vld [vmem:[%s196 + $0x10] sm:$0xff]
  %v200 = vld [vmem:[%s196 + $0x18] sm:$0xff]
  %v201 = vld [vmem:[%s196 + $0x20] sm:$0xff]
  %v202 = vld [vmem:[%s196 + $0x28] sm:$0xff]
  %v203 = vld [vmem:[%s196 + $0x30] sm:$0xff]
  %v211 = vunpack.c.l.b16 %v197
  %v212 = vunpack.c.h.b16 %v197
  %v213 = vunpack.c.l.b16 %v198
  %v214 = vunpack.c.h.b16 %v198
  %v215 = vunpack.c.l.b16 %v199
  %v216 = vunpack.c.h.b16 %v199
  %v217 = vunpack.c.l.b16 %v200
  %v218 = vunpack.c.h.b16 %v200
  %v219 = vunpack.c.l.b16 %v201
  %v220 = vunpack.c.h.b16 %v201
  %v221 = vunpack.c.l.b16 %v202
  %v222 = vunpack.c.h.b16 %v202
  %v223 = vunpack.c.l.b16 %v203
  %v224 = vunpack.c.h.b16 %v203
  %v225 = vpack.c.b16 %v213, %v211
  %v226 = vpack.c.b16 %v214, %v212
  %v227 = vpack.c.b16 %v217, %v215
  %v228 = vpack.c.b16 %v218, %v216
  %v229 = vpack.c.b16 %v221, %v219
  %v230 = vpack.c.b16 %v222, %v220
  %v231 = vpack.c.b16 %v223, %v223
  %v232 = vpack.c.b16 %v224, %v224
  %v238 = vsel %vm127, %v226, 0
  %v241 = vsel %vm127, %v228, 0
  %v244 = vsel %vm127, %v230, 0
  %v247 = vsel %vm127, %v232, 0
  %249 = vmatpush.bf16.msra.mxu0 %v116
  %250 = vmatpush.bf16.msra.mxu0 %v115
  %251 = vmatpush.bf16.msra.mxu0 %v114
  %252 = vmatpush.bf16.msra.mxu0 %v113
  %253 = vmatpush.bf16.msra.mxu0 %v112
  %254 = vmatpush.bf16.msra.mxu0 %v111
  %255 = vmatpush.bf16.msra.mxu0 %v110
  %256 = vmatpush.bf16.msra.mxu0 %v109
  %257 = vmatmul.bf16.gmra.mxu0 %v225
  %v258 = vpop.f32.mrf.mxu0
  %v259 = vadd.f32 0.0, %v258
  %v260 = vpop.f32.mrf.mxu0
  %v261 = vadd.f32 0.0, %v260
  %262 = vmatmul.bf16.gmra.mxu0 %v227
  %v263 = vpop.f32.mrf.mxu0
  %v264 = vadd.f32 0.0, %v263
  %v265 = vpop.f32.mrf.mxu0
  %v266 = vadd.f32 0.0, %v265
  %267 = vmatmul.bf16.gmra.mxu0 %v229
  %v268 = vpop.f32.mrf.mxu0
  %v269 = vadd.f32 0.0, %v268
  %v270 = vpop.f32.mrf.mxu0
  %v271 = vadd.f32 0.0, %v270
  %272 = vmatmul.bf16.gmra.mxu0 %v231
  %v273 = vpop.f32.mrf.mxu0
  %v274 = vadd.f32 0.0, %v273
  %v275 = vpop.f32.mrf.mxu0
  %276 = vdwg.mxu0
  %277 = vmatpush.bf16.msra.mxu0 0
  %278 = vmatpush.bf16.msra.mxu0 0
  %279 = vmatpush.bf16.msra.mxu0 0
  %280 = vmatpush.bf16.msra.mxu0 0
  %281 = vmatpush.bf16.msra.mxu0 0
  %282 = vmatpush.bf16.msra.mxu0 0
  %283 = vmatpush.bf16.msra.mxu0 0
  %284 = vmatpush.bf16.msra.mxu0 %v117
  %285 = vmatmul.bf16.gmra.mxu0 %v238
  %v286 = vpop.f32.mrf.mxu0
  %v287 = vadd.f32 %v259, %v286
  %v288 = vpop.f32.mrf.mxu0
  %v289 = vadd.f32 %v261, %v288
  %290 = vmatmul.bf16.gmra.mxu0 %v241
  %v291 = vpop.f32.mrf.mxu0
  %v292 = vadd.f32 %v264, %v291
  %v293 = vpop.f32.mrf.mxu0
  %v294 = vadd.f32 %v266, %v293
  %295 = vmatmul.bf16.gmra.mxu0 %v244
  %v296 = vpop.f32.mrf.mxu0
  %v297 = vadd.f32 %v269, %v296
  %v298 = vpop.f32.mrf.mxu0
  %v299 = vadd.f32 %v271, %v298
  %300 = vmatmul.bf16.gmra.mxu0 %v247
  %v301 = vpop.f32.mrf.mxu0
  %v302 = vadd.f32 %v274, %v301
  %v303 = vpop.f32.mrf.mxu0
  %304 = vdwg.mxu0
  %v305 = vmax.f32 %v178, %v287
  %v306 = vmax.f32 %v180, %v289
  %v307 = vmax.f32 %v183, %v292
  %v308 = vmax.f32 %v185, %v294
  %v309 = vmax.f32 %v188, %v297
  %v310 = vmax.f32 %v190, %v299
  %v311 = vmax.f32 %v193, %v302
  %s312 = scalar_lea.vmem %s0, 112
  %v313 = vld [vmem:[%s312] sm:$0xff]
  %v314 = vld [vmem:[%s312 + $0x8] sm:$0xff]
  %v315 = vld [vmem:[%s312 + $0x10] sm:$0xff]
  %v316 = vld [vmem:[%s312 + $0x18] sm:$0xff]
  %v317 = vld [vmem:[%s312 + $0x20] sm:$0xff]
  %v318 = vld [vmem:[%s312 + $0x28] sm:$0xff]
  %v319 = vld [vmem:[%s312 + $0x30] sm:$0xff]
  %v327 = vunpack.c.l.b16 %v313
  %v328 = vunpack.c.h.b16 %v313
  %v329 = vunpack.c.l.b16 %v314
  %v330 = vunpack.c.h.b16 %v314
  %v331 = vunpack.c.l.b16 %v315
  %v332 = vunpack.c.h.b16 %v315
  %v333 = vunpack.c.l.b16 %v316
  %v334 = vunpack.c.h.b16 %v316
  %v335 = vunpack.c.l.b16 %v317
  %v336 = vunpack.c.h.b16 %v317
  %v337 = vunpack.c.l.b16 %v318
  %v338 = vunpack.c.h.b16 %v318
  %v339 = vunpack.c.l.b16 %v319
  %v340 = vunpack.c.h.b16 %v319
  %v341 = vpack.c.b16 %v329, %v327
  %v342 = vpack.c.b16 %v330, %v328
  %v343 = vpack.c.b16 %v333, %v331
  %v344 = vpack.c.b16 %v334, %v332
  %v345 = vpack.c.b16 %v337, %v335
  %v346 = vpack.c.b16 %v338, %v336
  %v347 = vpack.c.b16 %v339, %v339
  %v348 = vpack.c.b16 %v340, %v340
  %v354 = vsel %vm127, %v342, 0
  %v357 = vsel %vm127, %v344, 0
  %v360 = vsel %vm127, %v346, 0
  %v363 = vsel %vm127, %v348, 0
  %365 = vmatpush.bf16.msra.mxu0 %v116
  %366 = vmatpush.bf16.msra.mxu0 %v115
  %367 = vmatpush.bf16.msra.mxu0 %v114
  %368 = vmatpush.bf16.msra.mxu0 %v113
  %369 = vmatpush.bf16.msra.mxu0 %v112
  %370 = vmatpush.bf16.msra.mxu0 %v111
  %371 = vmatpush.bf16.msra.mxu0 %v110
  %372 = vmatpush.bf16.msra.mxu0 %v109
  %373 = vmatmul.bf16.gmra.mxu0 %v341
  %v374 = vpop.f32.mrf.mxu0
  %v375 = vadd.f32 0.0, %v374
  %v376 = vpop.f32.mrf.mxu0
  %v377 = vadd.f32 0.0, %v376
  %378 = vmatmul.bf16.gmra.mxu0 %v343
  %v379 = vpop.f32.mrf.mxu0
  %v380 = vadd.f32 0.0, %v379
  %v381 = vpop.f32.mrf.mxu0
  %v382 = vadd.f32 0.0, %v381
  %383 = vmatmul.bf16.gmra.mxu0 %v345
  %v384 = vpop.f32.mrf.mxu0
  %v385 = vadd.f32 0.0, %v384
  %v386 = vpop.f32.mrf.mxu0
  %v387 = vadd.f32 0.0, %v386
  %388 = vmatmul.bf16.gmra.mxu0 %v347
  %v389 = vpop.f32.mrf.mxu0
  %v390 = vadd.f32 0.0, %v389
  %v391 = vpop.f32.mrf.mxu0
  %392 = vdwg.mxu0
  %393 = vmatpush.bf16.msra.mxu0 0
  %394 = vmatpush.bf16.msra.mxu0 0
  %395 = vmatpush.bf16.msra.mxu0 0
  %396 = vmatpush.bf16.msra.mxu0 0
  %397 = vmatpush.bf16.msra.mxu0 0
  %398 = vmatpush.bf16.msra.mxu0 0
  %399 = vmatpush.bf16.msra.mxu0 0
  %400 = vmatpush.bf16.msra.mxu0 %v117
  %401 = vmatmul.bf16.gmra.mxu0 %v354
  %v402 = vpop.f32.mrf.mxu0
  %v403 = vadd.f32 %v375, %v402
  %v404 = vpop.f32.mrf.mxu0
  %v405 = vadd.f32 %v377, %v404
  %406 = vmatmul.bf16.gmra.mxu0 %v357
  %v407 = vpop.f32.mrf.mxu0
  %v408 = vadd.f32 %v380, %v407
  %v409 = vpop.f32.mrf.mxu0
  %v410 = vadd.f32 %v382, %v409
  %411 = vmatmul.bf16.gmra.mxu0 %v360
  %v412 = vpop.f32.mrf.mxu0
  %v413 = vadd.f32 %v385, %v412
  %v414 = vpop.f32.mrf.mxu0
  %v415 = vadd.f32 %v387, %v414
  %416 = vmatmul.bf16.gmra.mxu0 %v363
  %v417 = vpop.f32.mrf.mxu0
  %v418 = vadd.f32 %v390, %v417
  %v419 = vpop.f32.mrf.mxu0
  %420 = vdwg.mxu0
  %v421 = vmax.f32 %v305, %v403
  %v422 = vmax.f32 %v306, %v405
  %v423 = vmax.f32 %v307, %v408
  %v424 = vmax.f32 %v308, %v410
  %v425 = vmax.f32 %v309, %v413
  %v426 = vmax.f32 %v310, %v415
  %v427 = vmax.f32 %v311, %v418
  %s428 = scalar_lea.vmem %s0, 168
  %v429 = vld [vmem:[%s428] sm:$0xff]
  %v430 = vld [vmem:[%s428 + $0x8] sm:$0xff]
  %v431 = vld [vmem:[%s428 + $0x10] sm:$0xff]
  %v432 = vld [vmem:[%s428 + $0x18] sm:$0xff]
  %v433 = vld [vmem:[%s428 + $0x20] sm:$0xff]
  %v434 = vld [vmem:[%s428 + $0x28] sm:$0xff]
  %v435 = vld [vmem:[%s428 + $0x30] sm:$0xff]
  %v443 = vunpack.c.l.b16 %v429
  %v444 = vunpack.c.h.b16 %v429
  %v445 = vunpack.c.l.b16 %v430
  %v446 = vunpack.c.h.b16 %v430
  %v447 = vunpack.c.l.b16 %v431
  %v448 = vunpack.c.h.b16 %v431
  %v449 = vunpack.c.l.b16 %v432
  %v450 = vunpack.c.h.b16 %v432
  %v451 = vunpack.c.l.b16 %v433
  %v452 = vunpack.c.h.b16 %v433
  %v453 = vunpack.c.l.b16 %v434
  %v454 = vunpack.c.h.b16 %v434
  %v455 = vunpack.c.l.b16 %v435
  %v456 = vunpack.c.h.b16 %v435
  %v457 = vpack.c.b16 %v445, %v443
  %v458 = vpack.c.b16 %v446, %v444
  %v459 = vpack.c.b16 %v449, %v447
  %v460 = vpack.c.b16 %v450, %v448
  %v461 = vpack.c.b16 %v453, %v451
  %v462 = vpack.c.b16 %v454, %v452
  %v463 = vpack.c.b16 %v455, %v455
  %v464 = vpack.c.b16 %v456, %v456
  %v470 = vsel %vm127, %v458, 0
  %v473 = vsel %vm127, %v460, 0
  %v476 = vsel %vm127, %v462, 0
  %v479 = vsel %vm127, %v464, 0
  %481 = vmatpush.bf16.msra.mxu0 %v116
  %482 = vmatpush.bf16.msra.mxu0 %v115
  %483 = vmatpush.bf16.msra.mxu0 %v114
  %484 = vmatpush.bf16.msra.mxu0 %v113
  %485 = vmatpush.bf16.msra.mxu0 %v112
  %486 = vmatpush.bf16.msra.mxu0 %v111
  %487 = vmatpush.bf16.msra.mxu0 %v110
  %488 = vmatpush.bf16.msra.mxu0 %v109
  %489 = vmatmul.bf16.gmra.mxu0 %v457
  %v490 = vpop.f32.mrf.mxu0
  %v491 = vadd.f32 0.0, %v490
  %v492 = vpop.f32.mrf.mxu0
  %v493 = vadd.f32 0.0, %v492
  %494 = vmatmul.bf16.gmra.mxu0 %v459
  %v495 = vpop.f32.mrf.mxu0
  %v496 = vadd.f32 0.0, %v495
  %v497 = vpop.f32.mrf.mxu0
  %v498 = vadd.f32 0.0, %v497
  %499 = vmatmul.bf16.gmra.mxu0 %v461
  %v500 = vpop.f32.mrf.mxu0
  %v501 = vadd.f32 0.0, %v500
  %v502 = vpop.f32.mrf.mxu0
  %v503 = vadd.f32 0.0, %v502
  %504 = vmatmul.bf16.gmra.mxu0 %v463
  %v505 = vpop.f32.mrf.mxu0
  %v506 = vadd.f32 0.0, %v505
  %v507 = vpop.f32.mrf.mxu0
  %508 = vdwg.mxu0
  %509 = vmatpush.bf16.msra.mxu0 0
  %510 = vmatpush.bf16.msra.mxu0 0
  %511 = vmatpush.bf16.msra.mxu0 0
  %512 = vmatpush.bf16.msra.mxu0 0
  %513 = vmatpush.bf16.msra.mxu0 0
  %514 = vmatpush.bf16.msra.mxu0 0
  %515 = vmatpush.bf16.msra.mxu0 0
  %516 = vmatpush.bf16.msra.mxu0 %v117
  %517 = vmatmul.bf16.gmra.mxu0 %v470
  %v518 = vpop.f32.mrf.mxu0
  %v519 = vadd.f32 %v491, %v518
  %v520 = vpop.f32.mrf.mxu0
  %v521 = vadd.f32 %v493, %v520
  %522 = vmatmul.bf16.gmra.mxu0 %v473
  %v523 = vpop.f32.mrf.mxu0
  %v524 = vadd.f32 %v496, %v523
  %v525 = vpop.f32.mrf.mxu0
  %v526 = vadd.f32 %v498, %v525
  %527 = vmatmul.bf16.gmra.mxu0 %v476
  %v528 = vpop.f32.mrf.mxu0
  %v529 = vadd.f32 %v501, %v528
  %v530 = vpop.f32.mrf.mxu0
  %v531 = vadd.f32 %v503, %v530
  %532 = vmatmul.bf16.gmra.mxu0 %v479
  %v533 = vpop.f32.mrf.mxu0
  %v534 = vadd.f32 %v506, %v533
  %v535 = vpop.f32.mrf.mxu0
  %536 = vdwg.mxu0
  %v537 = vmax.f32 %v421, %v519
  %v538 = vmax.f32 %v422, %v521
  %v539 = vmax.f32 %v423, %v524
  %v540 = vmax.f32 %v424, %v526
  %v541 = vmax.f32 %v425, %v529
  %v542 = vmax.f32 %v426, %v531
  %v543 = vmax.f32 %v427, %v534
  %s544 = scalar_lea.vmem %s0, 224
  %v545 = vld [vmem:[%s544] sm:$0xff]
  %v546 = vld [vmem:[%s544 + $0x8] sm:$0xff]
  %v547 = vld [vmem:[%s544 + $0x10] sm:$0xff]
  %v548 = vld [vmem:[%s544 + $0x18] sm:$0xff]
  %v549 = vld [vmem:[%s544 + $0x20] sm:$0xff]
  %v550 = vld [vmem:[%s544 + $0x28] sm:$0xff]
  %v551 = vld [vmem:[%s544 + $0x30] sm:$0xff]
  %v559 = vunpack.c.l.b16 %v545
  %v560 = vunpack.c.h.b16 %v545
  %v561 = vunpack.c.l.b16 %v546
  %v562 = vunpack.c.h.b16 %v546
  %v563 = vunpack.c.l.b16 %v547
  %v564 = vunpack.c.h.b16 %v547
  %v565 = vunpack.c.l.b16 %v548
  %v566 = vunpack.c.h.b16 %v548
  %v567 = vunpack.c.l.b16 %v549
  %v568 = vunpack.c.h.b16 %v549
  %v569 = vunpack.c.l.b16 %v550
  %v570 = vunpack.c.h.b16 %v550
  %v571 = vunpack.c.l.b16 %v551
  %v572 = vunpack.c.h.b16 %v551
  %v573 = vpack.c.b16 %v561, %v559
  %v574 = vpack.c.b16 %v562, %v560
  %v575 = vpack.c.b16 %v565, %v563
  %v576 = vpack.c.b16 %v566, %v564
  %v577 = vpack.c.b16 %v569, %v567
  %v578 = vpack.c.b16 %v570, %v568
  %v579 = vpack.c.b16 %v571, %v571
  %v580 = vpack.c.b16 %v572, %v572
  %v586 = vsel %vm127, %v574, 0
  %v589 = vsel %vm127, %v576, 0
  %v592 = vsel %vm127, %v578, 0
  %v595 = vsel %vm127, %v580, 0
  %597 = vmatpush.bf16.msra.mxu0 %v116
  %598 = vmatpush.bf16.msra.mxu0 %v115
  %599 = vmatpush.bf16.msra.mxu0 %v114
  %600 = vmatpush.bf16.msra.mxu0 %v113
  %601 = vmatpush.bf16.msra.mxu0 %v112
  %602 = vmatpush.bf16.msra.mxu0 %v111
  %603 = vmatpush.bf16.msra.mxu0 %v110
  %604 = vmatpush.bf16.msra.mxu0 %v109
  %605 = vmatmul.bf16.gmra.mxu0 %v573
  %v606 = vpop.f32.mrf.mxu0
  %v607 = vadd.f32 0.0, %v606
  %v608 = vpop.f32.mrf.mxu0
  %v609 = vadd.f32 0.0, %v608
  %610 = vmatmul.bf16.gmra.mxu0 %v575
  %v611 = vpop.f32.mrf.mxu0
  %v612 = vadd.f32 0.0, %v611
  %v613 = vpop.f32.mrf.mxu0
  %v614 = vadd.f32 0.0, %v613
  %615 = vmatmul.bf16.gmra.mxu0 %v577
  %v616 = vpop.f32.mrf.mxu0
  %v617 = vadd.f32 0.0, %v616
  %v618 = vpop.f32.mrf.mxu0
  %v619 = vadd.f32 0.0, %v618
  %620 = vmatmul.bf16.gmra.mxu0 %v579
  %v621 = vpop.f32.mrf.mxu0
  %v622 = vadd.f32 0.0, %v621
  %v623 = vpop.f32.mrf.mxu0
  %624 = vdwg.mxu0
  %625 = vmatpush.bf16.msra.mxu0 0
  %626 = vmatpush.bf16.msra.mxu0 0
  %627 = vmatpush.bf16.msra.mxu0 0
  %628 = vmatpush.bf16.msra.mxu0 0
  %629 = vmatpush.bf16.msra.mxu0 0
  %630 = vmatpush.bf16.msra.mxu0 0
  %631 = vmatpush.bf16.msra.mxu0 0
  %632 = vmatpush.bf16.msra.mxu0 %v117
  %633 = vmatmul.bf16.gmra.mxu0 %v586
  %v634 = vpop.f32.mrf.mxu0
  %v635 = vadd.f32 %v607, %v634
  %v636 = vpop.f32.mrf.mxu0
  %v637 = vadd.f32 %v609, %v636
  %638 = vmatmul.bf16.gmra.mxu0 %v589
  %v639 = vpop.f32.mrf.mxu0
  %v640 = vadd.f32 %v612, %v639
  %v641 = vpop.f32.mrf.mxu0
  %v642 = vadd.f32 %v614, %v641
  %643 = vmatmul.bf16.gmra.mxu0 %v592
  %v644 = vpop.f32.mrf.mxu0
  %v645 = vadd.f32 %v617, %v644
  %v646 = vpop.f32.mrf.mxu0
  %v647 = vadd.f32 %v619, %v646
  %648 = vmatmul.bf16.gmra.mxu0 %v595
  %v649 = vpop.f32.mrf.mxu0
  %v650 = vadd.f32 %v622, %v649
  %v651 = vpop.f32.mrf.mxu0
  %652 = vdwg.mxu0
  %v653 = vmax.f32 %v537, %v635
  %v654 = vmax.f32 %v538, %v637
  %v655 = vmax.f32 %v539, %v640
  %v656 = vmax.f32 %v540, %v642
  %v657 = vmax.f32 %v541, %v645
  %v658 = vmax.f32 %v542, %v647
  %v659 = vmax.f32 %v543, %v650
  %s660 = scalar_lea.vmem %s0, 280
  %v661 = vld [vmem:[%s660] sm:$0xff]
  %v662 = vld [vmem:[%s660 + $0x8] sm:$0xff]
  %v663 = vld [vmem:[%s660 + $0x10] sm:$0xff]
  %v664 = vld [vmem:[%s660 + $0x18] sm:$0xff]
  %v665 = vld [vmem:[%s660 + $0x20] sm:$0xff]
  %v666 = vld [vmem:[%s660 + $0x28] sm:$0xff]
  %v667 = vld [vmem:[%s660 + $0x30] sm:$0xff]
  %v675 = vunpack.c.l.b16 %v661
  %v676 = vunpack.c.h.b16 %v661
  %v677 = vunpack.c.l.b16 %v662
  %v678 = vunpack.c.h.b16 %v662
  %v679 = vunpack.c.l.b16 %v663
  %v680 = vunpack.c.h.b16 %v663
  %v681 = vunpack.c.l.b16 %v664
  %v682 = vunpack.c.h.b16 %v664
  %v683 = vunpack.c.l.b16 %v665
  %v684 = vunpack.c.h.b16 %v665
  %v685 = vunpack.c.l.b16 %v666
  %v686 = vunpack.c.h.b16 %v666
  %v687 = vunpack.c.l.b16 %v667
  %v688 = vunpack.c.h.b16 %v667
  %v689 = vpack.c.b16 %v677, %v675
  %v690 = vpack.c.b16 %v678, %v676
  %v691 = vpack.c.b16 %v681, %v679
  %v692 = vpack.c.b16 %v682, %v680
  %v693 = vpack.c.b16 %v685, %v683
  %v694 = vpack.c.b16 %v686, %v684
  %v695 = vpack.c.b16 %v687, %v687
  %v696 = vpack.c.b16 %v688, %v688
  %v702 = vsel %vm127, %v690, 0
  %v705 = vsel %vm127, %v692, 0
  %v708 = vsel %vm127, %v694, 0
  %v711 = vsel %vm127, %v696, 0
  %713 = vmatpush.bf16.msra.mxu0 %v116
  %714 = vmatpush.bf16.msra.mxu0 %v115
  %715 = vmatpush.bf16.msra.mxu0 %v114
  %716 = vmatpush.bf16.msra.mxu0 %v113
  %717 = vmatpush.bf16.msra.mxu0 %v112
  %718 = vmatpush.bf16.msra.mxu0 %v111
  %719 = vmatpush.bf16.msra.mxu0 %v110
  %720 = vmatpush.bf16.msra.mxu0 %v109
  %721 = vmatmul.bf16.gmra.mxu0 %v689
  %v722 = vpop.f32.mrf.mxu0
  %v723 = vadd.f32 0.0, %v722
  %v724 = vpop.f32.mrf.mxu0
  %v725 = vadd.f32 0.0, %v724
  %726 = vmatmul.bf16.gmra.mxu0 %v691
  %v727 = vpop.f32.mrf.mxu0
  %v728 = vadd.f32 0.0, %v727
  %v729 = vpop.f32.mrf.mxu0
  %v730 = vadd.f32 0.0, %v729
  %731 = vmatmul.bf16.gmra.mxu0 %v693
  %v732 = vpop.f32.mrf.mxu0
  %v733 = vadd.f32 0.0, %v732
  %v734 = vpop.f32.mrf.mxu0
  %v735 = vadd.f32 0.0, %v734
  %736 = vmatmul.bf16.gmra.mxu0 %v695
  %v737 = vpop.f32.mrf.mxu0
  %v738 = vadd.f32 0.0, %v737
  %v739 = vpop.f32.mrf.mxu0
  %740 = vdwg.mxu0
  %741 = vmatpush.bf16.msra.mxu0 0
  %742 = vmatpush.bf16.msra.mxu0 0
  %743 = vmatpush.bf16.msra.mxu0 0
  %744 = vmatpush.bf16.msra.mxu0 0
  %745 = vmatpush.bf16.msra.mxu0 0
  %746 = vmatpush.bf16.msra.mxu0 0
  %747 = vmatpush.bf16.msra.mxu0 0
  %748 = vmatpush.bf16.msra.mxu0 %v117
  %749 = vmatmul.bf16.gmra.mxu0 %v702
  %v750 = vpop.f32.mrf.mxu0
  %v751 = vadd.f32 %v723, %v750
  %v752 = vpop.f32.mrf.mxu0
  %v753 = vadd.f32 %v725, %v752
  %754 = vmatmul.bf16.gmra.mxu0 %v705
  %v755 = vpop.f32.mrf.mxu0
  %v756 = vadd.f32 %v728, %v755
  %v757 = vpop.f32.mrf.mxu0
  %v758 = vadd.f32 %v730, %v757
  %759 = vmatmul.bf16.gmra.mxu0 %v708
  %v760 = vpop.f32.mrf.mxu0
  %v761 = vadd.f32 %v733, %v760
  %v762 = vpop.f32.mrf.mxu0
  %v763 = vadd.f32 %v735, %v762
  %764 = vmatmul.bf16.gmra.mxu0 %v711
  %v765 = vpop.f32.mrf.mxu0
  %v766 = vadd.f32 %v738, %v765
  %v767 = vpop.f32.mrf.mxu0
  %768 = vdwg.mxu0
  %v769 = vmax.f32 %v653, %v751
  %v770 = vmax.f32 %v654, %v753
  %v771 = vmax.f32 %v655, %v756
  %v772 = vmax.f32 %v656, %v758
  %v773 = vmax.f32 %v657, %v761
  %v774 = vmax.f32 %v658, %v763
  %v775 = vmax.f32 %v659, %v766
  %s776 = scalar_lea.vmem %s0, 336
  %v777 = vld [vmem:[%s776] sm:$0xff]
  %v778 = vld [vmem:[%s776 + $0x8] sm:$0xff]
  %v779 = vld [vmem:[%s776 + $0x10] sm:$0xff]
  %v780 = vld [vmem:[%s776 + $0x18] sm:$0xff]
  %v781 = vld [vmem:[%s776 + $0x20] sm:$0xff]
  %v782 = vld [vmem:[%s776 + $0x28] sm:$0xff]
  %v783 = vld [vmem:[%s776 + $0x30] sm:$0xff]
  %v791 = vunpack.c.l.b16 %v777
  %v792 = vunpack.c.h.b16 %v777
  %v793 = vunpack.c.l.b16 %v778
  %v794 = vunpack.c.h.b16 %v778
  %v795 = vunpack.c.l.b16 %v779
  %v796 = vunpack.c.h.b16 %v779
  %v797 = vunpack.c.l.b16 %v780
  %v798 = vunpack.c.h.b16 %v780
  %v799 = vunpack.c.l.b16 %v781
  %v800 = vunpack.c.h.b16 %v781
  %v801 = vunpack.c.l.b16 %v782
  %v802 = vunpack.c.h.b16 %v782
  %v803 = vunpack.c.l.b16 %v783
  %v804 = vunpack.c.h.b16 %v783
  %v805 = vpack.c.b16 %v793, %v791
  %v806 = vpack.c.b16 %v794, %v792
  %v807 = vpack.c.b16 %v797, %v795
  %v808 = vpack.c.b16 %v798, %v796
  %v809 = vpack.c.b16 %v801, %v799
  %v810 = vpack.c.b16 %v802, %v800
  %v811 = vpack.c.b16 %v803, %v803
  %v812 = vpack.c.b16 %v804, %v804
  %v818 = vsel %vm127, %v806, 0
  %v821 = vsel %vm127, %v808, 0
  %v824 = vsel %vm127, %v810, 0
  %v827 = vsel %vm127, %v812, 0
  %829 = vmatpush.bf16.msra.mxu0 %v116
  %830 = vmatpush.bf16.msra.mxu0 %v115
  %831 = vmatpush.bf16.msra.mxu0 %v114
  %832 = vmatpush.bf16.msra.mxu0 %v113
  %833 = vmatpush.bf16.msra.mxu0 %v112
  %834 = vmatpush.bf16.msra.mxu0 %v111
  %835 = vmatpush.bf16.msra.mxu0 %v110
  %836 = vmatpush.bf16.msra.mxu0 %v109
  %837 = vmatmul.bf16.gmra.mxu0 %v805
  %v838 = vpop.f32.mrf.mxu0
  %v839 = vadd.f32 0.0, %v838
  %v840 = vpop.f32.mrf.mxu0
  %v841 = vadd.f32 0.0, %v840
  %842 = vmatmul.bf16.gmra.mxu0 %v807
  %v843 = vpop.f32.mrf.mxu0
  %v844 = vadd.f32 0.0, %v843
  %v845 = vpop.f32.mrf.mxu0
  %v846 = vadd.f32 0.0, %v845
  %847 = vmatmul.bf16.gmra.mxu0 %v809
  %v848 = vpop.f32.mrf.mxu0
  %v849 = vadd.f32 0.0, %v848
  %v850 = vpop.f32.mrf.mxu0
  %v851 = vadd.f32 0.0, %v850
  %852 = vmatmul.bf16.gmra.mxu0 %v811
  %v853 = vpop.f32.mrf.mxu0
  %v854 = vadd.f32 0.0, %v853
  %v855 = vpop.f32.mrf.mxu0
  %856 = vdwg.mxu0
  %857 = vmatpush.bf16.msra.mxu0 0
  %858 = vmatpush.bf16.msra.mxu0 0
  %859 = vmatpush.bf16.msra.mxu0 0
  %860 = vmatpush.bf16.msra.mxu0 0
  %861 = vmatpush.bf16.msra.mxu0 0
  %862 = vmatpush.bf16.msra.mxu0 0
  %863 = vmatpush.bf16.msra.mxu0 0
  %864 = vmatpush.bf16.msra.mxu0 %v117
  %865 = vmatmul.bf16.gmra.mxu0 %v818
  %v866 = vpop.f32.mrf.mxu0
  %v867 = vadd.f32 %v839, %v866
  %v868 = vpop.f32.mrf.mxu0
  %v869 = vadd.f32 %v841, %v868
  %870 = vmatmul.bf16.gmra.mxu0 %v821
  %v871 = vpop.f32.mrf.mxu0
  %v872 = vadd.f32 %v844, %v871
  %v873 = vpop.f32.mrf.mxu0
  %v874 = vadd.f32 %v846, %v873
  %875 = vmatmul.bf16.gmra.mxu0 %v824
  %v876 = vpop.f32.mrf.mxu0
  %v877 = vadd.f32 %v849, %v876
  %v878 = vpop.f32.mrf.mxu0
  %v879 = vadd.f32 %v851, %v878
  %880 = vmatmul.bf16.gmra.mxu0 %v827
  %v881 = vpop.f32.mrf.mxu0
  %v882 = vadd.f32 %v854, %v881
  %v883 = vpop.f32.mrf.mxu0
  %884 = vdwg.mxu0
  %v885 = vmax.f32 %v769, %v867
  %v886 = vmax.f32 %v770, %v869
  %v887 = vmax.f32 %v771, %v872
  %v888 = vmax.f32 %v772, %v874
  %v889 = vmax.f32 %v773, %v877
  %v890 = vmax.f32 %v774, %v879
  %v891 = vmax.f32 %v775, %v882
  %s892 = scalar_lea.vmem %s0, 392
  %v893 = vld [vmem:[%s892] sm:$0xff]
  %v894 = vld [vmem:[%s892 + $0x8] sm:$0xff]
  %v895 = vld [vmem:[%s892 + $0x10] sm:$0xff]
  %v896 = vld [vmem:[%s892 + $0x18] sm:$0xff]
  %v897 = vld [vmem:[%s892 + $0x20] sm:$0xff]
  %v898 = vld [vmem:[%s892 + $0x28] sm:$0xff]
  %v899 = vld [vmem:[%s892 + $0x30] sm:$0xff]
  %v907 = vunpack.c.l.b16 %v893
  %v908 = vunpack.c.h.b16 %v893
  %v909 = vunpack.c.l.b16 %v894
  %v910 = vunpack.c.h.b16 %v894
  %v911 = vunpack.c.l.b16 %v895
  %v912 = vunpack.c.h.b16 %v895
  %v913 = vunpack.c.l.b16 %v896
  %v914 = vunpack.c.h.b16 %v896
  %v915 = vunpack.c.l.b16 %v897
  %v916 = vunpack.c.h.b16 %v897
  %v917 = vunpack.c.l.b16 %v898
  %v918 = vunpack.c.h.b16 %v898
  %v919 = vunpack.c.l.b16 %v899
  %v920 = vunpack.c.h.b16 %v899
  %v921 = vpack.c.b16 %v909, %v907
  %v922 = vpack.c.b16 %v910, %v908
  %v923 = vpack.c.b16 %v913, %v911
  %v924 = vpack.c.b16 %v914, %v912
  %v925 = vpack.c.b16 %v917, %v915
  %v926 = vpack.c.b16 %v918, %v916
  %v927 = vpack.c.b16 %v919, %v919
  %v928 = vpack.c.b16 %v920, %v920
  %v934 = vsel %vm127, %v922, 0
  %v937 = vsel %vm127, %v924, 0
  %v940 = vsel %vm127, %v926, 0
  %v943 = vsel %vm127, %v928, 0
  %945 = vmatpush.bf16.msra.mxu0 %v116
  %946 = vmatpush.bf16.msra.mxu0 %v115
  %947 = vmatpush.bf16.msra.mxu0 %v114
  %948 = vmatpush.bf16.msra.mxu0 %v113
  %949 = vmatpush.bf16.msra.mxu0 %v112
  %950 = vmatpush.bf16.msra.mxu0 %v111
  %951 = vmatpush.bf16.msra.mxu0 %v110
  %952 = vmatpush.bf16.msra.mxu0 %v109
  %953 = vmatmul.bf16.gmra.mxu0 %v921
  %v954 = vpop.f32.mrf.mxu0
  %v955 = vadd.f32 0.0, %v954
  %v956 = vpop.f32.mrf.mxu0
  %v957 = vadd.f32 0.0, %v956
  %958 = vmatmul.bf16.gmra.mxu0 %v923
  %v959 = vpop.f32.mrf.mxu0
  %v960 = vadd.f32 0.0, %v959
  %v961 = vpop.f32.mrf.mxu0
  %v962 = vadd.f32 0.0, %v961
  %963 = vmatmul.bf16.gmra.mxu0 %v925
  %v964 = vpop.f32.mrf.mxu0
  %v965 = vadd.f32 0.0, %v964
  %v966 = vpop.f32.mrf.mxu0
  %v967 = vadd.f32 0.0, %v966
  %968 = vmatmul.bf16.gmra.mxu0 %v927
  %v969 = vpop.f32.mrf.mxu0
  %v970 = vadd.f32 0.0, %v969
  %v971 = vpop.f32.mrf.mxu0
  %972 = vdwg.mxu0
  %973 = vmatpush.bf16.msra.mxu0 0
  %974 = vmatpush.bf16.msra.mxu0 0
  %975 = vmatpush.bf16.msra.mxu0 0
  %976 = vmatpush.bf16.msra.mxu0 0
  %977 = vmatpush.bf16.msra.mxu0 0
  %978 = vmatpush.bf16.msra.mxu0 0
  %979 = vmatpush.bf16.msra.mxu0 0
  %980 = vmatpush.bf16.msra.mxu0 %v117
  %981 = vmatmul.bf16.gmra.mxu0 %v934
  %v982 = vpop.f32.mrf.mxu0
  %v983 = vadd.f32 %v955, %v982
  %v984 = vpop.f32.mrf.mxu0
  %v985 = vadd.f32 %v957, %v984
  %986 = vmatmul.bf16.gmra.mxu0 %v937
  %v987 = vpop.f32.mrf.mxu0
  %v988 = vadd.f32 %v960, %v987
  %v989 = vpop.f32.mrf.mxu0
  %v990 = vadd.f32 %v962, %v989
  %991 = vmatmul.bf16.gmra.mxu0 %v940
  %v992 = vpop.f32.mrf.mxu0
  %v993 = vadd.f32 %v965, %v992
  %v994 = vpop.f32.mrf.mxu0
  %v995 = vadd.f32 %v967, %v994
  %996 = vmatmul.bf16.gmra.mxu0 %v943
  %v997 = vpop.f32.mrf.mxu0
  %v998 = vadd.f32 %v970, %v997
  %v999 = vpop.f32.mrf.mxu0
  %1000 = vdwg.mxu0
  %v1001 = vmax.f32 %v885, %v983
  %v1002 = vmax.f32 %v886, %v985
  %v1003 = vmax.f32 %v887, %v988
  %v1004 = vmax.f32 %v888, %v990
  %v1005 = vmax.f32 %v889, %v993
  %v1006 = vmax.f32 %v890, %v995
  %v1007 = vmax.f32 %v891, %v998
  %s1008 = scalar_lea.vmem %s0, 448
  %v1009 = vld [vmem:[%s1008] sm:$0xff]
  %v1010 = vld [vmem:[%s1008 + $0x8] sm:$0xff]
  %v1011 = vld [vmem:[%s1008 + $0x10] sm:$0xff]
  %v1012 = vld [vmem:[%s1008 + $0x18] sm:$0xff]
  %v1013 = vld [vmem:[%s1008 + $0x20] sm:$0xff]
  %v1014 = vld [vmem:[%s1008 + $0x28] sm:$0xff]
  %v1015 = vld [vmem:[%s1008 + $0x30] sm:$0xff]
  %v1023 = vunpack.c.l.b16 %v1009
  %v1024 = vunpack.c.h.b16 %v1009
  %v1025 = vunpack.c.l.b16 %v1010
  %v1026 = vunpack.c.h.b16 %v1010
  %v1027 = vunpack.c.l.b16 %v1011
  %v1028 = vunpack.c.h.b16 %v1011
  %v1029 = vunpack.c.l.b16 %v1012
  %v1030 = vunpack.c.h.b16 %v1012
  %v1031 = vunpack.c.l.b16 %v1013
  %v1032 = vunpack.c.h.b16 %v1013
  %v1033 = vunpack.c.l.b16 %v1014
  %v1034 = vunpack.c.h.b16 %v1014
  %v1035 = vunpack.c.l.b16 %v1015
  %v1036 = vunpack.c.h.b16 %v1015
  %v1037 = vpack.c.b16 %v1025, %v1023
  %v1038 = vpack.c.b16 %v1026, %v1024
  %v1039 = vpack.c.b16 %v1029, %v1027
  %v1040 = vpack.c.b16 %v1030, %v1028
  %v1041 = vpack.c.b16 %v1033, %v1031
  %v1042 = vpack.c.b16 %v1034, %v1032
  %v1043 = vpack.c.b16 %v1035, %v1035
  %v1044 = vpack.c.b16 %v1036, %v1036
  %v1050 = vsel %vm127, %v1038, 0
  %v1053 = vsel %vm127, %v1040, 0
  %v1056 = vsel %vm127, %v1042, 0
  %v1059 = vsel %vm127, %v1044, 0
  %1061 = vmatpush.bf16.msra.mxu0 %v116
  %1062 = vmatpush.bf16.msra.mxu0 %v115
  %1063 = vmatpush.bf16.msra.mxu0 %v114
  %1064 = vmatpush.bf16.msra.mxu0 %v113
  %1065 = vmatpush.bf16.msra.mxu0 %v112
  %1066 = vmatpush.bf16.msra.mxu0 %v111
  %1067 = vmatpush.bf16.msra.mxu0 %v110
  %1068 = vmatpush.bf16.msra.mxu0 %v109
  %1069 = vmatmul.bf16.gmra.mxu0 %v1037
  %v1070 = vpop.f32.mrf.mxu0
  %v1071 = vadd.f32 0.0, %v1070
  %v1072 = vpop.f32.mrf.mxu0
  %v1073 = vadd.f32 0.0, %v1072
  %1074 = vmatmul.bf16.gmra.mxu0 %v1039
  %v1075 = vpop.f32.mrf.mxu0
  %v1076 = vadd.f32 0.0, %v1075
  %v1077 = vpop.f32.mrf.mxu0
  %v1078 = vadd.f32 0.0, %v1077
  %1079 = vmatmul.bf16.gmra.mxu0 %v1041
  %v1080 = vpop.f32.mrf.mxu0
  %v1081 = vadd.f32 0.0, %v1080
  %v1082 = vpop.f32.mrf.mxu0
  %v1083 = vadd.f32 0.0, %v1082
  %1084 = vmatmul.bf16.gmra.mxu0 %v1043
  %v1085 = vpop.f32.mrf.mxu0
  %v1086 = vadd.f32 0.0, %v1085
  %v1087 = vpop.f32.mrf.mxu0
  %1088 = vdwg.mxu0
  %1089 = vmatpush.bf16.msra.mxu0 0
  %1090 = vmatpush.bf16.msra.mxu0 0
  %1091 = vmatpush.bf16.msra.mxu0 0
  %1092 = vmatpush.bf16.msra.mxu0 0
  %1093 = vmatpush.bf16.msra.mxu0 0
  %1094 = vmatpush.bf16.msra.mxu0 0
  %1095 = vmatpush.bf16.msra.mxu0 0
  %1096 = vmatpush.bf16.msra.mxu0 %v117
  %1097 = vmatmul.bf16.gmra.mxu0 %v1050
  %v1098 = vpop.f32.mrf.mxu0
  %v1099 = vadd.f32 %v1071, %v1098
  %v1100 = vpop.f32.mrf.mxu0
  %v1101 = vadd.f32 %v1073, %v1100
  %1102 = vmatmul.bf16.gmra.mxu0 %v1053
  %v1103 = vpop.f32.mrf.mxu0
  %v1104 = vadd.f32 %v1076, %v1103
  %v1105 = vpop.f32.mrf.mxu0
  %v1106 = vadd.f32 %v1078, %v1105
  %1107 = vmatmul.bf16.gmra.mxu0 %v1056
  %v1108 = vpop.f32.mrf.mxu0
  %v1109 = vadd.f32 %v1081, %v1108
  %v1110 = vpop.f32.mrf.mxu0
  %v1111 = vadd.f32 %v1083, %v1110
  %1112 = vmatmul.bf16.gmra.mxu0 %v1059
  %v1113 = vpop.f32.mrf.mxu0
  %v1114 = vadd.f32 %v1086, %v1113
  %v1115 = vpop.f32.mrf.mxu0
  %1116 = vdwg.mxu0
  %v1117 = vmax.f32 %v1001, %v1099
  %v1118 = vmax.f32 %v1002, %v1101
  %v1119 = vmax.f32 %v1003, %v1104
  %v1120 = vmax.f32 %v1004, %v1106
  %v1121 = vmax.f32 %v1005, %v1109
  %v1122 = vmax.f32 %v1006, %v1111
  %v1123 = vmax.f32 %v1007, %v1114
  %s1124 = scalar_lea.vmem %s0, 504
  %v1125 = vld [vmem:[%s1124] sm:$0xff]
  %v1126 = vld [vmem:[%s1124 + $0x8] sm:$0xff]
  %v1127 = vld [vmem:[%s1124 + $0x10] sm:$0xff]
  %v1128 = vld [vmem:[%s1124 + $0x18] sm:$0xff]
  %v1129 = vld [vmem:[%s1124 + $0x20] sm:$0xff]
  %v1130 = vld [vmem:[%s1124 + $0x28] sm:$0xff]
  %v1131 = vld [vmem:[%s1124 + $0x30] sm:$0xff]
  %v1139 = vunpack.c.l.b16 %v1125
  %v1140 = vunpack.c.h.b16 %v1125
  %v1141 = vunpack.c.l.b16 %v1126
  %v1142 = vunpack.c.h.b16 %v1126
  %v1143 = vunpack.c.l.b16 %v1127
  %v1144 = vunpack.c.h.b16 %v1127
  %v1145 = vunpack.c.l.b16 %v1128
  %v1146 = vunpack.c.h.b16 %v1128
  %v1147 = vunpack.c.l.b16 %v1129
  %v1148 = vunpack.c.h.b16 %v1129
  %v1149 = vunpack.c.l.b16 %v1130
  %v1150 = vunpack.c.h.b16 %v1130
  %v1151 = vunpack.c.l.b16 %v1131
  %v1152 = vunpack.c.h.b16 %v1131
  %v1153 = vpack.c.b16 %v1141, %v1139
  %v1154 = vpack.c.b16 %v1142, %v1140
  %v1155 = vpack.c.b16 %v1145, %v1143
  %v1156 = vpack.c.b16 %v1146, %v1144
  %v1157 = vpack.c.b16 %v1149, %v1147
  %v1158 = vpack.c.b16 %v1150, %v1148
  %v1159 = vpack.c.b16 %v1151, %v1151
  %v1160 = vpack.c.b16 %v1152, %v1152
  %v1166 = vsel %vm127, %v1154, 0
  %v1169 = vsel %vm127, %v1156, 0
  %v1172 = vsel %vm127, %v1158, 0
  %v1175 = vsel %vm127, %v1160, 0
  %1177 = vmatpush.bf16.msra.mxu0 %v116
  %1178 = vmatpush.bf16.msra.mxu0 %v115
  %1179 = vmatpush.bf16.msra.mxu0 %v114
  %1180 = vmatpush.bf16.msra.mxu0 %v113
  %1181 = vmatpush.bf16.msra.mxu0 %v112
  %1182 = vmatpush.bf16.msra.mxu0 %v111
  %1183 = vmatpush.bf16.msra.mxu0 %v110
  %1184 = vmatpush.bf16.msra.mxu0 %v109
  %1185 = vmatmul.bf16.gmra.mxu0 %v1153
  %v1186 = vpop.f32.mrf.mxu0
  %v1187 = vadd.f32 0.0, %v1186
  %v1188 = vpop.f32.mrf.mxu0
  %v1189 = vadd.f32 0.0, %v1188
  %1190 = vmatmul.bf16.gmra.mxu0 %v1155
  %v1191 = vpop.f32.mrf.mxu0
  %v1192 = vadd.f32 0.0, %v1191
  %v1193 = vpop.f32.mrf.mxu0
  %v1194 = vadd.f32 0.0, %v1193
  %1195 = vmatmul.bf16.gmra.mxu0 %v1157
  %v1196 = vpop.f32.mrf.mxu0
  %v1197 = vadd.f32 0.0, %v1196
  %v1198 = vpop.f32.mrf.mxu0
  %v1199 = vadd.f32 0.0, %v1198
  %1200 = vmatmul.bf16.gmra.mxu0 %v1159
  %v1201 = vpop.f32.mrf.mxu0
  %v1202 = vadd.f32 0.0, %v1201
  %v1203 = vpop.f32.mrf.mxu0
  %1204 = vdwg.mxu0
  %1205 = vmatpush.bf16.msra.mxu0 0
  %1206 = vmatpush.bf16.msra.mxu0 0
  %1207 = vmatpush.bf16.msra.mxu0 0
  %1208 = vmatpush.bf16.msra.mxu0 0
  %1209 = vmatpush.bf16.msra.mxu0 0
  %1210 = vmatpush.bf16.msra.mxu0 0
  %1211 = vmatpush.bf16.msra.mxu0 0
  %1212 = vmatpush.bf16.msra.mxu0 %v117
  %1213 = vmatmul.bf16.gmra.mxu0 %v1166
  %v1214 = vpop.f32.mrf.mxu0
  %v1215 = vadd.f32 %v1187, %v1214
  %v1216 = vpop.f32.mrf.mxu0
  %v1217 = vadd.f32 %v1189, %v1216
  %1218 = vmatmul.bf16.gmra.mxu0 %v1169
  %v1219 = vpop.f32.mrf.mxu0
  %v1220 = vadd.f32 %v1192, %v1219
  %v1221 = vpop.f32.mrf.mxu0
  %v1222 = vadd.f32 %v1194, %v1221
  %1223 = vmatmul.bf16.gmra.mxu0 %v1172
  %v1224 = vpop.f32.mrf.mxu0
  %v1225 = vadd.f32 %v1197, %v1224
  %v1226 = vpop.f32.mrf.mxu0
  %v1227 = vadd.f32 %v1199, %v1226
  %1228 = vmatmul.bf16.gmra.mxu0 %v1175
  %v1229 = vpop.f32.mrf.mxu0
  %v1230 = vadd.f32 %v1202, %v1229
  %v1231 = vpop.f32.mrf.mxu0
  %1232 = vdwg.mxu0
  %v1233 = vmax.f32 %v1117, %v1215
  %v1234 = vmax.f32 %v1118, %v1217
  %v1235 = vmax.f32 %v1119, %v1220
  %v1236 = vmax.f32 %v1120, %v1222
  %v1237 = vmax.f32 %v1121, %v1225
  %v1238 = vmax.f32 %v1122, %v1227
  %v1239 = vmax.f32 %v1123, %v1230
  %s1240 = scalar_lea.vmem %s0, 560
  %v1241 = vld [vmem:[%s1240] sm:$0xff]
  %v1242 = vld [vmem:[%s1240 + $0x8] sm:$0xff]
  %v1243 = vld [vmem:[%s1240 + $0x10] sm:$0xff]
  %v1244 = vld [vmem:[%s1240 + $0x18] sm:$0xff]
  %v1245 = vld [vmem:[%s1240 + $0x20] sm:$0xff]
  %v1246 = vld [vmem:[%s1240 + $0x28] sm:$0xff]
  %v1247 = vld [vmem:[%s1240 + $0x30] sm:$0xff]
  %v1255 = vunpack.c.l.b16 %v1241
  %v1256 = vunpack.c.h.b16 %v1241
  %v1257 = vunpack.c.l.b16 %v1242
  %v1258 = vunpack.c.h.b16 %v1242
  %v1259 = vunpack.c.l.b16 %v1243
  %v1260 = vunpack.c.h.b16 %v1243
  %v1261 = vunpack.c.l.b16 %v1244
  %v1262 = vunpack.c.h.b16 %v1244
  %v1263 = vunpack.c.l.b16 %v1245
  %v1264 = vunpack.c.h.b16 %v1245
  %v1265 = vunpack.c.l.b16 %v1246
  %v1266 = vunpack.c.h.b16 %v1246
  %v1267 = vunpack.c.l.b16 %v1247
  %v1268 = vunpack.c.h.b16 %v1247
  %v1269 = vpack.c.b16 %v1257, %v1255
  %v1270 = vpack.c.b16 %v1258, %v1256
  %v1271 = vpack.c.b16 %v1261, %v1259
  %v1272 = vpack.c.b16 %v1262, %v1260
  %v1273 = vpack.c.b16 %v1265, %v1263
  %v1274 = vpack.c.b16 %v1266, %v1264
  %v1275 = vpack.c.b16 %v1267, %v1267
  %v1276 = vpack.c.b16 %v1268, %v1268
  %v1282 = vsel %vm127, %v1270, 0
  %v1285 = vsel %vm127, %v1272, 0
  %v1288 = vsel %vm127, %v1274, 0
  %v1291 = vsel %vm127, %v1276, 0
  %1293 = vmatpush.bf16.msra.mxu0 %v116
  %1294 = vmatpush.bf16.msra.mxu0 %v115
  %1295 = vmatpush.bf16.msra.mxu0 %v114
  %1296 = vmatpush.bf16.msra.mxu0 %v113
  %1297 = vmatpush.bf16.msra.mxu0 %v112
  %1298 = vmatpush.bf16.msra.mxu0 %v111
  %1299 = vmatpush.bf16.msra.mxu0 %v110
  %1300 = vmatpush.bf16.msra.mxu0 %v109
  %1301 = vmatmul.bf16.gmra.mxu0 %v1269
  %v1302 = vpop.f32.mrf.mxu0
  %v1303 = vadd.f32 0.0, %v1302
  %v1304 = vpop.f32.mrf.mxu0
  %v1305 = vadd.f32 0.0, %v1304
  %1306 = vmatmul.bf16.gmra.mxu0 %v1271
  %v1307 = vpop.f32.mrf.mxu0
  %v1308 = vadd.f32 0.0, %v1307
  %v1309 = vpop.f32.mrf.mxu0
  %v1310 = vadd.f32 0.0, %v1309
  %1311 = vmatmul.bf16.gmra.mxu0 %v1273
  %v1312 = vpop.f32.mrf.mxu0
  %v1313 = vadd.f32 0.0, %v1312
  %v1314 = vpop.f32.mrf.mxu0
  %v1315 = vadd.f32 0.0, %v1314
  %1316 = vmatmul.bf16.gmra.mxu0 %v1275
  %v1317 = vpop.f32.mrf.mxu0
  %v1318 = vadd.f32 0.0, %v1317
  %v1319 = vpop.f32.mrf.mxu0
  %1320 = vdwg.mxu0
  %1321 = vmatpush.bf16.msra.mxu0 0
  %1322 = vmatpush.bf16.msra.mxu0 0
  %1323 = vmatpush.bf16.msra.mxu0 0
  %1324 = vmatpush.bf16.msra.mxu0 0
  %1325 = vmatpush.bf16.msra.mxu0 0
  %1326 = vmatpush.bf16.msra.mxu0 0
  %1327 = vmatpush.bf16.msra.mxu0 0
  %1328 = vmatpush.bf16.msra.mxu0 %v117
  %1329 = vmatmul.bf16.gmra.mxu0 %v1282
  %v1330 = vpop.f32.mrf.mxu0
  %v1331 = vadd.f32 %v1303, %v1330
  %v1332 = vpop.f32.mrf.mxu0
  %v1333 = vadd.f32 %v1305, %v1332
  %1334 = vmatmul.bf16.gmra.mxu0 %v1285
  %v1335 = vpop.f32.mrf.mxu0
  %v1336 = vadd.f32 %v1308, %v1335
  %v1337 = vpop.f32.mrf.mxu0
  %v1338 = vadd.f32 %v1310, %v1337
  %1339 = vmatmul.bf16.gmra.mxu0 %v1288
  %v1340 = vpop.f32.mrf.mxu0
  %v1341 = vadd.f32 %v1313, %v1340
  %v1342 = vpop.f32.mrf.mxu0
  %v1343 = vadd.f32 %v1315, %v1342
  %1344 = vmatmul.bf16.gmra.mxu0 %v1291
  %v1345 = vpop.f32.mrf.mxu0
  %v1346 = vadd.f32 %v1318, %v1345
  %v1347 = vpop.f32.mrf.mxu0
  %1348 = vdwg.mxu0
  %v1349 = vmax.f32 %v1233, %v1331
  %v1350 = vmax.f32 %v1234, %v1333
  %v1351 = vmax.f32 %v1235, %v1336
  %v1352 = vmax.f32 %v1236, %v1338
  %v1353 = vmax.f32 %v1237, %v1341
  %v1354 = vmax.f32 %v1238, %v1343
  %v1355 = vmax.f32 %v1239, %v1346
  %s1356 = scalar_lea.vmem %s0, 616
  %v1357 = vld [vmem:[%s1356] sm:$0xff]
  %v1358 = vld [vmem:[%s1356 + $0x8] sm:$0xff]
  %v1359 = vld [vmem:[%s1356 + $0x10] sm:$0xff]
  %v1360 = vld [vmem:[%s1356 + $0x18] sm:$0xff]
  %v1361 = vld [vmem:[%s1356 + $0x20] sm:$0xff]
  %v1362 = vld [vmem:[%s1356 + $0x28] sm:$0xff]
  %v1363 = vld [vmem:[%s1356 + $0x30] sm:$0xff]
  %v1371 = vunpack.c.l.b16 %v1357
  %v1372 = vunpack.c.h.b16 %v1357
  %v1373 = vunpack.c.l.b16 %v1358
  %v1374 = vunpack.c.h.b16 %v1358
  %v1375 = vunpack.c.l.b16 %v1359
  %v1376 = vunpack.c.h.b16 %v1359
  %v1377 = vunpack.c.l.b16 %v1360
  %v1378 = vunpack.c.h.b16 %v1360
  %v1379 = vunpack.c.l.b16 %v1361
  %v1380 = vunpack.c.h.b16 %v1361
  %v1381 = vunpack.c.l.b16 %v1362
  %v1382 = vunpack.c.h.b16 %v1362
  %v1383 = vunpack.c.l.b16 %v1363
  %v1384 = vunpack.c.h.b16 %v1363
  %v1385 = vpack.c.b16 %v1373, %v1371
  %v1386 = vpack.c.b16 %v1374, %v1372
  %v1387 = vpack.c.b16 %v1377, %v1375
  %v1388 = vpack.c.b16 %v1378, %v1376
  %v1389 = vpack.c.b16 %v1381, %v1379
  %v1390 = vpack.c.b16 %v1382, %v1380
  %v1391 = vpack.c.b16 %v1383, %v1383
  %v1392 = vpack.c.b16 %v1384, %v1384
  %v1398 = vsel %vm127, %v1386, 0
  %v1401 = vsel %vm127, %v1388, 0
  %v1404 = vsel %vm127, %v1390, 0
  %v1407 = vsel %vm127, %v1392, 0
  %1409 = vmatpush.bf16.msra.mxu0 %v116
  %1410 = vmatpush.bf16.msra.mxu0 %v115
  %1411 = vmatpush.bf16.msra.mxu0 %v114
  %1412 = vmatpush.bf16.msra.mxu0 %v113
  %1413 = vmatpush.bf16.msra.mxu0 %v112
  %1414 = vmatpush.bf16.msra.mxu0 %v111
  %1415 = vmatpush.bf16.msra.mxu0 %v110
  %1416 = vmatpush.bf16.msra.mxu0 %v109
  %1417 = vmatmul.bf16.gmra.mxu0 %v1385
  %v1418 = vpop.f32.mrf.mxu0
  %v1419 = vadd.f32 0.0, %v1418
  %v1420 = vpop.f32.mrf.mxu0
  %v1421 = vadd.f32 0.0, %v1420
  %1422 = vmatmul.bf16.gmra.mxu0 %v1387
  %v1423 = vpop.f32.mrf.mxu0
  %v1424 = vadd.f32 0.0, %v1423
  %v1425 = vpop.f32.mrf.mxu0
  %v1426 = vadd.f32 0.0, %v1425
  %1427 = vmatmul.bf16.gmra.mxu0 %v1389
  %v1428 = vpop.f32.mrf.mxu0
  %v1429 = vadd.f32 0.0, %v1428
  %v1430 = vpop.f32.mrf.mxu0
  %v1431 = vadd.f32 0.0, %v1430
  %1432 = vmatmul.bf16.gmra.mxu0 %v1391
  %v1433 = vpop.f32.mrf.mxu0
  %v1434 = vadd.f32 0.0, %v1433
  %v1435 = vpop.f32.mrf.mxu0
  %1436 = vdwg.mxu0
  %1437 = vmatpush.bf16.msra.mxu0 0
  %1438 = vmatpush.bf16.msra.mxu0 0
  %1439 = vmatpush.bf16.msra.mxu0 0
  %1440 = vmatpush.bf16.msra.mxu0 0
  %1441 = vmatpush.bf16.msra.mxu0 0
  %1442 = vmatpush.bf16.msra.mxu0 0
  %1443 = vmatpush.bf16.msra.mxu0 0
  %1444 = vmatpush.bf16.msra.mxu0 %v117
  %1445 = vmatmul.bf16.gmra.mxu0 %v1398
  %v1446 = vpop.f32.mrf.mxu0
  %v1447 = vadd.f32 %v1419, %v1446
  %v1448 = vpop.f32.mrf.mxu0
  %v1449 = vadd.f32 %v1421, %v1448
  %1450 = vmatmul.bf16.gmra.mxu0 %v1401
  %v1451 = vpop.f32.mrf.mxu0
  %v1452 = vadd.f32 %v1424, %v1451
  %v1453 = vpop.f32.mrf.mxu0
  %v1454 = vadd.f32 %v1426, %v1453
  %1455 = vmatmul.bf16.gmra.mxu0 %v1404
  %v1456 = vpop.f32.mrf.mxu0
  %v1457 = vadd.f32 %v1429, %v1456
  %v1458 = vpop.f32.mrf.mxu0
  %v1459 = vadd.f32 %v1431, %v1458
  %1460 = vmatmul.bf16.gmra.mxu0 %v1407
  %v1461 = vpop.f32.mrf.mxu0
  %v1462 = vadd.f32 %v1434, %v1461
  %v1463 = vpop.f32.mrf.mxu0
  %1464 = vdwg.mxu0
  %v1465 = vmax.f32 %v1349, %v1447
  %v1466 = vmax.f32 %v1350, %v1449
  %v1467 = vmax.f32 %v1351, %v1452
  %v1468 = vmax.f32 %v1352, %v1454
  %v1469 = vmax.f32 %v1353, %v1457
  %v1470 = vmax.f32 %v1354, %v1459
  %v1471 = vmax.f32 %v1355, %v1462
  %s1472 = scalar_lea.vmem %s0, 672
  %v1473 = vld [vmem:[%s1472] sm:$0xff]
  %v1474 = vld [vmem:[%s1472 + $0x8] sm:$0xff]
  %v1475 = vld [vmem:[%s1472 + $0x10] sm:$0xff]
  %v1476 = vld [vmem:[%s1472 + $0x18] sm:$0xff]
  %v1477 = vld [vmem:[%s1472 + $0x20] sm:$0xff]
  %v1478 = vld [vmem:[%s1472 + $0x28] sm:$0xff]
  %v1479 = vld [vmem:[%s1472 + $0x30] sm:$0xff]
  %v1487 = vunpack.c.l.b16 %v1473
  %v1488 = vunpack.c.h.b16 %v1473
  %v1489 = vunpack.c.l.b16 %v1474
  %v1490 = vunpack.c.h.b16 %v1474
  %v1491 = vunpack.c.l.b16 %v1475
  %v1492 = vunpack.c.h.b16 %v1475
  %v1493 = vunpack.c.l.b16 %v1476
  %v1494 = vunpack.c.h.b16 %v1476
  %v1495 = vunpack.c.l.b16 %v1477
  %v1496 = vunpack.c.h.b16 %v1477
  %v1497 = vunpack.c.l.b16 %v1478
  %v1498 = vunpack.c.h.b16 %v1478
  %v1499 = vunpack.c.l.b16 %v1479
  %v1500 = vunpack.c.h.b16 %v1479
  %v1501 = vpack.c.b16 %v1489, %v1487
  %v1502 = vpack.c.b16 %v1490, %v1488
  %v1503 = vpack.c.b16 %v1493, %v1491
  %v1504 = vpack.c.b16 %v1494, %v1492
  %v1505 = vpack.c.b16 %v1497, %v1495
  %v1506 = vpack.c.b16 %v1498, %v1496
  %v1507 = vpack.c.b16 %v1499, %v1499
  %v1508 = vpack.c.b16 %v1500, %v1500
  %v1514 = vsel %vm127, %v1502, 0
  %v1517 = vsel %vm127, %v1504, 0
  %v1520 = vsel %vm127, %v1506, 0
  %v1523 = vsel %vm127, %v1508, 0
  %1525 = vmatpush.bf16.msra.mxu0 %v116
  %1526 = vmatpush.bf16.msra.mxu0 %v115
  %1527 = vmatpush.bf16.msra.mxu0 %v114
  %1528 = vmatpush.bf16.msra.mxu0 %v113
  %1529 = vmatpush.bf16.msra.mxu0 %v112
  %1530 = vmatpush.bf16.msra.mxu0 %v111
  %1531 = vmatpush.bf16.msra.mxu0 %v110
  %1532 = vmatpush.bf16.msra.mxu0 %v109
  %1533 = vmatmul.bf16.gmra.mxu0 %v1501
  %v1534 = vpop.f32.mrf.mxu0
  %v1535 = vadd.f32 0.0, %v1534
  %v1536 = vpop.f32.mrf.mxu0
  %v1537 = vadd.f32 0.0, %v1536
  %1538 = vmatmul.bf16.gmra.mxu0 %v1503
  %v1539 = vpop.f32.mrf.mxu0
  %v1540 = vadd.f32 0.0, %v1539
  %v1541 = vpop.f32.mrf.mxu0
  %v1542 = vadd.f32 0.0, %v1541
  %1543 = vmatmul.bf16.gmra.mxu0 %v1505
  %v1544 = vpop.f32.mrf.mxu0
  %v1545 = vadd.f32 0.0, %v1544
  %v1546 = vpop.f32.mrf.mxu0
  %v1547 = vadd.f32 0.0, %v1546
  %1548 = vmatmul.bf16.gmra.mxu0 %v1507
  %v1549 = vpop.f32.mrf.mxu0
  %v1550 = vadd.f32 0.0, %v1549
  %v1551 = vpop.f32.mrf.mxu0
  %1552 = vdwg.mxu0
  %1553 = vmatpush.bf16.msra.mxu0 0
  %1554 = vmatpush.bf16.msra.mxu0 0
  %1555 = vmatpush.bf16.msra.mxu0 0
  %1556 = vmatpush.bf16.msra.mxu0 0
  %1557 = vmatpush.bf16.msra.mxu0 0
  %1558 = vmatpush.bf16.msra.mxu0 0
  %1559 = vmatpush.bf16.msra.mxu0 0
  %1560 = vmatpush.bf16.msra.mxu0 %v117
  %1561 = vmatmul.bf16.gmra.mxu0 %v1514
  %v1562 = vpop.f32.mrf.mxu0
  %v1563 = vadd.f32 %v1535, %v1562
  %v1564 = vpop.f32.mrf.mxu0
  %v1565 = vadd.f32 %v1537, %v1564
  %1566 = vmatmul.bf16.gmra.mxu0 %v1517
  %v1567 = vpop.f32.mrf.mxu0
  %v1568 = vadd.f32 %v1540, %v1567
  %v1569 = vpop.f32.mrf.mxu0
  %v1570 = vadd.f32 %v1542, %v1569
  %1571 = vmatmul.bf16.gmra.mxu0 %v1520
  %v1572 = vpop.f32.mrf.mxu0
  %v1573 = vadd.f32 %v1545, %v1572
  %v1574 = vpop.f32.mrf.mxu0
  %v1575 = vadd.f32 %v1547, %v1574
  %1576 = vmatmul.bf16.gmra.mxu0 %v1523
  %v1577 = vpop.f32.mrf.mxu0
  %v1578 = vadd.f32 %v1550, %v1577
  %v1579 = vpop.f32.mrf.mxu0
  %1580 = vdwg.mxu0
  %v1581 = vmax.f32 %v1465, %v1563
  %v1582 = vmax.f32 %v1466, %v1565
  %v1583 = vmax.f32 %v1467, %v1568
  %v1584 = vmax.f32 %v1468, %v1570
  %v1585 = vmax.f32 %v1469, %v1573
  %v1586 = vmax.f32 %v1470, %v1575
  %v1587 = vmax.f32 %v1471, %v1578
  %s1588 = scalar_lea.vmem %s0, 728
  %v1589 = vld [vmem:[%s1588] sm:$0xff]
  %v1590 = vld [vmem:[%s1588 + $0x8] sm:$0xff]
  %v1591 = vld [vmem:[%s1588 + $0x10] sm:$0xff]
  %v1592 = vld [vmem:[%s1588 + $0x18] sm:$0xff]
  %v1593 = vld [vmem:[%s1588 + $0x20] sm:$0xff]
  %v1594 = vld [vmem:[%s1588 + $0x28] sm:$0xff]
  %v1595 = vld [vmem:[%s1588 + $0x30] sm:$0xff]
  %v1603 = vunpack.c.l.b16 %v1589
  %v1604 = vunpack.c.h.b16 %v1589
  %v1605 = vunpack.c.l.b16 %v1590
  %v1606 = vunpack.c.h.b16 %v1590
  %v1607 = vunpack.c.l.b16 %v1591
  %v1608 = vunpack.c.h.b16 %v1591
  %v1609 = vunpack.c.l.b16 %v1592
  %v1610 = vunpack.c.h.b16 %v1592
  %v1611 = vunpack.c.l.b16 %v1593
  %v1612 = vunpack.c.h.b16 %v1593
  %v1613 = vunpack.c.l.b16 %v1594
  %v1614 = vunpack.c.h.b16 %v1594
  %v1615 = vunpack.c.l.b16 %v1595
  %v1616 = vunpack.c.h.b16 %v1595
  %v1617 = vpack.c.b16 %v1605, %v1603
  %v1618 = vpack.c.b16 %v1606, %v1604
  %v1619 = vpack.c.b16 %v1609, %v1607
  %v1620 = vpack.c.b16 %v1610, %v1608
  %v1621 = vpack.c.b16 %v1613, %v1611
  %v1622 = vpack.c.b16 %v1614, %v1612
  %v1623 = vpack.c.b16 %v1615, %v1615
  %v1624 = vpack.c.b16 %v1616, %v1616
  %v1630 = vsel %vm127, %v1618, 0
  %v1633 = vsel %vm127, %v1620, 0
  %v1636 = vsel %vm127, %v1622, 0
  %v1639 = vsel %vm127, %v1624, 0
  %1641 = vmatpush.bf16.msra.mxu0 %v116
  %1642 = vmatpush.bf16.msra.mxu0 %v115
  %1643 = vmatpush.bf16.msra.mxu0 %v114
  %1644 = vmatpush.bf16.msra.mxu0 %v113
  %1645 = vmatpush.bf16.msra.mxu0 %v112
  %1646 = vmatpush.bf16.msra.mxu0 %v111
  %1647 = vmatpush.bf16.msra.mxu0 %v110
  %1648 = vmatpush.bf16.msra.mxu0 %v109
  %1649 = vmatmul.bf16.gmra.mxu0 %v1617
  %v1650 = vpop.f32.mrf.mxu0
  %v1651 = vadd.f32 0.0, %v1650
  %v1652 = vpop.f32.mrf.mxu0
  %v1653 = vadd.f32 0.0, %v1652
  %1654 = vmatmul.bf16.gmra.mxu0 %v1619
  %v1655 = vpop.f32.mrf.mxu0
  %v1656 = vadd.f32 0.0, %v1655
  %v1657 = vpop.f32.mrf.mxu0
  %v1658 = vadd.f32 0.0, %v1657
  %1659 = vmatmul.bf16.gmra.mxu0 %v1621
  %v1660 = vpop.f32.mrf.mxu0
  %v1661 = vadd.f32 0.0, %v1660
  %v1662 = vpop.f32.mrf.mxu0
  %v1663 = vadd.f32 0.0, %v1662
  %1664 = vmatmul.bf16.gmra.mxu0 %v1623
  %v1665 = vpop.f32.mrf.mxu0
  %v1666 = vadd.f32 0.0, %v1665
  %v1667 = vpop.f32.mrf.mxu0
  %1668 = vdwg.mxu0
  %1669 = vmatpush.bf16.msra.mxu0 0
  %1670 = vmatpush.bf16.msra.mxu0 0
  %1671 = vmatpush.bf16.msra.mxu0 0
  %1672 = vmatpush.bf16.msra.mxu0 0
  %1673 = vmatpush.bf16.msra.mxu0 0
  %1674 = vmatpush.bf16.msra.mxu0 0
  %1675 = vmatpush.bf16.msra.mxu0 0
  %1676 = vmatpush.bf16.msra.mxu0 %v117
  %1677 = vmatmul.bf16.gmra.mxu0 %v1630
  %v1678 = vpop.f32.mrf.mxu0
  %v1679 = vadd.f32 %v1651, %v1678
  %v1680 = vpop.f32.mrf.mxu0
  %v1681 = vadd.f32 %v1653, %v1680
  %1682 = vmatmul.bf16.gmra.mxu0 %v1633
  %v1683 = vpop.f32.mrf.mxu0
  %v1684 = vadd.f32 %v1656, %v1683
  %v1685 = vpop.f32.mrf.mxu0
  %v1686 = vadd.f32 %v1658, %v1685
  %1687 = vmatmul.bf16.gmra.mxu0 %v1636
  %v1688 = vpop.f32.mrf.mxu0
  %v1689 = vadd.f32 %v1661, %v1688
  %v1690 = vpop.f32.mrf.mxu0
  %v1691 = vadd.f32 %v1663, %v1690
  %1692 = vmatmul.bf16.gmra.mxu0 %v1639
  %v1693 = vpop.f32.mrf.mxu0
  %v1694 = vadd.f32 %v1666, %v1693
  %v1695 = vpop.f32.mrf.mxu0
  %1696 = vdwg.mxu0
  %v1697 = vmax.f32 %v1581, %v1679
  %v1698 = vmax.f32 %v1582, %v1681
  %v1699 = vmax.f32 %v1583, %v1684
  %v1700 = vmax.f32 %v1584, %v1686
  %v1701 = vmax.f32 %v1585, %v1689
  %v1702 = vmax.f32 %v1586, %v1691
  %v1703 = vmax.f32 %v1587, %v1694
  %s1704 = scalar_lea.vmem %s0, 784
  %v1705 = vld [vmem:[%s1704] sm:$0xff]
  %v1706 = vld [vmem:[%s1704 + $0x8] sm:$0xff]
  %v1707 = vld [vmem:[%s1704 + $0x10] sm:$0xff]
  %v1708 = vld [vmem:[%s1704 + $0x18] sm:$0xff]
  %v1709 = vld [vmem:[%s1704 + $0x20] sm:$0xff]
  %v1710 = vld [vmem:[%s1704 + $0x28] sm:$0xff]
  %v1711 = vld [vmem:[%s1704 + $0x30] sm:$0xff]
  %v1719 = vunpack.c.l.b16 %v1705
  %v1720 = vunpack.c.h.b16 %v1705
  %v1721 = vunpack.c.l.b16 %v1706
  %v1722 = vunpack.c.h.b16 %v1706
  %v1723 = vunpack.c.l.b16 %v1707
  %v1724 = vunpack.c.h.b16 %v1707
  %v1725 = vunpack.c.l.b16 %v1708
  %v1726 = vunpack.c.h.b16 %v1708
  %v1727 = vunpack.c.l.b16 %v1709
  %v1728 = vunpack.c.h.b16 %v1709
  %v1729 = vunpack.c.l.b16 %v1710
  %v1730 = vunpack.c.h.b16 %v1710
  %v1731 = vunpack.c.l.b16 %v1711
  %v1732 = vunpack.c.h.b16 %v1711
  %v1733 = vpack.c.b16 %v1721, %v1719
  %v1734 = vpack.c.b16 %v1722, %v1720
  %v1735 = vpack.c.b16 %v1725, %v1723
  %v1736 = vpack.c.b16 %v1726, %v1724
  %v1737 = vpack.c.b16 %v1729, %v1727
  %v1738 = vpack.c.b16 %v1730, %v1728
  %v1739 = vpack.c.b16 %v1731, %v1731
  %v1740 = vpack.c.b16 %v1732, %v1732
  %v1746 = vsel %vm127, %v1734, 0
  %v1749 = vsel %vm127, %v1736, 0
  %v1752 = vsel %vm127, %v1738, 0
  %v1755 = vsel %vm127, %v1740, 0
  %1757 = vmatpush.bf16.msra.mxu0 %v116
  %1758 = vmatpush.bf16.msra.mxu0 %v115
  %1759 = vmatpush.bf16.msra.mxu0 %v114
  %1760 = vmatpush.bf16.msra.mxu0 %v113
  %1761 = vmatpush.bf16.msra.mxu0 %v112
  %1762 = vmatpush.bf16.msra.mxu0 %v111
  %1763 = vmatpush.bf16.msra.mxu0 %v110
  %1764 = vmatpush.bf16.msra.mxu0 %v109
  %1765 = vmatmul.bf16.gmra.mxu0 %v1733
  %v1766 = vpop.f32.mrf.mxu0
  %v1767 = vadd.f32 0.0, %v1766
  %v1768 = vpop.f32.mrf.mxu0
  %v1769 = vadd.f32 0.0, %v1768
  %1770 = vmatmul.bf16.gmra.mxu0 %v1735
  %v1771 = vpop.f32.mrf.mxu0
  %v1772 = vadd.f32 0.0, %v1771
  %v1773 = vpop.f32.mrf.mxu0
  %v1774 = vadd.f32 0.0, %v1773
  %1775 = vmatmul.bf16.gmra.mxu0 %v1737
  %v1776 = vpop.f32.mrf.mxu0
  %v1777 = vadd.f32 0.0, %v1776
  %v1778 = vpop.f32.mrf.mxu0
  %v1779 = vadd.f32 0.0, %v1778
  %1780 = vmatmul.bf16.gmra.mxu0 %v1739
  %v1781 = vpop.f32.mrf.mxu0
  %v1782 = vadd.f32 0.0, %v1781
  %v1783 = vpop.f32.mrf.mxu0
  %1784 = vdwg.mxu0
  %1785 = vmatpush.bf16.msra.mxu0 0
  %1786 = vmatpush.bf16.msra.mxu0 0
  %1787 = vmatpush.bf16.msra.mxu0 0
  %1788 = vmatpush.bf16.msra.mxu0 0
  %1789 = vmatpush.bf16.msra.mxu0 0
  %1790 = vmatpush.bf16.msra.mxu0 0
  %1791 = vmatpush.bf16.msra.mxu0 0
  %1792 = vmatpush.bf16.msra.mxu0 %v117
  %1793 = vmatmul.bf16.gmra.mxu0 %v1746
  %v1794 = vpop.f32.mrf.mxu0
  %v1795 = vadd.f32 %v1767, %v1794
  %v1796 = vpop.f32.mrf.mxu0
  %v1797 = vadd.f32 %v1769, %v1796
  %1798 = vmatmul.bf16.gmra.mxu0 %v1749
  %v1799 = vpop.f32.mrf.mxu0
  %v1800 = vadd.f32 %v1772, %v1799
  %v1801 = vpop.f32.mrf.mxu0
  %v1802 = vadd.f32 %v1774, %v1801
  %1803 = vmatmul.bf16.gmra.mxu0 %v1752
  %v1804 = vpop.f32.mrf.mxu0
  %v1805 = vadd.f32 %v1777, %v1804
  %v1806 = vpop.f32.mrf.mxu0
  %v1807 = vadd.f32 %v1779, %v1806
  %1808 = vmatmul.bf16.gmra.mxu0 %v1755
  %v1809 = vpop.f32.mrf.mxu0
  %v1810 = vadd.f32 %v1782, %v1809
  %v1811 = vpop.f32.mrf.mxu0
  %1812 = vdwg.mxu0
  %v1813 = vmax.f32 %v1697, %v1795
  %v1814 = vmax.f32 %v1698, %v1797
  %v1815 = vmax.f32 %v1699, %v1800
  %v1816 = vmax.f32 %v1700, %v1802
  %v1817 = vmax.f32 %v1701, %v1805
  %v1818 = vmax.f32 %v1702, %v1807
  %v1819 = vmax.f32 %v1703, %v1810
  %s1820 = scalar_lea.vmem %s0, 840
  %v1821 = vld [vmem:[%s1820] sm:$0xff]
  %v1822 = vld [vmem:[%s1820 + $0x8] sm:$0xff]
  %v1823 = vld [vmem:[%s1820 + $0x10] sm:$0xff]
  %v1824 = vld [vmem:[%s1820 + $0x18] sm:$0xff]
  %v1825 = vld [vmem:[%s1820 + $0x20] sm:$0xff]
  %v1826 = vld [vmem:[%s1820 + $0x28] sm:$0xff]
  %v1827 = vld [vmem:[%s1820 + $0x30] sm:$0xff]
  %v1835 = vunpack.c.l.b16 %v1821
  %v1836 = vunpack.c.h.b16 %v1821
  %v1837 = vunpack.c.l.b16 %v1822
  %v1838 = vunpack.c.h.b16 %v1822
  %v1839 = vunpack.c.l.b16 %v1823
  %v1840 = vunpack.c.h.b16 %v1823
  %v1841 = vunpack.c.l.b16 %v1824
  %v1842 = vunpack.c.h.b16 %v1824
  %v1843 = vunpack.c.l.b16 %v1825
  %v1844 = vunpack.c.h.b16 %v1825
  %v1845 = vunpack.c.l.b16 %v1826
  %v1846 = vunpack.c.h.b16 %v1826
  %v1847 = vunpack.c.l.b16 %v1827
  %v1848 = vunpack.c.h.b16 %v1827
  %v1849 = vpack.c.b16 %v1837, %v1835
  %v1850 = vpack.c.b16 %v1838, %v1836
  %v1851 = vpack.c.b16 %v1841, %v1839
  %v1852 = vpack.c.b16 %v1842, %v1840
  %v1853 = vpack.c.b16 %v1845, %v1843
  %v1854 = vpack.c.b16 %v1846, %v1844
  %v1855 = vpack.c.b16 %v1847, %v1847
  %v1856 = vpack.c.b16 %v1848, %v1848
  %v1862 = vsel %vm127, %v1850, 0
  %v1865 = vsel %vm127, %v1852, 0
  %v1868 = vsel %vm127, %v1854, 0
  %v1871 = vsel %vm127, %v1856, 0
  %1873 = vmatpush.bf16.msra.mxu0 %v116
  %1874 = vmatpush.bf16.msra.mxu0 %v115
  %1875 = vmatpush.bf16.msra.mxu0 %v114
  %1876 = vmatpush.bf16.msra.mxu0 %v113
  %1877 = vmatpush.bf16.msra.mxu0 %v112
  %1878 = vmatpush.bf16.msra.mxu0 %v111
  %1879 = vmatpush.bf16.msra.mxu0 %v110
  %1880 = vmatpush.bf16.msra.mxu0 %v109
  %1881 = vmatmul.bf16.gmra.mxu0 %v1849
  %v1882 = vpop.f32.mrf.mxu0
  %v1883 = vadd.f32 0.0, %v1882
  %v1884 = vpop.f32.mrf.mxu0
  %v1885 = vadd.f32 0.0, %v1884
  %1886 = vmatmul.bf16.gmra.mxu0 %v1851
  %v1887 = vpop.f32.mrf.mxu0
  %v1888 = vadd.f32 0.0, %v1887
  %v1889 = vpop.f32.mrf.mxu0
  %v1890 = vadd.f32 0.0, %v1889
  %1891 = vmatmul.bf16.gmra.mxu0 %v1853
  %v1892 = vpop.f32.mrf.mxu0
  %v1893 = vadd.f32 0.0, %v1892
  %v1894 = vpop.f32.mrf.mxu0
  %v1895 = vadd.f32 0.0, %v1894
  %1896 = vmatmul.bf16.gmra.mxu0 %v1855
  %v1897 = vpop.f32.mrf.mxu0
  %v1898 = vadd.f32 0.0, %v1897
  %v1899 = vpop.f32.mrf.mxu0
  %1900 = vdwg.mxu0
  %1901 = vmatpush.bf16.msra.mxu0 0
  %1902 = vmatpush.bf16.msra.mxu0 0
  %1903 = vmatpush.bf16.msra.mxu0 0
  %1904 = vmatpush.bf16.msra.mxu0 0
  %1905 = vmatpush.bf16.msra.mxu0 0
  %1906 = vmatpush.bf16.msra.mxu0 0
  %1907 = vmatpush.bf16.msra.mxu0 0
  %1908 = vmatpush.bf16.msra.mxu0 %v117
  %1909 = vmatmul.bf16.gmra.mxu0 %v1862
  %v1910 = vpop.f32.mrf.mxu0
  %v1911 = vadd.f32 %v1883, %v1910
  %v1912 = vpop.f32.mrf.mxu0
  %v1913 = vadd.f32 %v1885, %v1912
  %1914 = vmatmul.bf16.gmra.mxu0 %v1865
  %v1915 = vpop.f32.mrf.mxu0
  %v1916 = vadd.f32 %v1888, %v1915
  %v1917 = vpop.f32.mrf.mxu0
  %v1918 = vadd.f32 %v1890, %v1917
  %1919 = vmatmul.bf16.gmra.mxu0 %v1868
  %v1920 = vpop.f32.mrf.mxu0
  %v1921 = vadd.f32 %v1893, %v1920
  %v1922 = vpop.f32.mrf.mxu0
  %v1923 = vadd.f32 %v1895, %v1922
  %1924 = vmatmul.bf16.gmra.mxu0 %v1871
  %v1925 = vpop.f32.mrf.mxu0
  %v1926 = vadd.f32 %v1898, %v1925
  %v1927 = vpop.f32.mrf.mxu0
  %1928 = vdwg.mxu0
  %v1929 = vmax.f32 %v1813, %v1911
  %v1930 = vmax.f32 %v1814, %v1913
  %v1931 = vmax.f32 %v1815, %v1916
  %v1932 = vmax.f32 %v1816, %v1918
  %v1933 = vmax.f32 %v1817, %v1921
  %v1934 = vmax.f32 %v1818, %v1923
  %v1935 = vmax.f32 %v1819, %v1926
  %v1936 = vld [vmem:[%s2] sm:$0x1]
  %v1938 = vperm.slane %v1936, 0
  %v1940 = vadd.f32 %v1929, %v1938
  %v1941 = vadd.f32 %v1930, %v1938
  %v1942 = vadd.f32 %v1931, %v1938
  %v1943 = vadd.f32 %v1932, %v1938
  %v1944 = vadd.f32 %v1933, %v1938
  %v1945 = vadd.f32 %v1934, %v1938
  %v1946 = vadd.f32 %v1935, %v1938
  %v1947 = vmax.f32 %v1940, 0.0
  %v1948 = vmax.f32 %v1941, 0.0
  %v1949 = vmax.f32 %v1942, 0.0
  %v1950 = vmax.f32 %v1943, 0.0
  %v1951 = vmax.f32 %v1944, 0.0
  %v1952 = vmax.f32 %v1945, 0.0
  %v1953 = vmax.f32 %v1946, 0.0
  %v1954 = vpack.c.bf16 %v1947, %v1947
  %v1955 = vpack.c.bf16 %v1948, %v1948
  %v1956 = vpack.c.bf16 %v1949, %v1949
  %v1957 = vpack.c.bf16 %v1950, %v1950
  %v1958 = vpack.c.bf16 %v1951, %v1951
  %v1959 = vpack.c.bf16 %v1952, %v1952
  %v1960 = vpack.c.bf16 %v1953, %v1953
  %vm1961 = vcmask 257024
  %1962 = vst.msk [vmem:[%s3] sm:$0xf] %vm1961, %v1954
  %1963 = vst.msk [vmem:[%s3 + $0x4] sm:$0xf] %vm1961, %v1955
  %1964 = vst.msk [vmem:[%s3 + $0x8] sm:$0xf] %vm1961, %v1956
  %1965 = vst.msk [vmem:[%s3 + $0xc] sm:$0xf] %vm1961, %v1957
  %1966 = vst.msk [vmem:[%s3 + $0x10] sm:$0xf] %vm1961, %v1958
  %1967 = vst.msk [vmem:[%s3 + $0x14] sm:$0xf] %vm1961, %v1959
  %1968 = vst.msk [vmem:[%s3 + $0x18] sm:$0xf] %vm1961, %v1960
  // Predicated region
  $region14: #{net_forward.4} parent=0 // pred_check
    _
  $region15: #{net_forward.4} parent=0 // pred_check_branch
    %1970 = sbr.rel (0) target = $region17
  $region16: #{net_forward.4} parent=0 // pred_region
    _
  $region17: #{net_forward.4} parent=0 // pred_fallthru
    _
  // Predicated region
  $region18: #{net_forward.4} parent=0 // pred_check
    _
  $region19: #{net_forward.4} parent=0 // pred_check_branch
    %1972 = sbr.rel (0) target = $region21
  $region20: #{net_forward.4} parent=0 // pred_region
    _
  $region21: #{net_forward.4} parent=0 // pred_fallthru
    _

// kernel: net_forward.5
$region0: #{net_forward.5}
  #allocation0 [shape = 'u32[]', space=smem, size = 0x4, offset = 0x4, fixed_abs, tag = 'smem constant byte address 0x4 - core index']
  #allocation1 [shape = 'u32[72,128]{1,0:T(1,128)}', space=vmem, size = 0x9000, scoped, tag = 'internal scratch']
  %s0 = inlined_call_operand.vmem [shape: bf16[4,2,288], index: 0, kind: input, shape index: {}]
  %s1 = inlined_call_operand.vmem [shape: bf16[288,64], index: 1, kind: input, shape index: {}]
  %s2 = inlined_call_operand.vmem [shape: f32[1,64], index: 2, kind: input, shape index: {}]
  %s3 = inlined_call_operand.vmem [shape: bf16[64,1280], index: 3, kind: input, shape index: {}]
  %s4 = inlined_call_operand.vmem [shape: f32[1,1280], index: 4, kind: input, shape index: {}]
  %s5 = inlined_call_operand.vmem [shape: bf16[1280,512], index: 5, kind: input, shape index: {}]
  %s6 = inlined_call_operand.vmem [shape: f32[1,512], index: 6, kind: input, shape index: {}]
  %s7 = inlined_call_operand.vmem [shape: bf16[512,256], index: 7, kind: input, shape index: {}]
  %s8 = inlined_call_operand.vmem [shape: f32[1,256], index: 8, kind: input, shape index: {}]
  %s9 = inlined_call_operand.vmem [shape: bf16[256,9], index: 9, kind: input, shape index: {}]
  %s10 = inlined_call_operand.vmem [shape: f32[1,9], index: 10, kind: input, shape index: {}]
  %s11 = inlined_call_operand.hbm [shape: f32[2,9], index: 11, kind: output, shape index: {}]
  %s12 = sld [smem:[#allocation0]]
  $region54: #{net_forward.5} parent=0
    _
  %s14 = ssub.s32 1, %s12
  %s15 = scalar_select 0, %s14, %s12
  $region1: #{net_forward.5} parent=0
    #allocation2 [shape = 'u8[1024]{0}', space=vmem, size = 0x400, scoped, tag = 'output window, operand 0, single buffered']
    #allocation3 [shape = 's32[1]{0}', space=sflag, size = 0x4, scoped, tag = 'scoped memory for net_forward.5']
    %16 = vsyncpa [#allocation3], 0
    // Predicated region
    $region2: #{net_forward.5} parent=1 // pred_check
      _
    $region3: #{net_forward.5} parent=1 // pred_check_branch
      %18 = sbr.rel (0) target = $region5
    $region4: #{net_forward.5} parent=1 // pred_region
      _
    $region5: #{net_forward.5} parent=1 // pred_fallthru
      _
    // Predicated region
    $region6: #{net_forward.5} parent=1 // pred_check
      _
    $region7: #{net_forward.5} parent=1 // pred_check_branch
      %20 = sbr.rel (0) target = $region9
    $region8: #{net_forward.5} parent=1 // pred_region
      _
    $region9: #{net_forward.5} parent=1 // pred_fallthru
      _
    // Predicated region
    $region10: #{net_forward.5} parent=1 // pred_check
      _
    $region11: #{net_forward.5} parent=1 // pred_check_branch
      %22 = sbr.rel (0) target = $region13
    $region12: #{net_forward.5} parent=1 // pred_region
      _
    $region13: #{net_forward.5} parent=1 // pred_fallthru
      _
    // Predicated region
    $region14: #{net_forward.5} parent=1 // pred_check
      _
    $region15: #{net_forward.5} parent=1 // pred_check_branch
      %24 = sbr.rel (0) target = $region17
    $region16: #{net_forward.5} parent=1 // pred_region
      _
    $region17: #{net_forward.5} parent=1 // pred_fallthru
      _
    // Predicated region
    $region18: #{net_forward.5} parent=1 // pred_check
      _
    $region19: #{net_forward.5} parent=1 // pred_check_branch
      %26 = sbr.rel (0) target = $region21
    $region20: #{net_forward.5} parent=1 // pred_region
      _
    $region21: #{net_forward.5} parent=1 // pred_fallthru
      _
    // Predicated region
    $region22: #{net_forward.5} parent=1 // pred_check
      _
    $region23: #{net_forward.5} parent=1 // pred_check_branch
      %28 = sbr.rel (0) target = $region25
    $region24: #{net_forward.5} parent=1 // pred_region
      _
    $region25: #{net_forward.5} parent=1 // pred_fallthru
      _
    // Predicated region
    $region26: #{net_forward.5} parent=1 // pred_check
      _
    $region27: #{net_forward.5} parent=1 // pred_check_branch
      %30 = sbr.rel (0) target = $region29
    $region28: #{net_forward.5} parent=1 // pred_region
      _
    $region29: #{net_forward.5} parent=1 // pred_fallthru
      _
    // Predicated region
    $region30: #{net_forward.5} parent=1 // pred_check
      _
    $region31: #{net_forward.5} parent=1 // pred_check_branch
      %32 = sbr.rel (0) target = $region33
    $region32: #{net_forward.5} parent=1 // pred_region
      _
    $region33: #{net_forward.5} parent=1 // pred_fallthru
      _
    // Predicated region
    $region34: #{net_forward.5} parent=1 // pred_check
      _
    $region35: #{net_forward.5} parent=1 // pred_check_branch
      %34 = sbr.rel (0) target = $region37
    $region36: #{net_forward.5} parent=1 // pred_region
      _
    $region37: #{net_forward.5} parent=1 // pred_fallthru
      _
    // Predicated region
    $region38: #{net_forward.5} parent=1 // pred_check
      _
    $region39: #{net_forward.5} parent=1 // pred_check_branch
      %36 = sbr.rel (0) target = $region41
    $region40: #{net_forward.5} parent=1 // pred_region
      _
    $region41: #{net_forward.5} parent=1 // pred_fallthru
      _
    // Predicated region
    $region42: #{net_forward.5} parent=1 // pred_check
      _
    $region43: #{net_forward.5} parent=1 // pred_check_branch
      %38 = sbr.rel (0) target = $region45
    $region44: #{net_forward.5} parent=1 // pred_region
      _
    $region45: #{net_forward.5} parent=1 // pred_fallthru
      _
    %v40 = vld [vmem:[%s1] sm:$0xf]
    %v41 = vld [vmem:[%s1 + $0x4] sm:$0xf]
    %v42 = vld [vmem:[%s1 + $0x8] sm:$0xf]
    %v43 = vld [vmem:[%s1 + $0xc] sm:$0xf]
    %v44 = vld [vmem:[%s1 + $0x10] sm:$0xf]
    %v45 = vld [vmem:[%s1 + $0x14] sm:$0xf]
    %v46 = vld [vmem:[%s1 + $0x18] sm:$0xf]
    %v47 = vld [vmem:[%s1 + $0x1c] sm:$0xf]
    %v48 = vld [vmem:[%s1 + $0x20] sm:$0xf]
    %v49 = vld [vmem:[%s1 + $0x24] sm:$0xf]
    %v50 = vld [vmem:[%s1 + $0x28] sm:$0xf]
    %v51 = vld [vmem:[%s1 + $0x2c] sm:$0xf]
    %v52 = vld [vmem:[%s1 + $0x30] sm:$0xf]
    %v53 = vld [vmem:[%s1 + $0x34] sm:$0xf]
    %v54 = vld [vmem:[%s1 + $0x38] sm:$0xf]
    %v55 = vld [vmem:[%s1 + $0x3c] sm:$0xf]
    %v56 = vld [vmem:[%s1 + $0x40] sm:$0xf]
    %v57 = vld [vmem:[%s1 + $0x44] sm:$0xf]
    %v58 = vld [vmem:[%s1 + $0x48] sm:$0xf]
    %v59 = vld [vmem:[%s1 + $0x4c] sm:$0xf]
    %v60 = vld [vmem:[%s1 + $0x50] sm:$0xf]
    %v61 = vld [vmem:[%s1 + $0x54] sm:$0xf]
    %v62 = vld [vmem:[%s1 + $0x58] sm:$0xf]
    %v63 = vld [vmem:[%s1 + $0x5c] sm:$0xf]
    %v64 = vld [vmem:[%s1 + $0x60] sm:$0xf]
    %v65 = vld [vmem:[%s1 + $0x64] sm:$0xf]
    %v66 = vld [vmem:[%s1 + $0x68] sm:$0xf]
    %v67 = vld [vmem:[%s1 + $0x6c] sm:$0xf]
    %v68 = vld [vmem:[%s1 + $0x70] sm:$0xf]
    %v69 = vld [vmem:[%s1 + $0x74] sm:$0xf]
    %v70 = vld [vmem:[%s1 + $0x78] sm:$0xf]
    %v71 = vld [vmem:[%s1 + $0x7c] sm:$0xf]
    %v72 = vld [vmem:[%s1 + $0x80] sm:$0xf]
    %v73 = vld [vmem:[%s1 + $0x84] sm:$0xf]
    %v74 = vld [vmem:[%s1 + $0x88] sm:$0xf]
    %v75 = vld [vmem:[%s1 + $0x8c] sm:$0xf]
    %v76 = vld [vmem:[%s0] sm:$0x7]
    %78 = vst [vmem:[#allocation1] ss:$9 sm:$0xff] %v76
    %v79 = vld [vmem:[#allocation1] sm:$0xff]
    %v80 = vld [vmem:[#allocation1 + $0x9] sm:$0xff]
    %v81 = vld [vmem:[#allocation1 + $0x12] sm:$0xff]
    %v120 = vunpack.c.l.b16 %v40
    %v121 = vunpack.c.l.b16 %v41
    %v122 = vunpack.c.l.b16 %v42
    %v123 = vunpack.c.l.b16 %v43
    %v124 = vunpack.c.l.b16 %v44
    %v125 = vunpack.c.l.b16 %v45
    %v126 = vunpack.c.l.b16 %v46
    %v127 = vunpack.c.l.b16 %v47
    %v128 = vunpack.c.l.b16 %v48
    %v129 = vunpack.c.l.b16 %v49
    %v130 = vunpack.c.l.b16 %v50
    %v131 = vunpack.c.l.b16 %v51
    %v132 = vunpack.c.l.b16 %v52
    %v133 = vunpack.c.l.b16 %v53
    %v134 = vunpack.c.l.b16 %v54
    %v135 = vunpack.c.l.b16 %v55
    %v136 = vunpack.c.l.b16 %v56
    %v137 = vunpack.c.l.b16 %v57
    %v138 = vunpack.c.l.b16 %v58
    %v139 = vunpack.c.l.b16 %v59
    %v140 = vunpack.c.l.b16 %v60
    %v141 = vunpack.c.l.b16 %v61
    %v142 = vunpack.c.l.b16 %v62
    %v143 = vunpack.c.l.b16 %v63
    %v144 = vunpack.c.l.b16 %v64
    %v145 = vunpack.c.l.b16 %v65
    %v146 = vunpack.c.l.b16 %v66
    %v147 = vunpack.c.l.b16 %v67
    %v148 = vunpack.c.l.b16 %v68
    %v149 = vunpack.c.l.b16 %v69
    %v150 = vunpack.c.l.b16 %v70
    %v151 = vunpack.c.l.b16 %v71
    %v152 = vunpack.c.l.b16 %v72
    %v153 = vunpack.c.l.b16 %v73
    %v154 = vunpack.c.l.b16 %v74
    %v155 = vunpack.c.l.b16 %v75
    %v156 = vpack.c.b16 %v121, %v120
    %v157 = vpack.c.b16 %v123, %v122
    %v158 = vpack.c.b16 %v125, %v124
    %v159 = vpack.c.b16 %v127, %v126
    %v160 = vpack.c.b16 %v129, %v128
    %v161 = vpack.c.b16 %v131, %v130
    %v162 = vpack.c.b16 %v133, %v132
    %v163 = vpack.c.b16 %v135, %v134
    %v164 = vpack.c.b16 %v137, %v136
    %v165 = vpack.c.b16 %v139, %v138
    %v166 = vpack.c.b16 %v141, %v140
    %v167 = vpack.c.b16 %v143, %v142
    %v168 = vpack.c.b16 %v145, %v144
    %v169 = vpack.c.b16 %v147, %v146
    %v170 = vpack.c.b16 %v149, %v148
    %v171 = vpack.c.b16 %v151, %v150
    %v172 = vpack.c.b16 %v153, %v152
    %v173 = vpack.c.b16 %v155, %v154
    %vm192 = vcmask 261120
    %v193 = vsel %vm192, %v81, 0
    %195 = vmatpush.bf16.msra.mxu0 %v163
    %196 = vmatpush.bf16.msra.mxu0 %v162
    %197 = vmatpush.bf16.msra.mxu0 %v161
    %198 = vmatpush.bf16.msra.mxu0 %v160
    %199 = vmatpush.bf16.msra.mxu0 %v159
    %200 = vmatpush.bf16.msra.mxu0 %v158
    %201 = vmatpush.bf16.msra.mxu0 %v157
    %202 = vmatpush.bf16.msra.mxu0 %v156
    %203 = vmatmul.bf16.gmra.mxu0 %v79
    %v204 = vpop.f32.mrf.mxu0
    %v205 = vadd.f32 0.0, %v204
    %v206 = vpop.f32.mrf.mxu0
    %207 = vdwg.mxu0
    %208 = vmatpush.bf16.msra.mxu0 %v171
    %209 = vmatpush.bf16.msra.mxu0 %v170
    %210 = vmatpush.bf16.msra.mxu0 %v169
    %211 = vmatpush.bf16.msra.mxu0 %v168
    %212 = vmatpush.bf16.msra.mxu0 %v167
    %213 = vmatpush.bf16.msra.mxu0 %v166
    %214 = vmatpush.bf16.msra.mxu0 %v165
    %215 = vmatpush.bf16.msra.mxu0 %v164
    %216 = vmatmul.bf16.gmra.mxu0 %v80
    %v217 = vpop.f32.mrf.mxu0
    %v218 = vadd.f32 %v205, %v217
    %v219 = vpop.f32.mrf.mxu0
    %220 = vdwg.mxu0
    %221 = vmatpush.bf16.msra.mxu0 0
    %222 = vmatpush.bf16.msra.mxu0 0
    %223 = vmatpush.bf16.msra.mxu0 0
    %224 = vmatpush.bf16.msra.mxu0 0
    %225 = vmatpush.bf16.msra.mxu0 0
    %226 = vmatpush.bf16.msra.mxu0 0
    %227 = vmatpush.bf16.msra.mxu0 %v173
    %228 = vmatpush.bf16.msra.mxu0 %v172
    %229 = vmatmul.bf16.gmra.mxu0 %v193
    %v230 = vpop.f32.mrf.mxu0
    %v231 = vadd.f32 %v218, %v230
    %v232 = vpop.f32.mrf.mxu0
    %233 = vdwg.mxu0
    %s234 = scalar_lea.vmem %s0, 3
    %v235 = vld [vmem:[%s234] sm:$0x7]
    %237 = vst [vmem:[#allocation1] ss:$9 sm:$0xff] %v235
    %v238 = vld [vmem:[#allocation1] sm:$0xff]
    %v239 = vld [vmem:[#allocation1 + $0x9] sm:$0xff]
    %v240 = vld [vmem:[#allocation1 + $0x12] sm:$0xff]
    %v243 = vsel %vm192, %v240, 0
    %245 = vmatpush.bf16.msra.mxu0 %v163
    %246 = vmatpush.bf16.msra.mxu0 %v162
    %247 = vmatpush.bf16.msra.mxu0 %v161
    %248 = vmatpush.bf16.msra.mxu0 %v160
    %249 = vmatpush.bf16.msra.mxu0 %v159
    %250 = vmatpush.bf16.msra.mxu0 %v158
    %251 = vmatpush.bf16.msra.mxu0 %v157
    %252 = vmatpush.bf16.msra.mxu0 %v156
    %253 = vmatmul.bf16.gmra.mxu0 %v238
    %v254 = vpop.f32.mrf.mxu0
    %v255 = vadd.f32 0.0, %v254
    %v256 = vpop.f32.mrf.mxu0
    %257 = vdwg.mxu0
    %258 = vmatpush.bf16.msra.mxu0 %v171
    %259 = vmatpush.bf16.msra.mxu0 %v170
    %260 = vmatpush.bf16.msra.mxu0 %v169
    %261 = vmatpush.bf16.msra.mxu0 %v168
    %262 = vmatpush.bf16.msra.mxu0 %v167
    %263 = vmatpush.bf16.msra.mxu0 %v166
    %264 = vmatpush.bf16.msra.mxu0 %v165
    %265 = vmatpush.bf16.msra.mxu0 %v164
    %266 = vmatmul.bf16.gmra.mxu0 %v239
    %v267 = vpop.f32.mrf.mxu0
    %v268 = vadd.f32 %v255, %v267
    %v269 = vpop.f32.mrf.mxu0
    %270 = vdwg.mxu0
    %271 = vmatpush.bf16.msra.mxu0 0
    %272 = vmatpush.bf16.msra.mxu0 0
    %273 = vmatpush.bf16.msra.mxu0 0
    %274 = vmatpush.bf16.msra.mxu0 0
    %275 = vmatpush.bf16.msra.mxu0 0
    %276 = vmatpush.bf16.msra.mxu0 0
    %277 = vmatpush.bf16.msra.mxu0 %v173
    %278 = vmatpush.bf16.msra.mxu0 %v172
    %279 = vmatmul.bf16.gmra.mxu0 %v243
    %v280 = vpop.f32.mrf.mxu0
    %v281 = vadd.f32 %v268, %v280
    %v282 = vpop.f32.mrf.mxu0
    %283 = vdwg.mxu0
    %v284 = vmax.f32 %v231, %v281
    %s285 = scalar_lea.vmem %s0, 6
    %v286 = vld [vmem:[%s285] sm:$0x7]
    %288 = vst [vmem:[#allocation1] ss:$9 sm:$0xff] %v286
    %v289 = vld [vmem:[#allocation1] sm:$0xff]
    %v290 = vld [vmem:[#allocation1 + $0x9] sm:$0xff]
    %v291 = vld [vmem:[#allocation1 + $0x12] sm:$0xff]
    %v294 = vsel %vm192, %v291, 0
    %296 = vmatpush.bf16.msra.mxu0 %v163
    %297 = vmatpush.bf16.msra.mxu0 %v162
    %298 = vmatpush.bf16.msra.mxu0 %v161
    %299 = vmatpush.bf16.msra.mxu0 %v160
    %300 = vmatpush.bf16.msra.mxu0 %v159
    %301 = vmatpush.bf16.msra.mxu0 %v158
    %302 = vmatpush.bf16.msra.mxu0 %v157
    %303 = vmatpush.bf16.msra.mxu0 %v156
    %304 = vmatmul.bf16.gmra.mxu0 %v289
    %v305 = vpop.f32.mrf.mxu0
    %v306 = vadd.f32 0.0, %v305
    %v307 = vpop.f32.mrf.mxu0
    %308 = vdwg.mxu0
    %309 = vmatpush.bf16.msra.mxu0 %v171
    %310 = vmatpush.bf16.msra.mxu0 %v170
    %311 = vmatpush.bf16.msra.mxu0 %v169
    %312 = vmatpush.bf16.msra.mxu0 %v168
    %313 = vmatpush.bf16.msra.mxu0 %v167
    %314 = vmatpush.bf16.msra.mxu0 %v166
    %315 = vmatpush.bf16.msra.mxu0 %v165
    %316 = vmatpush.bf16.msra.mxu0 %v164
    %317 = vmatmul.bf16.gmra.mxu0 %v290
    %v318 = vpop.f32.mrf.mxu0
    %v319 = vadd.f32 %v306, %v318
    %v320 = vpop.f32.mrf.mxu0
    %321 = vdwg.mxu0
    %322 = vmatpush.bf16.msra.mxu0 0
    %323 = vmatpush.bf16.msra.mxu0 0
    %324 = vmatpush.bf16.msra.mxu0 0
    %325 = vmatpush.bf16.msra.mxu0 0
    %326 = vmatpush.bf16.msra.mxu0 0
    %327 = vmatpush.bf16.msra.mxu0 0
    %328 = vmatpush.bf16.msra.mxu0 %v173
    %329 = vmatpush.bf16.msra.mxu0 %v172
    %330 = vmatmul.bf16.gmra.mxu0 %v294
    %v331 = vpop.f32.mrf.mxu0
    %v332 = vadd.f32 %v319, %v331
    %v333 = vpop.f32.mrf.mxu0
    %334 = vdwg.mxu0
    %v335 = vmax.f32 %v284, %v332
    %s336 = scalar_lea.vmem %s0, 9
    %v337 = vld [vmem:[%s336] sm:$0x7]
    %339 = vst [vmem:[#allocation1] ss:$9 sm:$0xff] %v337
    %v340 = vld [vmem:[#allocation1] sm:$0xff]
    %v341 = vld [vmem:[#allocation1 + $0x9] sm:$0xff]
    %v342 = vld [vmem:[#allocation1 + $0x12] sm:$0xff]
    %v345 = vsel %vm192, %v342, 0
    %347 = vmatpush.bf16.msra.mxu0 %v163
    %348 = vmatpush.bf16.msra.mxu0 %v162
    %349 = vmatpush.bf16.msra.mxu0 %v161
    %350 = vmatpush.bf16.msra.mxu0 %v160
    %351 = vmatpush.bf16.msra.mxu0 %v159
    %352 = vmatpush.bf16.msra.mxu0 %v158
    %353 = vmatpush.bf16.msra.mxu0 %v157
    %354 = vmatpush.bf16.msra.mxu0 %v156
    %355 = vmatmul.bf16.gmra.mxu0 %v340
    %v356 = vpop.f32.mrf.mxu0
    %v357 = vadd.f32 0.0, %v356
    %v358 = vpop.f32.mrf.mxu0
    %359 = vdwg.mxu0
    %360 = vmatpush.bf16.msra.mxu0 %v171
    %361 = vmatpush.bf16.msra.mxu0 %v170
    %362 = vmatpush.bf16.msra.mxu0 %v169
    %363 = vmatpush.bf16.msra.mxu0 %v168
    %364 = vmatpush.bf16.msra.mxu0 %v167
    %365 = vmatpush.bf16.msra.mxu0 %v166
    %366 = vmatpush.bf16.msra.mxu0 %v165
    %367 = vmatpush.bf16.msra.mxu0 %v164
    %368 = vmatmul.bf16.gmra.mxu0 %v341
    %v369 = vpop.f32.mrf.mxu0
    %v370 = vadd.f32 %v357, %v369
    %v371 = vpop.f32.mrf.mxu0
    %372 = vdwg.mxu0
    %373 = vmatpush.bf16.msra.mxu0 0
    %374 = vmatpush.bf16.msra.mxu0 0
    %375 = vmatpush.bf16.msra.mxu0 0
    %376 = vmatpush.bf16.msra.mxu0 0
    %377 = vmatpush.bf16.msra.mxu0 0
    %378 = vmatpush.bf16.msra.mxu0 0
    %379 = vmatpush.bf16.msra.mxu0 %v173
    %380 = vmatpush.bf16.msra.mxu0 %v172
    %381 = vmatmul.bf16.gmra.mxu0 %v345
    %v382 = vpop.f32.mrf.mxu0
    %v383 = vadd.f32 %v370, %v382
    %v384 = vpop.f32.mrf.mxu0
    %385 = vdwg.mxu0
    %v386 = vmax.f32 %v335, %v383
    %v387 = vld [vmem:[%s2] sm:$0x1]
    %v389 = vperm.slane %v387, 0
    %v391 = vadd.f32 %v386, %v389
    %v392 = vmax.f32 %v391, 0.0
    %v393 = vpack.c.bf16 %v392, %v392
    %v394 = vld [vmem:[%s3] sm:$0xff]
    %v395 = vld [vmem:[%s3 + $0x8] sm:$0xff]
    %v396 = vld [vmem:[%s3 + $0x10] sm:$0xff]
    %v397 = vld [vmem:[%s3 + $0x18] sm:$0xff]
    %v398 = vld [vmem:[%s3 + $0x20] sm:$0xff]
    %v399 = vld [vmem:[%s3 + $0x28] sm:$0xff]
    %v400 = vld [vmem:[%s3 + $0x30] sm:$0xff]
    %v401 = vld [vmem:[%s3 + $0x38] sm:$0xff]
    %v402 = vld [vmem:[%s3 + $0x40] sm:$0xff]
    %v403 = vld [vmem:[%s3 + $0x48] sm:$0xff]
    %v404 = vld [vmem:[%s3 + $0x50] sm:$0xff]
    %v405 = vld [vmem:[%s3 + $0x58] sm:$0xff]
    %v406 = vld [vmem:[%s3 + $0x60] sm:$0xff]
    %v407 = vld [vmem:[%s3 + $0x68] sm:$0xff]
    %v408 = vld [vmem:[%s3 + $0x70] sm:$0xff]
    %v409 = vld [vmem:[%s3 + $0x78] sm:$0xff]
    %v410 = vld [vmem:[%s3 + $0x80] sm:$0xff]
    %v411 = vld [vmem:[%s3 + $0x88] sm:$0xff]
    %v412 = vld [vmem:[%s3 + $0x90] sm:$0xff]
    %v413 = vld [vmem:[%s3 + $0x98] sm:$0xff]
    %v414 = vld [vmem:[%s3 + $0xa0] sm:$0xff]
    %v415 = vld [vmem:[%s3 + $0xa8] sm:$0xff]
    %v416 = vld [vmem:[%s3 + $0xb0] sm:$0xff]
    %v417 = vld [vmem:[%s3 + $0xb8] sm:$0xff]
    %v418 = vld [vmem:[%s3 + $0xc0] sm:$0xff]
    %v419 = vld [vmem:[%s3 + $0xc8] sm:$0xff]
    %v420 = vld [vmem:[%s3 + $0xd0] sm:$0xff]
    %v421 = vld [vmem:[%s3 + $0xd8] sm:$0xff]
    %v422 = vld [vmem:[%s3 + $0xe0] sm:$0xff]
    %v423 = vld [vmem:[%s3 + $0xe8] sm:$0xff]
    %v424 = vld [vmem:[%s3 + $0xf0] sm:$0xff]
    %v425 = vld [vmem:[%s3 + $0xf8] sm:$0xff]
    %v426 = vld [vmem:[%s3 + $0x100] sm:$0xff]
    %v427 = vld [vmem:[%s3 + $0x108] sm:$0xff]
    %v428 = vld [vmem:[%s3 + $0x110] sm:$0xff]
    %v429 = vld [vmem:[%s3 + $0x118] sm:$0xff]
    %v430 = vld [vmem:[%s3 + $0x120] sm:$0xff]
    %v431 = vld [vmem:[%s3 + $0x128] sm:$0xff]
    %v432 = vld [vmem:[%s3 + $0x130] sm:$0xff]
    %v433 = vld [vmem:[%s3 + $0x138] sm:$0xff]
    %v434 = vld [vmem:[%s4] sm:$0xff]
    %v435 = vld [vmem:[%s4 + $0x8] sm:$0x3]
    %v438 = vperm.slane %v434, 0
    %v439 = vperm.slane %v434, 1
    %v440 = vperm.slane %v434, 2
    %v441 = vperm.slane %v434, 3
    %v442 = vperm.slane %v434, 4
    %v443 = vperm.slane %v434, 5
    %v444 = vperm.slane %v434, 6
    %v445 = vperm.slane %v434, 7
    %v446 = vperm.slane %v435, 0
    %v447 = vperm.slane %v435, 1
    %v498 = vunpack.c.l.b16 %v394
    %v499 = vunpack.c.h.b16 %v394
    %v500 = vunpack.c.l.b16 %v395
    %v501 = vunpack.c.h.b16 %v395
    %v502 = vunpack.c.l.b16 %v396
    %v503 = vunpack.c.h.b16 %v396
    %v504 = vunpack.c.l.b16 %v397
    %v505 = vunpack.c.h.b16 %v397
    %v506 = vunpack.c.l.b16 %v398
    %v507 = vunpack.c.h.b16 %v398
    %v508 = vunpack.c.l.b16 %v399
    %v509 = vunpack.c.h.b16 %v399
    %v510 = vunpack.c.l.b16 %v400
    %v511 = vunpack.c.h.b16 %v400
    %v512 = vunpack.c.l.b16 %v401
    %v513 = vunpack.c.h.b16 %v401
    %v514 = vunpack.c.l.b16 %v402
    %v515 = vunpack.c.h.b16 %v402
    %v516 = vunpack.c.l.b16 %v403
    %v517 = vunpack.c.h.b16 %v403
    %v518 = vunpack.c.l.b16 %v404
    %v519 = vunpack.c.h.b16 %v404
    %v520 = vunpack.c.l.b16 %v405
    %v521 = vunpack.c.h.b16 %v405
    %v522 = vunpack.c.l.b16 %v406
    %v523 = vunpack.c.h.b16 %v406
    %v524 = vunpack.c.l.b16 %v407
    %v525 = vunpack.c.h.b16 %v407
    %v526 = vunpack.c.l.b16 %v408
    %v527 = vunpack.c.h.b16 %v408
    %v528 = vunpack.c.l.b16 %v409
    %v529 = vunpack.c.h.b16 %v409
    %v530 = vunpack.c.l.b16 %v410
    %v531 = vunpack.c.h.b16 %v410
    %v532 = vunpack.c.l.b16 %v411
    %v533 = vunpack.c.h.b16 %v411
    %v534 = vunpack.c.l.b16 %v412
    %v535 = vunpack.c.h.b16 %v412
    %v536 = vunpack.c.l.b16 %v413
    %v537 = vunpack.c.h.b16 %v413
    %v538 = vunpack.c.l.b16 %v414
    %v539 = vunpack.c.h.b16 %v414
    %v540 = vunpack.c.l.b16 %v415
    %v541 = vunpack.c.h.b16 %v415
    %v542 = vunpack.c.l.b16 %v416
    %v543 = vunpack.c.h.b16 %v416
    %v544 = vunpack.c.l.b16 %v417
    %v545 = vunpack.c.h.b16 %v417
    %v546 = vunpack.c.l.b16 %v418
    %v547 = vunpack.c.h.b16 %v418
    %v548 = vunpack.c.l.b16 %v419
    %v549 = vunpack.c.h.b16 %v419
    %v550 = vunpack.c.l.b16 %v420
    %v551 = vunpack.c.h.b16 %v420
    %v552 = vunpack.c.l.b16 %v421
    %v553 = vunpack.c.h.b16 %v421
    %v554 = vunpack.c.l.b16 %v422
    %v555 = vunpack.c.h.b16 %v422
    %v556 = vunpack.c.l.b16 %v423
    %v557 = vunpack.c.h.b16 %v423
    %v558 = vunpack.c.l.b16 %v424
    %v559 = vunpack.c.h.b16 %v424
    %v560 = vunpack.c.l.b16 %v425
    %v561 = vunpack.c.h.b16 %v425
    %v562 = vunpack.c.l.b16 %v426
    %v563 = vunpack.c.h.b16 %v426
    %v564 = vunpack.c.l.b16 %v427
    %v565 = vunpack.c.h.b16 %v427
    %v566 = vunpack.c.l.b16 %v428
    %v567 = vunpack.c.h.b16 %v428
    %v568 = vunpack.c.l.b16 %v429
    %v569 = vunpack.c.h.b16 %v429
    %v570 = vunpack.c.l.b16 %v430
    %v571 = vunpack.c.h.b16 %v430
    %v572 = vunpack.c.l.b16 %v431
    %v573 = vunpack.c.h.b16 %v431
    %v574 = vunpack.c.l.b16 %v432
    %v575 = vunpack.c.h.b16 %v432
    %v576 = vunpack.c.l.b16 %v433
    %v577 = vunpack.c.h.b16 %v433
    %v578 = vpack.c.b16 %v508, %v498
    %v579 = vpack.c.b16 %v509, %v499
    %v580 = vpack.c.b16 %v510, %v500
    %v581 = vpack.c.b16 %v511, %v501
    %v582 = vpack.c.b16 %v512, %v502
    %v583 = vpack.c.b16 %v513, %v503
    %v584 = vpack.c.b16 %v514, %v504
    %v585 = vpack.c.b16 %v515, %v505
    %v586 = vpack.c.b16 %v516, %v506
    %v587 = vpack.c.b16 %v517, %v507
    %v588 = vpack.c.b16 %v528, %v518
    %v589 = vpack.c.b16 %v529, %v519
    %v590 = vpack.c.b16 %v530, %v520
    %v591 = vpack.c.b16 %v531, %v521
    %v592 = vpack.c.b16 %v532, %v522
    %v593 = vpack.c.b16 %v533, %v523
    %v594 = vpack.c.b16 %v534, %v524
    %v595 = vpack.c.b16 %v535, %v525
    %v596 = vpack.c.b16 %v536, %v526
    %v597 = vpack.c.b16 %v537, %v527
    %v598 = vpack.c.b16 %v548, %v538
    %v599 = vpack.c.b16 %v549, %v539
    %v600 = vpack.c.b16 %v550, %v540
    %v601 = vpack.c.b16 %v551, %v541
    %v602 = vpack.c.b16 %v552, %v542
    %v603 = vpack.c.b16 %v553, %v543
    %v604 = vpack.c.b16 %v554, %v544
    %v605 = vpack.c.b16 %v555, %v545
    %v606 = vpack.c.b16 %v556, %v546
    %v607 = vpack.c.b16 %v557, %v547
    %v608 = vpack.c.b16 %v568, %v558
    %v609 = vpack.c.b16 %v569, %v559
    %v610 = vpack.c.b16 %v570, %v560
    %v611 = vpack.c.b16 %v571, %v561
    %v612 = vpack.c.b16 %v572, %v562
    %v613 = vpack.c.b16 %v573, %v563
    %v614 = vpack.c.b16 %v574, %v564
    %v615 = vpack.c.b16 %v575, %v565
    %v616 = vpack.c.b16 %v576, %v566
    %v617 = vpack.c.b16 %v577, %v567
    %vm658 = vcmask 523264
    %v660 = vsel %vm658, %v393, 0
    %662 = vmatpush.bf16.msra.mxu0 0
    %663 = vmatpush.bf16.msra.mxu0 0
    %664 = vmatpush.bf16.msra.mxu0 0
    %665 = vmatpush.bf16.msra.mxu0 0
    %666 = vmatpush.bf16.msra.mxu0 %v608
    %667 = vmatpush.bf16.msra.mxu0 %v598
    %668 = vmatpush.bf16.msra.mxu0 %v588
    %669 = vmatpush.bf16.msra.mxu0 %v578
    %670 = vmatmul.bf16.gmra.mxu0 %v660
    %v671 = vpop.f32.mrf.mxu0
    %v672 = vadd.f32 %v438, %v671
    %v673 = vpop.f32.mrf.mxu0
    %674 = vdwg.mxu0
    %675 = vmatpush.bf16.msra.mxu0 0
    %676 = vmatpush.bf16.msra.mxu0 0
    %677 = vmatpush.bf16.msra.mxu0 0
    %678 = vmatpush.bf16.msra.mxu0 0
    %679 = vmatpush.bf16.msra.mxu0 %v609
    %680 = vmatpush.bf16.msra.mxu0 %v599
    %681 = vmatpush.bf16.msra.mxu0 %v589
    %682 = vmatpush.bf16.msra.mxu0 %v579
    %683 = vmatmul.bf16.gmra.mxu0 %v660
    %v684 = vpop.f32.mrf.mxu0
    %v685 = vadd.f32 %v439, %v684
    %v686 = vpop.f32.mrf.mxu0
    %687 = vdwg.mxu0
    %688 = vmatpush.bf16.msra.mxu0 0
    %689 = vmatpush.bf16.msra.mxu0 0
    %690 = vmatpush.bf16.msra.mxu0 0
    %691 = vmatpush.bf16.msra.mxu0 0
    %692 = vmatpush.bf16.msra.mxu0 %v610
    %693 = vmatpush.bf16.msra.mxu0 %v600
    %694 = vmatpush.bf16.msra.mxu0 %v590
    %695 = vmatpush.bf16.msra.mxu0 %v580
    %696 = vmatmul.bf16.gmra.mxu0 %v660
    %v697 = vpop.f32.mrf.mxu0
    %v698 = vadd.f32 %v440, %v697
    %v699 = vpop.f32.mrf.mxu0
    %700 = vdwg.mxu0
    %701 = vmatpush.bf16.msra.mxu0 0
    %702 = vmatpush.bf16.msra.mxu0 0
    %703 = vmatpush.bf16.msra.mxu0 0
    %704 = vmatpush.bf16.msra.mxu0 0
    %705 = vmatpush.bf16.msra.mxu0 %v611
    %706 = vmatpush.bf16.msra.mxu0 %v601
    %707 = vmatpush.bf16.msra.mxu0 %v591
    %708 = vmatpush.bf16.msra.mxu0 %v581
    %709 = vmatmul.bf16.gmra.mxu0 %v660
    %v710 = vpop.f32.mrf.mxu0
    %v711 = vadd.f32 %v441, %v710
    %v712 = vpop.f32.mrf.mxu0
    %713 = vdwg.mxu0
    %714 = vmatpush.bf16.msra.mxu0 0
    %715 = vmatpush.bf16.msra.mxu0 0
    %716 = vmatpush.bf16.msra.mxu0 0
    %717 = vmatpush.bf16.msra.mxu0 0
    %718 = vmatpush.bf16.msra.mxu0 %v612
    %719 = vmatpush.bf16.msra.mxu0 %v602
    %720 = vmatpush.bf16.msra.mxu0 %v592
    %721 = vmatpush.bf16.msra.mxu0 %v582
    %722 = vmatmul.bf16.gmra.mxu0 %v660
    %v723 = vpop.f32.mrf.mxu0
    %v724 = vadd.f32 %v442, %v723
    %v725 = vpop.f32.mrf.mxu0
    %726 = vdwg.mxu0
    %727 = vmatpush.bf16.msra.mxu0 0
    %728 = vmatpush.bf16.msra.mxu0 0
    %729 = vmatpush.bf16.msra.mxu0 0
    %730 = vmatpush.bf16.msra.mxu0 0
    %731 = vmatpush.bf16.msra.mxu0 %v613
    %732 = vmatpush.bf16.msra.mxu0 %v603
    %733 = vmatpush.bf16.msra.mxu0 %v593
    %734 = vmatpush.bf16.msra.mxu0 %v583
    %735 = vmatmul.bf16.gmra.mxu0 %v660
    %v736 = vpop.f32.mrf.mxu0
    %v737 = vadd.f32 %v443, %v736
    %v738 = vpop.f32.mrf.mxu0
    %739 = vdwg.mxu0
    %740 = vmatpush.bf16.msra.mxu0 0
    %741 = vmatpush.bf16.msra.mxu0 0
    %742 = vmatpush.bf16.msra.mxu0 0
    %743 = vmatpush.bf16.msra.mxu0 0
    %744 = vmatpush.bf16.msra.mxu0 %v614
    %745 = vmatpush.bf16.msra.mxu0 %v604
    %746 = vmatpush.bf16.msra.mxu0 %v594
    %747 = vmatpush.bf16.msra.mxu0 %v584
    %748 = vmatmul.bf16.gmra.mxu0 %v660
    %v749 = vpop.f32.mrf.mxu0
    %v750 = vadd.f32 %v444, %v749
    %v751 = vpop.f32.mrf.mxu0
    %752 = vdwg.mxu0
    %753 = vmatpush.bf16.msra.mxu0 0
    %754 = vmatpush.bf16.msra.mxu0 0
    %755 = vmatpush.bf16.msra.mxu0 0
    %756 = vmatpush.bf16.msra.mxu0 0
    %757 = vmatpush.bf16.msra.mxu0 %v615
    %758 = vmatpush.bf16.msra.mxu0 %v605
    %759 = vmatpush.bf16.msra.mxu0 %v595
    %760 = vmatpush.bf16.msra.mxu0 %v585
    %761 = vmatmul.bf16.gmra.mxu0 %v660
    %v762 = vpop.f32.mrf.mxu0
    %v763 = vadd.f32 %v445, %v762
    %v764 = vpop.f32.mrf.mxu0
    %765 = vdwg.mxu0
    %766 = vmatpush.bf16.msra.mxu0 0
    %767 = vmatpush.bf16.msra.mxu0 0
    %768 = vmatpush.bf16.msra.mxu0 0
    %769 = vmatpush.bf16.msra.mxu0 0
    %770 = vmatpush.bf16.msra.mxu0 %v616
    %771 = vmatpush.bf16.msra.mxu0 %v606
    %772 = vmatpush.bf16.msra.mxu0 %v596
    %773 = vmatpush.bf16.msra.mxu0 %v586
    %774 = vmatmul.bf16.gmra.mxu0 %v660
    %v775 = vpop.f32.mrf.mxu0
    %v776 = vadd.f32 %v446, %v775
    %v777 = vpop.f32.mrf.mxu0
    %778 = vdwg.mxu0
    %779 = vmatpush.bf16.msra.mxu0 0
    %780 = vmatpush.bf16.msra.mxu0 0
    %781 = vmatpush.bf16.msra.mxu0 0
    %782 = vmatpush.bf16.msra.mxu0 0
    %783 = vmatpush.bf16.msra.mxu0 %v617
    %784 = vmatpush.bf16.msra.mxu0 %v607
    %785 = vmatpush.bf16.msra.mxu0 %v597
    %786 = vmatpush.bf16.msra.mxu0 %v587
    %787 = vmatmul.bf16.gmra.mxu0 %v660
    %v788 = vpop.f32.mrf.mxu0
    %v789 = vadd.f32 %v447, %v788
    %v790 = vpop.f32.mrf.mxu0
    %791 = vdwg.mxu0
    %v792 = vpack.c.bf16 %v672, %v672
    %v793 = vpack.c.bf16 %v685, %v685
    %v794 = vpack.c.bf16 %v698, %v698
    %v795 = vpack.c.bf16 %v711, %v711
    %v796 = vpack.c.bf16 %v724, %v724
    %v797 = vpack.c.bf16 %v737, %v737
    %v798 = vpack.c.bf16 %v750, %v750
    %v799 = vpack.c.bf16 %v763, %v763
    %v800 = vpack.c.bf16 %v776, %v776
    %v801 = vpack.c.bf16 %v789, %v789
    %v802 = vld [vmem:[%s5] sm:$0xff]
    %v803 = vld [vmem:[%s5 + $0x8] sm:$0xff]
    %v804 = vld [vmem:[%s5 + $0x10] sm:$0xff]
    %v805 = vld [vmem:[%s5 + $0x18] sm:$0xff]
    %v806 = vld [vmem:[%s5 + $0x20] sm:$0xff]
    %v807 = vld [vmem:[%s5 + $0x28] sm:$0xff]
    %v808 = vld [vmem:[%s5 + $0x30] sm:$0xff]
    %v809 = vld [vmem:[%s5 + $0x38] sm:$0xff]
    %v810 = vld [vmem:[%s5 + $0x40] sm:$0xff]
    %v811 = vld [vmem:[%s5 + $0x48] sm:$0xff]
    %v812 = vld [vmem:[%s5 + $0x50] sm:$0xff]
    %v813 = vld [vmem:[%s5 + $0x58] sm:$0xff]
    %v814 = vld [vmem:[%s5 + $0x60] sm:$0xff]
    %v815 = vld [vmem:[%s5 + $0x68] sm:$0xff]
    %v816 = vld [vmem:[%s5 + $0x70] sm:$0xff]
    %v817 = vld [vmem:[%s5 + $0x78] sm:$0xff]
    %v818 = vld [vmem:[%s5 + $0x80] sm:$0xff]
    %v819 = vld [vmem:[%s5 + $0x88] sm:$0xff]
    %v820 = vld [vmem:[%s5 + $0x90] sm:$0xff]
    %v821 = vld [vmem:[%s5 + $0x98] sm:$0xff]
    %v822 = vld [vmem:[%s5 + $0xa0] sm:$0xff]
    %v823 = vld [vmem:[%s5 + $0xa8] sm:$0xff]
    %v824 = vld [vmem:[%s5 + $0xb0] sm:$0xff]
    %v825 = vld [vmem:[%s5 + $0xb8] sm:$0xff]
    %v826 = vld [vmem:[%s5 + $0xc0] sm:$0xff]
    %v827 = vld [vmem:[%s5 + $0xc8] sm:$0xff]
    %v828 = vld [vmem:[%s5 + $0xd0] sm:$0xff]
    %v829 = vld [vmem:[%s5 + $0xd8] sm:$0xff]
    %v830 = vld [vmem:[%s5 + $0xe0] sm:$0xff]
    %v831 = vld [vmem:[%s5 + $0xe8] sm:$0xff]
    %v832 = vld [vmem:[%s5 + $0xf0] sm:$0xff]
    %v833 = vld [vmem:[%s5 + $0xf8] sm:$0xff]
    %v834 = vld [vmem:[%s5 + $0x100] sm:$0xff]
    %v835 = vld [vmem:[%s5 + $0x108] sm:$0xff]
    %v836 = vld [vmem:[%s5 + $0x110] sm:$0xff]
    %v837 = vld [vmem:[%s5 + $0x118] sm:$0xff]
    %v838 = vld [vmem:[%s5 + $0x120] sm:$0xff]
    %v839 = vld [vmem:[%s5 + $0x128] sm:$0xff]
    %v840 = vld [vmem:[%s5 + $0x130] sm:$0xff]
    %v841 = vld [vmem:[%s5 + $0x138] sm:$0xff]
    %v842 = vld [vmem:[%s5 + $0x140] sm:$0xff]
    %v843 = vld [vmem:[%s5 + $0x148] sm:$0xff]
    %v844 = vld [vmem:[%s5 + $0x150] sm:$0xff]
    %v845 = vld [vmem:[%s5 + $0x158] sm:$0xff]
    %v846 = vld [vmem:[%s5 + $0x160] sm:$0xff]
    %v847 = vld [vmem:[%s5 + $0x168] sm:$0xff]
    %v848 = vld [vmem:[%s5 + $0x170] sm:$0xff]
    %v849 = vld [vmem:[%s5 + $0x178] sm:$0xff]
    %v850 = vld [vmem:[%s5 + $0x180] sm:$0xff]
    %v851 = vld [vmem:[%s5 + $0x188] sm:$0xff]
    %v852 = vld [vmem:[%s5 + $0x190] sm:$0xff]
    %v853 = vld [vmem:[%s5 + $0x198] sm:$0xff]
    %v854 = vld [vmem:[%s5 + $0x1a0] sm:$0xff]
    %v855 = vld [vmem:[%s5 + $0x1a8] sm:$0xff]
    %v856 = vld [vmem:[%s5 + $0x1b0] sm:$0xff]
    %v857 = vld [vmem:[%s5 + $0x1b8] sm:$0xff]
    %v858 = vld [vmem:[%s5 + $0x1c0] sm:$0xff]
    %v859 = vld [vmem:[%s5 + $0x1c8] sm:$0xff]
    %v860 = vld [vmem:[%s5 + $0x1d0] sm:$0xff]
    %v861 = vld [vmem:[%s5 + $0x1d8] sm:$0xff]
    %v862 = vld [vmem:[%s5 + $0x1e0] sm:$0xff]
    %v863 = vld [vmem:[%s5 + $0x1e8] sm:$0xff]
    %v864 = vld [vmem:[%s5 + $0x1f0] sm:$0xff]
    %v865 = vld [vmem:[%s5 + $0x1f8] sm:$0xff]
    %v866 = vld [vmem:[%s5 + $0x200] sm:$0xff]
    %v867 = vld [vmem:[%s5 + $0x208] sm:$0xff]
    %v868 = vld [vmem:[%s5 + $0x210] sm:$0xff]
    %v869 = vld [vmem:[%s5 + $0x218] sm:$0xff]
    %v870 = vld [vmem:[%s5 + $0x220] sm:$0xff]
    %v871 = vld [vmem:[%s5 + $0x228] sm:$0xff]
    %v872 = vld [vmem:[%s5 + $0x230] sm:$0xff]
    %v873 = vld [vmem:[%s5 + $0x238] sm:$0xff]
    %v874 = vld [vmem:[%s5 + $0x240] sm:$0xff]
    %v875 = vld [vmem:[%s5 + $0x248] sm:$0xff]
    %v876 = vld [vmem:[%s5 + $0x250] sm:$0xff]
    %v877 = vld [vmem:[%s5 + $0x258] sm:$0xff]
    %v878 = vld [vmem:[%s5 + $0x260] sm:$0xff]
    %v879 = vld [vmem:[%s5 + $0x268] sm:$0xff]
    %v880 = vld [vmem:[%s5 + $0x270] sm:$0xff]
    %v881 = vld [vmem:[%s5 + $0x278] sm:$0xff]
    %v882 = vld [vmem:[%s5 + $0x280] sm:$0xff]
    %v883 = vld [vmem:[%s5 + $0x288] sm:$0xff]
    %v884 = vld [vmem:[%s5 + $0x290] sm:$0xff]
    %v885 = vld [vmem:[%s5 + $0x298] sm:$0xff]
    %v886 = vld [vmem:[%s5 + $0x2a0] sm:$0xff]
    %v887 = vld [vmem:[%s5 + $0x2a8] sm:$0xff]
    %v888 = vld [vmem:[%s5 + $0x2b0] sm:$0xff]
    %v889 = vld [vmem:[%s5 + $0x2b8] sm:$0xff]
    %v890 = vld [vmem:[%s5 + $0x2c0] sm:$0xff]
    %v891 = vld [vmem:[%s5 + $0x2c8] sm:$0xff]
    %v892 = vld [vmem:[%s5 + $0x2d0] sm:$0xff]
    %v893 = vld [vmem:[%s5 + $0x2d8] sm:$0xff]
    %v894 = vld [vmem:[%s5 + $0x2e0] sm:$0xff]
    %v895 = vld [vmem:[%s5 + $0x2e8] sm:$0xff]
    %v896 = vld [vmem:[%s5 + $0x2f0] sm:$0xff]
    %v897 = vld [vmem:[%s5 + $0x2f8] sm:$0xff]
    %v898 = vld [vmem:[%s5 + $0x300] sm:$0xff]
    %v899 = vld [vmem:[%s5 + $0x308] sm:$0xff]
    %v900 = vld [vmem:[%s5 + $0x310] sm:$0xff]
    %v901 = vld [vmem:[%s5 + $0x318] sm:$0xff]
    %v902 = vld [vmem:[%s5 + $0x320] sm:$0xff]
    %v903 = vld [vmem:[%s5 + $0x328] sm:$0xff]
    %v904 = vld [vmem:[%s5 + $0x330] sm:$0xff]
    %v905 = vld [vmem:[%s5 + $0x338] sm:$0xff]
    %v906 = vld [vmem:[%s5 + $0x340] sm:$0xff]
    %v907 = vld [vmem:[%s5 + $0x348] sm:$0xff]
    %v908 = vld [vmem:[%s5 + $0x350] sm:$0xff]
    %v909 = vld [vmem:[%s5 + $0x358] sm:$0xff]
    %v910 = vld [vmem:[%s5 + $0x360] sm:$0xff]
    %v911 = vld [vmem:[%s5 + $0x368] sm:$0xff]
    %v912 = vld [vmem:[%s5 + $0x370] sm:$0xff]
    %v913 = vld [vmem:[%s5 + $0x378] sm:$0xff]
    %v914 = vld [vmem:[%s5 + $0x380] sm:$0xff]
    %v915 = vld [vmem:[%s5 + $0x388] sm:$0xff]
    %v916 = vld [vmem:[%s5 + $0x390] sm:$0xff]
    %v917 = vld [vmem:[%s5 + $0x398] sm:$0xff]
    %v918 = vld [vmem:[%s5 + $0x3a0] sm:$0xff]
    %v919 = vld [vmem:[%s5 + $0x3a8] sm:$0xff]
    %v920 = vld [vmem:[%s5 + $0x3b0] sm:$0xff]
    %v921 = vld [vmem:[%s5 + $0x3b8] sm:$0xff]
    %v922 = vld [vmem:[%s5 + $0x3c0] sm:$0xff]
    %v923 = vld [vmem:[%s5 + $0x3c8] sm:$0xff]
    %v924 = vld [vmem:[%s5 + $0x3d0] sm:$0xff]
    %v925 = vld [vmem:[%s5 + $0x3d8] sm:$0xff]
    %v926 = vld [vmem:[%s5 + $0x3e0] sm:$0xff]
    %v927 = vld [vmem:[%s5 + $0x3e8] sm:$0xff]
    %v928 = vld [vmem:[%s5 + $0x3f0] sm:$0xff]
    %v929 = vld [vmem:[%s5 + $0x3f8] sm:$0xff]
    %v930 = vld [vmem:[%s5 + $0x400] sm:$0xff]
    %v931 = vld [vmem:[%s5 + $0x408] sm:$0xff]
    %v932 = vld [vmem:[%s5 + $0x410] sm:$0xff]
    %v933 = vld [vmem:[%s5 + $0x418] sm:$0xff]
    %v934 = vld [vmem:[%s5 + $0x420] sm:$0xff]
    %v935 = vld [vmem:[%s5 + $0x428] sm:$0xff]
    %v936 = vld [vmem:[%s5 + $0x430] sm:$0xff]
    %v937 = vld [vmem:[%s5 + $0x438] sm:$0xff]
    %v938 = vld [vmem:[%s5 + $0x440] sm:$0xff]
    %v939 = vld [vmem:[%s5 + $0x448] sm:$0xff]
    %v940 = vld [vmem:[%s5 + $0x450] sm:$0xff]
    %v941 = vld [vmem:[%s5 + $0x458] sm:$0xff]
    %v942 = vld [vmem:[%s5 + $0x460] sm:$0xff]
    %v943 = vld [vmem:[%s5 + $0x468] sm:$0xff]
    %v944 = vld [vmem:[%s5 + $0x470] sm:$0xff]
    %v945 = vld [vmem:[%s5 + $0x478] sm:$0xff]
    %v946 = vld [vmem:[%s5 + $0x480] sm:$0xff]
    %v947 = vld [vmem:[%s5 + $0x488] sm:$0xff]
    %v948 = vld [vmem:[%s5 + $0x490] sm:$0xff]
    %v949 = vld [vmem:[%s5 + $0x498] sm:$0xff]
    %v950 = vld [vmem:[%s5 + $0x4a0] sm:$0xff]
    %v951 = vld [vmem:[%s5 + $0x4a8] sm:$0xff]
    %v952 = vld [vmem:[%s5 + $0x4b0] sm:$0xff]
    %v953 = vld [vmem:[%s5 + $0x4b8] sm:$0xff]
    %v954 = vld [vmem:[%s5 + $0x4c0] sm:$0xff]
    %v955 = vld [vmem:[%s5 + $0x4c8] sm:$0xff]
    %v956 = vld [vmem:[%s5 + $0x4d0] sm:$0xff]
    %v957 = vld [vmem:[%s5 + $0x4d8] sm:$0xff]
    %v958 = vld [vmem:[%s5 + $0x4e0] sm:$0xff]
    %v959 = vld [vmem:[%s5 + $0x4e8] sm:$0xff]
    %v960 = vld [vmem:[%s5 + $0x4f0] sm:$0xff]
    %v961 = vld [vmem:[%s5 + $0x4f8] sm:$0xff]
    %v962 = vld [vmem:[%s5 + $0x500] sm:$0xff]
    %v963 = vld [vmem:[%s5 + $0x508] sm:$0xff]
    %v964 = vld [vmem:[%s5 + $0x510] sm:$0xff]
    %v965 = vld [vmem:[%s5 + $0x518] sm:$0xff]
    %v966 = vld [vmem:[%s5 + $0x520] sm:$0xff]
    %v967 = vld [vmem:[%s5 + $0x528] sm:$0xff]
    %v968 = vld [vmem:[%s5 + $0x530] sm:$0xff]
    %v969 = vld [vmem:[%s5 + $0x538] sm:$0xff]
    %v970 = vld [vmem:[%s5 + $0x540] sm:$0xff]
    %v971 = vld [vmem:[%s5 + $0x548] sm:$0xff]
    %v972 = vld [vmem:[%s5 + $0x550] sm:$0xff]
    %v973 = vld [vmem:[%s5 + $0x558] sm:$0xff]
    %v974 = vld [vmem:[%s5 + $0x560] sm:$0xff]
    %v975 = vld [vmem:[%s5 + $0x568] sm:$0xff]
    %v976 = vld [vmem:[%s5 + $0x570] sm:$0xff]
    %v977 = vld [vmem:[%s5 + $0x578] sm:$0xff]
    %v978 = vld [vmem:[%s5 + $0x580] sm:$0xff]
    %v979 = vld [vmem:[%s5 + $0x588] sm:$0xff]
    %v980 = vld [vmem:[%s5 + $0x590] sm:$0xff]
    %v981 = vld [vmem:[%s5 + $0x598] sm:$0xff]
    %v982 = vld [vmem:[%s5 + $0x5a0] sm:$0xff]
    %v983 = vld [vmem:[%s5 + $0x5a8] sm:$0xff]
    %v984 = vld [vmem:[%s5 + $0x5b0] sm:$0xff]
    %v985 = vld [vmem:[%s5 + $0x5b8] sm:$0xff]
    %v986 = vld [vmem:[%s5 + $0x5c0] sm:$0xff]
    %v987 = vld [vmem:[%s5 + $0x5c8] sm:$0xff]
    %v988 = vld [vmem:[%s5 + $0x5d0] sm:$0xff]
    %v989 = vld [vmem:[%s5 + $0x5d8] sm:$0xff]
    %v990 = vld [vmem:[%s5 + $0x5e0] sm:$0xff]
    %v991 = vld [vmem:[%s5 + $0x5e8] sm:$0xff]
    %v992 = vld [vmem:[%s5 + $0x5f0] sm:$0xff]
    %v993 = vld [vmem:[%s5 + $0x5f8] sm:$0xff]
    %v994 = vld [vmem:[%s5 + $0x600] sm:$0xff]
    %v995 = vld [vmem:[%s5 + $0x608] sm:$0xff]
    %v996 = vld [vmem:[%s5 + $0x610] sm:$0xff]
    %v997 = vld [vmem:[%s5 + $0x618] sm:$0xff]
    %v998 = vld [vmem:[%s5 + $0x620] sm:$0xff]
    %v999 = vld [vmem:[%s5 + $0x628] sm:$0xff]
    %v1000 = vld [vmem:[%s5 + $0x630] sm:$0xff]
    %v1001 = vld [vmem:[%s5 + $0x638] sm:$0xff]
    %v1002 = vld [vmem:[%s5 + $0x640] sm:$0xff]
    %v1003 = vld [vmem:[%s5 + $0x648] sm:$0xff]
    %v1004 = vld [vmem:[%s5 + $0x650] sm:$0xff]
    %v1005 = vld [vmem:[%s5 + $0x658] sm:$0xff]
    %v1006 = vld [vmem:[%s5 + $0x660] sm:$0xff]
    %v1007 = vld [vmem:[%s5 + $0x668] sm:$0xff]
    %v1008 = vld [vmem:[%s5 + $0x670] sm:$0xff]
    %v1009 = vld [vmem:[%s5 + $0x678] sm:$0xff]
    %v1010 = vld [vmem:[%s5 + $0x680] sm:$0xff]
    %v1011 = vld [vmem:[%s5 + $0x688] sm:$0xff]
    %v1012 = vld [vmem:[%s5 + $0x690] sm:$0xff]
    %v1013 = vld [vmem:[%s5 + $0x698] sm:$0xff]
    %v1014 = vld [vmem:[%s5 + $0x6a0] sm:$0xff]
    %v1015 = vld [vmem:[%s5 + $0x6a8] sm:$0xff]
    %v1016 = vld [vmem:[%s5 + $0x6b0] sm:$0xff]
    %v1017 = vld [vmem:[%s5 + $0x6b8] sm:$0xff]
    %v1018 = vld [vmem:[%s5 + $0x6c0] sm:$0xff]
    %v1019 = vld [vmem:[%s5 + $0x6c8] sm:$0xff]
    %v1020 = vld [vmem:[%s5 + $0x6d0] sm:$0xff]
    %v1021 = vld [vmem:[%s5 + $0x6d8] sm:$0xff]
    %v1022 = vld [vmem:[%s5 + $0x6e0] sm:$0xff]
    %v1023 = vld [vmem:[%s5 + $0x6e8] sm:$0xff]
    %v1024 = vld [vmem:[%s5 + $0x6f0] sm:$0xff]
    %v1025 = vld [vmem:[%s5 + $0x6f8] sm:$0xff]
    %v1026 = vld [vmem:[%s5 + $0x700] sm:$0xff]
    %v1027 = vld [vmem:[%s5 + $0x708] sm:$0xff]
    %v1028 = vld [vmem:[%s5 + $0x710] sm:$0xff]
    %v1029 = vld [vmem:[%s5 + $0x718] sm:$0xff]
    %v1030 = vld [vmem:[%s5 + $0x720] sm:$0xff]
    %v1031 = vld [vmem:[%s5 + $0x728] sm:$0xff]
    %v1032 = vld [vmem:[%s5 + $0x730] sm:$0xff]
    %v1033 = vld [vmem:[%s5 + $0x738] sm:$0xff]
    %v1034 = vld [vmem:[%s5 + $0x740] sm:$0xff]
    %v1035 = vld [vmem:[%s5 + $0x748] sm:$0xff]
    %v1036 = vld [vmem:[%s5 + $0x750] sm:$0xff]
    %v1037 = vld [vmem:[%s5 + $0x758] sm:$0xff]
    %v1038 = vld [vmem:[%s5 + $0x760] sm:$0xff]
    %v1039 = vld [vmem:[%s5 + $0x768] sm:$0xff]
    %v1040 = vld [vmem:[%s5 + $0x770] sm:$0xff]
    %v1041 = vld [vmem:[%s5 + $0x778] sm:$0xff]
    %v1042 = vld [vmem:[%s5 + $0x780] sm:$0xff]
    %v1043 = vld [vmem:[%s5 + $0x788] sm:$0xff]
    %v1044 = vld [vmem:[%s5 + $0x790] sm:$0xff]
    %v1045 = vld [vmem:[%s5 + $0x798] sm:$0xff]
    %v1046 = vld [vmem:[%s5 + $0x7a0] sm:$0xff]
    %v1047 = vld [vmem:[%s5 + $0x7a8] sm:$0xff]
    %v1048 = vld [vmem:[%s5 + $0x7b0] sm:$0xff]
    %v1049 = vld [vmem:[%s5 + $0x7b8] sm:$0xff]
    %v1050 = vld [vmem:[%s5 + $0x7c0] sm:$0xff]
    %v1051 = vld [vmem:[%s5 + $0x7c8] sm:$0xff]
    %v1052 = vld [vmem:[%s5 + $0x7d0] sm:$0xff]
    %v1053 = vld [vmem:[%s5 + $0x7d8] sm:$0xff]
    %v1054 = vld [vmem:[%s5 + $0x7e0] sm:$0xff]
    %v1055 = vld [vmem:[%s5 + $0x7e8] sm:$0xff]
    %v1056 = vld [vmem:[%s5 + $0x7f0] sm:$0xff]
    %v1057 = vld [vmem:[%s5 + $0x7f8] sm:$0xff]
    %v1058 = vld [vmem:[%s5 + $0x800] sm:$0xff]
    %v1059 = vld [vmem:[%s5 + $0x808] sm:$0xff]
    %v1060 = vld [vmem:[%s5 + $0x810] sm:$0xff]
    %v1061 = vld [vmem:[%s5 + $0x818] sm:$0xff]
    %v1062 = vld [vmem:[%s5 + $0x820] sm:$0xff]
    %v1063 = vld [vmem:[%s5 + $0x828] sm:$0xff]
    %v1064 = vld [vmem:[%s5 + $0x830] sm:$0xff]
    %v1065 = vld [vmem:[%s5 + $0x838] sm:$0xff]
    %v1066 = vld [vmem:[%s5 + $0x840] sm:$0xff]
    %v1067 = vld [vmem:[%s5 + $0x848] sm:$0xff]
    %v1068 = vld [vmem:[%s5 + $0x850] sm:$0xff]
    %v1069 = vld [vmem:[%s5 + $0x858] sm:$0xff]
    %v1070 = vld [vmem:[%s5 + $0x860] sm:$0xff]
    %v1071 = vld [vmem:[%s5 + $0x868] sm:$0xff]
    %v1072 = vld [vmem:[%s5 + $0x870] sm:$0xff]
    %v1073 = vld [vmem:[%s5 + $0x878] sm:$0xff]
    %v1074 = vld [vmem:[%s5 + $0x880] sm:$0xff]
    %v1075 = vld [vmem:[%s5 + $0x888] sm:$0xff]
    %v1076 = vld [vmem:[%s5 + $0x890] sm:$0xff]
    %v1077 = vld [vmem:[%s5 + $0x898] sm:$0xff]
    %v1078 = vld [vmem:[%s5 + $0x8a0] sm:$0xff]
    %v1079 = vld [vmem:[%s5 + $0x8a8] sm:$0xff]
    %v1080 = vld [vmem:[%s5 + $0x8b0] sm:$0xff]
    %v1081 = vld [vmem:[%s5 + $0x8b8] sm:$0xff]
    %v1082 = vld [vmem:[%s5 + $0x8c0] sm:$0xff]
    %v1083 = vld [vmem:[%s5 + $0x8c8] sm:$0xff]
    %v1084 = vld [vmem:[%s5 + $0x8d0] sm:$0xff]
    %v1085 = vld [vmem:[%s5 + $0x8d8] sm:$0xff]
    %v1086 = vld [vmem:[%s5 + $0x8e0] sm:$0xff]
    %v1087 = vld [vmem:[%s5 + $0x8e8] sm:$0xff]
    %v1088 = vld [vmem:[%s5 + $0x8f0] sm:$0xff]
    %v1089 = vld [vmem:[%s5 + $0x8f8] sm:$0xff]
    %v1090 = vld [vmem:[%s5 + $0x900] sm:$0xff]
    %v1091 = vld [vmem:[%s5 + $0x908] sm:$0xff]
    %v1092 = vld [vmem:[%s5 + $0x910] sm:$0xff]
    %v1093 = vld [vmem:[%s5 + $0x918] sm:$0xff]
    %v1094 = vld [vmem:[%s5 + $0x920] sm:$0xff]
    %v1095 = vld [vmem:[%s5 + $0x928] sm:$0xff]
    %v1096 = vld [vmem:[%s5 + $0x930] sm:$0xff]
    %v1097 = vld [vmem:[%s5 + $0x938] sm:$0xff]
    %v1098 = vld [vmem:[%s5 + $0x940] sm:$0xff]
    %v1099 = vld [vmem:[%s5 + $0x948] sm:$0xff]
    %v1100 = vld [vmem:[%s5 + $0x950] sm:$0xff]
    %v1101 = vld [vmem:[%s5 + $0x958] sm:$0xff]
    %v1102 = vld [vmem:[%s5 + $0x960] sm:$0xff]
    %v1103 = vld [vmem:[%s5 + $0x968] sm:$0xff]
    %v1104 = vld [vmem:[%s5 + $0x970] sm:$0xff]
    %v1105 = vld [vmem:[%s5 + $0x978] sm:$0xff]
    %v1106 = vld [vmem:[%s5 + $0x980] sm:$0xff]
    %v1107 = vld [vmem:[%s5 + $0x988] sm:$0xff]
    %v1108 = vld [vmem:[%s5 + $0x990] sm:$0xff]
    %v1109 = vld [vmem:[%s5 + $0x998] sm:$0xff]
    %v1110 = vld [vmem:[%s5 + $0x9a0] sm:$0xff]
    %v1111 = vld [vmem:[%s5 + $0x9a8] sm:$0xff]
    %v1112 = vld [vmem:[%s5 + $0x9b0] sm:$0xff]
    %v1113 = vld [vmem:[%s5 + $0x9b8] sm:$0xff]
    %v1114 = vld [vmem:[%s5 + $0x9c0] sm:$0xff]
    %v1115 = vld [vmem:[%s5 + $0x9c8] sm:$0xff]
    %v1116 = vld [vmem:[%s5 + $0x9d0] sm:$0xff]
    %v1117 = vld [vmem:[%s5 + $0x9d8] sm:$0xff]
    %v1118 = vld [vmem:[%s5 + $0x9e0] sm:$0xff]
    %v1119 = vld [vmem:[%s5 + $0x9e8] sm:$0xff]
    %v1120 = vld [vmem:[%s5 + $0x9f0] sm:$0xff]
    %v1121 = vld [vmem:[%s5 + $0x9f8] sm:$0xff]
    %v1122 = vld [vmem:[%s6] sm:$0xf]
    %v1124 = vperm.slane %v1122, 0
    %v1125 = vperm.slane %v1122, 1
    %v1126 = vperm.slane %v1122, 2
    %v1127 = vperm.slane %v1122, 3
    %v1452 = vunpack.c.l.b16 %v802
    %v1453 = vunpack.c.h.b16 %v802
    %v1454 = vunpack.c.l.b16 %v803
    %v1455 = vunpack.c.h.b16 %v803
    %v1456 = vunpack.c.l.b16 %v804
    %v1457 = vunpack.c.h.b16 %v804
    %v1458 = vunpack.c.l.b16 %v805
    %v1459 = vunpack.c.h.b16 %v805
    %v1460 = vunpack.c.l.b16 %v806
    %v1461 = vunpack.c.h.b16 %v806
    %v1462 = vunpack.c.l.b16 %v807
    %v1463 = vunpack.c.h.b16 %v807
    %v1464 = vunpack.c.l.b16 %v808
    %v1465 = vunpack.c.h.b16 %v808
    %v1466 = vunpack.c.l.b16 %v809
    %v1467 = vunpack.c.h.b16 %v809
    %v1468 = vunpack.c.l.b16 %v810
    %v1469 = vunpack.c.h.b16 %v810
    %v1470 = vunpack.c.l.b16 %v811
    %v1471 = vunpack.c.h.b16 %v811
    %v1472 = vunpack.c.l.b16 %v812
    %v1473 = vunpack.c.h.b16 %v812
    %v1474 = vunpack.c.l.b16 %v813
    %v1475 = vunpack.c.h.b16 %v813
    %v1476 = vunpack.c.l.b16 %v814
    %v1477 = vunpack.c.h.b16 %v814
    %v1478 = vunpack.c.l.b16 %v815
    %v1479 = vunpack.c.h.b16 %v815
    %v1480 = vunpack.c.l.b16 %v816
    %v1481 = vunpack.c.h.b16 %v816
    %v1482 = vunpack.c.l.b16 %v817
    %v1483 = vunpack.c.h.b16 %v817
    %v1484 = vunpack.c.l.b16 %v818
    %v1485 = vunpack.c.h.b16 %v818
    %v1486 = vunpack.c.l.b16 %v819
    %v1487 = vunpack.c.h.b16 %v819
    %v1488 = vunpack.c.l.b16 %v820
    %v1489 = vunpack.c.h.b16 %v820
    %v1490 = vunpack.c.l.b16 %v821
    %v1491 = vunpack.c.h.b16 %v821
    %v1492 = vunpack.c.l.b16 %v822
    %v1493 = vunpack.c.h.b16 %v822
    %v1494 = vunpack.c.l.b16 %v823
    %v1495 = vunpack.c.h.b16 %v823
    %v1496 = vunpack.c.l.b16 %v824
    %v1497 = vunpack.c.h.b16 %v824
    %v1498 = vunpack.c.l.b16 %v825
    %v1499 = vunpack.c.h.b16 %v825
    %v1500 = vunpack.c.l.b16 %v826
    %v1501 = vunpack.c.h.b16 %v826
    %v1502 = vunpack.c.l.b16 %v827
    %v1503 = vunpack.c.h.b16 %v827
    %v1504 = vunpack.c.l.b16 %v828
    %v1505 = vunpack.c.h.b16 %v828
    %v1506 = vunpack.c.l.b16 %v829
    %v1507 = vunpack.c.h.b16 %v829
    %v1508 = vunpack.c.l.b16 %v830
    %v1509 = vunpack.c.h.b16 %v830
    %v1510 = vunpack.c.l.b16 %v831
    %v1511 = vunpack.c.h.b16 %v831
    %v1512 = vunpack.c.l.b16 %v832
    %v1513 = vunpack.c.h.b16 %v832
    %v1514 = vunpack.c.l.b16 %v833
    %v1515 = vunpack.c.h.b16 %v833
    %v1516 = vunpack.c.l.b16 %v834
    %v1517 = vunpack.c.h.b16 %v834
    %v1518 = vunpack.c.l.b16 %v835
    %v1519 = vunpack.c.h.b16 %v835
    %v1520 = vunpack.c.l.b16 %v836
    %v1521 = vunpack.c.h.b16 %v836
    %v1522 = vunpack.c.l.b16 %v837
    %v1523 = vunpack.c.h.b16 %v837
    %v1524 = vunpack.c.l.b16 %v838
    %v1525 = vunpack.c.h.b16 %v838
    %v1526 = vunpack.c.l.b16 %v839
    %v1527 = vunpack.c.h.b16 %v839
    %v1528 = vunpack.c.l.b16 %v840
    %v1529 = vunpack.c.h.b16 %v840
    %v1530 = vunpack.c.l.b16 %v841
    %v1531 = vunpack.c.h.b16 %v841
    %v1532 = vunpack.c.l.b16 %v842
    %v1533 = vunpack.c.h.b16 %v842
    %v1534 = vunpack.c.l.b16 %v843
    %v1535 = vunpack.c.h.b16 %v843
    %v1536 = vunpack.c.l.b16 %v844
    %v1537 = vunpack.c.h.b16 %v844
    %v1538 = vunpack.c.l.b16 %v845
    %v1539 = vunpack.c.h.b16 %v845
    %v1540 = vunpack.c.l.b16 %v846
    %v1541 = vunpack.c.h.b16 %v846
    %v1542 = vunpack.c.l.b16 %v847
    %v1543 = vunpack.c.h.b16 %v847
    %v1544 = vunpack.c.l.b16 %v848
    %v1545 = vunpack.c.h.b16 %v848
    %v1546 = vunpack.c.l.b16 %v849
    %v1547 = vunpack.c.h.b16 %v849
    %v1548 = vunpack.c.l.b16 %v850
    %v1549 = vunpack.c.h.b16 %v850
    %v1550 = vunpack.c.l.b16 %v851
    %v1551 = vunpack.c.h.b16 %v851
    %v1552 = vunpack.c.l.b16 %v852
    %v1553 = vunpack.c.h.b16 %v852
    %v1554 = vunpack.c.l.b16 %v853
    %v1555 = vunpack.c.h.b16 %v853
    %v1556 = vunpack.c.l.b16 %v854
    %v1557 = vunpack.c.h.b16 %v854
    %v1558 = vunpack.c.l.b16 %v855
    %v1559 = vunpack.c.h.b16 %v855
    %v1560 = vunpack.c.l.b16 %v856
    %v1561 = vunpack.c.h.b16 %v856
    %v1562 = vunpack.c.l.b16 %v857
    %v1563 = vunpack.c.h.b16 %v857
    %v1564 = vunpack.c.l.b16 %v858
    %v1565 = vunpack.c.h.b16 %v858
    %v1566 = vunpack.c.l.b16 %v859
    %v1567 = vunpack.c.h.b16 %v859
    %v1568 = vunpack.c.l.b16 %v860
    %v1569 = vunpack.c.h.b16 %v860
    %v1570 = vunpack.c.l.b16 %v861
    %v1571 = vunpack.c.h.b16 %v861
    %v1572 = vunpack.c.l.b16 %v862
    %v1573 = vunpack.c.h.b16 %v862
    %v1574 = vunpack.c.l.b16 %v863
    %v1575 = vunpack.c.h.b16 %v863
    %v1576 = vunpack.c.l.b16 %v864
    %v1577 = vunpack.c.h.b16 %v864
    %v1578 = vunpack.c.l.b16 %v865
    %v1579 = vunpack.c.h.b16 %v865
    %v1580 = vunpack.c.l.b16 %v866
    %v1581 = vunpack.c.h.b16 %v866
    %v1582 = vunpack.c.l.b16 %v867
    %v1583 = vunpack.c.h.b16 %v867
    %v1584 = vunpack.c.l.b16 %v868
    %v1585 = vunpack.c.h.b16 %v868
    %v1586 = vunpack.c.l.b16 %v869
    %v1587 = vunpack.c.h.b16 %v869
    %v1588 = vunpack.c.l.b16 %v870
    %v1589 = vunpack.c.h.b16 %v870
    %v1590 = vunpack.c.l.b16 %v871
    %v1591 = vunpack.c.h.b16 %v871
    %v1592 = vunpack.c.l.b16 %v872
    %v1593 = vunpack.c.h.b16 %v872
    %v1594 = vunpack.c.l.b16 %v873
    %v1595 = vunpack.c.h.b16 %v873
    %v1596 = vunpack.c.l.b16 %v874
    %v1597 = vunpack.c.h.b16 %v874
    %v1598 = vunpack.c.l.b16 %v875
    %v1599 = vunpack.c.h.b16 %v875
    %v1600 = vunpack.c.l.b16 %v876
    %v1601 = vunpack.c.h.b16 %v876
    %v1602 = vunpack.c.l.b16 %v877
    %v1603 = vunpack.c.h.b16 %v877
    %v1604 = vunpack.c.l.b16 %v878
    %v1605 = vunpack.c.h.b16 %v878
    %v1606 = vunpack.c.l.b16 %v879
    %v1607 = vunpack.c.h.b16 %v879
    %v1608 = vunpack.c.l.b16 %v880
    %v1609 = vunpack.c.h.b16 %v880
    %v1610 = vunpack.c.l.b16 %v881
    %v1611 = vunpack.c.h.b16 %v881
    %v1612 = vunpack.c.l.b16 %v882
    %v1613 = vunpack.c.h.b16 %v882
    %v1614 = vunpack.c.l.b16 %v883
    %v1615 = vunpack.c.h.b16 %v883
    %v1616 = vunpack.c.l.b16 %v884
    %v1617 = vunpack.c.h.b16 %v884
    %v1618 = vunpack.c.l.b16 %v885
    %v1619 = vunpack.c.h.b16 %v885
    %v1620 = vunpack.c.l.b16 %v886
    %v1621 = vunpack.c.h.b16 %v886
    %v1622 = vunpack.c.l.b16 %v887
    %v1623 = vunpack.c.h.b16 %v887
    %v1624 = vunpack.c.l.b16 %v888
    %v1625 = vunpack.c.h.b16 %v888
    %v1626 = vunpack.c.l.b16 %v889
    %v1627 = vunpack.c.h.b16 %v889
    %v1628 = vunpack.c.l.b16 %v890
    %v1629 = vunpack.c.h.b16 %v890
    %v1630 = vunpack.c.l.b16 %v891
    %v1631 = vunpack.c.h.b16 %v891
    %v1632 = vunpack.c.l.b16 %v892
    %v1633 = vunpack.c.h.b16 %v892
    %v1634 = vunpack.c.l.b16 %v893
    %v1635 = vunpack.c.h.b16 %v893
    %v1636 = vunpack.c.l.b16 %v894
    %v1637 = vunpack.c.h.b16 %v894
    %v1638 = vunpack.c.l.b16 %v895
    %v1639 = vunpack.c.h.b16 %v895
    %v1640 = vunpack.c.l.b16 %v896
    %v1641 = vunpack.c.h.b16 %v896
    %v1642 = vunpack.c.l.b16 %v897
    %v1643 = vunpack.c.h.b16 %v897
    %v1644 = vunpack.c.l.b16 %v898
    %v1645 = vunpack.c.h.b16 %v898
    %v1646 = vunpack.c.l.b16 %v899
    %v1647 = vunpack.c.h.b16 %v899
    %v1648 = vunpack.c.l.b16 %v900
    %v1649 = vunpack.c.h.b16 %v900
    %v1650 = vunpack.c.l.b16 %v901
    %v1651 = vunpack.c.h.b16 %v901
    %v1652 = vunpack.c.l.b16 %v902
    %v1653 = vunpack.c.h.b16 %v902
    %v1654 = vunpack.c.l.b16 %v903
    %v1655 = vunpack.c.h.b16 %v903
    %v1656 = vunpack.c.l.b16 %v904
    %v1657 = vunpack.c.h.b16 %v904
    %v1658 = vunpack.c.l.b16 %v905
    %v1659 = vunpack.c.h.b16 %v905
    %v1660 = vunpack.c.l.b16 %v906
    %v1661 = vunpack.c.h.b16 %v906
    %v1662 = vunpack.c.l.b16 %v907
    %v1663 = vunpack.c.h.b16 %v907
    %v1664 = vunpack.c.l.b16 %v908
    %v1665 = vunpack.c.h.b16 %v908
    %v1666 = vunpack.c.l.b16 %v909
    %v1667 = vunpack.c.h.b16 %v909
    %v1668 = vunpack.c.l.b16 %v910
    %v1669 = vunpack.c.h.b16 %v910
    %v1670 = vunpack.c.l.b16 %v911
    %v1671 = vunpack.c.h.b16 %v911
    %v1672 = vunpack.c.l.b16 %v912
    %v1673 = vunpack.c.h.b16 %v912
    %v1674 = vunpack.c.l.b16 %v913
    %v1675 = vunpack.c.h.b16 %v913
    %v1676 = vunpack.c.l.b16 %v914
    %v1677 = vunpack.c.h.b16 %v914
    %v1678 = vunpack.c.l.b16 %v915
    %v1679 = vunpack.c.h.b16 %v915
    %v1680 = vunpack.c.l.b16 %v916
    %v1681 = vunpack.c.h.b16 %v916
    %v1682 = vunpack.c.l.b16 %v917
    %v1683 = vunpack.c.h.b16 %v917
    %v1684 = vunpack.c.l.b16 %v918
    %v1685 = vunpack.c.h.b16 %v918
    %v1686 = vunpack.c.l.b16 %v919
    %v1687 = vunpack.c.h.b16 %v919
    %v1688 = vunpack.c.l.b16 %v920
    %v1689 = vunpack.c.h.b16 %v920
    %v1690 = vunpack.c.l.b16 %v921
    %v1691 = vunpack.c.h.b16 %v921
    %v1692 = vunpack.c.l.b16 %v922
    %v1693 = vunpack.c.h.b16 %v922
    %v1694 = vunpack.c.l.b16 %v923
    %v1695 = vunpack.c.h.b16 %v923
    %v1696 = vunpack.c.l.b16 %v924
    %v1697 = vunpack.c.h.b16 %v924
    %v1698 = vunpack.c.l.b16 %v925
    %v1699 = vunpack.c.h.b16 %v925
    %v1700 = vunpack.c.l.b16 %v926
    %v1701 = vunpack.c.h.b16 %v926
    %v1702 = vunpack.c.l.b16 %v927
    %v1703 = vunpack.c.h.b16 %v927
    %v1704 = vunpack.c.l.b16 %v928
    %v1705 = vunpack.c.h.b16 %v928
    %v1706 = vunpack.c.l.b16 %v929
    %v1707 = vunpack.c.h.b16 %v929
    %v1708 = vunpack.c.l.b16 %v930
    %v1709 = vunpack.c.h.b16 %v930
    %v1710 = vunpack.c.l.b16 %v931
    %v1711 = vunpack.c.h.b16 %v931
    %v1712 = vunpack.c.l.b16 %v932
    %v1713 = vunpack.c.h.b16 %v932
    %v1714 = vunpack.c.l.b16 %v933
    %v1715 = vunpack.c.h.b16 %v933
    %v1716 = vunpack.c.l.b16 %v934
    %v1717 = vunpack.c.h.b16 %v934
    %v1718 = vunpack.c.l.b16 %v935
    %v1719 = vunpack.c.h.b16 %v935
    %v1720 = vunpack.c.l.b16 %v936
    %v1721 = vunpack.c.h.b16 %v936
    %v1722 = vunpack.c.l.b16 %v937
    %v1723 = vunpack.c.h.b16 %v937
    %v1724 = vunpack.c.l.b16 %v938
    %v1725 = vunpack.c.h.b16 %v938
    %v1726 = vunpack.c.l.b16 %v939
    %v1727 = vunpack.c.h.b16 %v939
    %v1728 = vunpack.c.l.b16 %v940
    %v1729 = vunpack.c.h.b16 %v940
    %v1730 = vunpack.c.l.b16 %v941
    %v1731 = vunpack.c.h.b16 %v941
    %v1732 = vunpack.c.l.b16 %v942
    %v1733 = vunpack.c.h.b16 %v942
    %v1734 = vunpack.c.l.b16 %v943
    %v1735 = vunpack.c.h.b16 %v943
    %v1736 = vunpack.c.l.b16 %v944
    %v1737 = vunpack.c.h.b16 %v944
    %v1738 = vunpack.c.l.b16 %v945
    %v1739 = vunpack.c.h.b16 %v945
    %v1740 = vunpack.c.l.b16 %v946
    %v1741 = vunpack.c.h.b16 %v946
    %v1742 = vunpack.c.l.b16 %v947
    %v1743 = vunpack.c.h.b16 %v947
    %v1744 = vunpack.c.l.b16 %v948
    %v1745 = vunpack.c.h.b16 %v948
    %v1746 = vunpack.c.l.b16 %v949
    %v1747 = vunpack.c.h.b16 %v949
    %v1748 = vunpack.c.l.b16 %v950
    %v1749 = vunpack.c.h.b16 %v950
    %v1750 = vunpack.c.l.b16 %v951
    %v1751 = vunpack.c.h.b16 %v951
    %v1752 = vunpack.c.l.b16 %v952
    %v1753 = vunpack.c.h.b16 %v952
    %v1754 = vunpack.c.l.b16 %v953
    %v1755 = vunpack.c.h.b16 %v953
    %v1756 = vunpack.c.l.b16 %v954
    %v1757 = vunpack.c.h.b16 %v954
    %v1758 = vunpack.c.l.b16 %v955
    %v1759 = vunpack.c.h.b16 %v955
    %v1760 = vunpack.c.l.b16 %v956
    %v1761 = vunpack.c.h.b16 %v956
    %v1762 = vunpack.c.l.b16 %v957
    %v1763 = vunpack.c.h.b16 %v957
    %v1764 = vunpack.c.l.b16 %v958
    %v1765 = vunpack.c.h.b16 %v958
    %v1766 = vunpack.c.l.b16 %v959
    %v1767 = vunpack.c.h.b16 %v959
    %v1768 = vunpack.c.l.b16 %v960
    %v1769 = vunpack.c.h.b16 %v960
    %v1770 = vunpack.c.l.b16 %v961
    %v1771 = vunpack.c.h.b16 %v961
    %v1772 = vunpack.c.l.b16 %v962
    %v1773 = vunpack.c.h.b16 %v962
    %v1774 = vunpack.c.l.b16 %v963
    %v1775 = vunpack.c.h.b16 %v963
    %v1776 = vunpack.c.l.b16 %v964
    %v1777 = vunpack.c.h.b16 %v964
    %v1778 = vunpack.c.l.b16 %v965
    %v1779 = vunpack.c.h.b16 %v965
    %v1780 = vunpack.c.l.b16 %v966
    %v1781 = vunpack.c.h.b16 %v966
    %v1782 = vunpack.c.l.b16 %v967
    %v1783 = vunpack.c.h.b16 %v967
    %v1784 = vunpack.c.l.b16 %v968
    %v1785 = vunpack.c.h.b16 %v968
    %v1786 = vunpack.c.l.b16 %v969
    %v1787 = vunpack.c.h.b16 %v969
    %v1788 = vunpack.c.l.b16 %v970
    %v1789 = vunpack.c.h.b16 %v970
    %v1790 = vunpack.c.l.b16 %v971
    %v1791 = vunpack.c.h.b16 %v971
    %v1792 = vunpack.c.l.b16 %v972
    %v1793 = vunpack.c.h.b16 %v972
    %v1794 = vunpack.c.l.b16 %v973
    %v1795 = vunpack.c.h.b16 %v973
    %v1796 = vunpack.c.l.b16 %v974
    %v1797 = vunpack.c.h.b16 %v974
    %v1798 = vunpack.c.l.b16 %v975
    %v1799 = vunpack.c.h.b16 %v975
    %v1800 = vunpack.c.l.b16 %v976
    %v1801 = vunpack.c.h.b16 %v976
    %v1802 = vunpack.c.l.b16 %v977
    %v1803 = vunpack.c.h.b16 %v977
    %v1804 = vunpack.c.l.b16 %v978
    %v1805 = vunpack.c.h.b16 %v978
    %v1806 = vunpack.c.l.b16 %v979
    %v1807 = vunpack.c.h.b16 %v979
    %v1808 = vunpack.c.l.b16 %v980
    %v1809 = vunpack.c.h.b16 %v980
    %v1810 = vunpack.c.l.b16 %v981
    %v1811 = vunpack.c.h.b16 %v981
    %v1812 = vunpack.c.l.b16 %v982
    %v1813 = vunpack.c.h.b16 %v982
    %v1814 = vunpack.c.l.b16 %v983
    %v1815 = vunpack.c.h.b16 %v983
    %v1816 = vunpack.c.l.b16 %v984
    %v1817 = vunpack.c.h.b16 %v984
    %v1818 = vunpack.c.l.b16 %v985
    %v1819 = vunpack.c.h.b16 %v985
    %v1820 = vunpack.c.l.b16 %v986
    %v1821 = vunpack.c.h.b16 %v986
    %v1822 = vunpack.c.l.b16 %v987
    %v1823 = vunpack.c.h.b16 %v987
    %v1824 = vunpack.c.l.b16 %v988
    %v1825 = vunpack.c.h.b16 %v988
    %v1826 = vunpack.c.l.b16 %v989
    %v1827 = vunpack.c.h.b16 %v989
    %v1828 = vunpack.c.l.b16 %v990
    %v1829 = vunpack.c.h.b16 %v990
    %v1830 = vunpack.c.l.b16 %v991
    %v1831 = vunpack.c.h.b16 %v991
    %v1832 = vunpack.c.l.b16 %v992
    %v1833 = vunpack.c.h.b16 %v992
    %v1834 = vunpack.c.l.b16 %v993
    %v1835 = vunpack.c.h.b16 %v993
    %v1836 = vunpack.c.l.b16 %v994
    %v1837 = vunpack.c.h.b16 %v994
    %v1838 = vunpack.c.l.b16 %v995
    %v1839 = vunpack.c.h.b16 %v995
    %v1840 = vunpack.c.l.b16 %v996
    %v1841 = vunpack.c.h.b16 %v996
    %v1842 = vunpack.c.l.b16 %v997
    %v1843 = vunpack.c.h.b16 %v997
    %v1844 = vunpack.c.l.b16 %v998
    %v1845 = vunpack.c.h.b16 %v998
    %v1846 = vunpack.c.l.b16 %v999
    %v1847 = vunpack.c.h.b16 %v999
    %v1848 = vunpack.c.l.b16 %v1000
    %v1849 = vunpack.c.h.b16 %v1000
    %v1850 = vunpack.c.l.b16 %v1001
    %v1851 = vunpack.c.h.b16 %v1001
    %v1852 = vunpack.c.l.b16 %v1002
    %v1853 = vunpack.c.h.b16 %v1002
    %v1854 = vunpack.c.l.b16 %v1003
    %v1855 = vunpack.c.h.b16 %v1003
    %v1856 = vunpack.c.l.b16 %v1004
    %v1857 = vunpack.c.h.b16 %v1004
    %v1858 = vunpack.c.l.b16 %v1005
    %v1859 = vunpack.c.h.b16 %v1005
    %v1860 = vunpack.c.l.b16 %v1006
    %v1861 = vunpack.c.h.b16 %v1006
    %v1862 = vunpack.c.l.b16 %v1007
    %v1863 = vunpack.c.h.b16 %v1007
    %v1864 = vunpack.c.l.b16 %v1008
    %v1865 = vunpack.c.h.b16 %v1008
    %v1866 = vunpack.c.l.b16 %v1009
    %v1867 = vunpack.c.h.b16 %v1009
    %v1868 = vunpack.c.l.b16 %v1010
    %v1869 = vunpack.c.h.b16 %v1010
    %v1870 = vunpack.c.l.b16 %v1011
    %v1871 = vunpack.c.h.b16 %v1011
    %v1872 = vunpack.c.l.b16 %v1012
    %v1873 = vunpack.c.h.b16 %v1012
    %v1874 = vunpack.c.l.b16 %v1013
    %v1875 = vunpack.c.h.b16 %v1013
    %v1876 = vunpack.c.l.b16 %v1014
    %v1877 = vunpack.c.h.b16 %v1014
    %v1878 = vunpack.c.l.b16 %v1015
    %v1879 = vunpack.c.h.b16 %v1015
    %v1880 = vunpack.c.l.b16 %v1016
    %v1881 = vunpack.c.h.b16 %v1016
    %v1882 = vunpack.c.l.b16 %v1017
    %v1883 = vunpack.c.h.b16 %v1017
    %v1884 = vunpack.c.l.b16 %v1018
    %v1885 = vunpack.c.h.b16 %v1018
    %v1886 = vunpack.c.l.b16 %v1019
    %v1887 = vunpack.c.h.b16 %v1019
    %v1888 = vunpack.c.l.b16 %v1020
    %v1889 = vunpack.c.h.b16 %v1020
    %v1890 = vunpack.c.l.b16 %v1021
    %v1891 = vunpack.c.h.b16 %v1021
    %v1892 = vunpack.c.l.b16 %v1022
    %v1893 = vunpack.c.h.b16 %v1022
    %v1894 = vunpack.c.l.b16 %v1023
    %v1895 = vunpack.c.h.b16 %v1023
    %v1896 = vunpack.c.l.b16 %v1024
    %v1897 = vunpack.c.h.b16 %v1024
    %v1898 = vunpack.c.l.b16 %v1025
    %v1899 = vunpack.c.h.b16 %v1025
    %v1900 = vunpack.c.l.b16 %v1026
    %v1901 = vunpack.c.h.b16 %v1026
    %v1902 = vunpack.c.l.b16 %v1027
    %v1903 = vunpack.c.h.b16 %v1027
    %v1904 = vunpack.c.l.b16 %v1028
    %v1905 = vunpack.c.h.b16 %v1028
    %v1906 = vunpack.c.l.b16 %v1029
    %v1907 = vunpack.c.h.b16 %v1029
    %v1908 = vunpack.c.l.b16 %v1030
    %v1909 = vunpack.c.h.b16 %v1030
    %v1910 = vunpack.c.l.b16 %v1031
    %v1911 = vunpack.c.h.b16 %v1031
    %v1912 = vunpack.c.l.b16 %v1032
    %v1913 = vunpack.c.h.b16 %v1032
    %v1914 = vunpack.c.l.b16 %v1033
    %v1915 = vunpack.c.h.b16 %v1033
    %v1916 = vunpack.c.l.b16 %v1034
    %v1917 = vunpack.c.h.b16 %v1034
    %v1918 = vunpack.c.l.b16 %v1035
    %v1919 = vunpack.c.h.b16 %v1035
    %v1920 = vunpack.c.l.b16 %v1036
    %v1921 = vunpack.c.h.b16 %v1036
    %v1922 = vunpack.c.l.b16 %v1037
    %v1923 = vunpack.c.h.b16 %v1037
    %v1924 = vunpack.c.l.b16 %v1038
    %v1925 = vunpack.c.h.b16 %v1038
    %v1926 = vunpack.c.l.b16 %v1039
    %v1927 = vunpack.c.h.b16 %v1039
    %v1928 = vunpack.c.l.b16 %v1040
    %v1929 = vunpack.c.h.b16 %v1040
    %v1930 = vunpack.c.l.b16 %v1041
    %v1931 = vunpack.c.h.b16 %v1041
    %v1932 = vunpack.c.l.b16 %v1042
    %v1933 = vunpack.c.h.b16 %v1042
    %v1934 = vunpack.c.l.b16 %v1043
    %v1935 = vunpack.c.h.b16 %v1043
    %v1936 = vunpack.c.l.b16 %v1044
    %v1937 = vunpack.c.h.b16 %v1044
    %v1938 = vunpack.c.l.b16 %v1045
    %v1939 = vunpack.c.h.b16 %v1045
    %v1940 = vunpack.c.l.b16 %v1046
    %v1941 = vunpack.c.h.b16 %v1046
    %v1942 = vunpack.c.l.b16 %v1047
    %v1943 = vunpack.c.h.b16 %v1047
    %v1944 = vunpack.c.l.b16 %v1048
    %v1945 = vunpack.c.h.b16 %v1048
    %v1946 = vunpack.c.l.b16 %v1049
    %v1947 = vunpack.c.h.b16 %v1049
    %v1948 = vunpack.c.l.b16 %v1050
    %v1949 = vunpack.c.h.b16 %v1050
    %v1950 = vunpack.c.l.b16 %v1051
    %v1951 = vunpack.c.h.b16 %v1051
    %v1952 = vunpack.c.l.b16 %v1052
    %v1953 = vunpack.c.h.b16 %v1052
    %v1954 = vunpack.c.l.b16 %v1053
    %v1955 = vunpack.c.h.b16 %v1053
    %v1956 = vunpack.c.l.b16 %v1054
    %v1957 = vunpack.c.h.b16 %v1054
    %v1958 = vunpack.c.l.b16 %v1055
    %v1959 = vunpack.c.h.b16 %v1055
    %v1960 = vunpack.c.l.b16 %v1056
    %v1961 = vunpack.c.h.b16 %v1056
    %v1962 = vunpack.c.l.b16 %v1057
    %v1963 = vunpack.c.h.b16 %v1057
    %v1964 = vunpack.c.l.b16 %v1058
    %v1965 = vunpack.c.h.b16 %v1058
    %v1966 = vunpack.c.l.b16 %v1059
    %v1967 = vunpack.c.h.b16 %v1059
    %v1968 = vunpack.c.l.b16 %v1060
    %v1969 = vunpack.c.h.b16 %v1060
    %v1970 = vunpack.c.l.b16 %v1061
    %v1971 = vunpack.c.h.b16 %v1061
    %v1972 = vunpack.c.l.b16 %v1062
    %v1973 = vunpack.c.h.b16 %v1062
    %v1974 = vunpack.c.l.b16 %v1063
    %v1975 = vunpack.c.h.b16 %v1063
    %v1976 = vunpack.c.l.b16 %v1064
    %v1977 = vunpack.c.h.b16 %v1064
    %v1978 = vunpack.c.l.b16 %v1065
    %v1979 = vunpack.c.h.b16 %v1065
    %v1980 = vunpack.c.l.b16 %v1066
    %v1981 = vunpack.c.h.b16 %v1066
    %v1982 = vunpack.c.l.b16 %v1067
    %v1983 = vunpack.c.h.b16 %v1067
    %v1984 = vunpack.c.l.b16 %v1068
    %v1985 = vunpack.c.h.b16 %v1068
    %v1986 = vunpack.c.l.b16 %v1069
    %v1987 = vunpack.c.h.b16 %v1069
    %v1988 = vunpack.c.l.b16 %v1070
    %v1989 = vunpack.c.h.b16 %v1070
    %v1990 = vunpack.c.l.b16 %v1071
    %v1991 = vunpack.c.h.b16 %v1071
    %v1992 = vunpack.c.l.b16 %v1072
    %v1993 = vunpack.c.h.b16 %v1072
    %v1994 = vunpack.c.l.b16 %v1073
    %v1995 = vunpack.c.h.b16 %v1073
    %v1996 = vunpack.c.l.b16 %v1074
    %v1997 = vunpack.c.h.b16 %v1074
    %v1998 = vunpack.c.l.b16 %v1075
    %v1999 = vunpack.c.h.b16 %v1075
    %v2000 = vunpack.c.l.b16 %v1076
    %v2001 = vunpack.c.h.b16 %v1076
    %v2002 = vunpack.c.l.b16 %v1077
    %v2003 = vunpack.c.h.b16 %v1077
    %v2004 = vunpack.c.l.b16 %v1078
    %v2005 = vunpack.c.h.b16 %v1078
    %v2006 = vunpack.c.l.b16 %v1079
    %v2007 = vunpack.c.h.b16 %v1079
    %v2008 = vunpack.c.l.b16 %v1080
    %v2009 = vunpack.c.h.b16 %v1080
    %v2010 = vunpack.c.l.b16 %v1081
    %v2011 = vunpack.c.h.b16 %v1081
    %v2012 = vunpack.c.l.b16 %v1082
    %v2013 = vunpack.c.h.b16 %v1082
    %v2014 = vunpack.c.l.b16 %v1083
    %v2015 = vunpack.c.h.b16 %v1083
    %v2016 = vunpack.c.l.b16 %v1084
    %v2017 = vunpack.c.h.b16 %v1084
    %v2018 = vunpack.c.l.b16 %v1085
    %v2019 = vunpack.c.h.b16 %v1085
    %v2020 = vunpack.c.l.b16 %v1086
    %v2021 = vunpack.c.h.b16 %v1086
    %v2022 = vunpack.c.l.b16 %v1087
    %v2023 = vunpack.c.h.b16 %v1087
    %v2024 = vunpack.c.l.b16 %v1088
    %v2025 = vunpack.c.h.b16 %v1088
    %v2026 = vunpack.c.l.b16 %v1089
    %v2027 = vunpack.c.h.b16 %v1089
    %v2028 = vunpack.c.l.b16 %v1090
    %v2029 = vunpack.c.h.b16 %v1090
    %v2030 = vunpack.c.l.b16 %v1091
    %v2031 = vunpack.c.h.b16 %v1091
    %v2032 = vunpack.c.l.b16 %v1092
    %v2033 = vunpack.c.h.b16 %v1092
    %v2034 = vunpack.c.l.b16 %v1093
    %v2035 = vunpack.c.h.b16 %v1093
    %v2036 = vunpack.c.l.b16 %v1094
    %v2037 = vunpack.c.h.b16 %v1094
    %v2038 = vunpack.c.l.b16 %v1095
    %v2039 = vunpack.c.h.b16 %v1095
    %v2040 = vunpack.c.l.b16 %v1096
    %v2041 = vunpack.c.h.b16 %v1096
    %v2042 = vunpack.c.l.b16 %v1097
    %v2043 = vunpack.c.h.b16 %v1097
    %v2044 = vunpack.c.l.b16 %v1098
    %v2045 = vunpack.c.h.b16 %v1098
    %v2046 = vunpack.c.l.b16 %v1099
    %v2047 = vunpack.c.h.b16 %v1099
    %v2048 = vunpack.c.l.b16 %v1100
    %v2049 = vunpack.c.h.b16 %v1100
    %v2050 = vunpack.c.l.b16 %v1101
    %v2051 = vunpack.c.h.b16 %v1101
    %v2052 = vunpack.c.l.b16 %v1102
    %v2053 = vunpack.c.h.b16 %v1102
    %v2054 = vunpack.c.l.b16 %v1103
    %v2055 = vunpack.c.h.b16 %v1103
    %v2056 = vunpack.c.l.b16 %v1104
    %v2057 = vunpack.c.h.b16 %v1104
    %v2058 = vunpack.c.l.b16 %v1105
    %v2059 = vunpack.c.h.b16 %v1105
    %v2060 = vunpack.c.l.b16 %v1106
    %v2061 = vunpack.c.h.b16 %v1106
    %v2062 = vunpack.c.l.b16 %v1107
    %v2063 = vunpack.c.h.b16 %v1107
    %v2064 = vunpack.c.l.b16 %v1108
    %v2065 = vunpack.c.h.b16 %v1108
    %v2066 = vunpack.c.l.b16 %v1109
    %v2067 = vunpack.c.h.b16 %v1109
    %v2068 = vunpack.c.l.b16 %v1110
    %v2069 = vunpack.c.h.b16 %v1110
    %v2070 = vunpack.c.l.b16 %v1111
    %v2071 = vunpack.c.h.b16 %v1111
    %v2072 = vunpack.c.l.b16 %v1112
    %v2073 = vunpack.c.h.b16 %v1112
    %v2074 = vunpack.c.l.b16 %v1113
    %v2075 = vunpack.c.h.b16 %v1113
    %v2076 = vunpack.c.l.b16 %v1114
    %v2077 = vunpack.c.h.b16 %v1114
    %v2078 = vunpack.c.l.b16 %v1115
    %v2079 = vunpack.c.h.b16 %v1115
    %v2080 = vunpack.c.l.b16 %v1116
    %v2081 = vunpack.c.h.b16 %v1116
    %v2082 = vunpack.c.l.b16 %v1117
    %v2083 = vunpack.c.h.b16 %v1117
    %v2084 = vunpack.c.l.b16 %v1118
    %v2085 = vunpack.c.h.b16 %v1118
    %v2086 = vunpack.c.l.b16 %v1119
    %v2087 = vunpack.c.h.b16 %v1119
    %v2088 = vunpack.c.l.b16 %v1120
    %v2089 = vunpack.c.h.b16 %v1120
    %v2090 = vunpack.c.l.b16 %v1121
    %v2091 = vunpack.c.h.b16 %v1121
    %v2092 = vpack.c.b16 %v1456, %v1452
    %v2093 = vpack.c.b16 %v1457, %v1453
    %v2094 = vpack.c.b16 %v1458, %v1454
    %v2095 = vpack.c.b16 %v1459, %v1455
    %v2096 = vpack.c.b16 %v1464, %v1460
    %v2097 = vpack.c.b16 %v1465, %v1461
    %v2098 = vpack.c.b16 %v1466, %v1462
    %v2099 = vpack.c.b16 %v1467, %v1463
    %v2100 = vpack.c.b16 %v1472, %v1468
    %v2101 = vpack.c.b16 %v1473, %v1469
    %v2102 = vpack.c.b16 %v1474, %v1470
    %v2103 = vpack.c.b16 %v1475, %v1471
    %v2104 = vpack.c.b16 %v1480, %v1476
    %v2105 = vpack.c.b16 %v1481, %v1477
    %v2106 = vpack.c.b16 %v1482, %v1478
    %v2107 = vpack.c.b16 %v1483, %v1479
    %v2108 = vpack.c.b16 %v1488, %v1484
    %v2109 = vpack.c.b16 %v1489, %v1485
    %v2110 = vpack.c.b16 %v1490, %v1486
    %v2111 = vpack.c.b16 %v1491, %v1487
    %v2112 = vpack.c.b16 %v1496, %v1492
    %v2113 = vpack.c.b16 %v1497, %v1493
    %v2114 = vpack.c.b16 %v1498, %v1494
    %v2115 = vpack.c.b16 %v1499, %v1495
    %v2116 = vpack.c.b16 %v1504, %v1500
    %v2117 = vpack.c.b16 %v1505, %v1501
    %v2118 = vpack.c.b16 %v1506, %v1502
    %v2119 = vpack.c.b16 %v1507, %v1503
    %v2120 = vpack.c.b16 %v1512, %v1508
    %v2121 = vpack.c.b16 %v1513, %v1509
    %v2122 = vpack.c.b16 %v1514, %v1510
    %v2123 = vpack.c.b16 %v1515, %v1511
    %v2124 = vpack.c.b16 %v1520, %v1516
    %v2125 = vpack.c.b16 %v1521, %v1517
    %v2126 = vpack.c.b16 %v1522, %v1518
    %v2127 = vpack.c.b16 %v1523, %v1519
    %v2128 = vpack.c.b16 %v1528, %v1524
    %v2129 = vpack.c.b16 %v1529, %v1525
    %v2130 = vpack.c.b16 %v1530, %v1526
    %v2131 = vpack.c.b16 %v1531, %v1527
    %v2132 = vpack.c.b16 %v1536, %v1532
    %v2133 = vpack.c.b16 %v1537, %v1533
    %v2134 = vpack.c.b16 %v1538, %v1534
    %v2135 = vpack.c.b16 %v1539, %v1535
    %v2136 = vpack.c.b16 %v1544, %v1540
    %v2137 = vpack.c.b16 %v1545, %v1541
    %v2138 = vpack.c.b16 %v1546, %v1542
    %v2139 = vpack.c.b16 %v1547, %v1543
    %v2140 = vpack.c.b16 %v1552, %v1548
    %v2141 = vpack.c.b16 %v1553, %v1549
    %v2142 = vpack.c.b16 %v1554, %v1550
    %v2143 = vpack.c.b16 %v1555, %v1551
    %v2144 = vpack.c.b16 %v1560, %v1556
    %v2145 = vpack.c.b16 %v1561, %v1557
    %v2146 = vpack.c.b16 %v1562, %v1558
    %v2147 = vpack.c.b16 %v1563, %v1559
    %v2148 = vpack.c.b16 %v1568, %v1564
    %v2149 = vpack.c.b16 %v1569, %v1565
    %v2150 = vpack.c.b16 %v1570, %v1566
    %v2151 = vpack.c.b16 %v1571, %v1567
    %v2152 = vpack.c.b16 %v1576, %v1572
    %v2153 = vpack.c.b16 %v1577, %v1573
    %v2154 = vpack.c.b16 %v1578, %v1574
    %v2155 = vpack.c.b16 %v1579, %v1575
    %v2156 = vpack.c.b16 %v1584, %v1580
    %v2157 = vpack.c.b16 %v1585, %v1581
    %v2158 = vpack.c.b16 %v1586, %v1582
    %v2159 = vpack.c.b16 %v1587, %v1583
    %v2160 = vpack.c.b16 %v1592, %v1588
    %v2161 = vpack.c.b16 %v1593, %v1589
    %v2162 = vpack.c.b16 %v1594, %v1590
    %v2163 = vpack.c.b16 %v1595, %v1591
    %v2164 = vpack.c.b16 %v1600, %v1596
    %v2165 = vpack.c.b16 %v1601, %v1597
    %v2166 = vpack.c.b16 %v1602, %v1598
    %v2167 = vpack.c.b16 %v1603, %v1599
    %v2168 = vpack.c.b16 %v1608, %v1604
    %v2169 = vpack.c.b16 %v1609, %v1605
    %v2170 = vpack.c.b16 %v1610, %v1606
    %v2171 = vpack.c.b16 %v1611, %v1607
    %v2172 = vpack.c.b16 %v1616, %v1612
    %v2173 = vpack.c.b16 %v1617, %v1613
    %v2174 = vpack.c.b16 %v1618, %v1614
    %v2175 = vpack.c.b16 %v1619, %v1615
    %v2176 = vpack.c.b16 %v1624, %v1620
    %v2177 = vpack.c.b16 %v1625, %v1621
    %v2178 = vpack.c.b16 %v1626, %v1622
    %v2179 = vpack.c.b16 %v1627, %v1623
    %v2180 = vpack.c.b16 %v1632, %v1628
    %v2181 = vpack.c.b16 %v1633, %v1629
    %v2182 = vpack.c.b16 %v1634, %v1630
    %v2183 = vpack.c.b16 %v1635, %v1631
    %v2184 = vpack.c.b16 %v1640, %v1636
    %v2185 = vpack.c.b16 %v1641, %v1637
    %v2186 = vpack.c.b16 %v1642, %v1638
    %v2187 = vpack.c.b16 %v1643, %v1639
    %v2188 = vpack.c.b16 %v1648, %v1644
    %v2189 = vpack.c.b16 %v1649, %v1645
    %v2190 = vpack.c.b16 %v1650, %v1646
    %v2191 = vpack.c.b16 %v1651, %v1647
    %v2192 = vpack.c.b16 %v1656, %v1652
    %v2193 = vpack.c.b16 %v1657, %v1653
    %v2194 = vpack.c.b16 %v1658, %v1654
    %v2195 = vpack.c.b16 %v1659, %v1655
    %v2196 = vpack.c.b16 %v1664, %v1660
    %v2197 = vpack.c.b16 %v1665, %v1661
    %v2198 = vpack.c.b16 %v1666, %v1662
    %v2199 = vpack.c.b16 %v1667, %v1663
    %v2200 = vpack.c.b16 %v1672, %v1668
    %v2201 = vpack.c.b16 %v1673, %v1669
    %v2202 = vpack.c.b16 %v1674, %v1670
    %v2203 = vpack.c.b16 %v1675, %v1671
    %v2204 = vpack.c.b16 %v1680, %v1676
    %v2205 = vpack.c.b16 %v1681, %v1677
    %v2206 = vpack.c.b16 %v1682, %v1678
    %v2207 = vpack.c.b16 %v1683, %v1679
    %v2208 = vpack.c.b16 %v1688, %v1684
    %v2209 = vpack.c.b16 %v1689, %v1685
    %v2210 = vpack.c.b16 %v1690, %v1686
    %v2211 = vpack.c.b16 %v1691, %v1687
    %v2212 = vpack.c.b16 %v1696, %v1692
    %v2213 = vpack.c.b16 %v1697, %v1693
    %v2214 = vpack.c.b16 %v1698, %v1694
    %v2215 = vpack.c.b16 %v1699, %v1695
    %v2216 = vpack.c.b16 %v1704, %v1700
    %v2217 = vpack.c.b16 %v1705, %v1701
    %v2218 = vpack.c.b16 %v1706, %v1702
    %v2219 = vpack.c.b16 %v1707, %v1703
    %v2220 = vpack.c.b16 %v1712, %v1708
    %v2221 = vpack.c.b16 %v1713, %v1709
    %v2222 = vpack.c.b16 %v1714, %v1710
    %v2223 = vpack.c.b16 %v1715, %v1711
    %v2224 = vpack.c.b16 %v1720, %v1716
    %v2225 = vpack.c.b16 %v1721, %v1717
    %v2226 = vpack.c.b16 %v1722, %v1718
    %v2227 = vpack.c.b16 %v1723, %v1719
    %v2228 = vpack.c.b16 %v1728, %v1724
    %v2229 = vpack.c.b16 %v1729, %v1725
    %v2230 = vpack.c.b16 %v1730, %v1726
    %v2231 = vpack.c.b16 %v1731, %v1727
    %v2232 = vpack.c.b16 %v1736, %v1732
    %v2233 = vpack.c.b16 %v1737, %v1733
    %v2234 = vpack.c.b16 %v1738, %v1734
    %v2235 = vpack.c.b16 %v1739, %v1735
    %v2236 = vpack.c.b16 %v1744, %v1740
    %v2237 = vpack.c.b16 %v1745, %v1741
    %v2238 = vpack.c.b16 %v1746, %v1742
    %v2239 = vpack.c.b16 %v1747, %v1743
    %v2240 = vpack.c.b16 %v1752, %v1748
    %v2241 = vpack.c.b16 %v1753, %v1749
    %v2242 = vpack.c.b16 %v1754, %v1750
    %v2243 = vpack.c.b16 %v1755, %v1751
    %v2244 = vpack.c.b16 %v1760, %v1756
    %v2245 = vpack.c.b16 %v1761, %v1757
    %v2246 = vpack.c.b16 %v1762, %v1758
    %v2247 = vpack.c.b16 %v1763, %v1759
    %v2248 = vpack.c.b16 %v1768, %v1764
    %v2249 = vpack.c.b16 %v1769, %v1765
    %v2250 = vpack.c.b16 %v1770, %v1766
    %v2251 = vpack.c.b16 %v1771, %v1767
    %v2252 = vpack.c.b16 %v1776, %v1772
    %v2253 = vpack.c.b16 %v1777, %v1773
    %v2254 = vpack.c.b16 %v1778, %v1774
    %v2255 = vpack.c.b16 %v1779, %v1775
    %v2256 = vpack.c.b16 %v1784, %v1780
    %v2257 = vpack.c.b16 %v1785, %v1781
    %v2258 = vpack.c.b16 %v1786, %v1782
    %v2259 = vpack.c.b16 %v1787, %v1783
    %v2260 = vpack.c.b16 %v1792, %v1788
    %v2261 = vpack.c.b16 %v1793, %v1789
    %v2262 = vpack.c.b16 %v1794, %v1790
    %v2263 = vpack.c.b16 %v1795, %v1791
    %v2264 = vpack.c.b16 %v1800, %v1796
    %v2265 = vpack.c.b16 %v1801, %v1797
    %v2266 = vpack.c.b16 %v1802, %v1798
    %v2267 = vpack.c.b16 %v1803, %v1799
    %v2268 = vpack.c.b16 %v1808, %v1804
    %v2269 = vpack.c.b16 %v1809, %v1805
    %v2270 = vpack.c.b16 %v1810, %v1806
    %v2271 = vpack.c.b16 %v1811, %v1807
    %v2272 = vpack.c.b16 %v1816, %v1812
    %v2273 = vpack.c.b16 %v1817, %v1813
    %v2274 = vpack.c.b16 %v1818, %v1814
    %v2275 = vpack.c.b16 %v1819, %v1815
    %v2276 = vpack.c.b16 %v1824, %v1820
    %v2277 = vpack.c.b16 %v1825, %v1821
    %v2278 = vpack.c.b16 %v1826, %v1822
    %v2279 = vpack.c.b16 %v1827, %v1823
    %v2280 = vpack.c.b16 %v1832, %v1828
    %v2281 = vpack.c.b16 %v1833, %v1829
    %v2282 = vpack.c.b16 %v1834, %v1830
    %v2283 = vpack.c.b16 %v1835, %v1831
    %v2284 = vpack.c.b16 %v1840, %v1836
    %v2285 = vpack.c.b16 %v1841, %v1837
    %v2286 = vpack.c.b16 %v1842, %v1838
    %v2287 = vpack.c.b16 %v1843, %v1839
    %v2288 = vpack.c.b16 %v1848, %v1844
    %v2289 = vpack.c.b16 %v1849, %v1845
    %v2290 = vpack.c.b16 %v1850, %v1846
    %v2291 = vpack.c.b16 %v1851, %v1847
    %v2292 = vpack.c.b16 %v1856, %v1852
    %v2293 = vpack.c.b16 %v1857, %v1853
    %v2294 = vpack.c.b16 %v1858, %v1854
    %v2295 = vpack.c.b16 %v1859, %v1855
    %v2296 = vpack.c.b16 %v1864, %v1860
    %v2297 = vpack.c.b16 %v1865, %v1861
    %v2298 = vpack.c.b16 %v1866, %v1862
    %v2299 = vpack.c.b16 %v1867, %v1863
    %v2300 = vpack.c.b16 %v1872, %v1868
    %v2301 = vpack.c.b16 %v1873, %v1869
    %v2302 = vpack.c.b16 %v1874, %v1870
    %v2303 = vpack.c.b16 %v1875, %v1871
    %v2304 = vpack.c.b16 %v1880, %v1876
    %v2305 = vpack.c.b16 %v1881, %v1877
    %v2306 = vpack.c.b16 %v1882, %v1878
    %v2307 = vpack.c.b16 %v1883, %v1879
    %v2308 = vpack.c.b16 %v1888, %v1884
    %v2309 = vpack.c.b16 %v1889, %v1885
    %v2310 = vpack.c.b16 %v1890, %v1886
    %v2311 = vpack.c.b16 %v1891, %v1887
    %v2312 = vpack.c.b16 %v1896, %v1892
    %v2313 = vpack.c.b16 %v1897, %v1893
    %v2314 = vpack.c.b16 %v1898, %v1894
    %v2315 = vpack.c.b16 %v1899, %v1895
    %v2316 = vpack.c.b16 %v1904, %v1900
    %v2317 = vpack.c.b16 %v1905, %v1901
    %v2318 = vpack.c.b16 %v1906, %v1902
    %v2319 = vpack.c.b16 %v1907, %v1903
    %v2320 = vpack.c.b16 %v1912, %v1908
    %v2321 = vpack.c.b16 %v1913, %v1909
    %v2322 = vpack.c.b16 %v1914, %v1910
    %v2323 = vpack.c.b16 %v1915, %v1911
    %v2324 = vpack.c.b16 %v1920, %v1916
    %v2325 = vpack.c.b16 %v1921, %v1917
    %v2326 = vpack.c.b16 %v1922, %v1918
    %v2327 = vpack.c.b16 %v1923, %v1919
    %v2328 = vpack.c.b16 %v1928, %v1924
    %v2329 = vpack.c.b16 %v1929, %v1925
    %v2330 = vpack.c.b16 %v1930, %v1926
    %v2331 = vpack.c.b16 %v1931, %v1927
    %v2332 = vpack.c.b16 %v1936, %v1932
    %v2333 = vpack.c.b16 %v1937, %v1933
    %v2334 = vpack.c.b16 %v1938, %v1934
    %v2335 = vpack.c.b16 %v1939, %v1935
    %v2336 = vpack.c.b16 %v1944, %v1940
    %v2337 = vpack.c.b16 %v1945, %v1941
    %v2338 = vpack.c.b16 %v1946, %v1942
    %v2339 = vpack.c.b16 %v1947, %v1943
    %v2340 = vpack.c.b16 %v1952, %v1948
    %v2341 = vpack.c.b16 %v1953, %v1949
    %v2342 = vpack.c.b16 %v1954, %v1950
    %v2343 = vpack.c.b16 %v1955, %v1951
    %v2344 = vpack.c.b16 %v1960, %v1956
    %v2345 = vpack.c.b16 %v1961, %v1957
    %v2346 = vpack.c.b16 %v1962, %v1958
    %v2347 = vpack.c.b16 %v1963, %v1959
    %v2348 = vpack.c.b16 %v1968, %v1964
    %v2349 = vpack.c.b16 %v1969, %v1965
    %v2350 = vpack.c.b16 %v1970, %v1966
    %v2351 = vpack.c.b16 %v1971, %v1967
    %v2352 = vpack.c.b16 %v1976, %v1972
    %v2353 = vpack.c.b16 %v1977, %v1973
    %v2354 = vpack.c.b16 %v1978, %v1974
    %v2355 = vpack.c.b16 %v1979, %v1975
    %v2356 = vpack.c.b16 %v1984, %v1980
    %v2357 = vpack.c.b16 %v1985, %v1981
    %v2358 = vpack.c.b16 %v1986, %v1982
    %v2359 = vpack.c.b16 %v1987, %v1983
    %v2360 = vpack.c.b16 %v1992, %v1988
    %v2361 = vpack.c.b16 %v1993, %v1989
    %v2362 = vpack.c.b16 %v1994, %v1990
    %v2363 = vpack.c.b16 %v1995, %v1991
    %v2364 = vpack.c.b16 %v2000, %v1996
    %v2365 = vpack.c.b16 %v2001, %v1997
    %v2366 = vpack.c.b16 %v2002, %v1998
    %v2367 = vpack.c.b16 %v2003, %v1999
    %v2368 = vpack.c.b16 %v2008, %v2004
    %v2369 = vpack.c.b16 %v2009, %v2005
    %v2370 = vpack.c.b16 %v2010, %v2006
    %v2371 = vpack.c.b16 %v2011, %v2007
    %v2372 = vpack.c.b16 %v2016, %v2012
    %v2373 = vpack.c.b16 %v2017, %v2013
    %v2374 = vpack.c.b16 %v2018, %v2014
    %v2375 = vpack.c.b16 %v2019, %v2015
    %v2376 = vpack.c.b16 %v2024, %v2020
    %v2377 = vpack.c.b16 %v2025, %v2021
    %v2378 = vpack.c.b16 %v2026, %v2022
    %v2379 = vpack.c.b16 %v2027, %v2023
    %v2380 = vpack.c.b16 %v2032, %v2028
    %v2381 = vpack.c.b16 %v2033, %v2029
    %v2382 = vpack.c.b16 %v2034, %v2030
    %v2383 = vpack.c.b16 %v2035, %v2031
    %v2384 = vpack.c.b16 %v2040, %v2036
    %v2385 = vpack.c.b16 %v2041, %v2037
    %v2386 = vpack.c.b16 %v2042, %v2038
    %v2387 = vpack.c.b16 %v2043, %v2039
    %v2388 = vpack.c.b16 %v2048, %v2044
    %v2389 = vpack.c.b16 %v2049, %v2045
    %v2390 = vpack.c.b16 %v2050, %v2046
    %v2391 = vpack.c.b16 %v2051, %v2047
    %v2392 = vpack.c.b16 %v2056, %v2052
    %v2393 = vpack.c.b16 %v2057, %v2053
    %v2394 = vpack.c.b16 %v2058, %v2054
    %v2395 = vpack.c.b16 %v2059, %v2055
    %v2396 = vpack.c.b16 %v2064, %v2060
    %v2397 = vpack.c.b16 %v2065, %v2061
    %v2398 = vpack.c.b16 %v2066, %v2062
    %v2399 = vpack.c.b16 %v2067, %v2063
    %v2400 = vpack.c.b16 %v2072, %v2068
    %v2401 = vpack.c.b16 %v2073, %v2069
    %v2402 = vpack.c.b16 %v2074, %v2070
    %v2403 = vpack.c.b16 %v2075, %v2071
    %v2404 = vpack.c.b16 %v2080, %v2076
    %v2405 = vpack.c.b16 %v2081, %v2077
    %v2406 = vpack.c.b16 %v2082, %v2078
    %v2407 = vpack.c.b16 %v2083, %v2079
    %v2408 = vpack.c.b16 %v2088, %v2084
    %v2409 = vpack.c.b16 %v2089, %v2085
    %v2410 = vpack.c.b16 %v2090, %v2086
    %v2411 = vpack.c.b16 %v2091, %v2087
    %2732 = vmatpush.bf16.msra.mxu0 %v2120
    %2733 = vmatpush.bf16.msra.mxu0 %v2116
    %2734 = vmatpush.bf16.msra.mxu0 %v2112
    %2735 = vmatpush.bf16.msra.mxu0 %v2108
    %2736 = vmatpush.bf16.msra.mxu0 %v2104
    %2737 = vmatpush.bf16.msra.mxu0 %v2100
    %2738 = vmatpush.bf16.msra.mxu0 %v2096
    %2739 = vmatpush.bf16.msra.mxu0 %v2092
    %2740 = vmatmul.bf16.gmra.mxu0 %v792
    %v2741 = vpop.f32.mrf.mxu0
    %v2742 = vadd.f32 %v1124, %v2741
    %v2743 = vpop.f32.mrf.mxu0
    %2744 = vdwg.mxu0
    %2745 = vmatpush.bf16.msra.mxu0 %v2152
    %2746 = vmatpush.bf16.msra.mxu0 %v2148
    %2747 = vmatpush.bf16.msra.mxu0 %v2144
    %2748 = vmatpush.bf16.msra.mxu0 %v2140
    %2749 = vmatpush.bf16.msra.mxu0 %v2136
    %2750 = vmatpush.bf16.msra.mxu0 %v2132
    %2751 = vmatpush.bf16.msra.mxu0 %v2128
    %2752 = vmatpush.bf16.msra.mxu0 %v2124
    %2753 = vmatmul.bf16.gmra.mxu0 %v793
    %v2754 = vpop.f32.mrf.mxu0
    %v2755 = vadd.f32 %v2742, %v2754
    %v2756 = vpop.f32.mrf.mxu0
    %2757 = vdwg.mxu0
    %2758 = vmatpush.bf16.msra.mxu0 %v2184
    %2759 = vmatpush.bf16.msra.mxu0 %v2180
    %2760 = vmatpush.bf16.msra.mxu0 %v2176
    %2761 = vmatpush.bf16.msra.mxu0 %v2172
    %2762 = vmatpush.bf16.msra.mxu0 %v2168
    %2763 = vmatpush.bf16.msra.mxu0 %v2164
    %2764 = vmatpush.bf16.msra.mxu0 %v2160
    %2765 = vmatpush.bf16.msra.mxu0 %v2156
    %2766 = vmatmul.bf16.gmra.mxu0 %v794
    %v2767 = vpop.f32.mrf.mxu0
    %v2768 = vadd.f32 %v2755, %v2767
    %v2769 = vpop.f32.mrf.mxu0
    %2770 = vdwg.mxu0
    %2771 = vmatpush.bf16.msra.mxu0 %v2216
    %2772 = vmatpush.bf16.msra.mxu0 %v2212
    %2773 = vmatpush.bf16.msra.mxu0 %v2208
    %2774 = vmatpush.bf16.msra.mxu0 %v2204
    %2775 = vmatpush.bf16.msra.mxu0 %v2200
    %2776 = vmatpush.bf16.msra.mxu0 %v2196
    %2777 = vmatpush.bf16.msra.mxu0 %v2192
    %2778 = vmatpush.bf16.msra.mxu0 %v2188
    %2779 = vmatmul.bf16.gmra.mxu0 %v795
    %v2780 = vpop.f32.mrf.mxu0
    %v2781 = vadd.f32 %v2768, %v2780
    %v2782 = vpop.f32.mrf.mxu0
    %2783 = vdwg.mxu0
    %2784 = vmatpush.bf16.msra.mxu0 %v2248
    %2785 = vmatpush.bf16.msra.mxu0 %v2244
    %2786 = vmatpush.bf16.msra.mxu0 %v2240
    %2787 = vmatpush.bf16.msra.mxu0 %v2236
    %2788 = vmatpush.bf16.msra.mxu0 %v2232
    %2789 = vmatpush.bf16.msra.mxu0 %v2228
    %2790 = vmatpush.bf16.msra.mxu0 %v2224
    %2791 = vmatpush.bf16.msra.mxu0 %v2220
    %2792 = vmatmul.bf16.gmra.mxu0 %v796
    %v2793 = vpop.f32.mrf.mxu0
    %v2794 = vadd.f32 %v2781, %v2793
    %v2795 = vpop.f32.mrf.mxu0
    %2796 = vdwg.mxu0
    %2797 = vmatpush.bf16.msra.mxu0 %v2280
    %2798 = vmatpush.bf16.msra.mxu0 %v2276
    %2799 = vmatpush.bf16.msra.mxu0 %v2272
    %2800 = vmatpush.bf16.msra.mxu0 %v2268
    %2801 = vmatpush.bf16.msra.mxu0 %v2264
    %2802 = vmatpush.bf16.msra.mxu0 %v2260
    %2803 = vmatpush.bf16.msra.mxu0 %v2256
    %2804 = vmatpush.bf16.msra.mxu0 %v2252
    %2805 = vmatmul.bf16.gmra.mxu0 %v797
    %v2806 = vpop.f32.mrf.mxu0
    %v2807 = vadd.f32 %v2794, %v2806
    %v2808 = vpop.f32.mrf.mxu0
    %2809 = vdwg.mxu0
    %2810 = vmatpush.bf16.msra.mxu0 %v2312
    %2811 = vmatpush.bf16.msra.mxu0 %v2308
    %2812 = vmatpush.bf16.msra.mxu0 %v2304
    %2813 = vmatpush.bf16.msra.mxu0 %v2300
    %2814 = vmatpush.bf16.msra.mxu0 %v2296
    %2815 = vmatpush.bf16.msra.mxu0 %v2292
    %2816 = vmatpush.bf16.msra.mxu0 %v2288
    %2817 = vmatpush.bf16.msra.mxu0 %v2284
    %2818 = vmatmul.bf16.gmra.mxu0 %v798
    %v2819 = vpop.f32.mrf.mxu0
    %v2820 = vadd.f32 %v2807, %v2819
    %v2821 = vpop.f32.mrf.mxu0
    %2822 = vdwg.mxu0
    %2823 = vmatpush.bf16.msra.mxu0 %v2344
    %2824 = vmatpush.bf16.msra.mxu0 %v2340
    %2825 = vmatpush.bf16.msra.mxu0 %v2336
    %2826 = vmatpush.bf16.msra.mxu0 %v2332
    %2827 = vmatpush.bf16.msra.mxu0 %v2328
    %2828 = vmatpush.bf16.msra.mxu0 %v2324
    %2829 = vmatpush.bf16.msra.mxu0 %v2320
    %2830 = vmatpush.bf16.msra.mxu0 %v2316
    %2831 = vmatmul.bf16.gmra.mxu0 %v799
    %v2832 = vpop.f32.mrf.mxu0
    %v2833 = vadd.f32 %v2820, %v2832
    %v2834 = vpop.f32.mrf.mxu0
    %2835 = vdwg.mxu0
    %2836 = vmatpush.bf16.msra.mxu0 %v2376
    %2837 = vmatpush.bf16.msra.mxu0 %v2372
    %2838 = vmatpush.bf16.msra.mxu0 %v2368
    %2839 = vmatpush.bf16.msra.mxu0 %v2364
    %2840 = vmatpush.bf16.msra.mxu0 %v2360
    %2841 = vmatpush.bf16.msra.mxu0 %v2356
    %2842 = vmatpush.bf16.msra.mxu0 %v2352
    %2843 = vmatpush.bf16.msra.mxu0 %v2348
    %2844 = vmatmul.bf16.gmra.mxu0 %v800
    %v2845 = vpop.f32.mrf.mxu0
    %v2846 = vadd.f32 %v2833, %v2845
    %v2847 = vpop.f32.mrf.mxu0
    %2848 = vdwg.mxu0
    %2849 = vmatpush.bf16.msra.mxu0 %v2408
    %2850 = vmatpush.bf16.msra.mxu0 %v2404
    %2851 = vmatpush.bf16.msra.mxu0 %v2400
    %2852 = vmatpush.bf16.msra.mxu0 %v2396
    %2853 = vmatpush.bf16.msra.mxu0 %v2392
    %2854 = vmatpush.bf16.msra.mxu0 %v2388
    %2855 = vmatpush.bf16.msra.mxu0 %v2384
    %2856 = vmatpush.bf16.msra.mxu0 %v2380
    %2857 = vmatmul.bf16.gmra.mxu0 %v801
    %v2858 = vpop.f32.mrf.mxu0
    %v2859 = vadd.f32 %v2846, %v2858
    %v2860 = vpop.f32.mrf.mxu0
    %2861 = vdwg.mxu0
    %2862 = vmatpush.bf16.msra.mxu0 %v2121
    %2863 = vmatpush.bf16.msra.mxu0 %v2117
    %2864 = vmatpush.bf16.msra.mxu0 %v2113
    %2865 = vmatpush.bf16.msra.mxu0 %v2109
    %2866 = vmatpush.bf16.msra.mxu0 %v2105
    %2867 = vmatpush.bf16.msra.mxu0 %v2101
    %2868 = vmatpush.bf16.msra.mxu0 %v2097
    %2869 = vmatpush.bf16.msra.mxu0 %v2093
    %2870 = vmatmul.bf16.gmra.mxu0 %v792
    %v2871 = vpop.f32.mrf.mxu0
    %v2872 = vadd.f32 %v1125, %v2871
    %v2873 = vpop.f32.mrf.mxu0
    %2874 = vdwg.mxu0
    %2875 = vmatpush.bf16.msra.mxu0 %v2153
    %2876 = vmatpush.bf16.msra.mxu0 %v2149
    %2877 = vmatpush.bf16.msra.mxu0 %v2145
    %2878 = vmatpush.bf16.msra.mxu0 %v2141
    %2879 = vmatpush.bf16.msra.mxu0 %v2137
    %2880 = vmatpush.bf16.msra.mxu0 %v2133
    %2881 = vmatpush.bf16.msra.mxu0 %v2129
    %2882 = vmatpush.bf16.msra.mxu0 %v2125
    %2883 = vmatmul.bf16.gmra.mxu0 %v793
    %v2884 = vpop.f32.mrf.mxu0
    %v2885 = vadd.f32 %v2872, %v2884
    %v2886 = vpop.f32.mrf.mxu0
    %2887 = vdwg.mxu0
    %2888 = vmatpush.bf16.msra.mxu0 %v2185
    %2889 = vmatpush.bf16.msra.mxu0 %v2181
    %2890 = vmatpush.bf16.msra.mxu0 %v2177
    %2891 = vmatpush.bf16.msra.mxu0 %v2173
    %2892 = vmatpush.bf16.msra.mxu0 %v2169
    %2893 = vmatpush.bf16.msra.mxu0 %v2165
    %2894 = vmatpush.bf16.msra.mxu0 %v2161
    %2895 = vmatpush.bf16.msra.mxu0 %v2157
    %2896 = vmatmul.bf16.gmra.mxu0 %v794
    %v2897 = vpop.f32.mrf.mxu0
    %v2898 = vadd.f32 %v2885, %v2897
    %v2899 = vpop.f32.mrf.mxu0
    %2900 = vdwg.mxu0
    %2901 = vmatpush.bf16.msra.mxu0 %v2217
    %2902 = vmatpush.bf16.msra.mxu0 %v2213
    %2903 = vmatpush.bf16.msra.mxu0 %v2209
    %2904 = vmatpush.bf16.msra.mxu0 %v2205
    %2905 = vmatpush.bf16.msra.mxu0 %v2201
    %2906 = vmatpush.bf16.msra.mxu0 %v2197
    %2907 = vmatpush.bf16.msra.mxu0 %v2193
    %2908 = vmatpush.bf16.msra.mxu0 %v2189
    %2909 = vmatmul.bf16.gmra.mxu0 %v795
    %v2910 = vpop.f32.mrf.mxu0
    %v2911 = vadd.f32 %v2898, %v2910
    %v2912 = vpop.f32.mrf.mxu0
    %2913 = vdwg.mxu0
    %2914 = vmatpush.bf16.msra.mxu0 %v2249
    %2915 = vmatpush.bf16.msra.mxu0 %v2245
    %2916 = vmatpush.bf16.msra.mxu0 %v2241
    %2917 = vmatpush.bf16.msra.mxu0 %v2237
    %2918 = vmatpush.bf16.msra.mxu0 %v2233
    %2919 = vmatpush.bf16.msra.mxu0 %v2229
    %2920 = vmatpush.bf16.msra.mxu0 %v2225
    %2921 = vmatpush.bf16.msra.mxu0 %v2221
    %2922 = vmatmul.bf16.gmra.mxu0 %v796
    %v2923 = vpop.f32.mrf.mxu0
    %v2924 = vadd.f32 %v2911, %v2923
    %v2925 = vpop.f32.mrf.mxu0
    %2926 = vdwg.mxu0
    %2927 = vmatpush.bf16.msra.mxu0 %v2281
    %2928 = vmatpush.bf16.msra.mxu0 %v2277
    %2929 = vmatpush.bf16.msra.mxu0 %v2273
    %2930 = vmatpush.bf16.msra.mxu0 %v2269
    %2931 = vmatpush.bf16.msra.mxu0 %v2265
    %2932 = vmatpush.bf16.msra.mxu0 %v2261
    %2933 = vmatpush.bf16.msra.mxu0 %v2257
    %2934 = vmatpush.bf16.msra.mxu0 %v2253
    %2935 = vmatmul.bf16.gmra.mxu0 %v797
    %v2936 = vpop.f32.mrf.mxu0
    %v2937 = vadd.f32 %v2924, %v2936
    %v2938 = vpop.f32.mrf.mxu0
    %2939 = vdwg.mxu0
    %2940 = vmatpush.bf16.msra.mxu0 %v2313
    %2941 = vmatpush.bf16.msra.mxu0 %v2309
    %2942 = vmatpush.bf16.msra.mxu0 %v2305
    %2943 = vmatpush.bf16.msra.mxu0 %v2301
    %2944 = vmatpush.bf16.msra.mxu0 %v2297
    %2945 = vmatpush.bf16.msra.mxu0 %v2293
    %2946 = vmatpush.bf16.msra.mxu0 %v2289
    %2947 = vmatpush.bf16.msra.mxu0 %v2285
    %2948 = vmatmul.bf16.gmra.mxu0 %v798
    %v2949 = vpop.f32.mrf.mxu0
    %v2950 = vadd.f32 %v2937, %v2949
    %v2951 = vpop.f32.mrf.mxu0
    %2952 = vdwg.mxu0
    %2953 = vmatpush.bf16.msra.mxu0 %v2345
    %2954 = vmatpush.bf16.msra.mxu0 %v2341
    %2955 = vmatpush.bf16.msra.mxu0 %v2337
    %2956 = vmatpush.bf16.msra.mxu0 %v2333
    %2957 = vmatpush.bf16.msra.mxu0 %v2329
    %2958 = vmatpush.bf16.msra.mxu0 %v2325
    %2959 = vmatpush.bf16.msra.mxu0 %v2321
    %2960 = vmatpush.bf16.msra.mxu0 %v2317
    %2961 = vmatmul.bf16.gmra.mxu0 %v799
    %v2962 = vpop.f32.mrf.mxu0
    %v2963 = vadd.f32 %v2950, %v2962
    %v2964 = vpop.f32.mrf.mxu0
    %2965 = vdwg.mxu0
    %2966 = vmatpush.bf16.msra.mxu0 %v2377
    %2967 = vmatpush.bf16.msra.mxu0 %v2373
    %2968 = vmatpush.bf16.msra.mxu0 %v2369
    %2969 = vmatpush.bf16.msra.mxu0 %v2365
    %2970 = vmatpush.bf16.msra.mxu0 %v2361
    %2971 = vmatpush.bf16.msra.mxu0 %v2357
    %2972 = vmatpush.bf16.msra.mxu0 %v2353
    %2973 = vmatpush.bf16.msra.mxu0 %v2349
    %2974 = vmatmul.bf16.gmra.mxu0 %v800
    %v2975 = vpop.f32.mrf.mxu0
    %v2976 = vadd.f32 %v2963, %v2975
    %v2977 = vpop.f32.mrf.mxu0
    %2978 = vdwg.mxu0
    %2979 = vmatpush.bf16.msra.mxu0 %v2409
    %2980 = vmatpush.bf16.msra.mxu0 %v2405
    %2981 = vmatpush.bf16.msra.mxu0 %v2401
    %2982 = vmatpush.bf16.msra.mxu0 %v2397
    %2983 = vmatpush.bf16.msra.mxu0 %v2393
    %2984 = vmatpush.bf16.msra.mxu0 %v2389
    %2985 = vmatpush.bf16.msra.mxu0 %v2385
    %2986 = vmatpush.bf16.msra.mxu0 %v2381
    %2987 = vmatmul.bf16.gmra.mxu0 %v801
    %v2988 = vpop.f32.mrf.mxu0
    %v2989 = vadd.f32 %v2976, %v2988
    %v2990 = vpop.f32.mrf.mxu0
    %2991 = vdwg.mxu0
    %2992 = vmatpush.bf16.msra.mxu0 %v2122
    %2993 = vmatpush.bf16.msra.mxu0 %v2118
    %2994 = vmatpush.bf16.msra.mxu0 %v2114
    %2995 = vmatpush.bf16.msra.mxu0 %v2110
    %2996 = vmatpush.bf16.msra.mxu0 %v2106
    %2997 = vmatpush.bf16.msra.mxu0 %v2102
    %2998 = vmatpush.bf16.msra.mxu0 %v2098
    %2999 = vmatpush.bf16.msra.mxu0 %v2094
    %3000 = vmatmul.bf16.gmra.mxu0 %v792
    %v3001 = vpop.f32.mrf.mxu0
    %v3002 = vadd.f32 %v1126, %v3001
    %v3003 = vpop.f32.mrf.mxu0
    %3004 = vdwg.mxu0
    %3005 = vmatpush.bf16.msra.mxu0 %v2154
    %3006 = vmatpush.bf16.msra.mxu0 %v2150
    %3007 = vmatpush.bf16.msra.mxu0 %v2146
    %3008 = vmatpush.bf16.msra.mxu0 %v2142
    %3009 = vmatpush.bf16.msra.mxu0 %v2138
    %3010 = vmatpush.bf16.msra.mxu0 %v2134
    %3011 = vmatpush.bf16.msra.mxu0 %v2130
    %3012 = vmatpush.bf16.msra.mxu0 %v2126
    %3013 = vmatmul.bf16.gmra.mxu0 %v793
    %v3014 = vpop.f32.mrf.mxu0
    %v3015 = vadd.f32 %v3002, %v3014
    %v3016 = vpop.f32.mrf.mxu0
    %3017 = vdwg.mxu0
    %3018 = vmatpush.bf16.msra.mxu0 %v2186
    %3019 = vmatpush.bf16.msra.mxu0 %v2182
    %3020 = vmatpush.bf16.msra.mxu0 %v2178
    %3021 = vmatpush.bf16.msra.mxu0 %v2174
    %3022 = vmatpush.bf16.msra.mxu0 %v2170
    %3023 = vmatpush.bf16.msra.mxu0 %v2166
    %3024 = vmatpush.bf16.msra.mxu0 %v2162
    %3025 = vmatpush.bf16.msra.mxu0 %v2158
    %3026 = vmatmul.bf16.gmra.mxu0 %v794
    %v3027 = vpop.f32.mrf.mxu0
    %v3028 = vadd.f32 %v3015, %v3027
    %v3029 = vpop.f32.mrf.mxu0
    %3030 = vdwg.mxu0
    %3031 = vmatpush.bf16.msra.mxu0 %v2218
    %3032 = vmatpush.bf16.msra.mxu0 %v2214
    %3033 = vmatpush.bf16.msra.mxu0 %v2210
    %3034 = vmatpush.bf16.msra.mxu0 %v2206
    %3035 = vmatpush.bf16.msra.mxu0 %v2202
    %3036 = vmatpush.bf16.msra.mxu0 %v2198
    %3037 = vmatpush.bf16.msra.mxu0 %v2194
    %3038 = vmatpush.bf16.msra.mxu0 %v2190
    %3039 = vmatmul.bf16.gmra.mxu0 %v795
    %v3040 = vpop.f32.mrf.mxu0
    %v3041 = vadd.f32 %v3028, %v3040
    %v3042 = vpop.f32.mrf.mxu0
    %3043 = vdwg.mxu0
    %3044 = vmatpush.bf16.msra.mxu0 %v2250
    %3045 = vmatpush.bf16.msra.mxu0 %v2246
    %3046 = vmatpush.bf16.msra.mxu0 %v2242
    %3047 = vmatpush.bf16.msra.mxu0 %v2238
    %3048 = vmatpush.bf16.msra.mxu0 %v2234
    %3049 = vmatpush.bf16.msra.mxu0 %v2230
    %3050 = vmatpush.bf16.msra.mxu0 %v2226
    %3051 = vmatpush.bf16.msra.mxu0 %v2222
    %3052 = vmatmul.bf16.gmra.mxu0 %v796
    %v3053 = vpop.f32.mrf.mxu0
    %v3054 = vadd.f32 %v3041, %v3053
    %v3055 = vpop.f32.mrf.mxu0
    %3056 = vdwg.mxu0
    %3057 = vmatpush.bf16.msra.mxu0 %v2282
    %3058 = vmatpush.bf16.msra.mxu0 %v2278
    %3059 = vmatpush.bf16.msra.mxu0 %v2274
    %3060 = vmatpush.bf16.msra.mxu0 %v2270
    %3061 = vmatpush.bf16.msra.mxu0 %v2266
    %3062 = vmatpush.bf16.msra.mxu0 %v2262
    %3063 = vmatpush.bf16.msra.mxu0 %v2258
    %3064 = vmatpush.bf16.msra.mxu0 %v2254
    %3065 = vmatmul.bf16.gmra.mxu0 %v797
    %v3066 = vpop.f32.mrf.mxu0
    %v3067 = vadd.f32 %v3054, %v3066
    %v3068 = vpop.f32.mrf.mxu0
    %3069 = vdwg.mxu0
    %3070 = vmatpush.bf16.msra.mxu0 %v2314
    %3071 = vmatpush.bf16.msra.mxu0 %v2310
    %3072 = vmatpush.bf16.msra.mxu0 %v2306
    %3073 = vmatpush.bf16.msra.mxu0 %v2302
    %3074 = vmatpush.bf16.msra.mxu0 %v2298
    %3075 = vmatpush.bf16.msra.mxu0 %v2294
    %3076 = vmatpush.bf16.msra.mxu0 %v2290
    %3077 = vmatpush.bf16.msra.mxu0 %v2286
    %3078 = vmatmul.bf16.gmra.mxu0 %v798
    %v3079 = vpop.f32.mrf.mxu0
    %v3080 = vadd.f32 %v3067, %v3079
    %v3081 = vpop.f32.mrf.mxu0
    %3082 = vdwg.mxu0
    %3083 = vmatpush.bf16.msra.mxu0 %v2346
    %3084 = vmatpush.bf16.msra.mxu0 %v2342
    %3085 = vmatpush.bf16.msra.mxu0 %v2338
    %3086 = vmatpush.bf16.msra.mxu0 %v2334
    %3087 = vmatpush.bf16.msra.mxu0 %v2330
    %3088 = vmatpush.bf16.msra.mxu0 %v2326
    %3089 = vmatpush.bf16.msra.mxu0 %v2322
    %3090 = vmatpush.bf16.msra.mxu0 %v2318
    %3091 = vmatmul.bf16.gmra.mxu0 %v799
    %v3092 = vpop.f32.mrf.mxu0
    %v3093 = vadd.f32 %v3080, %v3092
    %v3094 = vpop.f32.mrf.mxu0
    %3095 = vdwg.mxu0
    %3096 = vmatpush.bf16.msra.mxu0 %v2378
    %3097 = vmatpush.bf16.msra.mxu0 %v2374
    %3098 = vmatpush.bf16.msra.mxu0 %v2370
    %3099 = vmatpush.bf16.msra.mxu0 %v2366
    %3100 = vmatpush.bf16.msra.mxu0 %v2362
    %3101 = vmatpush.bf16.msra.mxu0 %v2358
    %3102 = vmatpush.bf16.msra.mxu0 %v2354
    %3103 = vmatpush.bf16.msra.mxu0 %v2350
    %3104 = vmatmul.bf16.gmra.mxu0 %v800
    %v3105 = vpop.f32.mrf.mxu0
    %v3106 = vadd.f32 %v3093, %v3105
    %v3107 = vpop.f32.mrf.mxu0
    %3108 = vdwg.mxu0
    %3109 = vmatpush.bf16.msra.mxu0 %v2410
    %3110 = vmatpush.bf16.msra.mxu0 %v2406
    %3111 = vmatpush.bf16.msra.mxu0 %v2402
    %3112 = vmatpush.bf16.msra.mxu0 %v2398
    %3113 = vmatpush.bf16.msra.mxu0 %v2394
    %3114 = vmatpush.bf16.msra.mxu0 %v2390
    %3115 = vmatpush.bf16.msra.mxu0 %v2386
    %3116 = vmatpush.bf16.msra.mxu0 %v2382
    %3117 = vmatmul.bf16.gmra.mxu0 %v801
    %v3118 = vpop.f32.mrf.mxu0
    %v3119 = vadd.f32 %v3106, %v3118
    %v3120 = vpop.f32.mrf.mxu0
    %3121 = vdwg.mxu0
    %3122 = vmatpush.bf16.msra.mxu0 %v2123
    %3123 = vmatpush.bf16.msra.mxu0 %v2119
    %3124 = vmatpush.bf16.msra.mxu0 %v2115
    %3125 = vmatpush.bf16.msra.mxu0 %v2111
    %3126 = vmatpush.bf16.msra.mxu0 %v2107
    %3127 = vmatpush.bf16.msra.mxu0 %v2103
    %3128 = vmatpush.bf16.msra.mxu0 %v2099
    %3129 = vmatpush.bf16.msra.mxu0 %v2095
    %3130 = vmatmul.bf16.gmra.mxu0 %v792
    %v3131 = vpop.f32.mrf.mxu0
    %v3132 = vadd.f32 %v1127, %v3131
    %v3133 = vpop.f32.mrf.mxu0
    %3134 = vdwg.mxu0
    %3135 = vmatpush.bf16.msra.mxu0 %v2155
    %3136 = vmatpush.bf16.msra.mxu0 %v2151
    %3137 = vmatpush.bf16.msra.mxu0 %v2147
    %3138 = vmatpush.bf16.msra.mxu0 %v2143
    %3139 = vmatpush.bf16.msra.mxu0 %v2139
    %3140 = vmatpush.bf16.msra.mxu0 %v2135
    %3141 = vmatpush.bf16.msra.mxu0 %v2131
    %3142 = vmatpush.bf16.msra.mxu0 %v2127
    %3143 = vmatmul.bf16.gmra.mxu0 %v793
    %v3144 = vpop.f32.mrf.mxu0
    %v3145 = vadd.f32 %v3132, %v3144
    %v3146 = vpop.f32.mrf.mxu0
    %3147 = vdwg.mxu0
    %3148 = vmatpush.bf16.msra.mxu0 %v2187
    %3149 = vmatpush.bf16.msra.mxu0 %v2183
    %3150 = vmatpush.bf16.msra.mxu0 %v2179
    %3151 = vmatpush.bf16.msra.mxu0 %v2175
    %3152 = vmatpush.bf16.msra.mxu0 %v2171
    %3153 = vmatpush.bf16.msra.mxu0 %v2167
    %3154 = vmatpush.bf16.msra.mxu0 %v2163
    %3155 = vmatpush.bf16.msra.mxu0 %v2159
    %3156 = vmatmul.bf16.gmra.mxu0 %v794
    %v3157 = vpop.f32.mrf.mxu0
    %v3158 = vadd.f32 %v3145, %v3157
    %v3159 = vpop.f32.mrf.mxu0
    %3160 = vdwg.mxu0
    %3161 = vmatpush.bf16.msra.mxu0 %v2219
    %3162 = vmatpush.bf16.msra.mxu0 %v2215
    %3163 = vmatpush.bf16.msra.mxu0 %v2211
    %3164 = vmatpush.bf16.msra.mxu0 %v2207
    %3165 = vmatpush.bf16.msra.mxu0 %v2203
    %3166 = vmatpush.bf16.msra.mxu0 %v2199
    %3167 = vmatpush.bf16.msra.mxu0 %v2195
    %3168 = vmatpush.bf16.msra.mxu0 %v2191
    %3169 = vmatmul.bf16.gmra.mxu0 %v795
    %v3170 = vpop.f32.mrf.mxu0
    %v3171 = vadd.f32 %v3158, %v3170
    %v3172 = vpop.f32.mrf.mxu0
    %3173 = vdwg.mxu0
    %3174 = vmatpush.bf16.msra.mxu0 %v2251
    %3175 = vmatpush.bf16.msra.mxu0 %v2247
    %3176 = vmatpush.bf16.msra.mxu0 %v2243
    %3177 = vmatpush.bf16.msra.mxu0 %v2239
    %3178 = vmatpush.bf16.msra.mxu0 %v2235
    %3179 = vmatpush.bf16.msra.mxu0 %v2231
    %3180 = vmatpush.bf16.msra.mxu0 %v2227
    %3181 = vmatpush.bf16.msra.mxu0 %v2223
    %3182 = vmatmul.bf16.gmra.mxu0 %v796
    %v3183 = vpop.f32.mrf.mxu0
    %v3184 = vadd.f32 %v3171, %v3183
    %v3185 = vpop.f32.mrf.mxu0
    %3186 = vdwg.mxu0
    %3187 = vmatpush.bf16.msra.mxu0 %v2283
    %3188 = vmatpush.bf16.msra.mxu0 %v2279
    %3189 = vmatpush.bf16.msra.mxu0 %v2275
    %3190 = vmatpush.bf16.msra.mxu0 %v2271
    %3191 = vmatpush.bf16.msra.mxu0 %v2267
    %3192 = vmatpush.bf16.msra.mxu0 %v2263
    %3193 = vmatpush.bf16.msra.mxu0 %v2259
    %3194 = vmatpush.bf16.msra.mxu0 %v2255
    %3195 = vmatmul.bf16.gmra.mxu0 %v797
    %v3196 = vpop.f32.mrf.mxu0
    %v3197 = vadd.f32 %v3184, %v3196
    %v3198 = vpop.f32.mrf.mxu0
    %3199 = vdwg.mxu0
    %3200 = vmatpush.bf16.msra.mxu0 %v2315
    %3201 = vmatpush.bf16.msra.mxu0 %v2311
    %3202 = vmatpush.bf16.msra.mxu0 %v2307
    %3203 = vmatpush.bf16.msra.mxu0 %v2303
    %3204 = vmatpush.bf16.msra.mxu0 %v2299
    %3205 = vmatpush.bf16.msra.mxu0 %v2295
    %3206 = vmatpush.bf16.msra.mxu0 %v2291
    %3207 = vmatpush.bf16.msra.mxu0 %v2287
    %3208 = vmatmul.bf16.gmra.mxu0 %v798
    %v3209 = vpop.f32.mrf.mxu0
    %v3210 = vadd.f32 %v3197, %v3209
    %v3211 = vpop.f32.mrf.mxu0
    %3212 = vdwg.mxu0
    %3213 = vmatpush.bf16.msra.mxu0 %v2347
    %3214 = vmatpush.bf16.msra.mxu0 %v2343
    %3215 = vmatpush.bf16.msra.mxu0 %v2339
    %3216 = vmatpush.bf16.msra.mxu0 %v2335
    %3217 = vmatpush.bf16.msra.mxu0 %v2331
    %3218 = vmatpush.bf16.msra.mxu0 %v2327
    %3219 = vmatpush.bf16.msra.mxu0 %v2323
    %3220 = vmatpush.bf16.msra.mxu0 %v2319
    %3221 = vmatmul.bf16.gmra.mxu0 %v799
    %v3222 = vpop.f32.mrf.mxu0
    %v3223 = vadd.f32 %v3210, %v3222
    %v3224 = vpop.f32.mrf.mxu0
    %3225 = vdwg.mxu0
    %3226 = vmatpush.bf16.msra.mxu0 %v2379
    %3227 = vmatpush.bf16.msra.mxu0 %v2375
    %3228 = vmatpush.bf16.msra.mxu0 %v2371
    %3229 = vmatpush.bf16.msra.mxu0 %v2367
    %3230 = vmatpush.bf16.msra.mxu0 %v2363
    %3231 = vmatpush.bf16.msra.mxu0 %v2359
    %3232 = vmatpush.bf16.msra.mxu0 %v2355
    %3233 = vmatpush.bf16.msra.mxu0 %v2351
    %3234 = vmatmul.bf16.gmra.mxu0 %v800
    %v3235 = vpop.f32.mrf.mxu0
    %v3236 = vadd.f32 %v3223, %v3235
    %v3237 = vpop.f32.mrf.mxu0
    %3238 = vdwg.mxu0
    %3239 = vmatpush.bf16.msra.mxu0 %v2411
    %3240 = vmatpush.bf16.msra.mxu0 %v2407
    %3241 = vmatpush.bf16.msra.mxu0 %v2403
    %3242 = vmatpush.bf16.msra.mxu0 %v2399
    %3243 = vmatpush.bf16.msra.mxu0 %v2395
    %3244 = vmatpush.bf16.msra.mxu0 %v2391
    %3245 = vmatpush.bf16.msra.mxu0 %v2387
    %3246 = vmatpush.bf16.msra.mxu0 %v2383
    %3247 = vmatmul.bf16.gmra.mxu0 %v801
    %v3248 = vpop.f32.mrf.mxu0
    %v3249 = vadd.f32 %v3236, %v3248
    %v3250 = vpop.f32.mrf.mxu0
    %3251 = vdwg.mxu0
    %v3252 = vpack.c.bf16 %v2859, %v2859
    %v3253 = vpack.c.bf16 %v2989, %v2989
    %v3254 = vpack.c.bf16 %v3119, %v3119
    %v3255 = vpack.c.bf16 %v3249, %v3249
    %v3256 = vld [vmem:[%s7] sm:$0xff]
    %v3257 = vld [vmem:[%s7 + $0x8] sm:$0xff]
    %v3258 = vld [vmem:[%s7 + $0x10] sm:$0xff]
    %v3259 = vld [vmem:[%s7 + $0x18] sm:$0xff]
    %v3260 = vld [vmem:[%s7 + $0x20] sm:$0xff]
    %v3261 = vld [vmem:[%s7 + $0x28] sm:$0xff]
    %v3262 = vld [vmem:[%s7 + $0x30] sm:$0xff]
    %v3263 = vld [vmem:[%s7 + $0x38] sm:$0xff]
    %v3264 = vld [vmem:[%s7 + $0x40] sm:$0xff]
    %v3265 = vld [vmem:[%s7 + $0x48] sm:$0xff]
    %v3266 = vld [vmem:[%s7 + $0x50] sm:$0xff]
    %v3267 = vld [vmem:[%s7 + $0x58] sm:$0xff]
    %v3268 = vld [vmem:[%s7 + $0x60] sm:$0xff]
    %v3269 = vld [vmem:[%s7 + $0x68] sm:$0xff]
    %v3270 = vld [vmem:[%s7 + $0x70] sm:$0xff]
    %v3271 = vld [vmem:[%s7 + $0x78] sm:$0xff]
    %v3272 = vld [vmem:[%s7 + $0x80] sm:$0xff]
    %v3273 = vld [vmem:[%s7 + $0x88] sm:$0xff]
    %v3274 = vld [vmem:[%s7 + $0x90] sm:$0xff]
    %v3275 = vld [vmem:[%s7 + $0x98] sm:$0xff]
    %v3276 = vld [vmem:[%s7 + $0xa0] sm:$0xff]
    %v3277 = vld [vmem:[%s7 + $0xa8] sm:$0xff]
    %v3278 = vld [vmem:[%s7 + $0xb0] sm:$0xff]
    %v3279 = vld [vmem:[%s7 + $0xb8] sm:$0xff]
    %v3280 = vld [vmem:[%s7 + $0xc0] sm:$0xff]
    %v3281 = vld [vmem:[%s7 + $0xc8] sm:$0xff]
    %v3282 = vld [vmem:[%s7 + $0xd0] sm:$0xff]
    %v3283 = vld [vmem:[%s7 + $0xd8] sm:$0xff]
    %v3284 = vld [vmem:[%s7 + $0xe0] sm:$0xff]
    %v3285 = vld [vmem:[%s7 + $0xe8] sm:$0xff]
    %v3286 = vld [vmem:[%s7 + $0xf0] sm:$0xff]
    %v3287 = vld [vmem:[%s7 + $0xf8] sm:$0xff]
    %v3288 = vld [vmem:[%s7 + $0x100] sm:$0xff]
    %v3289 = vld [vmem:[%s7 + $0x108] sm:$0xff]
    %v3290 = vld [vmem:[%s7 + $0x110] sm:$0xff]
    %v3291 = vld [vmem:[%s7 + $0x118] sm:$0xff]
    %v3292 = vld [vmem:[%s7 + $0x120] sm:$0xff]
    %v3293 = vld [vmem:[%s7 + $0x128] sm:$0xff]
    %v3294 = vld [vmem:[%s7 + $0x130] sm:$0xff]
    %v3295 = vld [vmem:[%s7 + $0x138] sm:$0xff]
    %v3296 = vld [vmem:[%s7 + $0x140] sm:$0xff]
    %v3297 = vld [vmem:[%s7 + $0x148] sm:$0xff]
    %v3298 = vld [vmem:[%s7 + $0x150] sm:$0xff]
    %v3299 = vld [vmem:[%s7 + $0x158] sm:$0xff]
    %v3300 = vld [vmem:[%s7 + $0x160] sm:$0xff]
    %v3301 = vld [vmem:[%s7 + $0x168] sm:$0xff]
    %v3302 = vld [vmem:[%s7 + $0x170] sm:$0xff]
    %v3303 = vld [vmem:[%s7 + $0x178] sm:$0xff]
    %v3304 = vld [vmem:[%s7 + $0x180] sm:$0xff]
    %v3305 = vld [vmem:[%s7 + $0x188] sm:$0xff]
    %v3306 = vld [vmem:[%s7 + $0x190] sm:$0xff]
    %v3307 = vld [vmem:[%s7 + $0x198] sm:$0xff]
    %v3308 = vld [vmem:[%s7 + $0x1a0] sm:$0xff]
    %v3309 = vld [vmem:[%s7 + $0x1a8] sm:$0xff]
    %v3310 = vld [vmem:[%s7 + $0x1b0] sm:$0xff]
    %v3311 = vld [vmem:[%s7 + $0x1b8] sm:$0xff]
    %v3312 = vld [vmem:[%s7 + $0x1c0] sm:$0xff]
    %v3313 = vld [vmem:[%s7 + $0x1c8] sm:$0xff]
    %v3314 = vld [vmem:[%s7 + $0x1d0] sm:$0xff]
    %v3315 = vld [vmem:[%s7 + $0x1d8] sm:$0xff]
    %v3316 = vld [vmem:[%s7 + $0x1e0] sm:$0xff]
    %v3317 = vld [vmem:[%s7 + $0x1e8] sm:$0xff]
    %v3318 = vld [vmem:[%s7 + $0x1f0] sm:$0xff]
    %v3319 = vld [vmem:[%s7 + $0x1f8] sm:$0xff]
    %v3320 = vld [vmem:[%s8] sm:$0x3]
    %v3322 = vperm.slane %v3320, 0
    %v3323 = vperm.slane %v3320, 1
    %v3390 = vunpack.c.l.b16 %v3256
    %v3391 = vunpack.c.h.b16 %v3256
    %v3392 = vunpack.c.l.b16 %v3257
    %v3393 = vunpack.c.h.b16 %v3257
    %v3394 = vunpack.c.l.b16 %v3258
    %v3395 = vunpack.c.h.b16 %v3258
    %v3396 = vunpack.c.l.b16 %v3259
    %v3397 = vunpack.c.h.b16 %v3259
    %v3398 = vunpack.c.l.b16 %v3260
    %v3399 = vunpack.c.h.b16 %v3260
    %v3400 = vunpack.c.l.b16 %v3261
    %v3401 = vunpack.c.h.b16 %v3261
    %v3402 = vunpack.c.l.b16 %v3262
    %v3403 = vunpack.c.h.b16 %v3262
    %v3404 = vunpack.c.l.b16 %v3263
    %v3405 = vunpack.c.h.b16 %v3263
    %v3406 = vunpack.c.l.b16 %v3264
    %v3407 = vunpack.c.h.b16 %v3264
    %v3408 = vunpack.c.l.b16 %v3265
    %v3409 = vunpack.c.h.b16 %v3265
    %v3410 = vunpack.c.l.b16 %v3266
    %v3411 = vunpack.c.h.b16 %v3266
    %v3412 = vunpack.c.l.b16 %v3267
    %v3413 = vunpack.c.h.b16 %v3267
    %v3414 = vunpack.c.l.b16 %v3268
    %v3415 = vunpack.c.h.b16 %v3268
    %v3416 = vunpack.c.l.b16 %v3269
    %v3417 = vunpack.c.h.b16 %v3269
    %v3418 = vunpack.c.l.b16 %v3270
    %v3419 = vunpack.c.h.b16 %v3270
    %v3420 = vunpack.c.l.b16 %v3271
    %v3421 = vunpack.c.h.b16 %v3271
    %v3422 = vunpack.c.l.b16 %v3272
    %v3423 = vunpack.c.h.b16 %v3272
    %v3424 = vunpack.c.l.b16 %v3273
    %v3425 = vunpack.c.h.b16 %v3273
    %v3426 = vunpack.c.l.b16 %v3274
    %v3427 = vunpack.c.h.b16 %v3274
    %v3428 = vunpack.c.l.b16 %v3275
    %v3429 = vunpack.c.h.b16 %v3275
    %v3430 = vunpack.c.l.b16 %v3276
    %v3431 = vunpack.c.h.b16 %v3276
    %v3432 = vunpack.c.l.b16 %v3277
    %v3433 = vunpack.c.h.b16 %v3277
    %v3434 = vunpack.c.l.b16 %v3278
    %v3435 = vunpack.c.h.b16 %v3278
    %v3436 = vunpack.c.l.b16 %v3279
    %v3437 = vunpack.c.h.b16 %v3279
    %v3438 = vunpack.c.l.b16 %v3280
    %v3439 = vunpack.c.h.b16 %v3280
    %v3440 = vunpack.c.l.b16 %v3281
    %v3441 = vunpack.c.h.b16 %v3281
    %v3442 = vunpack.c.l.b16 %v3282
    %v3443 = vunpack.c.h.b16 %v3282
    %v3444 = vunpack.c.l.b16 %v3283
    %v3445 = vunpack.c.h.b16 %v3283
    %v3446 = vunpack.c.l.b16 %v3284
    %v3447 = vunpack.c.h.b16 %v3284
    %v3448 = vunpack.c.l.b16 %v3285
    %v3449 = vunpack.c.h.b16 %v3285
    %v3450 = vunpack.c.l.b16 %v3286
    %v3451 = vunpack.c.h.b16 %v3286
    %v3452 = vunpack.c.l.b16 %v3287
    %v3453 = vunpack.c.h.b16 %v3287
    %v3454 = vunpack.c.l.b16 %v3288
    %v3455 = vunpack.c.h.b16 %v3288
    %v3456 = vunpack.c.l.b16 %v3289
    %v3457 = vunpack.c.h.b16 %v3289
    %v3458 = vunpack.c.l.b16 %v3290
    %v3459 = vunpack.c.h.b16 %v3290
    %v3460 = vunpack.c.l.b16 %v3291
    %v3461 = vunpack.c.h.b16 %v3291
    %v3462 = vunpack.c.l.b16 %v3292
    %v3463 = vunpack.c.h.b16 %v3292
    %v3464 = vunpack.c.l.b16 %v3293
    %v3465 = vunpack.c.h.b16 %v3293
    %v3466 = vunpack.c.l.b16 %v3294
    %v3467 = vunpack.c.h.b16 %v3294
    %v3468 = vunpack.c.l.b16 %v3295
    %v3469 = vunpack.c.h.b16 %v3295
    %v3470 = vunpack.c.l.b16 %v3296
    %v3471 = vunpack.c.h.b16 %v3296
    %v3472 = vunpack.c.l.b16 %v3297
    %v3473 = vunpack.c.h.b16 %v3297
    %v3474 = vunpack.c.l.b16 %v3298
    %v3475 = vunpack.c.h.b16 %v3298
    %v3476 = vunpack.c.l.b16 %v3299
    %v3477 = vunpack.c.h.b16 %v3299
    %v3478 = vunpack.c.l.b16 %v3300
    %v3479 = vunpack.c.h.b16 %v3300
    %v3480 = vunpack.c.l.b16 %v3301
    %v3481 = vunpack.c.h.b16 %v3301
    %v3482 = vunpack.c.l.b16 %v3302
    %v3483 = vunpack.c.h.b16 %v3302
    %v3484 = vunpack.c.l.b16 %v3303
    %v3485 = vunpack.c.h.b16 %v3303
    %v3486 = vunpack.c.l.b16 %v3304
    %v3487 = vunpack.c.h.b16 %v3304
    %v3488 = vunpack.c.l.b16 %v3305
    %v3489 = vunpack.c.h.b16 %v3305
    %v3490 = vunpack.c.l.b16 %v3306
    %v3491 = vunpack.c.h.b16 %v3306
    %v3492 = vunpack.c.l.b16 %v3307
    %v3493 = vunpack.c.h.b16 %v3307
    %v3494 = vunpack.c.l.b16 %v3308
    %v3495 = vunpack.c.h.b16 %v3308
    %v3496 = vunpack.c.l.b16 %v3309
    %v3497 = vunpack.c.h.b16 %v3309
    %v3498 = vunpack.c.l.b16 %v3310
    %v3499 = vunpack.c.h.b16 %v3310
    %v3500 = vunpack.c.l.b16 %v3311
    %v3501 = vunpack.c.h.b16 %v3311
    %v3502 = vunpack.c.l.b16 %v3312
    %v3503 = vunpack.c.h.b16 %v3312
    %v3504 = vunpack.c.l.b16 %v3313
    %v3505 = vunpack.c.h.b16 %v3313
    %v3506 = vunpack.c.l.b16 %v3314
    %v3507 = vunpack.c.h.b16 %v3314
    %v3508 = vunpack.c.l.b16 %v3315
    %v3509 = vunpack.c.h.b16 %v3315
    %v3510 = vunpack.c.l.b16 %v3316
    %v3511 = vunpack.c.h.b16 %v3316
    %v3512 = vunpack.c.l.b16 %v3317
    %v3513 = vunpack.c.h.b16 %v3317
    %v3514 = vunpack.c.l.b16 %v3318
    %v3515 = vunpack.c.h.b16 %v3318
    %v3516 = vunpack.c.l.b16 %v3319
    %v3517 = vunpack.c.h.b16 %v3319
    %v3518 = vpack.c.b16 %v3392, %v3390
    %v3519 = vpack.c.b16 %v3393, %v3391
    %v3520 = vpack.c.b16 %v3396, %v3394
    %v3521 = vpack.c.b16 %v3397, %v3395
    %v3522 = vpack.c.b16 %v3400, %v3398
    %v3523 = vpack.c.b16 %v3401, %v3399
    %v3524 = vpack.c.b16 %v3404, %v3402
    %v3525 = vpack.c.b16 %v3405, %v3403
    %v3526 = vpack.c.b16 %v3408, %v3406
    %v3527 = vpack.c.b16 %v3409, %v3407
    %v3528 = vpack.c.b16 %v3412, %v3410
    %v3529 = vpack.c.b16 %v3413, %v3411
    %v3530 = vpack.c.b16 %v3416, %v3414
    %v3531 = vpack.c.b16 %v3417, %v3415
    %v3532 = vpack.c.b16 %v3420, %v3418
    %v3533 = vpack.c.b16 %v3421, %v3419
    %v3534 = vpack.c.b16 %v3424, %v3422
    %v3535 = vpack.c.b16 %v3425, %v3423
    %v3536 = vpack.c.b16 %v3428, %v3426
    %v3537 = vpack.c.b16 %v3429, %v3427
    %v3538 = vpack.c.b16 %v3432, %v3430
    %v3539 = vpack.c.b16 %v3433, %v3431
    %v3540 = vpack.c.b16 %v3436, %v3434
    %v3541 = vpack.c.b16 %v3437, %v3435
    %v3542 = vpack.c.b16 %v3440, %v3438
    %v3543 = vpack.c.b16 %v3441, %v3439
    %v3544 = vpack.c.b16 %v3444, %v3442
    %v3545 = vpack.c.b16 %v3445, %v3443
    %v3546 = vpack.c.b16 %v3448, %v3446
    %v3547 = vpack.c.b16 %v3449, %v3447
    %v3548 = vpack.c.b16 %v3452, %v3450
    %v3549 = vpack.c.b16 %v3453, %v3451
    %v3550 = vpack.c.b16 %v3456, %v3454
    %v3551 = vpack.c.b16 %v3457, %v3455
    %v3552 = vpack.c.b16 %v3460, %v3458
    %v3553 = vpack.c.b16 %v3461, %v3459
    %v3554 = vpack.c.b16 %v3464, %v3462
    %v3555 = vpack.c.b16 %v3465, %v3463
    %v3556 = vpack.c.b16 %v3468, %v3466
    %v3557 = vpack.c.b16 %v3469, %v3467
    %v3558 = vpack.c.b16 %v3472, %v3470
    %v3559 = vpack.c.b16 %v3473, %v3471
    %v3560 = vpack.c.b16 %v3476, %v3474
    %v3561 = vpack.c.b16 %v3477, %v3475
    %v3562 = vpack.c.b16 %v3480, %v3478
    %v3563 = vpack.c.b16 %v3481, %v3479
    %v3564 = vpack.c.b16 %v3484, %v3482
    %v3565 = vpack.c.b16 %v3485, %v3483
    %v3566 = vpack.c.b16 %v3488, %v3486
    %v3567 = vpack.c.b16 %v3489, %v3487
    %v3568 = vpack.c.b16 %v3492, %v3490
    %v3569 = vpack.c.b16 %v3493, %v3491
    %v3570 = vpack.c.b16 %v3496, %v3494
    %v3571 = vpack.c.b16 %v3497, %v3495
    %v3572 = vpack.c.b16 %v3500, %v3498
    %v3573 = vpack.c.b16 %v3501, %v3499
    %v3574 = vpack.c.b16 %v3504, %v3502
    %v3575 = vpack.c.b16 %v3505, %v3503
    %v3576 = vpack.c.b16 %v3508, %v3506
    %v3577 = vpack.c.b16 %v3509, %v3507
    %v3578 = vpack.c.b16 %v3512, %v3510
    %v3579 = vpack.c.b16 %v3513, %v3511
    %v3580 = vpack.c.b16 %v3516, %v3514
    %v3581 = vpack.c.b16 %v3517, %v3515
    %3646 = vmatpush.bf16.msra.mxu0 %v3532
    %3647 = vmatpush.bf16.msra.mxu0 %v3530
    %3648 = vmatpush.bf16.msra.mxu0 %v3528
    %3649 = vmatpush.bf16.msra.mxu0 %v3526
    %3650 = vmatpush.bf16.msra.mxu0 %v3524
    %3651 = vmatpush.bf16.msra.mxu0 %v3522
    %3652 = vmatpush.bf16.msra.mxu0 %v3520
    %3653 = vmatpush.bf16.msra.mxu0 %v3518
    %3654 = vmatmul.bf16.gmra.mxu0 %v3252
    %v3655 = vpop.f32.mrf.mxu0
    %v3656 = vadd.f32 %v3322, %v3655
    %v3657 = vpop.f32.mrf.mxu0
    %3658 = vdwg.mxu0
    %3659 = vmatpush.bf16.msra.mxu0 %v3548
    %3660 = vmatpush.bf16.msra.mxu0 %v3546
    %3661 = vmatpush.bf16.msra.mxu0 %v3544
    %3662 = vmatpush.bf16.msra.mxu0 %v3542
    %3663 = vmatpush.bf16.msra.mxu0 %v3540
    %3664 = vmatpush.bf16.msra.mxu0 %v3538
    %3665 = vmatpush.bf16.msra.mxu0 %v3536
    %3666 = vmatpush.bf16.msra.mxu0 %v3534
    %3667 = vmatmul.bf16.gmra.mxu0 %v3253
    %v3668 = vpop.f32.mrf.mxu0
    %v3669 = vadd.f32 %v3656, %v3668
    %v3670 = vpop.f32.mrf.mxu0
    %3671 = vdwg.mxu0
    %3672 = vmatpush.bf16.msra.mxu0 %v3564
    %3673 = vmatpush.bf16.msra.mxu0 %v3562
    %3674 = vmatpush.bf16.msra.mxu0 %v3560
    %3675 = vmatpush.bf16.msra.mxu0 %v3558
    %3676 = vmatpush.bf16.msra.mxu0 %v3556
    %3677 = vmatpush.bf16.msra.mxu0 %v3554
    %3678 = vmatpush.bf16.msra.mxu0 %v3552
    %3679 = vmatpush.bf16.msra.mxu0 %v3550
    %3680 = vmatmul.bf16.gmra.mxu0 %v3254
    %v3681 = vpop.f32.mrf.mxu0
    %v3682 = vadd.f32 %v3669, %v3681
    %v3683 = vpop.f32.mrf.mxu0
    %3684 = vdwg.mxu0
    %3685 = vmatpush.bf16.msra.mxu0 %v3580
    %3686 = vmatpush.bf16.msra.mxu0 %v3578
    %3687 = vmatpush.bf16.msra.mxu0 %v3576
    %3688 = vmatpush.bf16.msra.mxu0 %v3574
    %3689 = vmatpush.bf16.msra.mxu0 %v3572
    %3690 = vmatpush.bf16.msra.mxu0 %v3570
    %3691 = vmatpush.bf16.msra.mxu0 %v3568
    %3692 = vmatpush.bf16.msra.mxu0 %v3566
    %3693 = vmatmul.bf16.gmra.mxu0 %v3255
    %v3694 = vpop.f32.mrf.mxu0
    %v3695 = vadd.f32 %v3682, %v3694
    %v3696 = vpop.f32.mrf.mxu0
    %3697 = vdwg.mxu0
    %3698 = vmatpush.bf16.msra.mxu0 %v3533
    %3699 = vmatpush.bf16.msra.mxu0 %v3531
    %3700 = vmatpush.bf16.msra.mxu0 %v3529
    %3701 = vmatpush.bf16.msra.mxu0 %v3527
    %3702 = vmatpush.bf16.msra.mxu0 %v3525
    %3703 = vmatpush.bf16.msra.mxu0 %v3523
    %3704 = vmatpush.bf16.msra.mxu0 %v3521
    %3705 = vmatpush.bf16.msra.mxu0 %v3519
    %3706 = vmatmul.bf16.gmra.mxu0 %v3252
    %v3707 = vpop.f32.mrf.mxu0
    %v3708 = vadd.f32 %v3323, %v3707
    %v3709 = vpop.f32.mrf.mxu0
    %3710 = vdwg.mxu0
    %3711 = vmatpush.bf16.msra.mxu0 %v3549
    %3712 = vmatpush.bf16.msra.mxu0 %v3547
    %3713 = vmatpush.bf16.msra.mxu0 %v3545
    %3714 = vmatpush.bf16.msra.mxu0 %v3543
    %3715 = vmatpush.bf16.msra.mxu0 %v3541
    %3716 = vmatpush.bf16.msra.mxu0 %v3539
    %3717 = vmatpush.bf16.msra.mxu0 %v3537
    %3718 = vmatpush.bf16.msra.mxu0 %v3535
    %3719 = vmatmul.bf16.gmra.mxu0 %v3253
    %v3720 = vpop.f32.mrf.mxu0
    %v3721 = vadd.f32 %v3708, %v3720
    %v3722 = vpop.f32.mrf.mxu0
    %3723 = vdwg.mxu0
    %3724 = vmatpush.bf16.msra.mxu0 %v3565
    %3725 = vmatpush.bf16.msra.mxu0 %v3563
    %3726 = vmatpush.bf16.msra.mxu0 %v3561
    %3727 = vmatpush.bf16.msra.mxu0 %v3559
    %3728 = vmatpush.bf16.msra.mxu0 %v3557
    %3729 = vmatpush.bf16.msra.mxu0 %v3555
    %3730 = vmatpush.bf16.msra.mxu0 %v3553
    %3731 = vmatpush.bf16.msra.mxu0 %v3551
    %3732 = vmatmul.bf16.gmra.mxu0 %v3254
    %v3733 = vpop.f32.mrf.mxu0
    %v3734 = vadd.f32 %v3721, %v3733
    %v3735 = vpop.f32.mrf.mxu0
    %3736 = vdwg.mxu0
    %3737 = vmatpush.bf16.msra.mxu0 %v3581
    %3738 = vmatpush.bf16.msra.mxu0 %v3579
    %3739 = vmatpush.bf16.msra.mxu0 %v3577
    %3740 = vmatpush.bf16.msra.mxu0 %v3575
    %3741 = vmatpush.bf16.msra.mxu0 %v3573
    %3742 = vmatpush.bf16.msra.mxu0 %v3571
    %3743 = vmatpush.bf16.msra.mxu0 %v3569
    %3744 = vmatpush.bf16.msra.mxu0 %v3567
    %3745 = vmatmul.bf16.gmra.mxu0 %v3255
    %v3746 = vpop.f32.mrf.mxu0
    %v3747 = vadd.f32 %v3734, %v3746
    %v3748 = vpop.f32.mrf.mxu0
    %3749 = vdwg.mxu0
    %v3750 = vpack.c.bf16 %v3695, %v3695
    %v3751 = vpack.c.bf16 %v3747, %v3747
    %v3752 = vld [vmem:[%s9] sm:$0xf]
    %v3753 = vld [vmem:[%s9 + $0x4] sm:$0xf]
    %v3754 = vld [vmem:[%s9 + $0x8] sm:$0xf]
    %v3755 = vld [vmem:[%s9 + $0xc] sm:$0xf]
    %v3756 = vld [vmem:[%s9 + $0x10] sm:$0xf]
    %v3757 = vld [vmem:[%s9 + $0x14] sm:$0xf]
    %v3758 = vld [vmem:[%s9 + $0x18] sm:$0xf]
    %v3759 = vld [vmem:[%s9 + $0x1c] sm:$0xf]
    %v3760 = vld [vmem:[%s9 + $0x20] sm:$0xf]
    %v3761 = vld [vmem:[%s9 + $0x24] sm:$0xf]
    %v3762 = vld [vmem:[%s9 + $0x28] sm:$0xf]
    %v3763 = vld [vmem:[%s9 + $0x2c] sm:$0xf]
    %v3764 = vld [vmem:[%s9 + $0x30] sm:$0xf]
    %v3765 = vld [vmem:[%s9 + $0x34] sm:$0xf]
    %v3766 = vld [vmem:[%s9 + $0x38] sm:$0xf]
    %v3767 = vld [vmem:[%s9 + $0x3c] sm:$0xf]
    %v3768 = vld [vmem:[%s9 + $0x40] sm:$0xf]
    %v3769 = vld [vmem:[%s9 + $0x44] sm:$0xf]
    %v3770 = vld [vmem:[%s9 + $0x48] sm:$0xf]
    %v3771 = vld [vmem:[%s9 + $0x4c] sm:$0xf]
    %v3772 = vld [vmem:[%s9 + $0x50] sm:$0xf]
    %v3773 = vld [vmem:[%s9 + $0x54] sm:$0xf]
    %v3774 = vld [vmem:[%s9 + $0x58] sm:$0xf]
    %v3775 = vld [vmem:[%s9 + $0x5c] sm:$0xf]
    %v3776 = vld [vmem:[%s9 + $0x60] sm:$0xf]
    %v3777 = vld [vmem:[%s9 + $0x64] sm:$0xf]
    %v3778 = vld [vmem:[%s9 + $0x68] sm:$0xf]
    %v3779 = vld [vmem:[%s9 + $0x6c] sm:$0xf]
    %v3780 = vld [vmem:[%s9 + $0x70] sm:$0xf]
    %v3781 = vld [vmem:[%s9 + $0x74] sm:$0xf]
    %v3782 = vld [vmem:[%s9 + $0x78] sm:$0xf]
    %v3783 = vld [vmem:[%s9 + $0x7c] sm:$0xf]
    %v3784 = vld [vmem:[%s10] sm:$0x1]
    %v3786 = vperm.slane %v3784, 0
    %v3820 = vunpack.c.l.b16 %v3752
    %v3821 = vunpack.c.l.b16 %v3753
    %v3822 = vunpack.c.l.b16 %v3754
    %v3823 = vunpack.c.l.b16 %v3755
    %v3824 = vunpack.c.l.b16 %v3756
    %v3825 = vunpack.c.l.b16 %v3757
    %v3826 = vunpack.c.l.b16 %v3758
    %v3827 = vunpack.c.l.b16 %v3759
    %v3828 = vunpack.c.l.b16 %v3760
    %v3829 = vunpack.c.l.b16 %v3761
    %v3830 = vunpack.c.l.b16 %v3762
    %v3831 = vunpack.c.l.b16 %v3763
    %v3832 = vunpack.c.l.b16 %v3764
    %v3833 = vunpack.c.l.b16 %v3765
    %v3834 = vunpack.c.l.b16 %v3766
    %v3835 = vunpack.c.l.b16 %v3767
    %v3836 = vunpack.c.l.b16 %v3768
    %v3837 = vunpack.c.l.b16 %v3769
    %v3838 = vunpack.c.l.b16 %v3770
    %v3839 = vunpack.c.l.b16 %v3771
    %v3840 = vunpack.c.l.b16 %v3772
    %v3841 = vunpack.c.l.b16 %v3773
    %v3842 = vunpack.c.l.b16 %v3774
    %v3843 = vunpack.c.l.b16 %v3775
    %v3844 = vunpack.c.l.b16 %v3776
    %v3845 = vunpack.c.l.b16 %v3777
    %v3846 = vunpack.c.l.b16 %v3778
    %v3847 = vunpack.c.l.b16 %v3779
    %v3848 = vunpack.c.l.b16 %v3780
    %v3849 = vunpack.c.l.b16 %v3781
    %v3850 = vunpack.c.l.b16 %v3782
    %v3851 = vunpack.c.l.b16 %v3783
    %v3852 = vpack.c.b16 %v3821, %v3820
    %v3853 = vpack.c.b16 %v3823, %v3822
    %v3854 = vpack.c.b16 %v3825, %v3824
    %v3855 = vpack.c.b16 %v3827, %v3826
    %v3856 = vpack.c.b16 %v3829, %v3828
    %v3857 = vpack.c.b16 %v3831, %v3830
    %v3858 = vpack.c.b16 %v3833, %v3832
    %v3859 = vpack.c.b16 %v3835, %v3834
    %v3860 = vpack.c.b16 %v3837, %v3836
    %v3861 = vpack.c.b16 %v3839, %v3838
    %v3862 = vpack.c.b16 %v3841, %v3840
    %v3863 = vpack.c.b16 %v3843, %v3842
    %v3864 = vpack.c.b16 %v3845, %v3844
    %v3865 = vpack.c.b16 %v3847, %v3846
    %v3866 = vpack.c.b16 %v3849, %v3848
    %v3867 = vpack.c.b16 %v3851, %v3850
    %3884 = vmatpush.bf16.msra.mxu0 %v3859
    %3885 = vmatpush.bf16.msra.mxu0 %v3858
    %3886 = vmatpush.bf16.msra.mxu0 %v3857
    %3887 = vmatpush.bf16.msra.mxu0 %v3856
    %3888 = vmatpush.bf16.msra.mxu0 %v3855
    %3889 = vmatpush.bf16.msra.mxu0 %v3854
    %3890 = vmatpush.bf16.msra.mxu0 %v3853
    %3891 = vmatpush.bf16.msra.mxu0 %v3852
    %3892 = vmatmul.bf16.gmra.mxu0 %v3750
    %v3893 = vpop.f32.mrf.mxu0
    %v3894 = vadd.f32 %v3786, %v3893
    %v3895 = vpop.f32.mrf.mxu0
    %3896 = vdwg.mxu0
    %3897 = vmatpush.bf16.msra.mxu0 %v3867
    %3898 = vmatpush.bf16.msra.mxu0 %v3866
    %3899 = vmatpush.bf16.msra.mxu0 %v3865
    %3900 = vmatpush.bf16.msra.mxu0 %v3864
    %3901 = vmatpush.bf16.msra.mxu0 %v3863
    %3902 = vmatpush.bf16.msra.mxu0 %v3862
    %3903 = vmatpush.bf16.msra.mxu0 %v3861
    %3904 = vmatpush.bf16.msra.mxu0 %v3860
    %3905 = vmatmul.bf16.gmra.mxu0 %v3751
    %v3906 = vpop.f32.mrf.mxu0
    %v3907 = vadd.f32 %v3894, %v3906
    %v3908 = vpop.f32.mrf.mxu0
    %3909 = vdwg.mxu0
    %vm3910 = vcmask 66560
    %3911 = vst.msk [vmem:[#allocation2] sm:$0x3] %vm3910, %v3907
    // Predicated region
    $region46: #{net_forward.5} parent=1 // pred_check
      _
    $region47: #{net_forward.5} parent=1 // pred_check_branch
      %3913 = sbr.rel (0) target = $region49
    $region48: #{net_forward.5} parent=1 // pred_region
      %3915 = vsyncadd [#allocation3], 0
      %s3917 = sshll.u32 [#allocation2], 4
      %s3918 = int_to_ptr.vmem [resolvable:$true] %s3917
      %s3919 = sshll.u32 %s11, 4
      %s3920 = int_to_ptr.hbm [resolvable:$true] %s3919
      %3922 = dma.vmem_to_hbm [thread:$0]  %s3918, 32, %s3920, [#allocation3]
    $region49: #{net_forward.5} parent=1 // pred_fallthru
      _
    // Predicated region
    $region50: #{net_forward.5} parent=1 // pred_check
      _
    $region51: #{net_forward.5} parent=1 // pred_check_branch
      %3924 = sbr.rel (0) target = $region53
    $region52: #{net_forward.5} parent=1 // pred_region
      %3926 = dma.done [#allocation3], 32
    $region53: #{net_forward.5} parent=1 // pred_fallthru
      _
    %3927 = vsyncpa [#allocation3], 1

</llo_original>
